<compile_context>
chip_gen: v6e
topology: v6e:2x2x1
jax: 0.10.0
libtpu: 0.0.40
codegen_flags: <defaults>
</compile_context>

<pallas_src>
import functools

import jax
import jax.numpy as jnp
from jax import lax
from jax.experimental import pallas as pl
from jax.experimental.pallas import tpu as pltpu


def _sae_kernel(x_ref, w_enc_t_ref, b_enc_ref, w_dec_ref, b_dec_ref,
                out_ref, stats_ref, *, k):
    """One batch-tile of the SAE forward.

    x_ref:       [TB, d_in]   caller dtype (math done in f32)
    w_enc_t_ref: [d_in, H]    encoder weight, pre-transposed; f32 or bf16
    b_enc_ref:   [1, H]       f32
    w_dec_ref:   [H, d_in]    f32 or bf16
    b_dec_ref:   [1, d_in]    f32
    out_ref:     [TB, d_in]
    stats_ref:   [8, d_in]    rows: 0=sum_b x, 1=sum_b x^2, 2=sum_b e^2, 3..7=0
    """
    x = x_ref[...].astype(jnp.float32)            # [TB, d_in]
    b_dec = b_dec_ref[...]                        # [1, d_in] f32

    # ---- encoder + ReLU (MXU, f32 accumulation) ----
    sae_in = x - b_dec
    pre = jnp.dot(sae_in.astype(w_enc_t_ref.dtype), w_enc_t_ref[...],
                  preferred_element_type=jnp.float32,
                  precision=lax.Precision.HIGHEST)
    pre = jnp.maximum(pre + b_enc_ref[...], 0.0)  # [TB, H] f32

    # ---- top-k via running threshold: 1 XLU reduction + 1 VPU where / iter ----
    tb = pre.shape[0]
    neg_inf = jnp.float32(-jnp.inf)

    def body(_, carry):
        work, _thr = carry
        m = jnp.max(work, axis=-1, keepdims=True)            # [TB, 1]
        work = jnp.where(work >= m, neg_inf, work)            # knock out row max
        return work, m

    _, thr = lax.fori_loop(
        0, k, body, (pre, jnp.full((tb, 1), jnp.inf, jnp.float32)))
    sparse = jnp.where(pre >= thr, pre, 0.0)                   # [TB, H] f32

    # ---- decoder (MXU, f32 accumulation) ----
    recon = jnp.dot(sparse.astype(w_dec_ref.dtype), w_dec_ref[...],
                    preferred_element_type=jnp.float32,
                    precision=lax.Precision.HIGHEST) + b_dec
    out_ref[...] = recon.astype(out_ref.dtype)

    # ---- fused fvu partial sums (f32) ----
    e = recon - x
    x_sum = jnp.sum(x, axis=0, keepdims=True)                  # [1, d_in]
    x_sq = jnp.sum(x * x, axis=0, keepdims=True)               # [1, d_in]
    e_sq = jnp.sum(e * e, axis=0, keepdims=True)               # [1, d_in]
    pad = jnp.zeros((5, x.shape[-1]), jnp.float32)
    stats_ref[...] = jnp.concatenate([x_sum, x_sq, e_sq, pad], axis=0)


def _vmem_limit_bytes(tile_b, d_in, H, w_bytes, x_bytes):
    """Rough VMEM budget: double-buffered blocks + in-kernel f32 working set."""
    weights = 2 * H * d_in * w_bytes + (H + d_in) * 4          # W_enc^T, W_dec, biases
    io = tile_b * d_in * (x_bytes + 4) + 8 * d_in * 4          # x tile, out tile, stats
    resident = 2 * (weights + io)                              # pipeline double-buffering
    interm = 4 * tile_b * H * 4                                # pre/work/sparse f32
    est = resident + interm
    # Floor 32 MiB (>= default scoped limits), cap 64 MiB (v7x physical VMEM).
    return int(min(max(2 * est, 32 * (1 << 20)), 64 * (1 << 20)))


def sae_forward(x, w_enc_t, b_enc, w_dec, b_dec, *, k, tile_b=128,
                compute_dtype=None):
    """Pallas SAE forward.

    x:       [B, d_in]
    w_enc_t: [d_in, H]   encoder weight PRE-TRANSPOSED (PyTorch stores [H, d_in])
    b_enc:   [H]
    w_dec:   [H, d_in]
    b_dec:   [d_in]
    Returns (recon [B, d_in], fvu scalar).

    compute_dtype: optional dtype (e.g. jnp.bfloat16) for the matmul operands;
    accumulation, top-k math and fvu stats stay in f32.
    """
    B, d_in = x.shape
    H = w_enc_t.shape[1]
    tile_b = min(tile_b, B)
    assert B % tile_b == 0, "B must be a multiple of tile_b"

    if compute_dtype is not None:
        w_enc_t = w_enc_t.astype(compute_dtype)
        w_dec = w_dec.astype(compute_dtype)

    b_enc_2d = b_enc.reshape(1, H).astype(jnp.float32)
    b_dec_2d = b_dec.reshape(1, d_in).astype(jnp.float32)

    num_tiles = B // tile_b
    kernel = functools.partial(_sae_kernel, k=k)
    vmem_limit = _vmem_limit_bytes(tile_b, d_in, H,
                                   jnp.dtype(w_enc_t.dtype).itemsize,
                                   jnp.dtype(x.dtype).itemsize)

    recon, stats = pl.pallas_call(
        kernel,
        out_shape=(
            jax.ShapeDtypeStruct((B, d_in), x.dtype),
            jax.ShapeDtypeStruct((num_tiles * 8, d_in), jnp.float32),
        ),
        grid_spec=pltpu.PrefetchScalarGridSpec(
            num_scalar_prefetch=0,
            grid=(num_tiles,),
            in_specs=[
                pl.BlockSpec((tile_b, d_in), lambda i: (i, 0)),   # x tile
                pl.BlockSpec((d_in, H), lambda i: (0, 0)),        # W_enc^T (resident)
                pl.BlockSpec((1, H), lambda i: (0, 0)),           # b_enc
                pl.BlockSpec((H, d_in), lambda i: (0, 0)),        # W_dec (resident)
                pl.BlockSpec((1, d_in), lambda i: (0, 0)),        # b_dec
            ],
            out_specs=[
                pl.BlockSpec((tile_b, d_in), lambda i: (i, 0)),   # recon tile
                pl.BlockSpec((8, d_in), lambda i: (i, 0)),        # fvu partial sums
            ],
        ),
        compiler_params=pltpu.CompilerParams(
            dimension_semantics=("parallel",),
            vmem_limit_bytes=vmem_limit),
    )(x, w_enc_t, b_enc_2d, w_dec, b_dec_2d)

    # Finish the fvu scalar from the fused per-tile partials (tiny reductions).
    stats = stats.reshape(num_tiles, 8, d_in)
    x_sum = jnp.sum(stats[:, 0, :], axis=0)        # per-feature sum_b x
    x_sq = jnp.sum(stats[:, 1, :])                 # total sum x^2
    e_sq = jnp.sum(stats[:, 2, :])                 # total sum e^2
    total_variance = x_sq - jnp.sum(x_sum * x_sum) / B
    fvu = e_sq / total_variance
    return recon, fvu


def _reference_forward(x, w_enc, b_enc, w_dec, b_dec, k):
    """Pure-JAX reference mirroring the PyTorch forward (eval path)."""
    sae_in = x - b_dec
    pre = jnp.maximum(
        jnp.dot(sae_in, w_enc.T, precision=lax.Precision.HIGHEST) + b_enc, 0.0)
    vals, idxs = lax.top_k(pre, k)
    rows = jnp.arange(pre.shape[0])[:, None]
    sparse = jnp.zeros_like(pre).at[rows, idxs].set(vals)
    recon = jnp.dot(sparse, w_dec, precision=lax.Precision.HIGHEST) + b_dec
    e = recon - x
    tv = jnp.sum((x - jnp.mean(x, axis=0)) ** 2)
    return recon, jnp.sum(e ** 2) / tv


if __name__ == "__main__":
    # Small, lane-aligned shapes consistent with the module:
    #   hidden_dim = d_in * sae_scale_size, k = sae_k
    B = 64
    d_in = 128
    scale_size = 8           # sae_scale_size (kept small for the demo)
    k = 32                   # sae_k
    H = d_in * scale_size    # hidden_dim = 1024
    tile_b = 32              # -> grid of 2 (exercises the parallel batch axis)

    key = jax.random.PRNGKey(0)
    kx, kw, kbe, kbd = jax.random.split(key, 4)

    # Parameter init mirroring nn.Linear + SAE.__init__ (biases made nonzero to
    # exercise the bias paths; the module zeroes them at init but they train).
    bound = 1.0 / jnp.sqrt(jnp.float32(d_in))
    w_enc = jax.random.uniform(kw, (H, d_in), jnp.float32, -bound, bound)
    eps = jnp.finfo(jnp.float32).eps
    w_dec = w_enc / (jnp.linalg.norm(w_enc, axis=1, keepdims=True) + eps)
    b_enc = 0.01 * jax.random.normal(kbe, (H,), jnp.float32)
    b_dec = 0.01 * jax.random.normal(kbd, (d_in,), jnp.float32)
    x = jax.random.normal(kx, (B, d_in), jnp.float32)

    # Hoisted once (would be done at weight-load time in production).
    w_enc_t = jnp.asarray(w_enc.T)                 # [d_in, H]

    # f32 path: correctness check against the pure-JAX reference.
    recon, fvu = sae_forward(x, w_enc_t, b_enc, w_dec, b_dec, k=k, tile_b=tile_b)
    recon = jax.block_until_ready(recon)
    fvu = jax.block_until_ready(fvu)

    recon_ref, fvu_ref = _reference_forward(x, w_enc, b_enc, w_dec, b_dec, k)
    assert jnp.allclose(recon, recon_ref, atol=1e-3, rtol=1e-3), "recon mismatch"
    assert jnp.allclose(fvu, fvu_ref, atol=1e-3, rtol=1e-3), "fvu mismatch"

    # bf16-weight path (perf option on v6e/v7x): smoke test, f32 accumulation.
    recon_bf, fvu_bf = sae_forward(x, w_enc_t, b_enc, w_dec, b_dec, k=k,
                                   tile_b=tile_b, compute_dtype=jnp.bfloat16)
    recon_bf = jax.block_until_ready(recon_bf)
    fvu_bf = jax.block_until_ready(fvu_bf)
    assert bool(jnp.all(jnp.isfinite(recon_bf))) and bool(jnp.isfinite(fvu_bf))

    print("KERNEL_OK")
</pallas_src>

<mosaic_0001>
module attributes {stable_mosaic.version = 11 : i64} {
  func.func @_sae_kernel(%arg0: i32, %arg1: memref<32x128xf32, #tpu.memory_space<vmem>>, %arg2: memref<128x1024xf32, #tpu.memory_space<vmem>>, %arg3: memref<1x1024xf32, #tpu.memory_space<vmem>>, %arg4: memref<1024x128xf32, #tpu.memory_space<vmem>>, %arg5: memref<1x128xf32, #tpu.memory_space<vmem>>, %arg6: memref<32x128xf32, #tpu.memory_space<vmem>>, %arg7: memref<8x128xf32, #tpu.memory_space<vmem>>) attributes {dimension_semantics = [#tpu.dimension_semantics<parallel>], iteration_bounds = array<i64: 2>, scalar_prefetch = 0 : i64, scratch_operands = 0 : i64, tpu.core_type = #tpu.core_type<tc>, window_params = [{transform_indices = @transform_0, window_bounds = array<i64: 32, 128>}, {pipeline_mode = #tpu.pipeline_mode<synchronous>, transform_indices = @transform_1, window_bounds = array<i64: 128, 1024>}, {pipeline_mode = #tpu.pipeline_mode<synchronous>, transform_indices = @transform_2, window_bounds = array<i64: 1, 1024>}, {pipeline_mode = #tpu.pipeline_mode<synchronous>, transform_indices = @transform_3, window_bounds = array<i64: 1024, 128>}, {pipeline_mode = #tpu.pipeline_mode<synchronous>, transform_indices = @transform_4, window_bounds = array<i64: 1, 128>}, {transform_indices = @transform_5, window_bounds = array<i64: 32, 128>}, {transform_indices = @transform_6, window_bounds = array<i64: 8, 128>}]} {
    %c0 = arith.constant 0 : index
    %c0_0 = arith.constant 0 : index
    %0 = vector.load %arg1[%c0, %c0_0] : memref<32x128xf32, #tpu.memory_space<vmem>>, vector<32x128xf32>
    %c0_1 = arith.constant 0 : index
    %c0_2 = arith.constant 0 : index
    %1 = vector.load %arg5[%c0_1, %c0_2] : memref<1x128xf32, #tpu.memory_space<vmem>>, vector<1x128xf32>
    %2 = vector.broadcast %1 : vector<1x128xf32> to vector<32x128xf32>
    %3 = arith.subf %0, %2 : vector<32x128xf32>
    %c0_3 = arith.constant 0 : index
    %c0_4 = arith.constant 0 : index
    %4 = vector.load %arg2[%c0_3, %c0_4] : memref<128x1024xf32, #tpu.memory_space<vmem>>, vector<128x1024xf32>
    %cst = arith.constant dense<0.000000e+00> : vector<32x1024xf32>
    %5 = tpu.matmul %3, %4, %cst {dimension_numbers = #tpu.dot_dimension_numbers<[1], [0], [0], [1], [0, 0, 1, 1], [], []>, precision = #tpu.contract_precision<fp32>} : vector<32x128xf32>, vector<128x1024xf32>, vector<32x1024xf32> -> vector<32x1024xf32>
    %c0_5 = arith.constant 0 : index
    %c0_6 = arith.constant 0 : index
    %6 = vector.load %arg3[%c0_5, %c0_6] : memref<1x1024xf32, #tpu.memory_space<vmem>>, vector<1x1024xf32>
    %7 = vector.broadcast %6 : vector<1x1024xf32> to vector<32x1024xf32>
    %8 = arith.addf %5, %7 : vector<32x1024xf32>
    %cst_7 = arith.constant 0.000000e+00 : f32
    %9 = vector.broadcast %cst_7 : f32 to vector<32x1024xf32>
    %10 = arith.maximumf %8, %9 : vector<32x1024xf32>
    %cst_8 = arith.constant 0x7F800000 : f32
    %11 = vector.broadcast %cst_8 : f32 to vector<32x1xf32>
    %cst_9 = arith.constant 0xFF800000 : f32
    %c0_i32 = arith.constant 0 : i32
    %c32_i32 = arith.constant 32 : i32
    %12 = arith.addi %c0_i32, %c32_i32 : i32
    %c1_i32 = arith.constant 1 : i32
    %13:2 = scf.for %arg8 = %c0_i32 to %12 step %c1_i32 iter_args(%arg9 = %10, %arg10 = %11) -> (vector<32x1024xf32>, vector<32x1xf32>)  : i32 {
      %cst_22 = arith.constant dense<0xFF800000> : vector<32xf32>
      %35 = vector.multi_reduction <maximumf>, %arg9, %cst_22 [1] : vector<32x1024xf32> to vector<32xf32>
      %36 = vector.shape_cast %35 : vector<32xf32> to vector<32x1xf32>
      %37 = vector.broadcast %36 : vector<32x1xf32> to vector<32x1024xf32>
      %38 = arith.cmpf oge, %arg9, %37 : vector<32x1024xf32>
      %39 = vector.broadcast %cst_9 : f32 to vector<32x1024xf32>
      %40 = arith.select %38, %39, %arg9 : vector<32x1024xi1>, vector<32x1024xf32>
      scf.yield %40, %36 : vector<32x1024xf32>, vector<32x1xf32>
    }
    %14 = vector.broadcast %13#1 : vector<32x1xf32> to vector<32x1024xf32>
    %15 = arith.cmpf oge, %10, %14 : vector<32x1024xf32>
    %cst_10 = arith.constant 0.000000e+00 : f32
    %16 = vector.broadcast %cst_10 : f32 to vector<32x1024xf32>
    %17 = arith.select %15, %10, %16 : vector<32x1024xi1>, vector<32x1024xf32>
    %c0_11 = arith.constant 0 : index
    %c0_12 = arith.constant 0 : index
    %18 = vector.load %arg4[%c0_11, %c0_12] : memref<1024x128xf32, #tpu.memory_space<vmem>>, vector<1024x128xf32>
    %cst_13 = arith.constant dense<0.000000e+00> : vector<32x128xf32>
    %19 = tpu.matmul %17, %18, %cst_13 {dimension_numbers = #tpu.dot_dimension_numbers<[1], [0], [0], [1], [0, 0, 1, 1], [], []>, precision = #tpu.contract_precision<fp32>} : vector<32x1024xf32>, vector<1024x128xf32>, vector<32x128xf32> -> vector<32x128xf32>
    %20 = vector.broadcast %1 : vector<1x128xf32> to vector<32x128xf32>
    %21 = arith.addf %19, %20 : vector<32x128xf32>
    %c0_14 = arith.constant 0 : index
    %c0_15 = arith.constant 0 : index
    %22 = vector.load %arg6[%c0_14, %c0_15] : memref<32x128xf32, #tpu.memory_space<vmem>>, vector<32x128xf32>
    tpu.vector_store %arg6[%c0_14, %c0_15], %21 {strides = array<i32>} : memref<32x128xf32, #tpu.memory_space<vmem>>, vector<32x128xf32>,
    %23 = arith.subf %21, %0 : vector<32x128xf32>
    %cst_16 = arith.constant dense<0.000000e+00> : vector<128xf32>
    %24 = vector.multi_reduction <add>, %0, %cst_16 [0] : vector<32x128xf32> to vector<128xf32>
    %25 = vector.shape_cast %24 : vector<128xf32> to vector<1x128xf32>
    %26 = arith.mulf %0, %0 : vector<32x128xf32>
    %cst_17 = arith.constant dense<0.000000e+00> : vector<128xf32>
    %27 = vector.multi_reduction <add>, %26, %cst_17 [0] : vector<32x128xf32> to vector<128xf32>
    %28 = vector.shape_cast %27 : vector<128xf32> to vector<1x128xf32>
    %29 = arith.mulf %23, %23 : vector<32x128xf32>
    %cst_18 = arith.constant dense<0.000000e+00> : vector<128xf32>
    %30 = vector.multi_reduction <add>, %29, %cst_18 [0] : vector<32x128xf32> to vector<128xf32>
    %31 = vector.shape_cast %30 : vector<128xf32> to vector<1x128xf32>
    %cst_19 = arith.constant 0.000000e+00 : f32
    %32 = vector.broadcast %cst_19 : f32 to vector<5x128xf32>
    %33 = tpu.concatenate %25, %28, %31, %32 in 0 : vector<1x128xf32>, vector<1x128xf32>, vector<1x128xf32>, vector<5x128xf32> -> vector<8x128xf32>
    %c0_20 = arith.constant 0 : index
    %c0_21 = arith.constant 0 : index
    %34 = vector.load %arg7[%c0_20, %c0_21] : memref<8x128xf32, #tpu.memory_space<vmem>>, vector<8x128xf32>
    tpu.vector_store %arg7[%c0_20, %c0_21], %33 {strides = array<i32>} : memref<8x128xf32, #tpu.memory_space<vmem>>, vector<8x128xf32>,
    return
  }
  func.func @transform_0(%arg0: i32) -> (i32, i32) {
    %c0_i32 = arith.constant 0 : i32
    %c0_i32_0 = arith.constant 0 : i32
    return %arg0, %c0_i32 : i32, i32
  }
  func.func @transform_1(%arg0: i32) -> (i32, i32) {
    %c0_i32 = arith.constant 0 : i32
    %c0_i32_0 = arith.constant 0 : i32
    %c0_i32_1 = arith.constant 0 : i32
    return %c0_i32, %c0_i32_0 : i32, i32
  }
  func.func @transform_2(%arg0: i32) -> (i32, i32) {
    %c0_i32 = arith.constant 0 : i32
    %c0_i32_0 = arith.constant 0 : i32
    %c0_i32_1 = arith.constant 0 : i32
    return %c0_i32, %c0_i32_0 : i32, i32
  }
  func.func @transform_3(%arg0: i32) -> (i32, i32) {
    %c0_i32 = arith.constant 0 : i32
    %c0_i32_0 = arith.constant 0 : i32
    %c0_i32_1 = arith.constant 0 : i32
    return %c0_i32, %c0_i32_0 : i32, i32
  }
  func.func @transform_4(%arg0: i32) -> (i32, i32) {
    %c0_i32 = arith.constant 0 : i32
    %c0_i32_0 = arith.constant 0 : i32
    %c0_i32_1 = arith.constant 0 : i32
    return %c0_i32, %c0_i32_0 : i32, i32
  }
  func.func @transform_5(%arg0: i32) -> (i32, i32) {
    %c0_i32 = arith.constant 0 : i32
    %c0_i32_0 = arith.constant 0 : i32
    return %arg0, %c0_i32 : i32, i32
  }
  func.func @transform_6(%arg0: i32) -> (i32, i32) {
    %c0_i32 = arith.constant 0 : i32
    %c0_i32_0 = arith.constant 0 : i32
    return %arg0, %c0_i32 : i32, i32
  }
}

</mosaic_0001>

<llo_original>
// kernel: tpu_custom_call.1
$region0: #{tpu_custom_call.1}
  #allocation0 [shape = 'u32[]', space=smem, size = 0x4, offset = 0x4, fixed_abs, tag = 'smem constant byte address 0x4 - core index']
  #allocation1 [shape = 'u32[144,128]{1,0:T(1,128)}', space=vmem, size = 0x12000, scoped, tag = 'internal scratch']
  %s0 = inlined_call_operand.hbm [shape: f32[64,128], index: 0, kind: input, shape index: {}]
  %s1 = inlined_call_operand.hbm [shape: f32[128,1024], index: 1, kind: input, shape index: {}]
  %s2 = inlined_call_operand.hbm [shape: f32[1,1024], index: 2, kind: input, shape index: {}]
  %s3 = inlined_call_operand.hbm [shape: f32[1024,128], index: 3, kind: input, shape index: {}]
  %s4 = inlined_call_operand.vmem [shape: f32[1,128], index: 4, kind: input, shape index: {}]
  %s5 = inlined_call_operand.hbm [shape: f32[64,128], index: 5, kind: output, shape index: {0}]
  %s6 = inlined_call_operand.hbm [shape: f32[16,128], index: 6, kind: output, shape index: {1}]
  %7 = xla_tuple %s5, %s6
  %s8 = sld [smem:[#allocation0]]
  $region84: #{tpu_custom_call.1} parent=0
    _
  %s10 = ssub.s32 1, %s8
  %s11 = scalar_select 0, %s10, %s8
  $region1: #{tpu_custom_call.1} parent=0
    #allocation2 [shape = 'u8[32768]{0}', space=vmem, size = 0x8000, scoped, tag = 'input window, operand 0']
    #allocation3 [shape = 's32[2]{0}', space=sflag, size = 0x8, scoped, tag = 'scoped memory for tpu_custom_call.1']
    #allocation4 [shape = 's32[2]{0}', space=sflag, size = 0x8, scoped, tag = 'scoped memory for tpu_custom_call.1']
    #allocation5 [shape = 'u8[524288]{0}', space=vmem, size = 0x80000, scoped, tag = 'input window, operand 1, single buffered']
    #allocation6 [shape = 's32[1]{0}', space=sflag, size = 0x4, scoped, tag = 'scoped memory for tpu_custom_call.1']
    #allocation7 [shape = 'u8[4096]{0}', space=vmem, size = 0x1000, scoped, tag = 'input window, operand 2, single buffered']
    #allocation8 [shape = 'u8[524288]{0}', space=vmem, size = 0x80000, scoped, tag = 'input window, operand 3, single buffered']
    #allocation9 [shape = 's32[1]{0}', space=sflag, size = 0x4, scoped, tag = 'scoped memory for tpu_custom_call.1']
    #allocation10 [shape = 'u8[32768]{0}', space=vmem, size = 0x8000, scoped, tag = 'output window, operand 0']
    #allocation11 [shape = 'u8[8192]{0}', space=vmem, size = 0x2000, scoped, tag = 'output window, operand 1']
    #allocation12 [shape = 's32[2]{0}', space=sflag, size = 0x8, scoped, tag = 'scoped memory for tpu_custom_call.1']
    %12 = vsyncpa [#allocation3], 0
    %s13 = scalar_lea.sflag [#allocation3], 1
    %14 = vsyncpa %s13, 0
    %15 = vsyncpa [#allocation6], 0
    %16 = vsyncpa [#allocation9], 0
    %17 = vsyncpa [#allocation4], 0
    %s18 = scalar_lea.sflag [#allocation4], 1
    %19 = vsyncpa %s18, 0
    %20 = vsyncpa [#allocation12], 0
    %s21 = scalar_lea.sflag [#allocation12], 1
    %22 = vsyncpa %s21, 0
    loop: start=0, step=1, limit=4
    $region2: #{tpu_custom_call.1} parent=1 // loop_pre_header
      _
    $region3: #{tpu_custom_call.1} parent=1 // loop_header
      %s24 = sphi 0, %s28
      %p25 = scmp.ge.s32.totalorder %s24, 4
      %s34 = sphi 0, %s36
      %s37 = sphi 0, %s34
      %s38 = sphi 0, %s37
      %s54 = sphi 0, %s38
      %s58 = sphi 0, %s58
      %s60 = sphi 0, %s58
      %s61 = sphi 0, %s60
      %s75 = sphi 0, %s61
      %s79 = sphi 0, %s79
      %s81 = sphi 0, %s79
      %s82 = sphi 0, %s81
      %s96 = sphi 0, %s82
      %s100 = sphi 0, %s100
      %s102 = sphi 0, %s100
      %s103 = sphi 0, %s102
      %s117 = sphi 0, %s103
      %s121 = sphi 0, %s121
      %s123 = sphi 0, %s121
      %s124 = sphi 0, %s123
      %s138 = sphi 0, %s124
      %s144 = sphi 0, %s146
      %s147 = sphi 0, %s144
      %s148 = sphi 0, %s147
      %s164 = sphi 0, %s148
      %s170 = sphi 0, %s172
      %s173 = sphi 0, %s170
      %s174 = sphi 0, %s173
      %s190 = sphi 0, %s174
    $region4: #{tpu_custom_call.1} parent=1 // loop_header_branch
      %27 = sbr.rel (%p25) target = $region8
    $region5: #{tpu_custom_call.1} parent=1 // loop_body
      %s29 = ssub.s32 %s24, 1
      %s30 = ssub.s32 %s24, 2
      %s31 = sadd.s32 %s24, 1
      %s32 = ssub.s32 %s24, %s31
      %p33 = scmp.eq.s32.totalorder %s32, 0
      %s35 = sadd.s32 %s34, 1
      %s36 = scalar_select %p33, %s34, %s35
      %p39 = pneg %p33
      %p40 = scmp.eq.s32.totalorder %s24, 1
      %p41 = por %p39, %p40
      %p42 = scmp.ne.s32.totalorder %s34, %s37
      %p43 = scmp.eq.s32.totalorder %s24, 0
      %p44 = por %p42, %p43
      %p45 = scmp.ne.s32.totalorder %s34, %s37
      %p46 = scmp.eq.s32.totalorder %s29, 1
      %p47 = por %p45, %p46
      %p48 = scmp.ne.s32.totalorder %s37, %s38
      %p49 = scmp.eq.s32.totalorder %s29, 0
      %p50 = por %p48, %p49
      %p51 = scmp.ne.s32.totalorder %s37, %s38
      %p52 = scmp.eq.s32.totalorder %s30, 1
      %p53 = por %p51, %p52
      %p55 = scmp.ne.s32.totalorder %s38, %s54
      %p56 = scmp.eq.s32.totalorder %s30, 0
      %p57 = por %p55, %p56
      %s59 = sadd.s32 %s58, 1
      %p62 = scmp.eq.s32.totalorder %s24, 1
      %p63 = scmp.ne.s32.totalorder %s58, %s60
      %p64 = scmp.eq.s32.totalorder %s24, 0
      %p65 = por %p63, %p64
      %p66 = scmp.ne.s32.totalorder %s58, %s60
      %p67 = scmp.eq.s32.totalorder %s29, 1
      %p68 = por %p66, %p67
      %p69 = scmp.ne.s32.totalorder %s60, %s61
      %p70 = scmp.eq.s32.totalorder %s29, 0
      %p71 = por %p69, %p70
      %p72 = scmp.ne.s32.totalorder %s60, %s61
      %p73 = scmp.eq.s32.totalorder %s30, 1
      %p74 = por %p72, %p73
      %p76 = scmp.ne.s32.totalorder %s61, %s75
      %p77 = scmp.eq.s32.totalorder %s30, 0
      %p78 = por %p76, %p77
      %s80 = sadd.s32 %s79, 1
      %p83 = scmp.eq.s32.totalorder %s24, 1
      %p84 = scmp.ne.s32.totalorder %s79, %s81
      %p85 = scmp.eq.s32.totalorder %s24, 0
      %p86 = por %p84, %p85
      %p87 = scmp.ne.s32.totalorder %s79, %s81
      %p88 = scmp.eq.s32.totalorder %s29, 1
      %p89 = por %p87, %p88
      %p90 = scmp.ne.s32.totalorder %s81, %s82
      %p91 = scmp.eq.s32.totalorder %s29, 0
      %p92 = por %p90, %p91
      %p93 = scmp.ne.s32.totalorder %s81, %s82
      %p94 = scmp.eq.s32.totalorder %s30, 1
      %p95 = por %p93, %p94
      %p97 = scmp.ne.s32.totalorder %s82, %s96
      %p98 = scmp.eq.s32.totalorder %s30, 0
      %p99 = por %p97, %p98
      %s101 = sadd.s32 %s100, 1
      %p104 = scmp.eq.s32.totalorder %s24, 1
      %p105 = scmp.ne.s32.totalorder %s100, %s102
      %p106 = scmp.eq.s32.totalorder %s24, 0
      %p107 = por %p105, %p106
      %p108 = scmp.ne.s32.totalorder %s100, %s102
      %p109 = scmp.eq.s32.totalorder %s29, 1
      %p110 = por %p108, %p109
      %p111 = scmp.ne.s32.totalorder %s102, %s103
      %p112 = scmp.eq.s32.totalorder %s29, 0
      %p113 = por %p111, %p112
      %p114 = scmp.ne.s32.totalorder %s102, %s103
      %p115 = scmp.eq.s32.totalorder %s30, 1
      %p116 = por %p114, %p115
      %p118 = scmp.ne.s32.totalorder %s103, %s117
      %p119 = scmp.eq.s32.totalorder %s30, 0
      %p120 = por %p118, %p119
      %s122 = sadd.s32 %s121, 1
      %p125 = scmp.eq.s32.totalorder %s24, 1
      %p126 = scmp.ne.s32.totalorder %s121, %s123
      %p127 = scmp.eq.s32.totalorder %s24, 0
      %p128 = por %p126, %p127
      %p129 = scmp.ne.s32.totalorder %s121, %s123
      %p130 = scmp.eq.s32.totalorder %s29, 1
      %p131 = por %p129, %p130
      %p132 = scmp.ne.s32.totalorder %s123, %s124
      %p133 = scmp.eq.s32.totalorder %s29, 0
      %p134 = por %p132, %p133
      %p135 = scmp.ne.s32.totalorder %s123, %s124
      %p136 = scmp.eq.s32.totalorder %s30, 1
      %p137 = por %p135, %p136
      %p139 = scmp.ne.s32.totalorder %s124, %s138
      %p140 = scmp.eq.s32.totalorder %s30, 0
      %p141 = por %p139, %p140
      %s142 = ssub.s32 %s24, %s31
      %p143 = scmp.eq.s32.totalorder %s142, 0
      %s145 = sadd.s32 %s144, 1
      %s146 = scalar_select %p143, %s144, %s145
      %p149 = pneg %p143
      %p150 = scmp.eq.s32.totalorder %s24, 1
      %p151 = por %p149, %p150
      %p152 = scmp.ne.s32.totalorder %s144, %s147
      %p153 = scmp.eq.s32.totalorder %s24, 0
      %p154 = por %p152, %p153
      %p155 = scmp.ne.s32.totalorder %s144, %s147
      %p156 = scmp.eq.s32.totalorder %s29, 1
      %p157 = por %p155, %p156
      %p158 = scmp.ne.s32.totalorder %s147, %s148
      %p159 = scmp.eq.s32.totalorder %s29, 0
      %p160 = por %p158, %p159
      %p161 = scmp.ne.s32.totalorder %s147, %s148
      %p162 = scmp.eq.s32.totalorder %s30, 1
      %p163 = por %p161, %p162
      %p165 = scmp.ne.s32.totalorder %s148, %s164
      %p166 = scmp.eq.s32.totalorder %s30, 0
      %p167 = por %p165, %p166
      %s168 = ssub.s32 %s24, %s31
      %p169 = scmp.eq.s32.totalorder %s168, 0
      %s171 = sadd.s32 %s170, 1
      %s172 = scalar_select %p169, %s170, %s171
      %p175 = pneg %p169
      %p176 = scmp.eq.s32.totalorder %s24, 1
      %p177 = por %p175, %p176
      %p178 = scmp.ne.s32.totalorder %s170, %s173
      %p179 = scmp.eq.s32.totalorder %s24, 0
      %p180 = por %p178, %p179
      %p181 = scmp.ne.s32.totalorder %s170, %s173
      %p182 = scmp.eq.s32.totalorder %s29, 1
      %p183 = por %p181, %p182
      %p184 = scmp.ne.s32.totalorder %s173, %s174
      %p185 = scmp.eq.s32.totalorder %s29, 0
      %p186 = por %p184, %p185
      %p187 = scmp.ne.s32.totalorder %s173, %s174
      %p188 = scmp.eq.s32.totalorder %s30, 1
      %p189 = por %p187, %p188
      %p191 = scmp.ne.s32.totalorder %s174, %s190
      %p192 = scmp.eq.s32.totalorder %s30, 0
      %p193 = por %p191, %p192
      %p194 = scmp.le.s32.totalorder 1, %s24
      %p195 = scmp.lt.s32.totalorder %s24, 3
      %p196 = pnand %p194, %p195
      %p197 = pneg %p196
      // Predicated region
      $region9: #{tpu_custom_call.1} parent=5 // pred_check
        _
      $region10: #{tpu_custom_call.1} parent=5 // pred_check_branch
        %199 = sbr.rel (%p196) target = $region12
      $region11: #{tpu_custom_call.1} parent=5 // pred_region
        %s200 = ssub.s32 %s24, 1
        // Predicated region
        $region13: #{tpu_custom_call.1} parent=11 // pred_check
          %p201 = pneg %p71
        $region14: #{tpu_custom_call.1} parent=11 // pred_check_branch
          %203 = sbr.rel (%p201) target = $region16
        $region15: #{tpu_custom_call.1} parent=11 // pred_region
          %s205 = ssub.s32 16384, 16384
          %206 = vsyncadd [#allocation6], %s205
          %s207 = sshll.u32 [#allocation5], 4
          %s208 = int_to_ptr.vmem [resolvable:$true] %s207
          %213 = dma.hbm_to_vmem [thread:$0]  %s1, 16384, %s208, [#allocation6], 1024, 1024, 64
        $region16: #{tpu_custom_call.1} parent=11 // pred_fallthru
          _
        // Predicated region
        $region17: #{tpu_custom_call.1} parent=11 // pred_check
          %p214 = pneg %p92
        $region18: #{tpu_custom_call.1} parent=11 // pred_check_branch
          %216 = sbr.rel (%p214) target = $region20
        $region19: #{tpu_custom_call.1} parent=11 // pred_region
          %s218 = ssub.s32 128, 128
          %219 = vsyncadd [#allocation6], %s218
          %s221 = sshll.u32 [#allocation7], 4
          %s222 = int_to_ptr.vmem [resolvable:$true] %s221
          %224 = dma.hbm_to_vmem [thread:$0]  %s2, 128, %s222, [#allocation6]
        $region20: #{tpu_custom_call.1} parent=11 // pred_fallthru
          _
        // Predicated region
        $region21: #{tpu_custom_call.1} parent=11 // pred_check
          %p225 = pneg %p113
        $region22: #{tpu_custom_call.1} parent=11 // pred_check_branch
          %227 = sbr.rel (%p225) target = $region24
        $region23: #{tpu_custom_call.1} parent=11 // pred_region
          %s229 = ssub.s32 16384, 16384
          %230 = vsyncadd [#allocation9], %s229
          %s231 = sshll.u32 [#allocation8], 4
          %s232 = int_to_ptr.vmem [resolvable:$true] %s231
          %237 = dma.hbm_to_vmem [thread:$0]  %s3, 16384, %s232, [#allocation9], 128, 128, 8
        $region24: #{tpu_custom_call.1} parent=11 // pred_fallthru
          _
        // Predicated region
        $region25: #{tpu_custom_call.1} parent=11 // pred_check
          %p238 = pneg %p134
        $region26: #{tpu_custom_call.1} parent=11 // pred_check_branch
          %240 = sbr.rel (%p238) target = $region28
        $region27: #{tpu_custom_call.1} parent=11 // pred_region
          _
        $region28: #{tpu_custom_call.1} parent=11 // pred_fallthru
          _
      $region12: #{tpu_custom_call.1} parent=5 // pred_fallthru
        _
      %p241 = scmp.lt.s32.totalorder %s24, 2
      // Predicated region
      $region29: #{tpu_custom_call.1} parent=5 // pred_check
        %p242 = pneg %p241
      $region30: #{tpu_custom_call.1} parent=5 // pred_check_branch
        %244 = sbr.rel (%p242) target = $region32
      $region31: #{tpu_custom_call.1} parent=5 // pred_region
        // Predicated region
        $region33: #{tpu_custom_call.1} parent=31 // pred_check
          %p245 = pneg %p44
        $region34: #{tpu_custom_call.1} parent=31 // pred_check_branch
          %247 = sbr.rel (%p245) target = $region36
        $region35: #{tpu_custom_call.1} parent=31 // pred_region
          %s248 = sand.u32 %s34, 1
          %s249 = scalar_lea.sflag [#allocation3], %s248
          %s250 = sand.u32 %s34, 1
          %s251 = smul.addr %s250, 32
          %s252 = scalar_lea.vmem [#allocation2], %s251
          %s253 = smul.u32 4, %s24
          %s255 = ssub.s32 512, 512
          %256 = vsyncadd %s249, %s255
          %s257 = smul.addr %s253, 128
          %s258 = scalar_lea.hbm %s0, %s257
          %s259 = sshll.u32 %s252, 4
          %s260 = int_to_ptr.vmem [resolvable:$true] %s259
          %265 = dma.hbm_to_vmem [thread:$0]  %s258, 512, %s260, %s249, 128, 128, 8
        $region36: #{tpu_custom_call.1} parent=31 // pred_fallthru
          _
      $region32: #{tpu_custom_call.1} parent=5 // pred_fallthru
        _
      %p266 = scmp.le.s32.totalorder 1, %s24
      %p267 = scmp.lt.s32.totalorder %s24, 3
      %p268 = pnand %p266, %p267
      %p269 = pneg %p268
      // Predicated region
      $region37: #{tpu_custom_call.1} parent=5 // pred_check
        _
      $region38: #{tpu_custom_call.1} parent=5 // pred_check_branch
        %271 = sbr.rel (%p268) target = $region40
      $region39: #{tpu_custom_call.1} parent=5 // pred_region
        %s272 = ssub.s32 %s24, 1
        %s273 = sand.u32 %s37, 1
        %s274 = scalar_lea.sflag [#allocation3], %s273
        %s275 = sand.u32 %s37, 1
        %s276 = smul.addr %s275, 32
        %s277 = scalar_lea.vmem [#allocation2], %s276
        // Predicated region
        $region41: #{tpu_custom_call.1} parent=39 // pred_check
          %p278 = pneg %p50
        $region42: #{tpu_custom_call.1} parent=39 // pred_check_branch
          %280 = sbr.rel (%p278) target = $region44
        $region43: #{tpu_custom_call.1} parent=39 // pred_region
          %281 = dma.done %s274, 512
        $region44: #{tpu_custom_call.1} parent=39 // pred_fallthru
          _
        // Predicated region
        $region45: #{tpu_custom_call.1} parent=39 // pred_check
          %p282 = pneg %p71
        $region46: #{tpu_custom_call.1} parent=39 // pred_check_branch
          %284 = sbr.rel (%p282) target = $region48
        $region47: #{tpu_custom_call.1} parent=39 // pred_region
          %285 = dma.done [#allocation6], 16384
        $region48: #{tpu_custom_call.1} parent=39 // pred_fallthru
          _
        // Predicated region
        $region49: #{tpu_custom_call.1} parent=39 // pred_check
          %p286 = pneg %p92
        $region50: #{tpu_custom_call.1} parent=39 // pred_check_branch
          %288 = sbr.rel (%p286) target = $region52
        $region51: #{tpu_custom_call.1} parent=39 // pred_region
          %289 = dma.done [#allocation6], 128
        $region52: #{tpu_custom_call.1} parent=39 // pred_fallthru
          _
        // Predicated region
        $region53: #{tpu_custom_call.1} parent=39 // pred_check
          %p290 = pneg %p113
        $region54: #{tpu_custom_call.1} parent=39 // pred_check_branch
          %292 = sbr.rel (%p290) target = $region56
        $region55: #{tpu_custom_call.1} parent=39 // pred_region
          %293 = dma.done [#allocation9], 16384
        $region56: #{tpu_custom_call.1} parent=39 // pred_fallthru
          _
        %s294 = sand.u32 %s37, 1
        %s295 = scalar_lea.sflag [#allocation3], %s294
        %s296 = sand.u32 %s37, 1
        %s297 = smul.addr %s296, 32
        %s298 = scalar_lea.vmem [#allocation2], %s297
        %p299 = pneg %p50
        %p300 = pneg %p47
        %p301 = pneg %p71
        %p302 = pneg %p68
        %p303 = pneg %p92
        %p304 = pneg %p89
        %p305 = pneg %p113
        %p306 = pneg %p110
        %p307 = pneg %p134
        %p308 = pneg %p131
        %p309 = pneg %p160
        %p310 = pneg %p157
        %s311 = sand.u32 %s147, 1
        %s312 = scalar_lea.sflag [#allocation4], %s311
        %s313 = sand.u32 %s147, 1
        %s314 = smul.addr %s313, 32
        %s315 = scalar_lea.vmem [#allocation10], %s314
        %p316 = pneg %p186
        %p317 = pneg %p183
        %s318 = sand.u32 %s173, 1
        %s319 = scalar_lea.sflag [#allocation12], %s318
        %s320 = sand.u32 %s173, 1
        %s321 = smul.addr %s320, 8
        %s322 = scalar_lea.vmem [#allocation11], %s321
        %s323 = smul.u32 4, %s29
        %s324 = smul.u32 4, %s29
        %v325 = vld [vmem:[%s277] sm:$0xff]
        %v326 = vld [vmem:[%s277 + $0x8] sm:$0xff]
        %v327 = vld [vmem:[%s277 + $0x10] sm:$0xff]
        %v328 = vld [vmem:[%s277 + $0x18] sm:$0xff]
        %v329 = vld [vmem:[%s4] sm:$0x1]
        %v331 = vlaneseq
        %v332 = vshrl.u32 %v331, 7
        %v333 = vsub.s32 0, %v332
        %v334 = vrot.slane %v329, %v333
        %v336 = vsub.f32 %v325, %v334
        %v337 = vsub.f32 %v326, %v334
        %v338 = vsub.f32 %v327, %v334
        %v339 = vsub.f32 %v328, %v334
        %v340 = vld [vmem:[#allocation5] sm:$0xff]
        %v341 = vld [vmem:[#allocation5 + $0x8] sm:$0xff]
        %v342 = vld [vmem:[#allocation5 + $0x10] sm:$0xff]
        %v343 = vld [vmem:[#allocation5 + $0x18] sm:$0xff]
        %v344 = vld [vmem:[#allocation5 + $0x20] sm:$0xff]
        %v345 = vld [vmem:[#allocation5 + $0x28] sm:$0xff]
        %v346 = vld [vmem:[#allocation5 + $0x30] sm:$0xff]
        %v347 = vld [vmem:[#allocation5 + $0x38] sm:$0xff]
        %v348 = vld [vmem:[#allocation5 + $0x40] sm:$0xff]
        %v349 = vld [vmem:[#allocation5 + $0x48] sm:$0xff]
        %v350 = vld [vmem:[#allocation5 + $0x50] sm:$0xff]
        %v351 = vld [vmem:[#allocation5 + $0x58] sm:$0xff]
        %v352 = vld [vmem:[#allocation5 + $0x60] sm:$0xff]
        %v353 = vld [vmem:[#allocation5 + $0x68] sm:$0xff]
        %v354 = vld [vmem:[#allocation5 + $0x70] sm:$0xff]
        %v355 = vld [vmem:[#allocation5 + $0x78] sm:$0xff]
        %v356 = vld [vmem:[#allocation5 + $0x80] sm:$0xff]
        %v357 = vld [vmem:[#allocation5 + $0x88] sm:$0xff]
        %v358 = vld [vmem:[#allocation5 + $0x90] sm:$0xff]
        %v359 = vld [vmem:[#allocation5 + $0x98] sm:$0xff]
        %v360 = vld [vmem:[#allocation5 + $0xa0] sm:$0xff]
        %v361 = vld [vmem:[#allocation5 + $0xa8] sm:$0xff]
        %v362 = vld [vmem:[#allocation5 + $0xb0] sm:$0xff]
        %v363 = vld [vmem:[#allocation5 + $0xb8] sm:$0xff]
        %v364 = vld [vmem:[#allocation5 + $0xc0] sm:$0xff]
        %v365 = vld [vmem:[#allocation5 + $0xc8] sm:$0xff]
        %v366 = vld [vmem:[#allocation5 + $0xd0] sm:$0xff]
        %v367 = vld [vmem:[#allocation5 + $0xd8] sm:$0xff]
        %v368 = vld [vmem:[#allocation5 + $0xe0] sm:$0xff]
        %v369 = vld [vmem:[#allocation5 + $0xe8] sm:$0xff]
        %v370 = vld [vmem:[#allocation5 + $0xf0] sm:$0xff]
        %v371 = vld [vmem:[#allocation5 + $0xf8] sm:$0xff]
        %v372 = vld [vmem:[#allocation5 + $0x100] sm:$0xff]
        %v373 = vld [vmem:[#allocation5 + $0x108] sm:$0xff]
        %v374 = vld [vmem:[#allocation5 + $0x110] sm:$0xff]
        %v375 = vld [vmem:[#allocation5 + $0x118] sm:$0xff]
        %v376 = vld [vmem:[#allocation5 + $0x120] sm:$0xff]
        %v377 = vld [vmem:[#allocation5 + $0x128] sm:$0xff]
        %v378 = vld [vmem:[#allocation5 + $0x130] sm:$0xff]
        %v379 = vld [vmem:[#allocation5 + $0x138] sm:$0xff]
        %v380 = vld [vmem:[#allocation5 + $0x140] sm:$0xff]
        %v381 = vld [vmem:[#allocation5 + $0x148] sm:$0xff]
        %v382 = vld [vmem:[#allocation5 + $0x150] sm:$0xff]
        %v383 = vld [vmem:[#allocation5 + $0x158] sm:$0xff]
        %v384 = vld [vmem:[#allocation5 + $0x160] sm:$0xff]
        %v385 = vld [vmem:[#allocation5 + $0x168] sm:$0xff]
        %v386 = vld [vmem:[#allocation5 + $0x170] sm:$0xff]
        %v387 = vld [vmem:[#allocation5 + $0x178] sm:$0xff]
        %v388 = vld [vmem:[#allocation5 + $0x180] sm:$0xff]
        %v389 = vld [vmem:[#allocation5 + $0x188] sm:$0xff]
        %v390 = vld [vmem:[#allocation5 + $0x190] sm:$0xff]
        %v391 = vld [vmem:[#allocation5 + $0x198] sm:$0xff]
        %v392 = vld [vmem:[#allocation5 + $0x1a0] sm:$0xff]
        %v393 = vld [vmem:[#allocation5 + $0x1a8] sm:$0xff]
        %v394 = vld [vmem:[#allocation5 + $0x1b0] sm:$0xff]
        %v395 = vld [vmem:[#allocation5 + $0x1b8] sm:$0xff]
        %v396 = vld [vmem:[#allocation5 + $0x1c0] sm:$0xff]
        %v397 = vld [vmem:[#allocation5 + $0x1c8] sm:$0xff]
        %v398 = vld [vmem:[#allocation5 + $0x1d0] sm:$0xff]
        %v399 = vld [vmem:[#allocation5 + $0x1d8] sm:$0xff]
        %v400 = vld [vmem:[#allocation5 + $0x1e0] sm:$0xff]
        %v401 = vld [vmem:[#allocation5 + $0x1e8] sm:$0xff]
        %v402 = vld [vmem:[#allocation5 + $0x1f0] sm:$0xff]
        %v403 = vld [vmem:[#allocation5 + $0x1f8] sm:$0xff]
        %v404 = vld [vmem:[#allocation5 + $0x200] sm:$0xff]
        %v405 = vld [vmem:[#allocation5 + $0x208] sm:$0xff]
        %v406 = vld [vmem:[#allocation5 + $0x210] sm:$0xff]
        %v407 = vld [vmem:[#allocation5 + $0x218] sm:$0xff]
        %v408 = vld [vmem:[#allocation5 + $0x220] sm:$0xff]
        %v409 = vld [vmem:[#allocation5 + $0x228] sm:$0xff]
        %v410 = vld [vmem:[#allocation5 + $0x230] sm:$0xff]
        %v411 = vld [vmem:[#allocation5 + $0x238] sm:$0xff]
        %v412 = vld [vmem:[#allocation5 + $0x240] sm:$0xff]
        %v413 = vld [vmem:[#allocation5 + $0x248] sm:$0xff]
        %v414 = vld [vmem:[#allocation5 + $0x250] sm:$0xff]
        %v415 = vld [vmem:[#allocation5 + $0x258] sm:$0xff]
        %v416 = vld [vmem:[#allocation5 + $0x260] sm:$0xff]
        %v417 = vld [vmem:[#allocation5 + $0x268] sm:$0xff]
        %v418 = vld [vmem:[#allocation5 + $0x270] sm:$0xff]
        %v419 = vld [vmem:[#allocation5 + $0x278] sm:$0xff]
        %v420 = vld [vmem:[#allocation5 + $0x280] sm:$0xff]
        %v421 = vld [vmem:[#allocation5 + $0x288] sm:$0xff]
        %v422 = vld [vmem:[#allocation5 + $0x290] sm:$0xff]
        %v423 = vld [vmem:[#allocation5 + $0x298] sm:$0xff]
        %v424 = vld [vmem:[#allocation5 + $0x2a0] sm:$0xff]
        %v425 = vld [vmem:[#allocation5 + $0x2a8] sm:$0xff]
        %v426 = vld [vmem:[#allocation5 + $0x2b0] sm:$0xff]
        %v427 = vld [vmem:[#allocation5 + $0x2b8] sm:$0xff]
        %v428 = vld [vmem:[#allocation5 + $0x2c0] sm:$0xff]
        %v429 = vld [vmem:[#allocation5 + $0x2c8] sm:$0xff]
        %v430 = vld [vmem:[#allocation5 + $0x2d0] sm:$0xff]
        %v431 = vld [vmem:[#allocation5 + $0x2d8] sm:$0xff]
        %v432 = vld [vmem:[#allocation5 + $0x2e0] sm:$0xff]
        %v433 = vld [vmem:[#allocation5 + $0x2e8] sm:$0xff]
        %v434 = vld [vmem:[#allocation5 + $0x2f0] sm:$0xff]
        %v435 = vld [vmem:[#allocation5 + $0x2f8] sm:$0xff]
        %v436 = vld [vmem:[#allocation5 + $0x300] sm:$0xff]
        %v437 = vld [vmem:[#allocation5 + $0x308] sm:$0xff]
        %v438 = vld [vmem:[#allocation5 + $0x310] sm:$0xff]
        %v439 = vld [vmem:[#allocation5 + $0x318] sm:$0xff]
        %v440 = vld [vmem:[#allocation5 + $0x320] sm:$0xff]
        %v441 = vld [vmem:[#allocation5 + $0x328] sm:$0xff]
        %v442 = vld [vmem:[#allocation5 + $0x330] sm:$0xff]
        %v443 = vld [vmem:[#allocation5 + $0x338] sm:$0xff]
        %v444 = vld [vmem:[#allocation5 + $0x340] sm:$0xff]
        %v445 = vld [vmem:[#allocation5 + $0x348] sm:$0xff]
        %v446 = vld [vmem:[#allocation5 + $0x350] sm:$0xff]
        %v447 = vld [vmem:[#allocation5 + $0x358] sm:$0xff]
        %v448 = vld [vmem:[#allocation5 + $0x360] sm:$0xff]
        %v449 = vld [vmem:[#allocation5 + $0x368] sm:$0xff]
        %v450 = vld [vmem:[#allocation5 + $0x370] sm:$0xff]
        %v451 = vld [vmem:[#allocation5 + $0x378] sm:$0xff]
        %v452 = vld [vmem:[#allocation5 + $0x380] sm:$0xff]
        %v453 = vld [vmem:[#allocation5 + $0x388] sm:$0xff]
        %v454 = vld [vmem:[#allocation5 + $0x390] sm:$0xff]
        %v455 = vld [vmem:[#allocation5 + $0x398] sm:$0xff]
        %v456 = vld [vmem:[#allocation5 + $0x3a0] sm:$0xff]
        %v457 = vld [vmem:[#allocation5 + $0x3a8] sm:$0xff]
        %v458 = vld [vmem:[#allocation5 + $0x3b0] sm:$0xff]
        %v459 = vld [vmem:[#allocation5 + $0x3b8] sm:$0xff]
        %v460 = vld [vmem:[#allocation5 + $0x3c0] sm:$0xff]
        %v461 = vld [vmem:[#allocation5 + $0x3c8] sm:$0xff]
        %v462 = vld [vmem:[#allocation5 + $0x3d0] sm:$0xff]
        %v463 = vld [vmem:[#allocation5 + $0x3d8] sm:$0xff]
        %v464 = vld [vmem:[#allocation5 + $0x3e0] sm:$0xff]
        %v465 = vld [vmem:[#allocation5 + $0x3e8] sm:$0xff]
        %v466 = vld [vmem:[#allocation5 + $0x3f0] sm:$0xff]
        %v467 = vld [vmem:[#allocation5 + $0x3f8] sm:$0xff]
        %v468 = vld [vmem:[#allocation7] sm:$0xff]
        %v470 = vlaneseq
        %v471 = vshrl.u32 %v470, 7
        %v472 = vsub.s32 0, %v471
        %v473 = vrot.slane %v468, %v472
        %v474 = vlaneseq
        %v475 = vshrl.u32 %v474, 7
        %v476 = vsub.s32 1, %v475
        %v477 = vrot.slane %v468, %v476
        %v478 = vlaneseq
        %v479 = vshrl.u32 %v478, 7
        %v480 = vsub.s32 2, %v479
        %v481 = vrot.slane %v468, %v480
        %v482 = vlaneseq
        %v483 = vshrl.u32 %v482, 7
        %v484 = vsub.s32 3, %v483
        %v485 = vrot.slane %v468, %v484
        %v486 = vlaneseq
        %v487 = vshrl.u32 %v486, 7
        %v488 = vsub.s32 4, %v487
        %v489 = vrot.slane %v468, %v488
        %v490 = vlaneseq
        %v491 = vshrl.u32 %v490, 7
        %v492 = vsub.s32 5, %v491
        %v493 = vrot.slane %v468, %v492
        %v494 = vlaneseq
        %v495 = vshrl.u32 %v494, 7
        %v496 = vsub.s32 6, %v495
        %v497 = vrot.slane %v468, %v496
        %v498 = vlaneseq
        %v499 = vshrl.u32 %v498, 7
        %v500 = vsub.s32 7, %v499
        %v501 = vrot.slane %v468, %v500
        %v510 = vand.u32 %v461, 4294901760
        %511 = vmatprep.subr.mxu0 %v510
        %v512 = vand.u32 %v460, 4294901760
        %513 = vmatpush1.msra.mxu0 %v512
        %v514 = vand.u32 %v453, 4294901760
        %515 = vmatprep.subr.mxu0 %v514
        %v516 = vand.u32 %v452, 4294901760
        %517 = vmatpush1.msra.mxu0 %v516
        %v518 = vand.u32 %v445, 4294901760
        %519 = vmatprep.subr.mxu0 %v518
        %v520 = vand.u32 %v444, 4294901760
        %521 = vmatpush1.msra.mxu0 %v520
        %v522 = vand.u32 %v437, 4294901760
        %523 = vmatprep.subr.mxu0 %v522
        %v524 = vand.u32 %v436, 4294901760
        %525 = vmatpush1.msra.mxu0 %v524
        %v526 = vand.u32 %v429, 4294901760
        %527 = vmatprep.subr.mxu0 %v526
        %v528 = vand.u32 %v428, 4294901760
        %529 = vmatpush1.msra.mxu0 %v528
        %v530 = vand.u32 %v421, 4294901760
        %531 = vmatprep.subr.mxu0 %v530
        %v532 = vand.u32 %v420, 4294901760
        %533 = vmatpush1.msra.mxu0 %v532
        %v534 = vand.u32 %v413, 4294901760
        %535 = vmatprep.subr.mxu0 %v534
        %v536 = vand.u32 %v412, 4294901760
        %537 = vmatpush1.msra.mxu0 %v536
        %v538 = vand.u32 %v405, 4294901760
        %539 = vmatprep.subr.mxu0 %v538
        %v540 = vand.u32 %v404, 4294901760
        %541 = vmatpush1.msra.mxu0 %v540
        %v542 = vand.u32 %v397, 4294901760
        %543 = vmatprep.subr.mxu0 %v542
        %v544 = vand.u32 %v396, 4294901760
        %545 = vmatpush1.msra.mxu0 %v544
        %v546 = vand.u32 %v389, 4294901760
        %547 = vmatprep.subr.mxu0 %v546
        %v548 = vand.u32 %v388, 4294901760
        %549 = vmatpush1.msra.mxu0 %v548
        %v550 = vand.u32 %v381, 4294901760
        %551 = vmatprep.subr.mxu0 %v550
        %v552 = vand.u32 %v380, 4294901760
        %553 = vmatpush1.msra.mxu0 %v552
        %v554 = vand.u32 %v373, 4294901760
        %555 = vmatprep.subr.mxu0 %v554
        %v556 = vand.u32 %v372, 4294901760
        %557 = vmatpush1.msra.mxu0 %v556
        %v558 = vand.u32 %v365, 4294901760
        %559 = vmatprep.subr.mxu0 %v558
        %v560 = vand.u32 %v364, 4294901760
        %561 = vmatpush1.msra.mxu0 %v560
        %v562 = vand.u32 %v357, 4294901760
        %563 = vmatprep.subr.mxu0 %v562
        %v564 = vand.u32 %v356, 4294901760
        %565 = vmatpush1.msra.mxu0 %v564
        %v566 = vand.u32 %v349, 4294901760
        %567 = vmatprep.subr.mxu0 %v566
        %v568 = vand.u32 %v348, 4294901760
        %569 = vmatpush1.msra.mxu0 %v568
        %v570 = vand.u32 %v341, 4294901760
        %571 = vmatprep.subr.mxu0 %v570
        %v572 = vand.u32 %v340, 4294901760
        %573 = vmatpush1.msra.mxu0 %v572
        %574 = vmatprep.subr.mxu0 0.0
        %575 = vmatpush2.msra.mxu0 0.0
        %576 = vmatprep.subr.mxu0 0.0
        %577 = vmatpush2.msra.mxu0 0.0
        %578 = vmatprep.subr.mxu0 0.0
        %579 = vmatpush2.msra.mxu0 0.0
        %580 = vmatprep.subr.mxu0 0.0
        %581 = vmatpush2.msra.mxu0 0.0
        %582 = vmatprep.subr.mxu0 0.0
        %583 = vmatpush2.msra.mxu0 0.0
        %584 = vmatprep.subr.mxu0 0.0
        %585 = vmatpush2.msra.mxu0 0.0
        %586 = vmatprep.subr.mxu0 0.0
        %587 = vmatpush2.msra.mxu0 0.0
        %588 = vmatprep.subr.mxu0 0.0
        %589 = vmatpush2.msra.mxu0 0.0
        %590 = vmatprep.subr.mxu0 0.0
        %591 = vmatpush2.msra.mxu0 0.0
        %592 = vmatprep.subr.mxu0 0.0
        %593 = vmatpush2.msra.mxu0 0.0
        %594 = vmatprep.subr.mxu0 0.0
        %595 = vmatpush2.msra.mxu0 0.0
        %596 = vmatprep.subr.mxu0 0.0
        %597 = vmatpush2.msra.mxu0 0.0
        %598 = vmatprep.subr.mxu0 0.0
        %599 = vmatpush2.msra.mxu0 0.0
        %600 = vmatprep.subr.mxu0 0.0
        %601 = vmatpush2.msra.mxu0 0.0
        %602 = vmatprep.subr.mxu0 0.0
        %603 = vmatpush2.msra.mxu0 0.0
        %604 = vmatprep.subr.mxu0 0.0
        %605 = vmatpush2.msra.mxu0 0.0
        %606 = vmatprep.mubr.f32.mxu0 0.0
        %v607 = vand.u32 %v336, 4294901760
        %v608 = vsub.f32 %v336, %v607
        %v609 = vand.u32 %v608, 4294901760
        %v610 = vsub.f32 %v608, %v609
        %v611 = vand.u32 %v610, 4294901760
        %612 = vmatmul.mubr.f32.gmra.mxu0 %v611
        %v613 = vpop.f32.mrf.mxu0
        %v614 = vadd.f32 %v473, %v613
        %v615 = vpop.f32.mrf.mxu0
        %v616 = vadd.f32 %v477, %v615
        %617 = vmatprep.mubr.f32.mxu0 0.0
        %v618 = vand.u32 %v337, 4294901760
        %v619 = vsub.f32 %v337, %v618
        %v620 = vand.u32 %v619, 4294901760
        %v621 = vsub.f32 %v619, %v620
        %v622 = vand.u32 %v621, 4294901760
        %623 = vmatmul.mubr.f32.gmra.mxu0 %v622
        %v624 = vpop.f32.mrf.mxu0
        %v625 = vadd.f32 %v473, %v624
        %v626 = vpop.f32.mrf.mxu0
        %v627 = vadd.f32 %v477, %v626
        %628 = vmatprep.mubr.f32.mxu0 0.0
        %v629 = vand.u32 %v338, 4294901760
        %v630 = vsub.f32 %v338, %v629
        %v631 = vand.u32 %v630, 4294901760
        %v632 = vsub.f32 %v630, %v631
        %v633 = vand.u32 %v632, 4294901760
        %634 = vmatmul.mubr.f32.gmra.mxu0 %v633
        %v635 = vpop.f32.mrf.mxu0
        %v636 = vadd.f32 %v473, %v635
        %v637 = vpop.f32.mrf.mxu0
        %v638 = vadd.f32 %v477, %v637
        %639 = vmatprep.mubr.f32.mxu0 0.0
        %v640 = vand.u32 %v339, 4294901760
        %v641 = vsub.f32 %v339, %v640
        %v642 = vand.u32 %v641, 4294901760
        %v643 = vsub.f32 %v641, %v642
        %v644 = vand.u32 %v643, 4294901760
        %645 = vmatmul.mubr.f32.gmra.mxu0 %v644
        %v646 = vpop.f32.mrf.mxu0
        %v647 = vadd.f32 %v473, %v646
        %v648 = vpop.f32.mrf.mxu0
        %v649 = vadd.f32 %v477, %v648
        %650 = vdwg.mxu0
        %v651 = vand.u32 %v461, 4294901760
        %v652 = vsub.f32 %v461, %v651
        %v653 = vand.u32 %v652, 4294901760
        %v654 = vsub.f32 %v652, %v653
        %v655 = vand.u32 %v654, 4294901760
        %656 = vmatprep.subr.mxu0 %v655
        %v657 = vand.u32 %v460, 4294901760
        %v658 = vsub.f32 %v460, %v657
        %v659 = vand.u32 %v658, 4294901760
        %v660 = vsub.f32 %v658, %v659
        %v661 = vand.u32 %v660, 4294901760
        %662 = vmatpush1.msra.mxu0 %v661
        %v663 = vand.u32 %v453, 4294901760
        %v664 = vsub.f32 %v453, %v663
        %v665 = vand.u32 %v664, 4294901760
        %v666 = vsub.f32 %v664, %v665
        %v667 = vand.u32 %v666, 4294901760
        %668 = vmatprep.subr.mxu0 %v667
        %v669 = vand.u32 %v452, 4294901760
        %v670 = vsub.f32 %v452, %v669
        %v671 = vand.u32 %v670, 4294901760
        %v672 = vsub.f32 %v670, %v671
        %v673 = vand.u32 %v672, 4294901760
        %674 = vmatpush1.msra.mxu0 %v673
        %v675 = vand.u32 %v445, 4294901760
        %v676 = vsub.f32 %v445, %v675
        %v677 = vand.u32 %v676, 4294901760
        %v678 = vsub.f32 %v676, %v677
        %v679 = vand.u32 %v678, 4294901760
        %680 = vmatprep.subr.mxu0 %v679
        %v681 = vand.u32 %v444, 4294901760
        %v682 = vsub.f32 %v444, %v681
        %v683 = vand.u32 %v682, 4294901760
        %v684 = vsub.f32 %v682, %v683
        %v685 = vand.u32 %v684, 4294901760
        %686 = vmatpush1.msra.mxu0 %v685
        %v687 = vand.u32 %v437, 4294901760
        %v688 = vsub.f32 %v437, %v687
        %v689 = vand.u32 %v688, 4294901760
        %v690 = vsub.f32 %v688, %v689
        %v691 = vand.u32 %v690, 4294901760
        %692 = vmatprep.subr.mxu0 %v691
        %v693 = vand.u32 %v436, 4294901760
        %v694 = vsub.f32 %v436, %v693
        %v695 = vand.u32 %v694, 4294901760
        %v696 = vsub.f32 %v694, %v695
        %v697 = vand.u32 %v696, 4294901760
        %698 = vmatpush1.msra.mxu0 %v697
        %v699 = vand.u32 %v429, 4294901760
        %v700 = vsub.f32 %v429, %v699
        %v701 = vand.u32 %v700, 4294901760
        %v702 = vsub.f32 %v700, %v701
        %v703 = vand.u32 %v702, 4294901760
        %704 = vmatprep.subr.mxu0 %v703
        %v705 = vand.u32 %v428, 4294901760
        %v706 = vsub.f32 %v428, %v705
        %v707 = vand.u32 %v706, 4294901760
        %v708 = vsub.f32 %v706, %v707
        %v709 = vand.u32 %v708, 4294901760
        %710 = vmatpush1.msra.mxu0 %v709
        %v711 = vand.u32 %v421, 4294901760
        %v712 = vsub.f32 %v421, %v711
        %v713 = vand.u32 %v712, 4294901760
        %v714 = vsub.f32 %v712, %v713
        %v715 = vand.u32 %v714, 4294901760
        %716 = vmatprep.subr.mxu0 %v715
        %v717 = vand.u32 %v420, 4294901760
        %v718 = vsub.f32 %v420, %v717
        %v719 = vand.u32 %v718, 4294901760
        %v720 = vsub.f32 %v718, %v719
        %v721 = vand.u32 %v720, 4294901760
        %722 = vmatpush1.msra.mxu0 %v721
        %v723 = vand.u32 %v413, 4294901760
        %v724 = vsub.f32 %v413, %v723
        %v725 = vand.u32 %v724, 4294901760
        %v726 = vsub.f32 %v724, %v725
        %v727 = vand.u32 %v726, 4294901760
        %728 = vmatprep.subr.mxu0 %v727
        %v729 = vand.u32 %v412, 4294901760
        %v730 = vsub.f32 %v412, %v729
        %v731 = vand.u32 %v730, 4294901760
        %v732 = vsub.f32 %v730, %v731
        %v733 = vand.u32 %v732, 4294901760
        %734 = vmatpush1.msra.mxu0 %v733
        %v735 = vand.u32 %v405, 4294901760
        %v736 = vsub.f32 %v405, %v735
        %v737 = vand.u32 %v736, 4294901760
        %v738 = vsub.f32 %v736, %v737
        %v739 = vand.u32 %v738, 4294901760
        %740 = vmatprep.subr.mxu0 %v739
        %v741 = vand.u32 %v404, 4294901760
        %v742 = vsub.f32 %v404, %v741
        %v743 = vand.u32 %v742, 4294901760
        %v744 = vsub.f32 %v742, %v743
        %v745 = vand.u32 %v744, 4294901760
        %746 = vmatpush1.msra.mxu0 %v745
        %v747 = vand.u32 %v397, 4294901760
        %v748 = vsub.f32 %v397, %v747
        %v749 = vand.u32 %v748, 4294901760
        %v750 = vsub.f32 %v748, %v749
        %v751 = vand.u32 %v750, 4294901760
        %752 = vmatprep.subr.mxu0 %v751
        %v753 = vand.u32 %v396, 4294901760
        %v754 = vsub.f32 %v396, %v753
        %v755 = vand.u32 %v754, 4294901760
        %v756 = vsub.f32 %v754, %v755
        %v757 = vand.u32 %v756, 4294901760
        %758 = vmatpush1.msra.mxu0 %v757
        %v759 = vand.u32 %v389, 4294901760
        %v760 = vsub.f32 %v389, %v759
        %v761 = vand.u32 %v760, 4294901760
        %v762 = vsub.f32 %v760, %v761
        %v763 = vand.u32 %v762, 4294901760
        %764 = vmatprep.subr.mxu0 %v763
        %v765 = vand.u32 %v388, 4294901760
        %v766 = vsub.f32 %v388, %v765
        %v767 = vand.u32 %v766, 4294901760
        %v768 = vsub.f32 %v766, %v767
        %v769 = vand.u32 %v768, 4294901760
        %770 = vmatpush1.msra.mxu0 %v769
        %v771 = vand.u32 %v381, 4294901760
        %v772 = vsub.f32 %v381, %v771
        %v773 = vand.u32 %v772, 4294901760
        %v774 = vsub.f32 %v772, %v773
        %v775 = vand.u32 %v774, 4294901760
        %776 = vmatprep.subr.mxu0 %v775
        %v777 = vand.u32 %v380, 4294901760
        %v778 = vsub.f32 %v380, %v777
        %v779 = vand.u32 %v778, 4294901760
        %v780 = vsub.f32 %v778, %v779
        %v781 = vand.u32 %v780, 4294901760
        %782 = vmatpush1.msra.mxu0 %v781
        %v783 = vand.u32 %v373, 4294901760
        %v784 = vsub.f32 %v373, %v783
        %v785 = vand.u32 %v784, 4294901760
        %v786 = vsub.f32 %v784, %v785
        %v787 = vand.u32 %v786, 4294901760
        %788 = vmatprep.subr.mxu0 %v787
        %v789 = vand.u32 %v372, 4294901760
        %v790 = vsub.f32 %v372, %v789
        %v791 = vand.u32 %v790, 4294901760
        %v792 = vsub.f32 %v790, %v791
        %v793 = vand.u32 %v792, 4294901760
        %794 = vmatpush1.msra.mxu0 %v793
        %v795 = vand.u32 %v365, 4294901760
        %v796 = vsub.f32 %v365, %v795
        %v797 = vand.u32 %v796, 4294901760
        %v798 = vsub.f32 %v796, %v797
        %v799 = vand.u32 %v798, 4294901760
        %800 = vmatprep.subr.mxu0 %v799
        %v801 = vand.u32 %v364, 4294901760
        %v802 = vsub.f32 %v364, %v801
        %v803 = vand.u32 %v802, 4294901760
        %v804 = vsub.f32 %v802, %v803
        %v805 = vand.u32 %v804, 4294901760
        %806 = vmatpush1.msra.mxu0 %v805
        %v807 = vand.u32 %v357, 4294901760
        %v808 = vsub.f32 %v357, %v807
        %v809 = vand.u32 %v808, 4294901760
        %v810 = vsub.f32 %v808, %v809
        %v811 = vand.u32 %v810, 4294901760
        %812 = vmatprep.subr.mxu0 %v811
        %v813 = vand.u32 %v356, 4294901760
        %v814 = vsub.f32 %v356, %v813
        %v815 = vand.u32 %v814, 4294901760
        %v816 = vsub.f32 %v814, %v815
        %v817 = vand.u32 %v816, 4294901760
        %818 = vmatpush1.msra.mxu0 %v817
        %v819 = vand.u32 %v349, 4294901760
        %v820 = vsub.f32 %v349, %v819
        %v821 = vand.u32 %v820, 4294901760
        %v822 = vsub.f32 %v820, %v821
        %v823 = vand.u32 %v822, 4294901760
        %824 = vmatprep.subr.mxu0 %v823
        %v825 = vand.u32 %v348, 4294901760
        %v826 = vsub.f32 %v348, %v825
        %v827 = vand.u32 %v826, 4294901760
        %v828 = vsub.f32 %v826, %v827
        %v829 = vand.u32 %v828, 4294901760
        %830 = vmatpush1.msra.mxu0 %v829
        %v831 = vand.u32 %v341, 4294901760
        %v832 = vsub.f32 %v341, %v831
        %v833 = vand.u32 %v832, 4294901760
        %v834 = vsub.f32 %v832, %v833
        %v835 = vand.u32 %v834, 4294901760
        %836 = vmatprep.subr.mxu0 %v835
        %v837 = vand.u32 %v340, 4294901760
        %v838 = vsub.f32 %v340, %v837
        %v839 = vand.u32 %v838, 4294901760
        %v840 = vsub.f32 %v838, %v839
        %v841 = vand.u32 %v840, 4294901760
        %842 = vmatpush1.msra.mxu0 %v841
        %843 = vmatprep.subr.mxu0 0.0
        %844 = vmatpush2.msra.mxu0 0.0
        %845 = vmatprep.subr.mxu0 0.0
        %846 = vmatpush2.msra.mxu0 0.0
        %847 = vmatprep.subr.mxu0 0.0
        %848 = vmatpush2.msra.mxu0 0.0
        %849 = vmatprep.subr.mxu0 0.0
        %850 = vmatpush2.msra.mxu0 0.0
        %851 = vmatprep.subr.mxu0 0.0
        %852 = vmatpush2.msra.mxu0 0.0
        %853 = vmatprep.subr.mxu0 0.0
        %854 = vmatpush2.msra.mxu0 0.0
        %855 = vmatprep.subr.mxu0 0.0
        %856 = vmatpush2.msra.mxu0 0.0
        %857 = vmatprep.subr.mxu0 0.0
        %858 = vmatpush2.msra.mxu0 0.0
        %859 = vmatprep.subr.mxu0 0.0
        %860 = vmatpush2.msra.mxu0 0.0
        %861 = vmatprep.subr.mxu0 0.0
        %862 = vmatpush2.msra.mxu0 0.0
        %863 = vmatprep.subr.mxu0 0.0
        %864 = vmatpush2.msra.mxu0 0.0
        %865 = vmatprep.subr.mxu0 0.0
        %866 = vmatpush2.msra.mxu0 0.0
        %867 = vmatprep.subr.mxu0 0.0
        %868 = vmatpush2.msra.mxu0 0.0
        %869 = vmatprep.subr.mxu0 0.0
        %870 = vmatpush2.msra.mxu0 0.0
        %871 = vmatprep.subr.mxu0 0.0
        %872 = vmatpush2.msra.mxu0 0.0
        %873 = vmatprep.subr.mxu0 0.0
        %874 = vmatpush2.msra.mxu0 0.0
        %875 = vmatprep.mubr.f32.mxu0 0.0
        %v876 = vand.u32 %v336, 4294901760
        %877 = vmatmul.mubr.f32.gmra.mxu0 %v876
        %v878 = vpop.f32.mrf.mxu0
        %v879 = vadd.f32 %v614, %v878
        %v880 = vpop.f32.mrf.mxu0
        %v881 = vadd.f32 %v616, %v880
        %882 = vmatprep.mubr.f32.mxu0 0.0
        %v883 = vand.u32 %v337, 4294901760
        %884 = vmatmul.mubr.f32.gmra.mxu0 %v883
        %v885 = vpop.f32.mrf.mxu0
        %v886 = vadd.f32 %v625, %v885
        %v887 = vpop.f32.mrf.mxu0
        %v888 = vadd.f32 %v627, %v887
        %889 = vmatprep.mubr.f32.mxu0 0.0
        %v890 = vand.u32 %v338, 4294901760
        %891 = vmatmul.mubr.f32.gmra.mxu0 %v890
        %v892 = vpop.f32.mrf.mxu0
        %v893 = vadd.f32 %v636, %v892
        %v894 = vpop.f32.mrf.mxu0
        %v895 = vadd.f32 %v638, %v894
        %896 = vmatprep.mubr.f32.mxu0 0.0
        %v897 = vand.u32 %v339, 4294901760
        %898 = vmatmul.mubr.f32.gmra.mxu0 %v897
        %v899 = vpop.f32.mrf.mxu0
        %v900 = vadd.f32 %v647, %v899
        %v901 = vpop.f32.mrf.mxu0
        %v902 = vadd.f32 %v649, %v901
        %903 = vdwg.mxu0
        %v904 = vand.u32 %v461, 4294901760
        %v905 = vsub.f32 %v461, %v904
        %906 = vmatprep.subr.mxu0 %v905
        %v907 = vand.u32 %v460, 4294901760
        %v908 = vsub.f32 %v460, %v907
        %909 = vmatpush1.msra.mxu0 %v908
        %v910 = vand.u32 %v453, 4294901760
        %v911 = vsub.f32 %v453, %v910
        %912 = vmatprep.subr.mxu0 %v911
        %v913 = vand.u32 %v452, 4294901760
        %v914 = vsub.f32 %v452, %v913
        %915 = vmatpush1.msra.mxu0 %v914
        %v916 = vand.u32 %v445, 4294901760
        %v917 = vsub.f32 %v445, %v916
        %918 = vmatprep.subr.mxu0 %v917
        %v919 = vand.u32 %v444, 4294901760
        %v920 = vsub.f32 %v444, %v919
        %921 = vmatpush1.msra.mxu0 %v920
        %v922 = vand.u32 %v437, 4294901760
        %v923 = vsub.f32 %v437, %v922
        %924 = vmatprep.subr.mxu0 %v923
        %v925 = vand.u32 %v436, 4294901760
        %v926 = vsub.f32 %v436, %v925
        %927 = vmatpush1.msra.mxu0 %v926
        %v928 = vand.u32 %v429, 4294901760
        %v929 = vsub.f32 %v429, %v928
        %930 = vmatprep.subr.mxu0 %v929
        %v931 = vand.u32 %v428, 4294901760
        %v932 = vsub.f32 %v428, %v931
        %933 = vmatpush1.msra.mxu0 %v932
        %v934 = vand.u32 %v421, 4294901760
        %v935 = vsub.f32 %v421, %v934
        %936 = vmatprep.subr.mxu0 %v935
        %v937 = vand.u32 %v420, 4294901760
        %v938 = vsub.f32 %v420, %v937
        %939 = vmatpush1.msra.mxu0 %v938
        %v940 = vand.u32 %v413, 4294901760
        %v941 = vsub.f32 %v413, %v940
        %942 = vmatprep.subr.mxu0 %v941
        %v943 = vand.u32 %v412, 4294901760
        %v944 = vsub.f32 %v412, %v943
        %945 = vmatpush1.msra.mxu0 %v944
        %v946 = vand.u32 %v405, 4294901760
        %v947 = vsub.f32 %v405, %v946
        %948 = vmatprep.subr.mxu0 %v947
        %v949 = vand.u32 %v404, 4294901760
        %v950 = vsub.f32 %v404, %v949
        %951 = vmatpush1.msra.mxu0 %v950
        %v952 = vand.u32 %v397, 4294901760
        %v953 = vsub.f32 %v397, %v952
        %954 = vmatprep.subr.mxu0 %v953
        %v955 = vand.u32 %v396, 4294901760
        %v956 = vsub.f32 %v396, %v955
        %957 = vmatpush1.msra.mxu0 %v956
        %v958 = vand.u32 %v389, 4294901760
        %v959 = vsub.f32 %v389, %v958
        %960 = vmatprep.subr.mxu0 %v959
        %v961 = vand.u32 %v388, 4294901760
        %v962 = vsub.f32 %v388, %v961
        %963 = vmatpush1.msra.mxu0 %v962
        %v964 = vand.u32 %v381, 4294901760
        %v965 = vsub.f32 %v381, %v964
        %966 = vmatprep.subr.mxu0 %v965
        %v967 = vand.u32 %v380, 4294901760
        %v968 = vsub.f32 %v380, %v967
        %969 = vmatpush1.msra.mxu0 %v968
        %v970 = vand.u32 %v373, 4294901760
        %v971 = vsub.f32 %v373, %v970
        %972 = vmatprep.subr.mxu0 %v971
        %v973 = vand.u32 %v372, 4294901760
        %v974 = vsub.f32 %v372, %v973
        %975 = vmatpush1.msra.mxu0 %v974
        %v976 = vand.u32 %v365, 4294901760
        %v977 = vsub.f32 %v365, %v976
        %978 = vmatprep.subr.mxu0 %v977
        %v979 = vand.u32 %v364, 4294901760
        %v980 = vsub.f32 %v364, %v979
        %981 = vmatpush1.msra.mxu0 %v980
        %v982 = vand.u32 %v357, 4294901760
        %v983 = vsub.f32 %v357, %v982
        %984 = vmatprep.subr.mxu0 %v983
        %v985 = vand.u32 %v356, 4294901760
        %v986 = vsub.f32 %v356, %v985
        %987 = vmatpush1.msra.mxu0 %v986
        %v988 = vand.u32 %v349, 4294901760
        %v989 = vsub.f32 %v349, %v988
        %990 = vmatprep.subr.mxu0 %v989
        %v991 = vand.u32 %v348, 4294901760
        %v992 = vsub.f32 %v348, %v991
        %993 = vmatpush1.msra.mxu0 %v992
        %v994 = vand.u32 %v341, 4294901760
        %v995 = vsub.f32 %v341, %v994
        %996 = vmatprep.subr.mxu0 %v995
        %v997 = vand.u32 %v340, 4294901760
        %v998 = vsub.f32 %v340, %v997
        %999 = vmatpush1.msra.mxu0 %v998
        %1000 = vmatprep.subr.mxu0 0.0
        %1001 = vmatpush2.msra.mxu0 0.0
        %1002 = vmatprep.subr.mxu0 0.0
        %1003 = vmatpush2.msra.mxu0 0.0
        %1004 = vmatprep.subr.mxu0 0.0
        %1005 = vmatpush2.msra.mxu0 0.0
        %1006 = vmatprep.subr.mxu0 0.0
        %1007 = vmatpush2.msra.mxu0 0.0
        %1008 = vmatprep.subr.mxu0 0.0
        %1009 = vmatpush2.msra.mxu0 0.0
        %1010 = vmatprep.subr.mxu0 0.0
        %1011 = vmatpush2.msra.mxu0 0.0
        %1012 = vmatprep.subr.mxu0 0.0
        %1013 = vmatpush2.msra.mxu0 0.0
        %1014 = vmatprep.subr.mxu0 0.0
        %1015 = vmatpush2.msra.mxu0 0.0
        %1016 = vmatprep.subr.mxu0 0.0
        %1017 = vmatpush2.msra.mxu0 0.0
        %1018 = vmatprep.subr.mxu0 0.0
        %1019 = vmatpush2.msra.mxu0 0.0
        %1020 = vmatprep.subr.mxu0 0.0
        %1021 = vmatpush2.msra.mxu0 0.0
        %1022 = vmatprep.subr.mxu0 0.0
        %1023 = vmatpush2.msra.mxu0 0.0
        %1024 = vmatprep.subr.mxu0 0.0
        %1025 = vmatpush2.msra.mxu0 0.0
        %1026 = vmatprep.subr.mxu0 0.0
        %1027 = vmatpush2.msra.mxu0 0.0
        %1028 = vmatprep.subr.mxu0 0.0
        %1029 = vmatpush2.msra.mxu0 0.0
        %1030 = vmatprep.subr.mxu0 0.0
        %1031 = vmatpush2.msra.mxu0 0.0
        %1032 = vmatprep.mubr.f32.mxu0 0.0
        %v1033 = vand.u32 %v336, 4294901760
        %v1034 = vsub.f32 %v336, %v1033
        %1035 = vmatmul.mubr.f32.gmra.mxu0 %v1034
        %v1036 = vpop.f32.mrf.mxu0
        %v1037 = vadd.f32 %v879, %v1036
        %v1038 = vpop.f32.mrf.mxu0
        %v1039 = vadd.f32 %v881, %v1038
        %1040 = vmatprep.mubr.f32.mxu0 0.0
        %v1041 = vand.u32 %v337, 4294901760
        %v1042 = vsub.f32 %v337, %v1041
        %1043 = vmatmul.mubr.f32.gmra.mxu0 %v1042
        %v1044 = vpop.f32.mrf.mxu0
        %v1045 = vadd.f32 %v886, %v1044
        %v1046 = vpop.f32.mrf.mxu0
        %v1047 = vadd.f32 %v888, %v1046
        %1048 = vmatprep.mubr.f32.mxu0 0.0
        %v1049 = vand.u32 %v338, 4294901760
        %v1050 = vsub.f32 %v338, %v1049
        %1051 = vmatmul.mubr.f32.gmra.mxu0 %v1050
        %v1052 = vpop.f32.mrf.mxu0
        %v1053 = vadd.f32 %v893, %v1052
        %v1054 = vpop.f32.mrf.mxu0
        %v1055 = vadd.f32 %v895, %v1054
        %1056 = vmatprep.mubr.f32.mxu0 0.0
        %v1057 = vand.u32 %v339, 4294901760
        %v1058 = vsub.f32 %v339, %v1057
        %1059 = vmatmul.mubr.f32.gmra.mxu0 %v1058
        %v1060 = vpop.f32.mrf.mxu0
        %v1061 = vadd.f32 %v900, %v1060
        %v1062 = vpop.f32.mrf.mxu0
        %v1063 = vadd.f32 %v902, %v1062
        %1064 = vdwg.mxu0
        %v1065 = vand.u32 %v461, 4294901760
        %1066 = vmatprep.subr.mxu0 %v1065
        %v1067 = vand.u32 %v460, 4294901760
        %1068 = vmatpush1.msra.mxu0 %v1067
        %v1069 = vand.u32 %v453, 4294901760
        %1070 = vmatprep.subr.mxu0 %v1069
        %v1071 = vand.u32 %v452, 4294901760
        %1072 = vmatpush1.msra.mxu0 %v1071
        %v1073 = vand.u32 %v445, 4294901760
        %1074 = vmatprep.subr.mxu0 %v1073
        %v1075 = vand.u32 %v444, 4294901760
        %1076 = vmatpush1.msra.mxu0 %v1075
        %v1077 = vand.u32 %v437, 4294901760
        %1078 = vmatprep.subr.mxu0 %v1077
        %v1079 = vand.u32 %v436, 4294901760
        %1080 = vmatpush1.msra.mxu0 %v1079
        %v1081 = vand.u32 %v429, 4294901760
        %1082 = vmatprep.subr.mxu0 %v1081
        %v1083 = vand.u32 %v428, 4294901760
        %1084 = vmatpush1.msra.mxu0 %v1083
        %v1085 = vand.u32 %v421, 4294901760
        %1086 = vmatprep.subr.mxu0 %v1085
        %v1087 = vand.u32 %v420, 4294901760
        %1088 = vmatpush1.msra.mxu0 %v1087
        %v1089 = vand.u32 %v413, 4294901760
        %1090 = vmatprep.subr.mxu0 %v1089
        %v1091 = vand.u32 %v412, 4294901760
        %1092 = vmatpush1.msra.mxu0 %v1091
        %v1093 = vand.u32 %v405, 4294901760
        %1094 = vmatprep.subr.mxu0 %v1093
        %v1095 = vand.u32 %v404, 4294901760
        %1096 = vmatpush1.msra.mxu0 %v1095
        %v1097 = vand.u32 %v397, 4294901760
        %1098 = vmatprep.subr.mxu0 %v1097
        %v1099 = vand.u32 %v396, 4294901760
        %1100 = vmatpush1.msra.mxu0 %v1099
        %v1101 = vand.u32 %v389, 4294901760
        %1102 = vmatprep.subr.mxu0 %v1101
        %v1103 = vand.u32 %v388, 4294901760
        %1104 = vmatpush1.msra.mxu0 %v1103
        %v1105 = vand.u32 %v381, 4294901760
        %1106 = vmatprep.subr.mxu0 %v1105
        %v1107 = vand.u32 %v380, 4294901760
        %1108 = vmatpush1.msra.mxu0 %v1107
        %v1109 = vand.u32 %v373, 4294901760
        %1110 = vmatprep.subr.mxu0 %v1109
        %v1111 = vand.u32 %v372, 4294901760
        %1112 = vmatpush1.msra.mxu0 %v1111
        %v1113 = vand.u32 %v365, 4294901760
        %1114 = vmatprep.subr.mxu0 %v1113
        %v1115 = vand.u32 %v364, 4294901760
        %1116 = vmatpush1.msra.mxu0 %v1115
        %v1117 = vand.u32 %v357, 4294901760
        %1118 = vmatprep.subr.mxu0 %v1117
        %v1119 = vand.u32 %v356, 4294901760
        %1120 = vmatpush1.msra.mxu0 %v1119
        %v1121 = vand.u32 %v349, 4294901760
        %1122 = vmatprep.subr.mxu0 %v1121
        %v1123 = vand.u32 %v348, 4294901760
        %1124 = vmatpush1.msra.mxu0 %v1123
        %v1125 = vand.u32 %v341, 4294901760
        %1126 = vmatprep.subr.mxu0 %v1125
        %v1127 = vand.u32 %v340, 4294901760
        %1128 = vmatpush1.msra.mxu0 %v1127
        %1129 = vmatprep.subr.mxu0 0.0
        %1130 = vmatpush2.msra.mxu0 0.0
        %1131 = vmatprep.subr.mxu0 0.0
        %1132 = vmatpush2.msra.mxu0 0.0
        %1133 = vmatprep.subr.mxu0 0.0
        %1134 = vmatpush2.msra.mxu0 0.0
        %1135 = vmatprep.subr.mxu0 0.0
        %1136 = vmatpush2.msra.mxu0 0.0
        %1137 = vmatprep.subr.mxu0 0.0
        %1138 = vmatpush2.msra.mxu0 0.0
        %1139 = vmatprep.subr.mxu0 0.0
        %1140 = vmatpush2.msra.mxu0 0.0
        %1141 = vmatprep.subr.mxu0 0.0
        %1142 = vmatpush2.msra.mxu0 0.0
        %1143 = vmatprep.subr.mxu0 0.0
        %1144 = vmatpush2.msra.mxu0 0.0
        %1145 = vmatprep.subr.mxu0 0.0
        %1146 = vmatpush2.msra.mxu0 0.0
        %1147 = vmatprep.subr.mxu0 0.0
        %1148 = vmatpush2.msra.mxu0 0.0
        %1149 = vmatprep.subr.mxu0 0.0
        %1150 = vmatpush2.msra.mxu0 0.0
        %1151 = vmatprep.subr.mxu0 0.0
        %1152 = vmatpush2.msra.mxu0 0.0
        %1153 = vmatprep.subr.mxu0 0.0
        %1154 = vmatpush2.msra.mxu0 0.0
        %1155 = vmatprep.subr.mxu0 0.0
        %1156 = vmatpush2.msra.mxu0 0.0
        %1157 = vmatprep.subr.mxu0 0.0
        %1158 = vmatpush2.msra.mxu0 0.0
        %1159 = vmatprep.subr.mxu0 0.0
        %1160 = vmatpush2.msra.mxu0 0.0
        %1161 = vmatprep.mubr.f32.mxu0 0.0
        %v1162 = vand.u32 %v336, 4294901760
        %v1163 = vsub.f32 %v336, %v1162
        %v1164 = vand.u32 %v1163, 4294901760
        %1165 = vmatmul.mubr.f32.gmra.mxu0 %v1164
        %v1166 = vpop.f32.mrf.mxu0
        %v1167 = vadd.f32 %v1037, %v1166
        %v1168 = vpop.f32.mrf.mxu0
        %v1169 = vadd.f32 %v1039, %v1168
        %1170 = vmatprep.mubr.f32.mxu0 0.0
        %v1171 = vand.u32 %v337, 4294901760
        %v1172 = vsub.f32 %v337, %v1171
        %v1173 = vand.u32 %v1172, 4294901760
        %1174 = vmatmul.mubr.f32.gmra.mxu0 %v1173
        %v1175 = vpop.f32.mrf.mxu0
        %v1176 = vadd.f32 %v1045, %v1175
        %v1177 = vpop.f32.mrf.mxu0
        %v1178 = vadd.f32 %v1047, %v1177
        %1179 = vmatprep.mubr.f32.mxu0 0.0
        %v1180 = vand.u32 %v338, 4294901760
        %v1181 = vsub.f32 %v338, %v1180
        %v1182 = vand.u32 %v1181, 4294901760
        %1183 = vmatmul.mubr.f32.gmra.mxu0 %v1182
        %v1184 = vpop.f32.mrf.mxu0
        %v1185 = vadd.f32 %v1053, %v1184
        %v1186 = vpop.f32.mrf.mxu0
        %v1187 = vadd.f32 %v1055, %v1186
        %1188 = vmatprep.mubr.f32.mxu0 0.0
        %v1189 = vand.u32 %v339, 4294901760
        %v1190 = vsub.f32 %v339, %v1189
        %v1191 = vand.u32 %v1190, 4294901760
        %1192 = vmatmul.mubr.f32.gmra.mxu0 %v1191
        %v1193 = vpop.f32.mrf.mxu0
        %v1194 = vadd.f32 %v1061, %v1193
        %v1195 = vpop.f32.mrf.mxu0
        %v1196 = vadd.f32 %v1063, %v1195
        %1197 = vdwg.mxu0
        %v1198 = vand.u32 %v461, 4294901760
        %v1199 = vsub.f32 %v461, %v1198
        %v1200 = vand.u32 %v1199, 4294901760
        %1201 = vmatprep.subr.mxu0 %v1200
        %v1202 = vand.u32 %v460, 4294901760
        %v1203 = vsub.f32 %v460, %v1202
        %v1204 = vand.u32 %v1203, 4294901760
        %1205 = vmatpush1.msra.mxu0 %v1204
        %v1206 = vand.u32 %v453, 4294901760
        %v1207 = vsub.f32 %v453, %v1206
        %v1208 = vand.u32 %v1207, 4294901760
        %1209 = vmatprep.subr.mxu0 %v1208
        %v1210 = vand.u32 %v452, 4294901760
        %v1211 = vsub.f32 %v452, %v1210
        %v1212 = vand.u32 %v1211, 4294901760
        %1213 = vmatpush1.msra.mxu0 %v1212
        %v1214 = vand.u32 %v445, 4294901760
        %v1215 = vsub.f32 %v445, %v1214
        %v1216 = vand.u32 %v1215, 4294901760
        %1217 = vmatprep.subr.mxu0 %v1216
        %v1218 = vand.u32 %v444, 4294901760
        %v1219 = vsub.f32 %v444, %v1218
        %v1220 = vand.u32 %v1219, 4294901760
        %1221 = vmatpush1.msra.mxu0 %v1220
        %v1222 = vand.u32 %v437, 4294901760
        %v1223 = vsub.f32 %v437, %v1222
        %v1224 = vand.u32 %v1223, 4294901760
        %1225 = vmatprep.subr.mxu0 %v1224
        %v1226 = vand.u32 %v436, 4294901760
        %v1227 = vsub.f32 %v436, %v1226
        %v1228 = vand.u32 %v1227, 4294901760
        %1229 = vmatpush1.msra.mxu0 %v1228
        %v1230 = vand.u32 %v429, 4294901760
        %v1231 = vsub.f32 %v429, %v1230
        %v1232 = vand.u32 %v1231, 4294901760
        %1233 = vmatprep.subr.mxu0 %v1232
        %v1234 = vand.u32 %v428, 4294901760
        %v1235 = vsub.f32 %v428, %v1234
        %v1236 = vand.u32 %v1235, 4294901760
        %1237 = vmatpush1.msra.mxu0 %v1236
        %v1238 = vand.u32 %v421, 4294901760
        %v1239 = vsub.f32 %v421, %v1238
        %v1240 = vand.u32 %v1239, 4294901760
        %1241 = vmatprep.subr.mxu0 %v1240
        %v1242 = vand.u32 %v420, 4294901760
        %v1243 = vsub.f32 %v420, %v1242
        %v1244 = vand.u32 %v1243, 4294901760
        %1245 = vmatpush1.msra.mxu0 %v1244
        %v1246 = vand.u32 %v413, 4294901760
        %v1247 = vsub.f32 %v413, %v1246
        %v1248 = vand.u32 %v1247, 4294901760
        %1249 = vmatprep.subr.mxu0 %v1248
        %v1250 = vand.u32 %v412, 4294901760
        %v1251 = vsub.f32 %v412, %v1250
        %v1252 = vand.u32 %v1251, 4294901760
        %1253 = vmatpush1.msra.mxu0 %v1252
        %v1254 = vand.u32 %v405, 4294901760
        %v1255 = vsub.f32 %v405, %v1254
        %v1256 = vand.u32 %v1255, 4294901760
        %1257 = vmatprep.subr.mxu0 %v1256
        %v1258 = vand.u32 %v404, 4294901760
        %v1259 = vsub.f32 %v404, %v1258
        %v1260 = vand.u32 %v1259, 4294901760
        %1261 = vmatpush1.msra.mxu0 %v1260
        %v1262 = vand.u32 %v397, 4294901760
        %v1263 = vsub.f32 %v397, %v1262
        %v1264 = vand.u32 %v1263, 4294901760
        %1265 = vmatprep.subr.mxu0 %v1264
        %v1266 = vand.u32 %v396, 4294901760
        %v1267 = vsub.f32 %v396, %v1266
        %v1268 = vand.u32 %v1267, 4294901760
        %1269 = vmatpush1.msra.mxu0 %v1268
        %v1270 = vand.u32 %v389, 4294901760
        %v1271 = vsub.f32 %v389, %v1270
        %v1272 = vand.u32 %v1271, 4294901760
        %1273 = vmatprep.subr.mxu0 %v1272
        %v1274 = vand.u32 %v388, 4294901760
        %v1275 = vsub.f32 %v388, %v1274
        %v1276 = vand.u32 %v1275, 4294901760
        %1277 = vmatpush1.msra.mxu0 %v1276
        %v1278 = vand.u32 %v381, 4294901760
        %v1279 = vsub.f32 %v381, %v1278
        %v1280 = vand.u32 %v1279, 4294901760
        %1281 = vmatprep.subr.mxu0 %v1280
        %v1282 = vand.u32 %v380, 4294901760
        %v1283 = vsub.f32 %v380, %v1282
        %v1284 = vand.u32 %v1283, 4294901760
        %1285 = vmatpush1.msra.mxu0 %v1284
        %v1286 = vand.u32 %v373, 4294901760
        %v1287 = vsub.f32 %v373, %v1286
        %v1288 = vand.u32 %v1287, 4294901760
        %1289 = vmatprep.subr.mxu0 %v1288
        %v1290 = vand.u32 %v372, 4294901760
        %v1291 = vsub.f32 %v372, %v1290
        %v1292 = vand.u32 %v1291, 4294901760
        %1293 = vmatpush1.msra.mxu0 %v1292
        %v1294 = vand.u32 %v365, 4294901760
        %v1295 = vsub.f32 %v365, %v1294
        %v1296 = vand.u32 %v1295, 4294901760
        %1297 = vmatprep.subr.mxu0 %v1296
        %v1298 = vand.u32 %v364, 4294901760
        %v1299 = vsub.f32 %v364, %v1298
        %v1300 = vand.u32 %v1299, 4294901760
        %1301 = vmatpush1.msra.mxu0 %v1300
        %v1302 = vand.u32 %v357, 4294901760
        %v1303 = vsub.f32 %v357, %v1302
        %v1304 = vand.u32 %v1303, 4294901760
        %1305 = vmatprep.subr.mxu0 %v1304
        %v1306 = vand.u32 %v356, 4294901760
        %v1307 = vsub.f32 %v356, %v1306
        %v1308 = vand.u32 %v1307, 4294901760
        %1309 = vmatpush1.msra.mxu0 %v1308
        %v1310 = vand.u32 %v349, 4294901760
        %v1311 = vsub.f32 %v349, %v1310
        %v1312 = vand.u32 %v1311, 4294901760
        %1313 = vmatprep.subr.mxu0 %v1312
        %v1314 = vand.u32 %v348, 4294901760
        %v1315 = vsub.f32 %v348, %v1314
        %v1316 = vand.u32 %v1315, 4294901760
        %1317 = vmatpush1.msra.mxu0 %v1316
        %v1318 = vand.u32 %v341, 4294901760
        %v1319 = vsub.f32 %v341, %v1318
        %v1320 = vand.u32 %v1319, 4294901760
        %1321 = vmatprep.subr.mxu0 %v1320
        %v1322 = vand.u32 %v340, 4294901760
        %v1323 = vsub.f32 %v340, %v1322
        %v1324 = vand.u32 %v1323, 4294901760
        %1325 = vmatpush1.msra.mxu0 %v1324
        %1326 = vmatprep.subr.mxu0 0.0
        %1327 = vmatpush2.msra.mxu0 0.0
        %1328 = vmatprep.subr.mxu0 0.0
        %1329 = vmatpush2.msra.mxu0 0.0
        %1330 = vmatprep.subr.mxu0 0.0
        %1331 = vmatpush2.msra.mxu0 0.0
        %1332 = vmatprep.subr.mxu0 0.0
        %1333 = vmatpush2.msra.mxu0 0.0
        %1334 = vmatprep.subr.mxu0 0.0
        %1335 = vmatpush2.msra.mxu0 0.0
        %1336 = vmatprep.subr.mxu0 0.0
        %1337 = vmatpush2.msra.mxu0 0.0
        %1338 = vmatprep.subr.mxu0 0.0
        %1339 = vmatpush2.msra.mxu0 0.0
        %1340 = vmatprep.subr.mxu0 0.0
        %1341 = vmatpush2.msra.mxu0 0.0
        %1342 = vmatprep.subr.mxu0 0.0
        %1343 = vmatpush2.msra.mxu0 0.0
        %1344 = vmatprep.subr.mxu0 0.0
        %1345 = vmatpush2.msra.mxu0 0.0
        %1346 = vmatprep.subr.mxu0 0.0
        %1347 = vmatpush2.msra.mxu0 0.0
        %1348 = vmatprep.subr.mxu0 0.0
        %1349 = vmatpush2.msra.mxu0 0.0
        %1350 = vmatprep.subr.mxu0 0.0
        %1351 = vmatpush2.msra.mxu0 0.0
        %1352 = vmatprep.subr.mxu0 0.0
        %1353 = vmatpush2.msra.mxu0 0.0
        %1354 = vmatprep.subr.mxu0 0.0
        %1355 = vmatpush2.msra.mxu0 0.0
        %1356 = vmatprep.subr.mxu0 0.0
        %1357 = vmatpush2.msra.mxu0 0.0
        %1358 = vmatprep.mubr.f32.mxu0 0.0
        %v1359 = vand.u32 %v336, 4294901760
        %1360 = vmatmul.mubr.f32.gmra.mxu0 %v1359
        %v1361 = vpop.f32.mrf.mxu0
        %v1362 = vadd.f32 %v1167, %v1361
        %v1363 = vpop.f32.mrf.mxu0
        %v1364 = vadd.f32 %v1169, %v1363
        %1365 = vmatprep.mubr.f32.mxu0 0.0
        %v1366 = vand.u32 %v337, 4294901760
        %1367 = vmatmul.mubr.f32.gmra.mxu0 %v1366
        %v1368 = vpop.f32.mrf.mxu0
        %v1369 = vadd.f32 %v1176, %v1368
        %v1370 = vpop.f32.mrf.mxu0
        %v1371 = vadd.f32 %v1178, %v1370
        %1372 = vmatprep.mubr.f32.mxu0 0.0
        %v1373 = vand.u32 %v338, 4294901760
        %1374 = vmatmul.mubr.f32.gmra.mxu0 %v1373
        %v1375 = vpop.f32.mrf.mxu0
        %v1376 = vadd.f32 %v1185, %v1375
        %v1377 = vpop.f32.mrf.mxu0
        %v1378 = vadd.f32 %v1187, %v1377
        %1379 = vmatprep.mubr.f32.mxu0 0.0
        %v1380 = vand.u32 %v339, 4294901760
        %1381 = vmatmul.mubr.f32.gmra.mxu0 %v1380
        %v1382 = vpop.f32.mrf.mxu0
        %v1383 = vadd.f32 %v1194, %v1382
        %v1384 = vpop.f32.mrf.mxu0
        %v1385 = vadd.f32 %v1196, %v1384
        %1386 = vdwg.mxu0
        %v1387 = vand.u32 %v461, 4294901760
        %1388 = vmatprep.subr.mxu0 %v1387
        %v1389 = vand.u32 %v460, 4294901760
        %1390 = vmatpush1.msra.mxu0 %v1389
        %v1391 = vand.u32 %v453, 4294901760
        %1392 = vmatprep.subr.mxu0 %v1391
        %v1393 = vand.u32 %v452, 4294901760
        %1394 = vmatpush1.msra.mxu0 %v1393
        %v1395 = vand.u32 %v445, 4294901760
        %1396 = vmatprep.subr.mxu0 %v1395
        %v1397 = vand.u32 %v444, 4294901760
        %1398 = vmatpush1.msra.mxu0 %v1397
        %v1399 = vand.u32 %v437, 4294901760
        %1400 = vmatprep.subr.mxu0 %v1399
        %v1401 = vand.u32 %v436, 4294901760
        %1402 = vmatpush1.msra.mxu0 %v1401
        %v1403 = vand.u32 %v429, 4294901760
        %1404 = vmatprep.subr.mxu0 %v1403
        %v1405 = vand.u32 %v428, 4294901760
        %1406 = vmatpush1.msra.mxu0 %v1405
        %v1407 = vand.u32 %v421, 4294901760
        %1408 = vmatprep.subr.mxu0 %v1407
        %v1409 = vand.u32 %v420, 4294901760
        %1410 = vmatpush1.msra.mxu0 %v1409
        %v1411 = vand.u32 %v413, 4294901760
        %1412 = vmatprep.subr.mxu0 %v1411
        %v1413 = vand.u32 %v412, 4294901760
        %1414 = vmatpush1.msra.mxu0 %v1413
        %v1415 = vand.u32 %v405, 4294901760
        %1416 = vmatprep.subr.mxu0 %v1415
        %v1417 = vand.u32 %v404, 4294901760
        %1418 = vmatpush1.msra.mxu0 %v1417
        %v1419 = vand.u32 %v397, 4294901760
        %1420 = vmatprep.subr.mxu0 %v1419
        %v1421 = vand.u32 %v396, 4294901760
        %1422 = vmatpush1.msra.mxu0 %v1421
        %v1423 = vand.u32 %v389, 4294901760
        %1424 = vmatprep.subr.mxu0 %v1423
        %v1425 = vand.u32 %v388, 4294901760
        %1426 = vmatpush1.msra.mxu0 %v1425
        %v1427 = vand.u32 %v381, 4294901760
        %1428 = vmatprep.subr.mxu0 %v1427
        %v1429 = vand.u32 %v380, 4294901760
        %1430 = vmatpush1.msra.mxu0 %v1429
        %v1431 = vand.u32 %v373, 4294901760
        %1432 = vmatprep.subr.mxu0 %v1431
        %v1433 = vand.u32 %v372, 4294901760
        %1434 = vmatpush1.msra.mxu0 %v1433
        %v1435 = vand.u32 %v365, 4294901760
        %1436 = vmatprep.subr.mxu0 %v1435
        %v1437 = vand.u32 %v364, 4294901760
        %1438 = vmatpush1.msra.mxu0 %v1437
        %v1439 = vand.u32 %v357, 4294901760
        %1440 = vmatprep.subr.mxu0 %v1439
        %v1441 = vand.u32 %v356, 4294901760
        %1442 = vmatpush1.msra.mxu0 %v1441
        %v1443 = vand.u32 %v349, 4294901760
        %1444 = vmatprep.subr.mxu0 %v1443
        %v1445 = vand.u32 %v348, 4294901760
        %1446 = vmatpush1.msra.mxu0 %v1445
        %v1447 = vand.u32 %v341, 4294901760
        %1448 = vmatprep.subr.mxu0 %v1447
        %v1449 = vand.u32 %v340, 4294901760
        %1450 = vmatpush1.msra.mxu0 %v1449
        %1451 = vmatprep.subr.mxu0 0.0
        %1452 = vmatpush2.msra.mxu0 0.0
        %1453 = vmatprep.subr.mxu0 0.0
        %1454 = vmatpush2.msra.mxu0 0.0
        %1455 = vmatprep.subr.mxu0 0.0
        %1456 = vmatpush2.msra.mxu0 0.0
        %1457 = vmatprep.subr.mxu0 0.0
        %1458 = vmatpush2.msra.mxu0 0.0
        %1459 = vmatprep.subr.mxu0 0.0
        %1460 = vmatpush2.msra.mxu0 0.0
        %1461 = vmatprep.subr.mxu0 0.0
        %1462 = vmatpush2.msra.mxu0 0.0
        %1463 = vmatprep.subr.mxu0 0.0
        %1464 = vmatpush2.msra.mxu0 0.0
        %1465 = vmatprep.subr.mxu0 0.0
        %1466 = vmatpush2.msra.mxu0 0.0
        %1467 = vmatprep.subr.mxu0 0.0
        %1468 = vmatpush2.msra.mxu0 0.0
        %1469 = vmatprep.subr.mxu0 0.0
        %1470 = vmatpush2.msra.mxu0 0.0
        %1471 = vmatprep.subr.mxu0 0.0
        %1472 = vmatpush2.msra.mxu0 0.0
        %1473 = vmatprep.subr.mxu0 0.0
        %1474 = vmatpush2.msra.mxu0 0.0
        %1475 = vmatprep.subr.mxu0 0.0
        %1476 = vmatpush2.msra.mxu0 0.0
        %1477 = vmatprep.subr.mxu0 0.0
        %1478 = vmatpush2.msra.mxu0 0.0
        %1479 = vmatprep.subr.mxu0 0.0
        %1480 = vmatpush2.msra.mxu0 0.0
        %1481 = vmatprep.subr.mxu0 0.0
        %1482 = vmatpush2.msra.mxu0 0.0
        %1483 = vmatprep.mubr.f32.mxu0 0.0
        %v1484 = vand.u32 %v336, 4294901760
        %1485 = vmatmul.mubr.f32.gmra.mxu0 %v1484
        %v1486 = vpop.f32.mrf.mxu0
        %v1487 = vadd.f32 %v1362, %v1486
        %v1488 = vpop.f32.mrf.mxu0
        %v1489 = vadd.f32 %v1364, %v1488
        %1490 = vmatprep.mubr.f32.mxu0 0.0
        %v1491 = vand.u32 %v337, 4294901760
        %1492 = vmatmul.mubr.f32.gmra.mxu0 %v1491
        %v1493 = vpop.f32.mrf.mxu0
        %v1494 = vadd.f32 %v1369, %v1493
        %v1495 = vpop.f32.mrf.mxu0
        %v1496 = vadd.f32 %v1371, %v1495
        %1497 = vmatprep.mubr.f32.mxu0 0.0
        %v1498 = vand.u32 %v338, 4294901760
        %1499 = vmatmul.mubr.f32.gmra.mxu0 %v1498
        %v1500 = vpop.f32.mrf.mxu0
        %v1501 = vadd.f32 %v1376, %v1500
        %v1502 = vpop.f32.mrf.mxu0
        %v1503 = vadd.f32 %v1378, %v1502
        %1504 = vmatprep.mubr.f32.mxu0 0.0
        %v1505 = vand.u32 %v339, 4294901760
        %1506 = vmatmul.mubr.f32.gmra.mxu0 %v1505
        %v1507 = vpop.f32.mrf.mxu0
        %v1508 = vadd.f32 %v1383, %v1507
        %v1509 = vpop.f32.mrf.mxu0
        %v1510 = vadd.f32 %v1385, %v1509
        %1511 = vdwg.mxu0
        %v1512 = vand.u32 %v463, 4294901760
        %1513 = vmatprep.subr.mxu0 %v1512
        %v1514 = vand.u32 %v462, 4294901760
        %1515 = vmatpush1.msra.mxu0 %v1514
        %v1516 = vand.u32 %v455, 4294901760
        %1517 = vmatprep.subr.mxu0 %v1516
        %v1518 = vand.u32 %v454, 4294901760
        %1519 = vmatpush1.msra.mxu0 %v1518
        %v1520 = vand.u32 %v447, 4294901760
        %1521 = vmatprep.subr.mxu0 %v1520
        %v1522 = vand.u32 %v446, 4294901760
        %1523 = vmatpush1.msra.mxu0 %v1522
        %v1524 = vand.u32 %v439, 4294901760
        %1525 = vmatprep.subr.mxu0 %v1524
        %v1526 = vand.u32 %v438, 4294901760
        %1527 = vmatpush1.msra.mxu0 %v1526
        %v1528 = vand.u32 %v431, 4294901760
        %1529 = vmatprep.subr.mxu0 %v1528
        %v1530 = vand.u32 %v430, 4294901760
        %1531 = vmatpush1.msra.mxu0 %v1530
        %v1532 = vand.u32 %v423, 4294901760
        %1533 = vmatprep.subr.mxu0 %v1532
        %v1534 = vand.u32 %v422, 4294901760
        %1535 = vmatpush1.msra.mxu0 %v1534
        %v1536 = vand.u32 %v415, 4294901760
        %1537 = vmatprep.subr.mxu0 %v1536
        %v1538 = vand.u32 %v414, 4294901760
        %1539 = vmatpush1.msra.mxu0 %v1538
        %v1540 = vand.u32 %v407, 4294901760
        %1541 = vmatprep.subr.mxu0 %v1540
        %v1542 = vand.u32 %v406, 4294901760
        %1543 = vmatpush1.msra.mxu0 %v1542
        %v1544 = vand.u32 %v399, 4294901760
        %1545 = vmatprep.subr.mxu0 %v1544
        %v1546 = vand.u32 %v398, 4294901760
        %1547 = vmatpush1.msra.mxu0 %v1546
        %v1548 = vand.u32 %v391, 4294901760
        %1549 = vmatprep.subr.mxu0 %v1548
        %v1550 = vand.u32 %v390, 4294901760
        %1551 = vmatpush1.msra.mxu0 %v1550
        %v1552 = vand.u32 %v383, 4294901760
        %1553 = vmatprep.subr.mxu0 %v1552
        %v1554 = vand.u32 %v382, 4294901760
        %1555 = vmatpush1.msra.mxu0 %v1554
        %v1556 = vand.u32 %v375, 4294901760
        %1557 = vmatprep.subr.mxu0 %v1556
        %v1558 = vand.u32 %v374, 4294901760
        %1559 = vmatpush1.msra.mxu0 %v1558
        %v1560 = vand.u32 %v367, 4294901760
        %1561 = vmatprep.subr.mxu0 %v1560
        %v1562 = vand.u32 %v366, 4294901760
        %1563 = vmatpush1.msra.mxu0 %v1562
        %v1564 = vand.u32 %v359, 4294901760
        %1565 = vmatprep.subr.mxu0 %v1564
        %v1566 = vand.u32 %v358, 4294901760
        %1567 = vmatpush1.msra.mxu0 %v1566
        %v1568 = vand.u32 %v351, 4294901760
        %1569 = vmatprep.subr.mxu0 %v1568
        %v1570 = vand.u32 %v350, 4294901760
        %1571 = vmatpush1.msra.mxu0 %v1570
        %v1572 = vand.u32 %v343, 4294901760
        %1573 = vmatprep.subr.mxu0 %v1572
        %v1574 = vand.u32 %v342, 4294901760
        %1575 = vmatpush1.msra.mxu0 %v1574
        %1576 = vmatprep.subr.mxu0 0.0
        %1577 = vmatpush2.msra.mxu0 0.0
        %1578 = vmatprep.subr.mxu0 0.0
        %1579 = vmatpush2.msra.mxu0 0.0
        %1580 = vmatprep.subr.mxu0 0.0
        %1581 = vmatpush2.msra.mxu0 0.0
        %1582 = vmatprep.subr.mxu0 0.0
        %1583 = vmatpush2.msra.mxu0 0.0
        %1584 = vmatprep.subr.mxu0 0.0
        %1585 = vmatpush2.msra.mxu0 0.0
        %1586 = vmatprep.subr.mxu0 0.0
        %1587 = vmatpush2.msra.mxu0 0.0
        %1588 = vmatprep.subr.mxu0 0.0
        %1589 = vmatpush2.msra.mxu0 0.0
        %1590 = vmatprep.subr.mxu0 0.0
        %1591 = vmatpush2.msra.mxu0 0.0
        %1592 = vmatprep.subr.mxu0 0.0
        %1593 = vmatpush2.msra.mxu0 0.0
        %1594 = vmatprep.subr.mxu0 0.0
        %1595 = vmatpush2.msra.mxu0 0.0
        %1596 = vmatprep.subr.mxu0 0.0
        %1597 = vmatpush2.msra.mxu0 0.0
        %1598 = vmatprep.subr.mxu0 0.0
        %1599 = vmatpush2.msra.mxu0 0.0
        %1600 = vmatprep.subr.mxu0 0.0
        %1601 = vmatpush2.msra.mxu0 0.0
        %1602 = vmatprep.subr.mxu0 0.0
        %1603 = vmatpush2.msra.mxu0 0.0
        %1604 = vmatprep.subr.mxu0 0.0
        %1605 = vmatpush2.msra.mxu0 0.0
        %1606 = vmatprep.subr.mxu0 0.0
        %1607 = vmatpush2.msra.mxu0 0.0
        %1608 = vmatprep.mubr.f32.mxu0 0.0
        %v1609 = vand.u32 %v336, 4294901760
        %v1610 = vsub.f32 %v336, %v1609
        %v1611 = vand.u32 %v1610, 4294901760
        %v1612 = vsub.f32 %v1610, %v1611
        %v1613 = vand.u32 %v1612, 4294901760
        %1614 = vmatmul.mubr.f32.gmra.mxu0 %v1613
        %v1615 = vpop.f32.mrf.mxu0
        %v1616 = vadd.f32 %v481, %v1615
        %v1617 = vpop.f32.mrf.mxu0
        %v1618 = vadd.f32 %v485, %v1617
        %1619 = vmatprep.mubr.f32.mxu0 0.0
        %v1620 = vand.u32 %v337, 4294901760
        %v1621 = vsub.f32 %v337, %v1620
        %v1622 = vand.u32 %v1621, 4294901760
        %v1623 = vsub.f32 %v1621, %v1622
        %v1624 = vand.u32 %v1623, 4294901760
        %1625 = vmatmul.mubr.f32.gmra.mxu0 %v1624
        %v1626 = vpop.f32.mrf.mxu0
        %v1627 = vadd.f32 %v481, %v1626
        %v1628 = vpop.f32.mrf.mxu0
        %v1629 = vadd.f32 %v485, %v1628
        %1630 = vmatprep.mubr.f32.mxu0 0.0
        %v1631 = vand.u32 %v338, 4294901760
        %v1632 = vsub.f32 %v338, %v1631
        %v1633 = vand.u32 %v1632, 4294901760
        %v1634 = vsub.f32 %v1632, %v1633
        %v1635 = vand.u32 %v1634, 4294901760
        %1636 = vmatmul.mubr.f32.gmra.mxu0 %v1635
        %v1637 = vpop.f32.mrf.mxu0
        %v1638 = vadd.f32 %v481, %v1637
        %v1639 = vpop.f32.mrf.mxu0
        %v1640 = vadd.f32 %v485, %v1639
        %1641 = vmatprep.mubr.f32.mxu0 0.0
        %v1642 = vand.u32 %v339, 4294901760
        %v1643 = vsub.f32 %v339, %v1642
        %v1644 = vand.u32 %v1643, 4294901760
        %v1645 = vsub.f32 %v1643, %v1644
        %v1646 = vand.u32 %v1645, 4294901760
        %1647 = vmatmul.mubr.f32.gmra.mxu0 %v1646
        %v1648 = vpop.f32.mrf.mxu0
        %v1649 = vadd.f32 %v481, %v1648
        %v1650 = vpop.f32.mrf.mxu0
        %v1651 = vadd.f32 %v485, %v1650
        %1652 = vdwg.mxu0
        %v1653 = vand.u32 %v463, 4294901760
        %v1654 = vsub.f32 %v463, %v1653
        %v1655 = vand.u32 %v1654, 4294901760
        %v1656 = vsub.f32 %v1654, %v1655
        %v1657 = vand.u32 %v1656, 4294901760
        %1658 = vmatprep.subr.mxu0 %v1657
        %v1659 = vand.u32 %v462, 4294901760
        %v1660 = vsub.f32 %v462, %v1659
        %v1661 = vand.u32 %v1660, 4294901760
        %v1662 = vsub.f32 %v1660, %v1661
        %v1663 = vand.u32 %v1662, 4294901760
        %1664 = vmatpush1.msra.mxu0 %v1663
        %v1665 = vand.u32 %v455, 4294901760
        %v1666 = vsub.f32 %v455, %v1665
        %v1667 = vand.u32 %v1666, 4294901760
        %v1668 = vsub.f32 %v1666, %v1667
        %v1669 = vand.u32 %v1668, 4294901760
        %1670 = vmatprep.subr.mxu0 %v1669
        %v1671 = vand.u32 %v454, 4294901760
        %v1672 = vsub.f32 %v454, %v1671
        %v1673 = vand.u32 %v1672, 4294901760
        %v1674 = vsub.f32 %v1672, %v1673
        %v1675 = vand.u32 %v1674, 4294901760
        %1676 = vmatpush1.msra.mxu0 %v1675
        %v1677 = vand.u32 %v447, 4294901760
        %v1678 = vsub.f32 %v447, %v1677
        %v1679 = vand.u32 %v1678, 4294901760
        %v1680 = vsub.f32 %v1678, %v1679
        %v1681 = vand.u32 %v1680, 4294901760
        %1682 = vmatprep.subr.mxu0 %v1681
        %v1683 = vand.u32 %v446, 4294901760
        %v1684 = vsub.f32 %v446, %v1683
        %v1685 = vand.u32 %v1684, 4294901760
        %v1686 = vsub.f32 %v1684, %v1685
        %v1687 = vand.u32 %v1686, 4294901760
        %1688 = vmatpush1.msra.mxu0 %v1687
        %v1689 = vand.u32 %v439, 4294901760
        %v1690 = vsub.f32 %v439, %v1689
        %v1691 = vand.u32 %v1690, 4294901760
        %v1692 = vsub.f32 %v1690, %v1691
        %v1693 = vand.u32 %v1692, 4294901760
        %1694 = vmatprep.subr.mxu0 %v1693
        %v1695 = vand.u32 %v438, 4294901760
        %v1696 = vsub.f32 %v438, %v1695
        %v1697 = vand.u32 %v1696, 4294901760
        %v1698 = vsub.f32 %v1696, %v1697
        %v1699 = vand.u32 %v1698, 4294901760
        %1700 = vmatpush1.msra.mxu0 %v1699
        %v1701 = vand.u32 %v431, 4294901760
        %v1702 = vsub.f32 %v431, %v1701
        %v1703 = vand.u32 %v1702, 4294901760
        %v1704 = vsub.f32 %v1702, %v1703
        %v1705 = vand.u32 %v1704, 4294901760
        %1706 = vmatprep.subr.mxu0 %v1705
        %v1707 = vand.u32 %v430, 4294901760
        %v1708 = vsub.f32 %v430, %v1707
        %v1709 = vand.u32 %v1708, 4294901760
        %v1710 = vsub.f32 %v1708, %v1709
        %v1711 = vand.u32 %v1710, 4294901760
        %1712 = vmatpush1.msra.mxu0 %v1711
        %v1713 = vand.u32 %v423, 4294901760
        %v1714 = vsub.f32 %v423, %v1713
        %v1715 = vand.u32 %v1714, 4294901760
        %v1716 = vsub.f32 %v1714, %v1715
        %v1717 = vand.u32 %v1716, 4294901760
        %1718 = vmatprep.subr.mxu0 %v1717
        %v1719 = vand.u32 %v422, 4294901760
        %v1720 = vsub.f32 %v422, %v1719
        %v1721 = vand.u32 %v1720, 4294901760
        %v1722 = vsub.f32 %v1720, %v1721
        %v1723 = vand.u32 %v1722, 4294901760
        %1724 = vmatpush1.msra.mxu0 %v1723
        %v1725 = vand.u32 %v415, 4294901760
        %v1726 = vsub.f32 %v415, %v1725
        %v1727 = vand.u32 %v1726, 4294901760
        %v1728 = vsub.f32 %v1726, %v1727
        %v1729 = vand.u32 %v1728, 4294901760
        %1730 = vmatprep.subr.mxu0 %v1729
        %v1731 = vand.u32 %v414, 4294901760
        %v1732 = vsub.f32 %v414, %v1731
        %v1733 = vand.u32 %v1732, 4294901760
        %v1734 = vsub.f32 %v1732, %v1733
        %v1735 = vand.u32 %v1734, 4294901760
        %1736 = vmatpush1.msra.mxu0 %v1735
        %v1737 = vand.u32 %v407, 4294901760
        %v1738 = vsub.f32 %v407, %v1737
        %v1739 = vand.u32 %v1738, 4294901760
        %v1740 = vsub.f32 %v1738, %v1739
        %v1741 = vand.u32 %v1740, 4294901760
        %1742 = vmatprep.subr.mxu0 %v1741
        %v1743 = vand.u32 %v406, 4294901760
        %v1744 = vsub.f32 %v406, %v1743
        %v1745 = vand.u32 %v1744, 4294901760
        %v1746 = vsub.f32 %v1744, %v1745
        %v1747 = vand.u32 %v1746, 4294901760
        %1748 = vmatpush1.msra.mxu0 %v1747
        %v1749 = vand.u32 %v399, 4294901760
        %v1750 = vsub.f32 %v399, %v1749
        %v1751 = vand.u32 %v1750, 4294901760
        %v1752 = vsub.f32 %v1750, %v1751
        %v1753 = vand.u32 %v1752, 4294901760
        %1754 = vmatprep.subr.mxu0 %v1753
        %v1755 = vand.u32 %v398, 4294901760
        %v1756 = vsub.f32 %v398, %v1755
        %v1757 = vand.u32 %v1756, 4294901760
        %v1758 = vsub.f32 %v1756, %v1757
        %v1759 = vand.u32 %v1758, 4294901760
        %1760 = vmatpush1.msra.mxu0 %v1759
        %v1761 = vand.u32 %v391, 4294901760
        %v1762 = vsub.f32 %v391, %v1761
        %v1763 = vand.u32 %v1762, 4294901760
        %v1764 = vsub.f32 %v1762, %v1763
        %v1765 = vand.u32 %v1764, 4294901760
        %1766 = vmatprep.subr.mxu0 %v1765
        %v1767 = vand.u32 %v390, 4294901760
        %v1768 = vsub.f32 %v390, %v1767
        %v1769 = vand.u32 %v1768, 4294901760
        %v1770 = vsub.f32 %v1768, %v1769
        %v1771 = vand.u32 %v1770, 4294901760
        %1772 = vmatpush1.msra.mxu0 %v1771
        %v1773 = vand.u32 %v383, 4294901760
        %v1774 = vsub.f32 %v383, %v1773
        %v1775 = vand.u32 %v1774, 4294901760
        %v1776 = vsub.f32 %v1774, %v1775
        %v1777 = vand.u32 %v1776, 4294901760
        %1778 = vmatprep.subr.mxu0 %v1777
        %v1779 = vand.u32 %v382, 4294901760
        %v1780 = vsub.f32 %v382, %v1779
        %v1781 = vand.u32 %v1780, 4294901760
        %v1782 = vsub.f32 %v1780, %v1781
        %v1783 = vand.u32 %v1782, 4294901760
        %1784 = vmatpush1.msra.mxu0 %v1783
        %v1785 = vand.u32 %v375, 4294901760
        %v1786 = vsub.f32 %v375, %v1785
        %v1787 = vand.u32 %v1786, 4294901760
        %v1788 = vsub.f32 %v1786, %v1787
        %v1789 = vand.u32 %v1788, 4294901760
        %1790 = vmatprep.subr.mxu0 %v1789
        %v1791 = vand.u32 %v374, 4294901760
        %v1792 = vsub.f32 %v374, %v1791
        %v1793 = vand.u32 %v1792, 4294901760
        %v1794 = vsub.f32 %v1792, %v1793
        %v1795 = vand.u32 %v1794, 4294901760
        %1796 = vmatpush1.msra.mxu0 %v1795
        %v1797 = vand.u32 %v367, 4294901760
        %v1798 = vsub.f32 %v367, %v1797
        %v1799 = vand.u32 %v1798, 4294901760
        %v1800 = vsub.f32 %v1798, %v1799
        %v1801 = vand.u32 %v1800, 4294901760
        %1802 = vmatprep.subr.mxu0 %v1801
        %v1803 = vand.u32 %v366, 4294901760
        %v1804 = vsub.f32 %v366, %v1803
        %v1805 = vand.u32 %v1804, 4294901760
        %v1806 = vsub.f32 %v1804, %v1805
        %v1807 = vand.u32 %v1806, 4294901760
        %1808 = vmatpush1.msra.mxu0 %v1807
        %v1809 = vand.u32 %v359, 4294901760
        %v1810 = vsub.f32 %v359, %v1809
        %v1811 = vand.u32 %v1810, 4294901760
        %v1812 = vsub.f32 %v1810, %v1811
        %v1813 = vand.u32 %v1812, 4294901760
        %1814 = vmatprep.subr.mxu0 %v1813
        %v1815 = vand.u32 %v358, 4294901760
        %v1816 = vsub.f32 %v358, %v1815
        %v1817 = vand.u32 %v1816, 4294901760
        %v1818 = vsub.f32 %v1816, %v1817
        %v1819 = vand.u32 %v1818, 4294901760
        %1820 = vmatpush1.msra.mxu0 %v1819
        %v1821 = vand.u32 %v351, 4294901760
        %v1822 = vsub.f32 %v351, %v1821
        %v1823 = vand.u32 %v1822, 4294901760
        %v1824 = vsub.f32 %v1822, %v1823
        %v1825 = vand.u32 %v1824, 4294901760
        %1826 = vmatprep.subr.mxu0 %v1825
        %v1827 = vand.u32 %v350, 4294901760
        %v1828 = vsub.f32 %v350, %v1827
        %v1829 = vand.u32 %v1828, 4294901760
        %v1830 = vsub.f32 %v1828, %v1829
        %v1831 = vand.u32 %v1830, 4294901760
        %1832 = vmatpush1.msra.mxu0 %v1831
        %v1833 = vand.u32 %v343, 4294901760
        %v1834 = vsub.f32 %v343, %v1833
        %v1835 = vand.u32 %v1834, 4294901760
        %v1836 = vsub.f32 %v1834, %v1835
        %v1837 = vand.u32 %v1836, 4294901760
        %1838 = vmatprep.subr.mxu0 %v1837
        %v1839 = vand.u32 %v342, 4294901760
        %v1840 = vsub.f32 %v342, %v1839
        %v1841 = vand.u32 %v1840, 4294901760
        %v1842 = vsub.f32 %v1840, %v1841
        %v1843 = vand.u32 %v1842, 4294901760
        %1844 = vmatpush1.msra.mxu0 %v1843
        %1845 = vmatprep.subr.mxu0 0.0
        %1846 = vmatpush2.msra.mxu0 0.0
        %1847 = vmatprep.subr.mxu0 0.0
        %1848 = vmatpush2.msra.mxu0 0.0
        %1849 = vmatprep.subr.mxu0 0.0
        %1850 = vmatpush2.msra.mxu0 0.0
        %1851 = vmatprep.subr.mxu0 0.0
        %1852 = vmatpush2.msra.mxu0 0.0
        %1853 = vmatprep.subr.mxu0 0.0
        %1854 = vmatpush2.msra.mxu0 0.0
        %1855 = vmatprep.subr.mxu0 0.0
        %1856 = vmatpush2.msra.mxu0 0.0
        %1857 = vmatprep.subr.mxu0 0.0
        %1858 = vmatpush2.msra.mxu0 0.0
        %1859 = vmatprep.subr.mxu0 0.0
        %1860 = vmatpush2.msra.mxu0 0.0
        %1861 = vmatprep.subr.mxu0 0.0
        %1862 = vmatpush2.msra.mxu0 0.0
        %1863 = vmatprep.subr.mxu0 0.0
        %1864 = vmatpush2.msra.mxu0 0.0
        %1865 = vmatprep.subr.mxu0 0.0
        %1866 = vmatpush2.msra.mxu0 0.0
        %1867 = vmatprep.subr.mxu0 0.0
        %1868 = vmatpush2.msra.mxu0 0.0
        %1869 = vmatprep.subr.mxu0 0.0
        %1870 = vmatpush2.msra.mxu0 0.0
        %1871 = vmatprep.subr.mxu0 0.0
        %1872 = vmatpush2.msra.mxu0 0.0
        %1873 = vmatprep.subr.mxu0 0.0
        %1874 = vmatpush2.msra.mxu0 0.0
        %1875 = vmatprep.subr.mxu0 0.0
        %1876 = vmatpush2.msra.mxu0 0.0
        %1877 = vmatprep.mubr.f32.mxu0 0.0
        %v1878 = vand.u32 %v336, 4294901760
        %1879 = vmatmul.mubr.f32.gmra.mxu0 %v1878
        %v1880 = vpop.f32.mrf.mxu0
        %v1881 = vadd.f32 %v1616, %v1880
        %v1882 = vpop.f32.mrf.mxu0
        %v1883 = vadd.f32 %v1618, %v1882
        %1884 = vmatprep.mubr.f32.mxu0 0.0
        %v1885 = vand.u32 %v337, 4294901760
        %1886 = vmatmul.mubr.f32.gmra.mxu0 %v1885
        %v1887 = vpop.f32.mrf.mxu0
        %v1888 = vadd.f32 %v1627, %v1887
        %v1889 = vpop.f32.mrf.mxu0
        %v1890 = vadd.f32 %v1629, %v1889
        %1891 = vmatprep.mubr.f32.mxu0 0.0
        %v1892 = vand.u32 %v338, 4294901760
        %1893 = vmatmul.mubr.f32.gmra.mxu0 %v1892
        %v1894 = vpop.f32.mrf.mxu0
        %v1895 = vadd.f32 %v1638, %v1894
        %v1896 = vpop.f32.mrf.mxu0
        %v1897 = vadd.f32 %v1640, %v1896
        %1898 = vmatprep.mubr.f32.mxu0 0.0
        %v1899 = vand.u32 %v339, 4294901760
        %1900 = vmatmul.mubr.f32.gmra.mxu0 %v1899
        %v1901 = vpop.f32.mrf.mxu0
        %v1902 = vadd.f32 %v1649, %v1901
        %v1903 = vpop.f32.mrf.mxu0
        %v1904 = vadd.f32 %v1651, %v1903
        %1905 = vdwg.mxu0
        %v1906 = vand.u32 %v463, 4294901760
        %v1907 = vsub.f32 %v463, %v1906
        %1908 = vmatprep.subr.mxu0 %v1907
        %v1909 = vand.u32 %v462, 4294901760
        %v1910 = vsub.f32 %v462, %v1909
        %1911 = vmatpush1.msra.mxu0 %v1910
        %v1912 = vand.u32 %v455, 4294901760
        %v1913 = vsub.f32 %v455, %v1912
        %1914 = vmatprep.subr.mxu0 %v1913
        %v1915 = vand.u32 %v454, 4294901760
        %v1916 = vsub.f32 %v454, %v1915
        %1917 = vmatpush1.msra.mxu0 %v1916
        %v1918 = vand.u32 %v447, 4294901760
        %v1919 = vsub.f32 %v447, %v1918
        %1920 = vmatprep.subr.mxu0 %v1919
        %v1921 = vand.u32 %v446, 4294901760
        %v1922 = vsub.f32 %v446, %v1921
        %1923 = vmatpush1.msra.mxu0 %v1922
        %v1924 = vand.u32 %v439, 4294901760
        %v1925 = vsub.f32 %v439, %v1924
        %1926 = vmatprep.subr.mxu0 %v1925
        %v1927 = vand.u32 %v438, 4294901760
        %v1928 = vsub.f32 %v438, %v1927
        %1929 = vmatpush1.msra.mxu0 %v1928
        %v1930 = vand.u32 %v431, 4294901760
        %v1931 = vsub.f32 %v431, %v1930
        %1932 = vmatprep.subr.mxu0 %v1931
        %v1933 = vand.u32 %v430, 4294901760
        %v1934 = vsub.f32 %v430, %v1933
        %1935 = vmatpush1.msra.mxu0 %v1934
        %v1936 = vand.u32 %v423, 4294901760
        %v1937 = vsub.f32 %v423, %v1936
        %1938 = vmatprep.subr.mxu0 %v1937
        %v1939 = vand.u32 %v422, 4294901760
        %v1940 = vsub.f32 %v422, %v1939
        %1941 = vmatpush1.msra.mxu0 %v1940
        %v1942 = vand.u32 %v415, 4294901760
        %v1943 = vsub.f32 %v415, %v1942
        %1944 = vmatprep.subr.mxu0 %v1943
        %v1945 = vand.u32 %v414, 4294901760
        %v1946 = vsub.f32 %v414, %v1945
        %1947 = vmatpush1.msra.mxu0 %v1946
        %v1948 = vand.u32 %v407, 4294901760
        %v1949 = vsub.f32 %v407, %v1948
        %1950 = vmatprep.subr.mxu0 %v1949
        %v1951 = vand.u32 %v406, 4294901760
        %v1952 = vsub.f32 %v406, %v1951
        %1953 = vmatpush1.msra.mxu0 %v1952
        %v1954 = vand.u32 %v399, 4294901760
        %v1955 = vsub.f32 %v399, %v1954
        %1956 = vmatprep.subr.mxu0 %v1955
        %v1957 = vand.u32 %v398, 4294901760
        %v1958 = vsub.f32 %v398, %v1957
        %1959 = vmatpush1.msra.mxu0 %v1958
        %v1960 = vand.u32 %v391, 4294901760
        %v1961 = vsub.f32 %v391, %v1960
        %1962 = vmatprep.subr.mxu0 %v1961
        %v1963 = vand.u32 %v390, 4294901760
        %v1964 = vsub.f32 %v390, %v1963
        %1965 = vmatpush1.msra.mxu0 %v1964
        %v1966 = vand.u32 %v383, 4294901760
        %v1967 = vsub.f32 %v383, %v1966
        %1968 = vmatprep.subr.mxu0 %v1967
        %v1969 = vand.u32 %v382, 4294901760
        %v1970 = vsub.f32 %v382, %v1969
        %1971 = vmatpush1.msra.mxu0 %v1970
        %v1972 = vand.u32 %v375, 4294901760
        %v1973 = vsub.f32 %v375, %v1972
        %1974 = vmatprep.subr.mxu0 %v1973
        %v1975 = vand.u32 %v374, 4294901760
        %v1976 = vsub.f32 %v374, %v1975
        %1977 = vmatpush1.msra.mxu0 %v1976
        %v1978 = vand.u32 %v367, 4294901760
        %v1979 = vsub.f32 %v367, %v1978
        %1980 = vmatprep.subr.mxu0 %v1979
        %v1981 = vand.u32 %v366, 4294901760
        %v1982 = vsub.f32 %v366, %v1981
        %1983 = vmatpush1.msra.mxu0 %v1982
        %v1984 = vand.u32 %v359, 4294901760
        %v1985 = vsub.f32 %v359, %v1984
        %1986 = vmatprep.subr.mxu0 %v1985
        %v1987 = vand.u32 %v358, 4294901760
        %v1988 = vsub.f32 %v358, %v1987
        %1989 = vmatpush1.msra.mxu0 %v1988
        %v1990 = vand.u32 %v351, 4294901760
        %v1991 = vsub.f32 %v351, %v1990
        %1992 = vmatprep.subr.mxu0 %v1991
        %v1993 = vand.u32 %v350, 4294901760
        %v1994 = vsub.f32 %v350, %v1993
        %1995 = vmatpush1.msra.mxu0 %v1994
        %v1996 = vand.u32 %v343, 4294901760
        %v1997 = vsub.f32 %v343, %v1996
        %1998 = vmatprep.subr.mxu0 %v1997
        %v1999 = vand.u32 %v342, 4294901760
        %v2000 = vsub.f32 %v342, %v1999
        %2001 = vmatpush1.msra.mxu0 %v2000
        %2002 = vmatprep.subr.mxu0 0.0
        %2003 = vmatpush2.msra.mxu0 0.0
        %2004 = vmatprep.subr.mxu0 0.0
        %2005 = vmatpush2.msra.mxu0 0.0
        %2006 = vmatprep.subr.mxu0 0.0
        %2007 = vmatpush2.msra.mxu0 0.0
        %2008 = vmatprep.subr.mxu0 0.0
        %2009 = vmatpush2.msra.mxu0 0.0
        %2010 = vmatprep.subr.mxu0 0.0
        %2011 = vmatpush2.msra.mxu0 0.0
        %2012 = vmatprep.subr.mxu0 0.0
        %2013 = vmatpush2.msra.mxu0 0.0
        %2014 = vmatprep.subr.mxu0 0.0
        %2015 = vmatpush2.msra.mxu0 0.0
        %2016 = vmatprep.subr.mxu0 0.0
        %2017 = vmatpush2.msra.mxu0 0.0
        %2018 = vmatprep.subr.mxu0 0.0
        %2019 = vmatpush2.msra.mxu0 0.0
        %2020 = vmatprep.subr.mxu0 0.0
        %2021 = vmatpush2.msra.mxu0 0.0
        %2022 = vmatprep.subr.mxu0 0.0
        %2023 = vmatpush2.msra.mxu0 0.0
        %2024 = vmatprep.subr.mxu0 0.0
        %2025 = vmatpush2.msra.mxu0 0.0
        %2026 = vmatprep.subr.mxu0 0.0
        %2027 = vmatpush2.msra.mxu0 0.0
        %2028 = vmatprep.subr.mxu0 0.0
        %2029 = vmatpush2.msra.mxu0 0.0
        %2030 = vmatprep.subr.mxu0 0.0
        %2031 = vmatpush2.msra.mxu0 0.0
        %2032 = vmatprep.subr.mxu0 0.0
        %2033 = vmatpush2.msra.mxu0 0.0
        %2034 = vmatprep.mubr.f32.mxu0 0.0
        %v2035 = vand.u32 %v336, 4294901760
        %v2036 = vsub.f32 %v336, %v2035
        %2037 = vmatmul.mubr.f32.gmra.mxu0 %v2036
        %v2038 = vpop.f32.mrf.mxu0
        %v2039 = vadd.f32 %v1881, %v2038
        %v2040 = vpop.f32.mrf.mxu0
        %v2041 = vadd.f32 %v1883, %v2040
        %2042 = vmatprep.mubr.f32.mxu0 0.0
        %v2043 = vand.u32 %v337, 4294901760
        %v2044 = vsub.f32 %v337, %v2043
        %2045 = vmatmul.mubr.f32.gmra.mxu0 %v2044
        %v2046 = vpop.f32.mrf.mxu0
        %v2047 = vadd.f32 %v1888, %v2046
        %v2048 = vpop.f32.mrf.mxu0
        %v2049 = vadd.f32 %v1890, %v2048
        %2050 = vmatprep.mubr.f32.mxu0 0.0
        %v2051 = vand.u32 %v338, 4294901760
        %v2052 = vsub.f32 %v338, %v2051
        %2053 = vmatmul.mubr.f32.gmra.mxu0 %v2052
        %v2054 = vpop.f32.mrf.mxu0
        %v2055 = vadd.f32 %v1895, %v2054
        %v2056 = vpop.f32.mrf.mxu0
        %v2057 = vadd.f32 %v1897, %v2056
        %2058 = vmatprep.mubr.f32.mxu0 0.0
        %v2059 = vand.u32 %v339, 4294901760
        %v2060 = vsub.f32 %v339, %v2059
        %2061 = vmatmul.mubr.f32.gmra.mxu0 %v2060
        %v2062 = vpop.f32.mrf.mxu0
        %v2063 = vadd.f32 %v1902, %v2062
        %v2064 = vpop.f32.mrf.mxu0
        %v2065 = vadd.f32 %v1904, %v2064
        %2066 = vdwg.mxu0
        %v2067 = vand.u32 %v463, 4294901760
        %2068 = vmatprep.subr.mxu0 %v2067
        %v2069 = vand.u32 %v462, 4294901760
        %2070 = vmatpush1.msra.mxu0 %v2069
        %v2071 = vand.u32 %v455, 4294901760
        %2072 = vmatprep.subr.mxu0 %v2071
        %v2073 = vand.u32 %v454, 4294901760
        %2074 = vmatpush1.msra.mxu0 %v2073
        %v2075 = vand.u32 %v447, 4294901760
        %2076 = vmatprep.subr.mxu0 %v2075
        %v2077 = vand.u32 %v446, 4294901760
        %2078 = vmatpush1.msra.mxu0 %v2077
        %v2079 = vand.u32 %v439, 4294901760
        %2080 = vmatprep.subr.mxu0 %v2079
        %v2081 = vand.u32 %v438, 4294901760
        %2082 = vmatpush1.msra.mxu0 %v2081
        %v2083 = vand.u32 %v431, 4294901760
        %2084 = vmatprep.subr.mxu0 %v2083
        %v2085 = vand.u32 %v430, 4294901760
        %2086 = vmatpush1.msra.mxu0 %v2085
        %v2087 = vand.u32 %v423, 4294901760
        %2088 = vmatprep.subr.mxu0 %v2087
        %v2089 = vand.u32 %v422, 4294901760
        %2090 = vmatpush1.msra.mxu0 %v2089
        %v2091 = vand.u32 %v415, 4294901760
        %2092 = vmatprep.subr.mxu0 %v2091
        %v2093 = vand.u32 %v414, 4294901760
        %2094 = vmatpush1.msra.mxu0 %v2093
        %v2095 = vand.u32 %v407, 4294901760
        %2096 = vmatprep.subr.mxu0 %v2095
        %v2097 = vand.u32 %v406, 4294901760
        %2098 = vmatpush1.msra.mxu0 %v2097
        %v2099 = vand.u32 %v399, 4294901760
        %2100 = vmatprep.subr.mxu0 %v2099
        %v2101 = vand.u32 %v398, 4294901760
        %2102 = vmatpush1.msra.mxu0 %v2101
        %v2103 = vand.u32 %v391, 4294901760
        %2104 = vmatprep.subr.mxu0 %v2103
        %v2105 = vand.u32 %v390, 4294901760
        %2106 = vmatpush1.msra.mxu0 %v2105
        %v2107 = vand.u32 %v383, 4294901760
        %2108 = vmatprep.subr.mxu0 %v2107
        %v2109 = vand.u32 %v382, 4294901760
        %2110 = vmatpush1.msra.mxu0 %v2109
        %v2111 = vand.u32 %v375, 4294901760
        %2112 = vmatprep.subr.mxu0 %v2111
        %v2113 = vand.u32 %v374, 4294901760
        %2114 = vmatpush1.msra.mxu0 %v2113
        %v2115 = vand.u32 %v367, 4294901760
        %2116 = vmatprep.subr.mxu0 %v2115
        %v2117 = vand.u32 %v366, 4294901760
        %2118 = vmatpush1.msra.mxu0 %v2117
        %v2119 = vand.u32 %v359, 4294901760
        %2120 = vmatprep.subr.mxu0 %v2119
        %v2121 = vand.u32 %v358, 4294901760
        %2122 = vmatpush1.msra.mxu0 %v2121
        %v2123 = vand.u32 %v351, 4294901760
        %2124 = vmatprep.subr.mxu0 %v2123
        %v2125 = vand.u32 %v350, 4294901760
        %2126 = vmatpush1.msra.mxu0 %v2125
        %v2127 = vand.u32 %v343, 4294901760
        %2128 = vmatprep.subr.mxu0 %v2127
        %v2129 = vand.u32 %v342, 4294901760
        %2130 = vmatpush1.msra.mxu0 %v2129
        %2131 = vmatprep.subr.mxu0 0.0
        %2132 = vmatpush2.msra.mxu0 0.0
        %2133 = vmatprep.subr.mxu0 0.0
        %2134 = vmatpush2.msra.mxu0 0.0
        %2135 = vmatprep.subr.mxu0 0.0
        %2136 = vmatpush2.msra.mxu0 0.0
        %2137 = vmatprep.subr.mxu0 0.0
        %2138 = vmatpush2.msra.mxu0 0.0
        %2139 = vmatprep.subr.mxu0 0.0
        %2140 = vmatpush2.msra.mxu0 0.0
        %2141 = vmatprep.subr.mxu0 0.0
        %2142 = vmatpush2.msra.mxu0 0.0
        %2143 = vmatprep.subr.mxu0 0.0
        %2144 = vmatpush2.msra.mxu0 0.0
        %2145 = vmatprep.subr.mxu0 0.0
        %2146 = vmatpush2.msra.mxu0 0.0
        %2147 = vmatprep.subr.mxu0 0.0
        %2148 = vmatpush2.msra.mxu0 0.0
        %2149 = vmatprep.subr.mxu0 0.0
        %2150 = vmatpush2.msra.mxu0 0.0
        %2151 = vmatprep.subr.mxu0 0.0
        %2152 = vmatpush2.msra.mxu0 0.0
        %2153 = vmatprep.subr.mxu0 0.0
        %2154 = vmatpush2.msra.mxu0 0.0
        %2155 = vmatprep.subr.mxu0 0.0
        %2156 = vmatpush2.msra.mxu0 0.0
        %2157 = vmatprep.subr.mxu0 0.0
        %2158 = vmatpush2.msra.mxu0 0.0
        %2159 = vmatprep.subr.mxu0 0.0
        %2160 = vmatpush2.msra.mxu0 0.0
        %2161 = vmatprep.subr.mxu0 0.0
        %2162 = vmatpush2.msra.mxu0 0.0
        %2163 = vmatprep.mubr.f32.mxu0 0.0
        %v2164 = vand.u32 %v336, 4294901760
        %v2165 = vsub.f32 %v336, %v2164
        %v2166 = vand.u32 %v2165, 4294901760
        %2167 = vmatmul.mubr.f32.gmra.mxu0 %v2166
        %v2168 = vpop.f32.mrf.mxu0
        %v2169 = vadd.f32 %v2039, %v2168
        %v2170 = vpop.f32.mrf.mxu0
        %v2171 = vadd.f32 %v2041, %v2170
        %2172 = vmatprep.mubr.f32.mxu0 0.0
        %v2173 = vand.u32 %v337, 4294901760
        %v2174 = vsub.f32 %v337, %v2173
        %v2175 = vand.u32 %v2174, 4294901760
        %2176 = vmatmul.mubr.f32.gmra.mxu0 %v2175
        %v2177 = vpop.f32.mrf.mxu0
        %v2178 = vadd.f32 %v2047, %v2177
        %v2179 = vpop.f32.mrf.mxu0
        %v2180 = vadd.f32 %v2049, %v2179
        %2181 = vmatprep.mubr.f32.mxu0 0.0
        %v2182 = vand.u32 %v338, 4294901760
        %v2183 = vsub.f32 %v338, %v2182
        %v2184 = vand.u32 %v2183, 4294901760
        %2185 = vmatmul.mubr.f32.gmra.mxu0 %v2184
        %v2186 = vpop.f32.mrf.mxu0
        %v2187 = vadd.f32 %v2055, %v2186
        %v2188 = vpop.f32.mrf.mxu0
        %v2189 = vadd.f32 %v2057, %v2188
        %2190 = vmatprep.mubr.f32.mxu0 0.0
        %v2191 = vand.u32 %v339, 4294901760
        %v2192 = vsub.f32 %v339, %v2191
        %v2193 = vand.u32 %v2192, 4294901760
        %2194 = vmatmul.mubr.f32.gmra.mxu0 %v2193
        %v2195 = vpop.f32.mrf.mxu0
        %v2196 = vadd.f32 %v2063, %v2195
        %v2197 = vpop.f32.mrf.mxu0
        %v2198 = vadd.f32 %v2065, %v2197
        %2199 = vdwg.mxu0
        %v2200 = vand.u32 %v463, 4294901760
        %v2201 = vsub.f32 %v463, %v2200
        %v2202 = vand.u32 %v2201, 4294901760
        %2203 = vmatprep.subr.mxu0 %v2202
        %v2204 = vand.u32 %v462, 4294901760
        %v2205 = vsub.f32 %v462, %v2204
        %v2206 = vand.u32 %v2205, 4294901760
        %2207 = vmatpush1.msra.mxu0 %v2206
        %v2208 = vand.u32 %v455, 4294901760
        %v2209 = vsub.f32 %v455, %v2208
        %v2210 = vand.u32 %v2209, 4294901760
        %2211 = vmatprep.subr.mxu0 %v2210
        %v2212 = vand.u32 %v454, 4294901760
        %v2213 = vsub.f32 %v454, %v2212
        %v2214 = vand.u32 %v2213, 4294901760
        %2215 = vmatpush1.msra.mxu0 %v2214
        %v2216 = vand.u32 %v447, 4294901760
        %v2217 = vsub.f32 %v447, %v2216
        %v2218 = vand.u32 %v2217, 4294901760
        %2219 = vmatprep.subr.mxu0 %v2218
        %v2220 = vand.u32 %v446, 4294901760
        %v2221 = vsub.f32 %v446, %v2220
        %v2222 = vand.u32 %v2221, 4294901760
        %2223 = vmatpush1.msra.mxu0 %v2222
        %v2224 = vand.u32 %v439, 4294901760
        %v2225 = vsub.f32 %v439, %v2224
        %v2226 = vand.u32 %v2225, 4294901760
        %2227 = vmatprep.subr.mxu0 %v2226
        %v2228 = vand.u32 %v438, 4294901760
        %v2229 = vsub.f32 %v438, %v2228
        %v2230 = vand.u32 %v2229, 4294901760
        %2231 = vmatpush1.msra.mxu0 %v2230
        %v2232 = vand.u32 %v431, 4294901760
        %v2233 = vsub.f32 %v431, %v2232
        %v2234 = vand.u32 %v2233, 4294901760
        %2235 = vmatprep.subr.mxu0 %v2234
        %v2236 = vand.u32 %v430, 4294901760
        %v2237 = vsub.f32 %v430, %v2236
        %v2238 = vand.u32 %v2237, 4294901760
        %2239 = vmatpush1.msra.mxu0 %v2238
        %v2240 = vand.u32 %v423, 4294901760
        %v2241 = vsub.f32 %v423, %v2240
        %v2242 = vand.u32 %v2241, 4294901760
        %2243 = vmatprep.subr.mxu0 %v2242
        %v2244 = vand.u32 %v422, 4294901760
        %v2245 = vsub.f32 %v422, %v2244
        %v2246 = vand.u32 %v2245, 4294901760
        %2247 = vmatpush1.msra.mxu0 %v2246
        %v2248 = vand.u32 %v415, 4294901760
        %v2249 = vsub.f32 %v415, %v2248
        %v2250 = vand.u32 %v2249, 4294901760
        %2251 = vmatprep.subr.mxu0 %v2250
        %v2252 = vand.u32 %v414, 4294901760
        %v2253 = vsub.f32 %v414, %v2252
        %v2254 = vand.u32 %v2253, 4294901760
        %2255 = vmatpush1.msra.mxu0 %v2254
        %v2256 = vand.u32 %v407, 4294901760
        %v2257 = vsub.f32 %v407, %v2256
        %v2258 = vand.u32 %v2257, 4294901760
        %2259 = vmatprep.subr.mxu0 %v2258
        %v2260 = vand.u32 %v406, 4294901760
        %v2261 = vsub.f32 %v406, %v2260
        %v2262 = vand.u32 %v2261, 4294901760
        %2263 = vmatpush1.msra.mxu0 %v2262
        %v2264 = vand.u32 %v399, 4294901760
        %v2265 = vsub.f32 %v399, %v2264
        %v2266 = vand.u32 %v2265, 4294901760
        %2267 = vmatprep.subr.mxu0 %v2266
        %v2268 = vand.u32 %v398, 4294901760
        %v2269 = vsub.f32 %v398, %v2268
        %v2270 = vand.u32 %v2269, 4294901760
        %2271 = vmatpush1.msra.mxu0 %v2270
        %v2272 = vand.u32 %v391, 4294901760
        %v2273 = vsub.f32 %v391, %v2272
        %v2274 = vand.u32 %v2273, 4294901760
        %2275 = vmatprep.subr.mxu0 %v2274
        %v2276 = vand.u32 %v390, 4294901760
        %v2277 = vsub.f32 %v390, %v2276
        %v2278 = vand.u32 %v2277, 4294901760
        %2279 = vmatpush1.msra.mxu0 %v2278
        %v2280 = vand.u32 %v383, 4294901760
        %v2281 = vsub.f32 %v383, %v2280
        %v2282 = vand.u32 %v2281, 4294901760
        %2283 = vmatprep.subr.mxu0 %v2282
        %v2284 = vand.u32 %v382, 4294901760
        %v2285 = vsub.f32 %v382, %v2284
        %v2286 = vand.u32 %v2285, 4294901760
        %2287 = vmatpush1.msra.mxu0 %v2286
        %v2288 = vand.u32 %v375, 4294901760
        %v2289 = vsub.f32 %v375, %v2288
        %v2290 = vand.u32 %v2289, 4294901760
        %2291 = vmatprep.subr.mxu0 %v2290
        %v2292 = vand.u32 %v374, 4294901760
        %v2293 = vsub.f32 %v374, %v2292
        %v2294 = vand.u32 %v2293, 4294901760
        %2295 = vmatpush1.msra.mxu0 %v2294
        %v2296 = vand.u32 %v367, 4294901760
        %v2297 = vsub.f32 %v367, %v2296
        %v2298 = vand.u32 %v2297, 4294901760
        %2299 = vmatprep.subr.mxu0 %v2298
        %v2300 = vand.u32 %v366, 4294901760
        %v2301 = vsub.f32 %v366, %v2300
        %v2302 = vand.u32 %v2301, 4294901760
        %2303 = vmatpush1.msra.mxu0 %v2302
        %v2304 = vand.u32 %v359, 4294901760
        %v2305 = vsub.f32 %v359, %v2304
        %v2306 = vand.u32 %v2305, 4294901760
        %2307 = vmatprep.subr.mxu0 %v2306
        %v2308 = vand.u32 %v358, 4294901760
        %v2309 = vsub.f32 %v358, %v2308
        %v2310 = vand.u32 %v2309, 4294901760
        %2311 = vmatpush1.msra.mxu0 %v2310
        %v2312 = vand.u32 %v351, 4294901760
        %v2313 = vsub.f32 %v351, %v2312
        %v2314 = vand.u32 %v2313, 4294901760
        %2315 = vmatprep.subr.mxu0 %v2314
        %v2316 = vand.u32 %v350, 4294901760
        %v2317 = vsub.f32 %v350, %v2316
        %v2318 = vand.u32 %v2317, 4294901760
        %2319 = vmatpush1.msra.mxu0 %v2318
        %v2320 = vand.u32 %v343, 4294901760
        %v2321 = vsub.f32 %v343, %v2320
        %v2322 = vand.u32 %v2321, 4294901760
        %2323 = vmatprep.subr.mxu0 %v2322
        %v2324 = vand.u32 %v342, 4294901760
        %v2325 = vsub.f32 %v342, %v2324
        %v2326 = vand.u32 %v2325, 4294901760
        %2327 = vmatpush1.msra.mxu0 %v2326
        %2328 = vmatprep.subr.mxu0 0.0
        %2329 = vmatpush2.msra.mxu0 0.0
        %2330 = vmatprep.subr.mxu0 0.0
        %2331 = vmatpush2.msra.mxu0 0.0
        %2332 = vmatprep.subr.mxu0 0.0
        %2333 = vmatpush2.msra.mxu0 0.0
        %2334 = vmatprep.subr.mxu0 0.0
        %2335 = vmatpush2.msra.mxu0 0.0
        %2336 = vmatprep.subr.mxu0 0.0
        %2337 = vmatpush2.msra.mxu0 0.0
        %2338 = vmatprep.subr.mxu0 0.0
        %2339 = vmatpush2.msra.mxu0 0.0
        %2340 = vmatprep.subr.mxu0 0.0
        %2341 = vmatpush2.msra.mxu0 0.0
        %2342 = vmatprep.subr.mxu0 0.0
        %2343 = vmatpush2.msra.mxu0 0.0
        %2344 = vmatprep.subr.mxu0 0.0
        %2345 = vmatpush2.msra.mxu0 0.0
        %2346 = vmatprep.subr.mxu0 0.0
        %2347 = vmatpush2.msra.mxu0 0.0
        %2348 = vmatprep.subr.mxu0 0.0
        %2349 = vmatpush2.msra.mxu0 0.0
        %2350 = vmatprep.subr.mxu0 0.0
        %2351 = vmatpush2.msra.mxu0 0.0
        %2352 = vmatprep.subr.mxu0 0.0
        %2353 = vmatpush2.msra.mxu0 0.0
        %2354 = vmatprep.subr.mxu0 0.0
        %2355 = vmatpush2.msra.mxu0 0.0
        %2356 = vmatprep.subr.mxu0 0.0
        %2357 = vmatpush2.msra.mxu0 0.0
        %2358 = vmatprep.subr.mxu0 0.0
        %2359 = vmatpush2.msra.mxu0 0.0
        %2360 = vmatprep.mubr.f32.mxu0 0.0
        %v2361 = vand.u32 %v336, 4294901760
        %2362 = vmatmul.mubr.f32.gmra.mxu0 %v2361
        %v2363 = vpop.f32.mrf.mxu0
        %v2364 = vadd.f32 %v2169, %v2363
        %v2365 = vpop.f32.mrf.mxu0
        %v2366 = vadd.f32 %v2171, %v2365
        %2367 = vmatprep.mubr.f32.mxu0 0.0
        %v2368 = vand.u32 %v337, 4294901760
        %2369 = vmatmul.mubr.f32.gmra.mxu0 %v2368
        %v2370 = vpop.f32.mrf.mxu0
        %v2371 = vadd.f32 %v2178, %v2370
        %v2372 = vpop.f32.mrf.mxu0
        %v2373 = vadd.f32 %v2180, %v2372
        %2374 = vmatprep.mubr.f32.mxu0 0.0
        %v2375 = vand.u32 %v338, 4294901760
        %2376 = vmatmul.mubr.f32.gmra.mxu0 %v2375
        %v2377 = vpop.f32.mrf.mxu0
        %v2378 = vadd.f32 %v2187, %v2377
        %v2379 = vpop.f32.mrf.mxu0
        %v2380 = vadd.f32 %v2189, %v2379
        %2381 = vmatprep.mubr.f32.mxu0 0.0
        %v2382 = vand.u32 %v339, 4294901760
        %2383 = vmatmul.mubr.f32.gmra.mxu0 %v2382
        %v2384 = vpop.f32.mrf.mxu0
        %v2385 = vadd.f32 %v2196, %v2384
        %v2386 = vpop.f32.mrf.mxu0
        %v2387 = vadd.f32 %v2198, %v2386
        %2388 = vdwg.mxu0
        %v2389 = vand.u32 %v463, 4294901760
        %2390 = vmatprep.subr.mxu0 %v2389
        %v2391 = vand.u32 %v462, 4294901760
        %2392 = vmatpush1.msra.mxu0 %v2391
        %v2393 = vand.u32 %v455, 4294901760
        %2394 = vmatprep.subr.mxu0 %v2393
        %v2395 = vand.u32 %v454, 4294901760
        %2396 = vmatpush1.msra.mxu0 %v2395
        %v2397 = vand.u32 %v447, 4294901760
        %2398 = vmatprep.subr.mxu0 %v2397
        %v2399 = vand.u32 %v446, 4294901760
        %2400 = vmatpush1.msra.mxu0 %v2399
        %v2401 = vand.u32 %v439, 4294901760
        %2402 = vmatprep.subr.mxu0 %v2401
        %v2403 = vand.u32 %v438, 4294901760
        %2404 = vmatpush1.msra.mxu0 %v2403
        %v2405 = vand.u32 %v431, 4294901760
        %2406 = vmatprep.subr.mxu0 %v2405
        %v2407 = vand.u32 %v430, 4294901760
        %2408 = vmatpush1.msra.mxu0 %v2407
        %v2409 = vand.u32 %v423, 4294901760
        %2410 = vmatprep.subr.mxu0 %v2409
        %v2411 = vand.u32 %v422, 4294901760
        %2412 = vmatpush1.msra.mxu0 %v2411
        %v2413 = vand.u32 %v415, 4294901760
        %2414 = vmatprep.subr.mxu0 %v2413
        %v2415 = vand.u32 %v414, 4294901760
        %2416 = vmatpush1.msra.mxu0 %v2415
        %v2417 = vand.u32 %v407, 4294901760
        %2418 = vmatprep.subr.mxu0 %v2417
        %v2419 = vand.u32 %v406, 4294901760
        %2420 = vmatpush1.msra.mxu0 %v2419
        %v2421 = vand.u32 %v399, 4294901760
        %2422 = vmatprep.subr.mxu0 %v2421
        %v2423 = vand.u32 %v398, 4294901760
        %2424 = vmatpush1.msra.mxu0 %v2423
        %v2425 = vand.u32 %v391, 4294901760
        %2426 = vmatprep.subr.mxu0 %v2425
        %v2427 = vand.u32 %v390, 4294901760
        %2428 = vmatpush1.msra.mxu0 %v2427
        %v2429 = vand.u32 %v383, 4294901760
        %2430 = vmatprep.subr.mxu0 %v2429
        %v2431 = vand.u32 %v382, 4294901760
        %2432 = vmatpush1.msra.mxu0 %v2431
        %v2433 = vand.u32 %v375, 4294901760
        %2434 = vmatprep.subr.mxu0 %v2433
        %v2435 = vand.u32 %v374, 4294901760
        %2436 = vmatpush1.msra.mxu0 %v2435
        %v2437 = vand.u32 %v367, 4294901760
        %2438 = vmatprep.subr.mxu0 %v2437
        %v2439 = vand.u32 %v366, 4294901760
        %2440 = vmatpush1.msra.mxu0 %v2439
        %v2441 = vand.u32 %v359, 4294901760
        %2442 = vmatprep.subr.mxu0 %v2441
        %v2443 = vand.u32 %v358, 4294901760
        %2444 = vmatpush1.msra.mxu0 %v2443
        %v2445 = vand.u32 %v351, 4294901760
        %2446 = vmatprep.subr.mxu0 %v2445
        %v2447 = vand.u32 %v350, 4294901760
        %2448 = vmatpush1.msra.mxu0 %v2447
        %v2449 = vand.u32 %v343, 4294901760
        %2450 = vmatprep.subr.mxu0 %v2449
        %v2451 = vand.u32 %v342, 4294901760
        %2452 = vmatpush1.msra.mxu0 %v2451
        %2453 = vmatprep.subr.mxu0 0.0
        %2454 = vmatpush2.msra.mxu0 0.0
        %2455 = vmatprep.subr.mxu0 0.0
        %2456 = vmatpush2.msra.mxu0 0.0
        %2457 = vmatprep.subr.mxu0 0.0
        %2458 = vmatpush2.msra.mxu0 0.0
        %2459 = vmatprep.subr.mxu0 0.0
        %2460 = vmatpush2.msra.mxu0 0.0
        %2461 = vmatprep.subr.mxu0 0.0
        %2462 = vmatpush2.msra.mxu0 0.0
        %2463 = vmatprep.subr.mxu0 0.0
        %2464 = vmatpush2.msra.mxu0 0.0
        %2465 = vmatprep.subr.mxu0 0.0
        %2466 = vmatpush2.msra.mxu0 0.0
        %2467 = vmatprep.subr.mxu0 0.0
        %2468 = vmatpush2.msra.mxu0 0.0
        %2469 = vmatprep.subr.mxu0 0.0
        %2470 = vmatpush2.msra.mxu0 0.0
        %2471 = vmatprep.subr.mxu0 0.0
        %2472 = vmatpush2.msra.mxu0 0.0
        %2473 = vmatprep.subr.mxu0 0.0
        %2474 = vmatpush2.msra.mxu0 0.0
        %2475 = vmatprep.subr.mxu0 0.0
        %2476 = vmatpush2.msra.mxu0 0.0
        %2477 = vmatprep.subr.mxu0 0.0
        %2478 = vmatpush2.msra.mxu0 0.0
        %2479 = vmatprep.subr.mxu0 0.0
        %2480 = vmatpush2.msra.mxu0 0.0
        %2481 = vmatprep.subr.mxu0 0.0
        %2482 = vmatpush2.msra.mxu0 0.0
        %2483 = vmatprep.subr.mxu0 0.0
        %2484 = vmatpush2.msra.mxu0 0.0
        %2485 = vmatprep.mubr.f32.mxu0 0.0
        %v2486 = vand.u32 %v336, 4294901760
        %2487 = vmatmul.mubr.f32.gmra.mxu0 %v2486
        %v2488 = vpop.f32.mrf.mxu0
        %v2489 = vadd.f32 %v2364, %v2488
        %v2490 = vpop.f32.mrf.mxu0
        %v2491 = vadd.f32 %v2366, %v2490
        %2492 = vmatprep.mubr.f32.mxu0 0.0
        %v2493 = vand.u32 %v337, 4294901760
        %2494 = vmatmul.mubr.f32.gmra.mxu0 %v2493
        %v2495 = vpop.f32.mrf.mxu0
        %v2496 = vadd.f32 %v2371, %v2495
        %v2497 = vpop.f32.mrf.mxu0
        %v2498 = vadd.f32 %v2373, %v2497
        %2499 = vmatprep.mubr.f32.mxu0 0.0
        %v2500 = vand.u32 %v338, 4294901760
        %2501 = vmatmul.mubr.f32.gmra.mxu0 %v2500
        %v2502 = vpop.f32.mrf.mxu0
        %v2503 = vadd.f32 %v2378, %v2502
        %v2504 = vpop.f32.mrf.mxu0
        %v2505 = vadd.f32 %v2380, %v2504
        %2506 = vmatprep.mubr.f32.mxu0 0.0
        %v2507 = vand.u32 %v339, 4294901760
        %2508 = vmatmul.mubr.f32.gmra.mxu0 %v2507
        %v2509 = vpop.f32.mrf.mxu0
        %v2510 = vadd.f32 %v2385, %v2509
        %v2511 = vpop.f32.mrf.mxu0
        %v2512 = vadd.f32 %v2387, %v2511
        %2513 = vdwg.mxu0
        %v2514 = vand.u32 %v465, 4294901760
        %2515 = vmatprep.subr.mxu0 %v2514
        %v2516 = vand.u32 %v464, 4294901760
        %2517 = vmatpush1.msra.mxu0 %v2516
        %v2518 = vand.u32 %v457, 4294901760
        %2519 = vmatprep.subr.mxu0 %v2518
        %v2520 = vand.u32 %v456, 4294901760
        %2521 = vmatpush1.msra.mxu0 %v2520
        %v2522 = vand.u32 %v449, 4294901760
        %2523 = vmatprep.subr.mxu0 %v2522
        %v2524 = vand.u32 %v448, 4294901760
        %2525 = vmatpush1.msra.mxu0 %v2524
        %v2526 = vand.u32 %v441, 4294901760
        %2527 = vmatprep.subr.mxu0 %v2526
        %v2528 = vand.u32 %v440, 4294901760
        %2529 = vmatpush1.msra.mxu0 %v2528
        %v2530 = vand.u32 %v433, 4294901760
        %2531 = vmatprep.subr.mxu0 %v2530
        %v2532 = vand.u32 %v432, 4294901760
        %2533 = vmatpush1.msra.mxu0 %v2532
        %v2534 = vand.u32 %v425, 4294901760
        %2535 = vmatprep.subr.mxu0 %v2534
        %v2536 = vand.u32 %v424, 4294901760
        %2537 = vmatpush1.msra.mxu0 %v2536
        %v2538 = vand.u32 %v417, 4294901760
        %2539 = vmatprep.subr.mxu0 %v2538
        %v2540 = vand.u32 %v416, 4294901760
        %2541 = vmatpush1.msra.mxu0 %v2540
        %v2542 = vand.u32 %v409, 4294901760
        %2543 = vmatprep.subr.mxu0 %v2542
        %v2544 = vand.u32 %v408, 4294901760
        %2545 = vmatpush1.msra.mxu0 %v2544
        %v2546 = vand.u32 %v401, 4294901760
        %2547 = vmatprep.subr.mxu0 %v2546
        %v2548 = vand.u32 %v400, 4294901760
        %2549 = vmatpush1.msra.mxu0 %v2548
        %v2550 = vand.u32 %v393, 4294901760
        %2551 = vmatprep.subr.mxu0 %v2550
        %v2552 = vand.u32 %v392, 4294901760
        %2553 = vmatpush1.msra.mxu0 %v2552
        %v2554 = vand.u32 %v385, 4294901760
        %2555 = vmatprep.subr.mxu0 %v2554
        %v2556 = vand.u32 %v384, 4294901760
        %2557 = vmatpush1.msra.mxu0 %v2556
        %v2558 = vand.u32 %v377, 4294901760
        %2559 = vmatprep.subr.mxu0 %v2558
        %v2560 = vand.u32 %v376, 4294901760
        %2561 = vmatpush1.msra.mxu0 %v2560
        %v2562 = vand.u32 %v369, 4294901760
        %2563 = vmatprep.subr.mxu0 %v2562
        %v2564 = vand.u32 %v368, 4294901760
        %2565 = vmatpush1.msra.mxu0 %v2564
        %v2566 = vand.u32 %v361, 4294901760
        %2567 = vmatprep.subr.mxu0 %v2566
        %v2568 = vand.u32 %v360, 4294901760
        %2569 = vmatpush1.msra.mxu0 %v2568
        %v2570 = vand.u32 %v353, 4294901760
        %2571 = vmatprep.subr.mxu0 %v2570
        %v2572 = vand.u32 %v352, 4294901760
        %2573 = vmatpush1.msra.mxu0 %v2572
        %v2574 = vand.u32 %v345, 4294901760
        %2575 = vmatprep.subr.mxu0 %v2574
        %v2576 = vand.u32 %v344, 4294901760
        %2577 = vmatpush1.msra.mxu0 %v2576
        %2578 = vmatprep.subr.mxu0 0.0
        %2579 = vmatpush2.msra.mxu0 0.0
        %2580 = vmatprep.subr.mxu0 0.0
        %2581 = vmatpush2.msra.mxu0 0.0
        %2582 = vmatprep.subr.mxu0 0.0
        %2583 = vmatpush2.msra.mxu0 0.0
        %2584 = vmatprep.subr.mxu0 0.0
        %2585 = vmatpush2.msra.mxu0 0.0
        %2586 = vmatprep.subr.mxu0 0.0
        %2587 = vmatpush2.msra.mxu0 0.0
        %2588 = vmatprep.subr.mxu0 0.0
        %2589 = vmatpush2.msra.mxu0 0.0
        %2590 = vmatprep.subr.mxu0 0.0
        %2591 = vmatpush2.msra.mxu0 0.0
        %2592 = vmatprep.subr.mxu0 0.0
        %2593 = vmatpush2.msra.mxu0 0.0
        %2594 = vmatprep.subr.mxu0 0.0
        %2595 = vmatpush2.msra.mxu0 0.0
        %2596 = vmatprep.subr.mxu0 0.0
        %2597 = vmatpush2.msra.mxu0 0.0
        %2598 = vmatprep.subr.mxu0 0.0
        %2599 = vmatpush2.msra.mxu0 0.0
        %2600 = vmatprep.subr.mxu0 0.0
        %2601 = vmatpush2.msra.mxu0 0.0
        %2602 = vmatprep.subr.mxu0 0.0
        %2603 = vmatpush2.msra.mxu0 0.0
        %2604 = vmatprep.subr.mxu0 0.0
        %2605 = vmatpush2.msra.mxu0 0.0
        %2606 = vmatprep.subr.mxu0 0.0
        %2607 = vmatpush2.msra.mxu0 0.0
        %2608 = vmatprep.subr.mxu0 0.0
        %2609 = vmatpush2.msra.mxu0 0.0
        %2610 = vmatprep.mubr.f32.mxu0 0.0
        %v2611 = vand.u32 %v336, 4294901760
        %v2612 = vsub.f32 %v336, %v2611
        %v2613 = vand.u32 %v2612, 4294901760
        %v2614 = vsub.f32 %v2612, %v2613
        %v2615 = vand.u32 %v2614, 4294901760
        %2616 = vmatmul.mubr.f32.gmra.mxu0 %v2615
        %v2617 = vpop.f32.mrf.mxu0
        %v2618 = vadd.f32 %v489, %v2617
        %v2619 = vpop.f32.mrf.mxu0
        %v2620 = vadd.f32 %v493, %v2619
        %2621 = vmatprep.mubr.f32.mxu0 0.0
        %v2622 = vand.u32 %v337, 4294901760
        %v2623 = vsub.f32 %v337, %v2622
        %v2624 = vand.u32 %v2623, 4294901760
        %v2625 = vsub.f32 %v2623, %v2624
        %v2626 = vand.u32 %v2625, 4294901760
        %2627 = vmatmul.mubr.f32.gmra.mxu0 %v2626
        %v2628 = vpop.f32.mrf.mxu0
        %v2629 = vadd.f32 %v489, %v2628
        %v2630 = vpop.f32.mrf.mxu0
        %v2631 = vadd.f32 %v493, %v2630
        %2632 = vmatprep.mubr.f32.mxu0 0.0
        %v2633 = vand.u32 %v338, 4294901760
        %v2634 = vsub.f32 %v338, %v2633
        %v2635 = vand.u32 %v2634, 4294901760
        %v2636 = vsub.f32 %v2634, %v2635
        %v2637 = vand.u32 %v2636, 4294901760
        %2638 = vmatmul.mubr.f32.gmra.mxu0 %v2637
        %v2639 = vpop.f32.mrf.mxu0
        %v2640 = vadd.f32 %v489, %v2639
        %v2641 = vpop.f32.mrf.mxu0
        %v2642 = vadd.f32 %v493, %v2641
        %2643 = vmatprep.mubr.f32.mxu0 0.0
        %v2644 = vand.u32 %v339, 4294901760
        %v2645 = vsub.f32 %v339, %v2644
        %v2646 = vand.u32 %v2645, 4294901760
        %v2647 = vsub.f32 %v2645, %v2646
        %v2648 = vand.u32 %v2647, 4294901760
        %2649 = vmatmul.mubr.f32.gmra.mxu0 %v2648
        %v2650 = vpop.f32.mrf.mxu0
        %v2651 = vadd.f32 %v489, %v2650
        %v2652 = vpop.f32.mrf.mxu0
        %v2653 = vadd.f32 %v493, %v2652
        %2654 = vdwg.mxu0
        %v2655 = vand.u32 %v465, 4294901760
        %v2656 = vsub.f32 %v465, %v2655
        %v2657 = vand.u32 %v2656, 4294901760
        %v2658 = vsub.f32 %v2656, %v2657
        %v2659 = vand.u32 %v2658, 4294901760
        %2660 = vmatprep.subr.mxu0 %v2659
        %v2661 = vand.u32 %v464, 4294901760
        %v2662 = vsub.f32 %v464, %v2661
        %v2663 = vand.u32 %v2662, 4294901760
        %v2664 = vsub.f32 %v2662, %v2663
        %v2665 = vand.u32 %v2664, 4294901760
        %2666 = vmatpush1.msra.mxu0 %v2665
        %v2667 = vand.u32 %v457, 4294901760
        %v2668 = vsub.f32 %v457, %v2667
        %v2669 = vand.u32 %v2668, 4294901760
        %v2670 = vsub.f32 %v2668, %v2669
        %v2671 = vand.u32 %v2670, 4294901760
        %2672 = vmatprep.subr.mxu0 %v2671
        %v2673 = vand.u32 %v456, 4294901760
        %v2674 = vsub.f32 %v456, %v2673
        %v2675 = vand.u32 %v2674, 4294901760
        %v2676 = vsub.f32 %v2674, %v2675
        %v2677 = vand.u32 %v2676, 4294901760
        %2678 = vmatpush1.msra.mxu0 %v2677
        %v2679 = vand.u32 %v449, 4294901760
        %v2680 = vsub.f32 %v449, %v2679
        %v2681 = vand.u32 %v2680, 4294901760
        %v2682 = vsub.f32 %v2680, %v2681
        %v2683 = vand.u32 %v2682, 4294901760
        %2684 = vmatprep.subr.mxu0 %v2683
        %v2685 = vand.u32 %v448, 4294901760
        %v2686 = vsub.f32 %v448, %v2685
        %v2687 = vand.u32 %v2686, 4294901760
        %v2688 = vsub.f32 %v2686, %v2687
        %v2689 = vand.u32 %v2688, 4294901760
        %2690 = vmatpush1.msra.mxu0 %v2689
        %v2691 = vand.u32 %v441, 4294901760
        %v2692 = vsub.f32 %v441, %v2691
        %v2693 = vand.u32 %v2692, 4294901760
        %v2694 = vsub.f32 %v2692, %v2693
        %v2695 = vand.u32 %v2694, 4294901760
        %2696 = vmatprep.subr.mxu0 %v2695
        %v2697 = vand.u32 %v440, 4294901760
        %v2698 = vsub.f32 %v440, %v2697
        %v2699 = vand.u32 %v2698, 4294901760
        %v2700 = vsub.f32 %v2698, %v2699
        %v2701 = vand.u32 %v2700, 4294901760
        %2702 = vmatpush1.msra.mxu0 %v2701
        %v2703 = vand.u32 %v433, 4294901760
        %v2704 = vsub.f32 %v433, %v2703
        %v2705 = vand.u32 %v2704, 4294901760
        %v2706 = vsub.f32 %v2704, %v2705
        %v2707 = vand.u32 %v2706, 4294901760
        %2708 = vmatprep.subr.mxu0 %v2707
        %v2709 = vand.u32 %v432, 4294901760
        %v2710 = vsub.f32 %v432, %v2709
        %v2711 = vand.u32 %v2710, 4294901760
        %v2712 = vsub.f32 %v2710, %v2711
        %v2713 = vand.u32 %v2712, 4294901760
        %2714 = vmatpush1.msra.mxu0 %v2713
        %v2715 = vand.u32 %v425, 4294901760
        %v2716 = vsub.f32 %v425, %v2715
        %v2717 = vand.u32 %v2716, 4294901760
        %v2718 = vsub.f32 %v2716, %v2717
        %v2719 = vand.u32 %v2718, 4294901760
        %2720 = vmatprep.subr.mxu0 %v2719
        %v2721 = vand.u32 %v424, 4294901760
        %v2722 = vsub.f32 %v424, %v2721
        %v2723 = vand.u32 %v2722, 4294901760
        %v2724 = vsub.f32 %v2722, %v2723
        %v2725 = vand.u32 %v2724, 4294901760
        %2726 = vmatpush1.msra.mxu0 %v2725
        %v2727 = vand.u32 %v417, 4294901760
        %v2728 = vsub.f32 %v417, %v2727
        %v2729 = vand.u32 %v2728, 4294901760
        %v2730 = vsub.f32 %v2728, %v2729
        %v2731 = vand.u32 %v2730, 4294901760
        %2732 = vmatprep.subr.mxu0 %v2731
        %v2733 = vand.u32 %v416, 4294901760
        %v2734 = vsub.f32 %v416, %v2733
        %v2735 = vand.u32 %v2734, 4294901760
        %v2736 = vsub.f32 %v2734, %v2735
        %v2737 = vand.u32 %v2736, 4294901760
        %2738 = vmatpush1.msra.mxu0 %v2737
        %v2739 = vand.u32 %v409, 4294901760
        %v2740 = vsub.f32 %v409, %v2739
        %v2741 = vand.u32 %v2740, 4294901760
        %v2742 = vsub.f32 %v2740, %v2741
        %v2743 = vand.u32 %v2742, 4294901760
        %2744 = vmatprep.subr.mxu0 %v2743
        %v2745 = vand.u32 %v408, 4294901760
        %v2746 = vsub.f32 %v408, %v2745
        %v2747 = vand.u32 %v2746, 4294901760
        %v2748 = vsub.f32 %v2746, %v2747
        %v2749 = vand.u32 %v2748, 4294901760
        %2750 = vmatpush1.msra.mxu0 %v2749
        %v2751 = vand.u32 %v401, 4294901760
        %v2752 = vsub.f32 %v401, %v2751
        %v2753 = vand.u32 %v2752, 4294901760
        %v2754 = vsub.f32 %v2752, %v2753
        %v2755 = vand.u32 %v2754, 4294901760
        %2756 = vmatprep.subr.mxu0 %v2755
        %v2757 = vand.u32 %v400, 4294901760
        %v2758 = vsub.f32 %v400, %v2757
        %v2759 = vand.u32 %v2758, 4294901760
        %v2760 = vsub.f32 %v2758, %v2759
        %v2761 = vand.u32 %v2760, 4294901760
        %2762 = vmatpush1.msra.mxu0 %v2761
        %v2763 = vand.u32 %v393, 4294901760
        %v2764 = vsub.f32 %v393, %v2763
        %v2765 = vand.u32 %v2764, 4294901760
        %v2766 = vsub.f32 %v2764, %v2765
        %v2767 = vand.u32 %v2766, 4294901760
        %2768 = vmatprep.subr.mxu0 %v2767
        %v2769 = vand.u32 %v392, 4294901760
        %v2770 = vsub.f32 %v392, %v2769
        %v2771 = vand.u32 %v2770, 4294901760
        %v2772 = vsub.f32 %v2770, %v2771
        %v2773 = vand.u32 %v2772, 4294901760
        %2774 = vmatpush1.msra.mxu0 %v2773
        %v2775 = vand.u32 %v385, 4294901760
        %v2776 = vsub.f32 %v385, %v2775
        %v2777 = vand.u32 %v2776, 4294901760
        %v2778 = vsub.f32 %v2776, %v2777
        %v2779 = vand.u32 %v2778, 4294901760
        %2780 = vmatprep.subr.mxu0 %v2779
        %v2781 = vand.u32 %v384, 4294901760
        %v2782 = vsub.f32 %v384, %v2781
        %v2783 = vand.u32 %v2782, 4294901760
        %v2784 = vsub.f32 %v2782, %v2783
        %v2785 = vand.u32 %v2784, 4294901760
        %2786 = vmatpush1.msra.mxu0 %v2785
        %v2787 = vand.u32 %v377, 4294901760
        %v2788 = vsub.f32 %v377, %v2787
        %v2789 = vand.u32 %v2788, 4294901760
        %v2790 = vsub.f32 %v2788, %v2789
        %v2791 = vand.u32 %v2790, 4294901760
        %2792 = vmatprep.subr.mxu0 %v2791
        %v2793 = vand.u32 %v376, 4294901760
        %v2794 = vsub.f32 %v376, %v2793
        %v2795 = vand.u32 %v2794, 4294901760
        %v2796 = vsub.f32 %v2794, %v2795
        %v2797 = vand.u32 %v2796, 4294901760
        %2798 = vmatpush1.msra.mxu0 %v2797
        %v2799 = vand.u32 %v369, 4294901760
        %v2800 = vsub.f32 %v369, %v2799
        %v2801 = vand.u32 %v2800, 4294901760
        %v2802 = vsub.f32 %v2800, %v2801
        %v2803 = vand.u32 %v2802, 4294901760
        %2804 = vmatprep.subr.mxu0 %v2803
        %v2805 = vand.u32 %v368, 4294901760
        %v2806 = vsub.f32 %v368, %v2805
        %v2807 = vand.u32 %v2806, 4294901760
        %v2808 = vsub.f32 %v2806, %v2807
        %v2809 = vand.u32 %v2808, 4294901760
        %2810 = vmatpush1.msra.mxu0 %v2809
        %v2811 = vand.u32 %v361, 4294901760
        %v2812 = vsub.f32 %v361, %v2811
        %v2813 = vand.u32 %v2812, 4294901760
        %v2814 = vsub.f32 %v2812, %v2813
        %v2815 = vand.u32 %v2814, 4294901760
        %2816 = vmatprep.subr.mxu0 %v2815
        %v2817 = vand.u32 %v360, 4294901760
        %v2818 = vsub.f32 %v360, %v2817
        %v2819 = vand.u32 %v2818, 4294901760
        %v2820 = vsub.f32 %v2818, %v2819
        %v2821 = vand.u32 %v2820, 4294901760
        %2822 = vmatpush1.msra.mxu0 %v2821
        %v2823 = vand.u32 %v353, 4294901760
        %v2824 = vsub.f32 %v353, %v2823
        %v2825 = vand.u32 %v2824, 4294901760
        %v2826 = vsub.f32 %v2824, %v2825
        %v2827 = vand.u32 %v2826, 4294901760
        %2828 = vmatprep.subr.mxu0 %v2827
        %v2829 = vand.u32 %v352, 4294901760
        %v2830 = vsub.f32 %v352, %v2829
        %v2831 = vand.u32 %v2830, 4294901760
        %v2832 = vsub.f32 %v2830, %v2831
        %v2833 = vand.u32 %v2832, 4294901760
        %2834 = vmatpush1.msra.mxu0 %v2833
        %v2835 = vand.u32 %v345, 4294901760
        %v2836 = vsub.f32 %v345, %v2835
        %v2837 = vand.u32 %v2836, 4294901760
        %v2838 = vsub.f32 %v2836, %v2837
        %v2839 = vand.u32 %v2838, 4294901760
        %2840 = vmatprep.subr.mxu0 %v2839
        %v2841 = vand.u32 %v344, 4294901760
        %v2842 = vsub.f32 %v344, %v2841
        %v2843 = vand.u32 %v2842, 4294901760
        %v2844 = vsub.f32 %v2842, %v2843
        %v2845 = vand.u32 %v2844, 4294901760
        %2846 = vmatpush1.msra.mxu0 %v2845
        %2847 = vmatprep.subr.mxu0 0.0
        %2848 = vmatpush2.msra.mxu0 0.0
        %2849 = vmatprep.subr.mxu0 0.0
        %2850 = vmatpush2.msra.mxu0 0.0
        %2851 = vmatprep.subr.mxu0 0.0
        %2852 = vmatpush2.msra.mxu0 0.0
        %2853 = vmatprep.subr.mxu0 0.0
        %2854 = vmatpush2.msra.mxu0 0.0
        %2855 = vmatprep.subr.mxu0 0.0
        %2856 = vmatpush2.msra.mxu0 0.0
        %2857 = vmatprep.subr.mxu0 0.0
        %2858 = vmatpush2.msra.mxu0 0.0
        %2859 = vmatprep.subr.mxu0 0.0
        %2860 = vmatpush2.msra.mxu0 0.0
        %2861 = vmatprep.subr.mxu0 0.0
        %2862 = vmatpush2.msra.mxu0 0.0
        %2863 = vmatprep.subr.mxu0 0.0
        %2864 = vmatpush2.msra.mxu0 0.0
        %2865 = vmatprep.subr.mxu0 0.0
        %2866 = vmatpush2.msra.mxu0 0.0
        %2867 = vmatprep.subr.mxu0 0.0
        %2868 = vmatpush2.msra.mxu0 0.0
        %2869 = vmatprep.subr.mxu0 0.0
        %2870 = vmatpush2.msra.mxu0 0.0
        %2871 = vmatprep.subr.mxu0 0.0
        %2872 = vmatpush2.msra.mxu0 0.0
        %2873 = vmatprep.subr.mxu0 0.0
        %2874 = vmatpush2.msra.mxu0 0.0
        %2875 = vmatprep.subr.mxu0 0.0
        %2876 = vmatpush2.msra.mxu0 0.0
        %2877 = vmatprep.subr.mxu0 0.0
        %2878 = vmatpush2.msra.mxu0 0.0
        %2879 = vmatprep.mubr.f32.mxu0 0.0
        %v2880 = vand.u32 %v336, 4294901760
        %2881 = vmatmul.mubr.f32.gmra.mxu0 %v2880
        %v2882 = vpop.f32.mrf.mxu0
        %v2883 = vadd.f32 %v2618, %v2882
        %v2884 = vpop.f32.mrf.mxu0
        %v2885 = vadd.f32 %v2620, %v2884
        %2886 = vmatprep.mubr.f32.mxu0 0.0
        %v2887 = vand.u32 %v337, 4294901760
        %2888 = vmatmul.mubr.f32.gmra.mxu0 %v2887
        %v2889 = vpop.f32.mrf.mxu0
        %v2890 = vadd.f32 %v2629, %v2889
        %v2891 = vpop.f32.mrf.mxu0
        %v2892 = vadd.f32 %v2631, %v2891
        %2893 = vmatprep.mubr.f32.mxu0 0.0
        %v2894 = vand.u32 %v338, 4294901760
        %2895 = vmatmul.mubr.f32.gmra.mxu0 %v2894
        %v2896 = vpop.f32.mrf.mxu0
        %v2897 = vadd.f32 %v2640, %v2896
        %v2898 = vpop.f32.mrf.mxu0
        %v2899 = vadd.f32 %v2642, %v2898
        %2900 = vmatprep.mubr.f32.mxu0 0.0
        %v2901 = vand.u32 %v339, 4294901760
        %2902 = vmatmul.mubr.f32.gmra.mxu0 %v2901
        %v2903 = vpop.f32.mrf.mxu0
        %v2904 = vadd.f32 %v2651, %v2903
        %v2905 = vpop.f32.mrf.mxu0
        %v2906 = vadd.f32 %v2653, %v2905
        %2907 = vdwg.mxu0
        %v2908 = vand.u32 %v465, 4294901760
        %v2909 = vsub.f32 %v465, %v2908
        %2910 = vmatprep.subr.mxu0 %v2909
        %v2911 = vand.u32 %v464, 4294901760
        %v2912 = vsub.f32 %v464, %v2911
        %2913 = vmatpush1.msra.mxu0 %v2912
        %v2914 = vand.u32 %v457, 4294901760
        %v2915 = vsub.f32 %v457, %v2914
        %2916 = vmatprep.subr.mxu0 %v2915
        %v2917 = vand.u32 %v456, 4294901760
        %v2918 = vsub.f32 %v456, %v2917
        %2919 = vmatpush1.msra.mxu0 %v2918
        %v2920 = vand.u32 %v449, 4294901760
        %v2921 = vsub.f32 %v449, %v2920
        %2922 = vmatprep.subr.mxu0 %v2921
        %v2923 = vand.u32 %v448, 4294901760
        %v2924 = vsub.f32 %v448, %v2923
        %2925 = vmatpush1.msra.mxu0 %v2924
        %v2926 = vand.u32 %v441, 4294901760
        %v2927 = vsub.f32 %v441, %v2926
        %2928 = vmatprep.subr.mxu0 %v2927
        %v2929 = vand.u32 %v440, 4294901760
        %v2930 = vsub.f32 %v440, %v2929
        %2931 = vmatpush1.msra.mxu0 %v2930
        %v2932 = vand.u32 %v433, 4294901760
        %v2933 = vsub.f32 %v433, %v2932
        %2934 = vmatprep.subr.mxu0 %v2933
        %v2935 = vand.u32 %v432, 4294901760
        %v2936 = vsub.f32 %v432, %v2935
        %2937 = vmatpush1.msra.mxu0 %v2936
        %v2938 = vand.u32 %v425, 4294901760
        %v2939 = vsub.f32 %v425, %v2938
        %2940 = vmatprep.subr.mxu0 %v2939
        %v2941 = vand.u32 %v424, 4294901760
        %v2942 = vsub.f32 %v424, %v2941
        %2943 = vmatpush1.msra.mxu0 %v2942
        %v2944 = vand.u32 %v417, 4294901760
        %v2945 = vsub.f32 %v417, %v2944
        %2946 = vmatprep.subr.mxu0 %v2945
        %v2947 = vand.u32 %v416, 4294901760
        %v2948 = vsub.f32 %v416, %v2947
        %2949 = vmatpush1.msra.mxu0 %v2948
        %v2950 = vand.u32 %v409, 4294901760
        %v2951 = vsub.f32 %v409, %v2950
        %2952 = vmatprep.subr.mxu0 %v2951
        %v2953 = vand.u32 %v408, 4294901760
        %v2954 = vsub.f32 %v408, %v2953
        %2955 = vmatpush1.msra.mxu0 %v2954
        %v2956 = vand.u32 %v401, 4294901760
        %v2957 = vsub.f32 %v401, %v2956
        %2958 = vmatprep.subr.mxu0 %v2957
        %v2959 = vand.u32 %v400, 4294901760
        %v2960 = vsub.f32 %v400, %v2959
        %2961 = vmatpush1.msra.mxu0 %v2960
        %v2962 = vand.u32 %v393, 4294901760
        %v2963 = vsub.f32 %v393, %v2962
        %2964 = vmatprep.subr.mxu0 %v2963
        %v2965 = vand.u32 %v392, 4294901760
        %v2966 = vsub.f32 %v392, %v2965
        %2967 = vmatpush1.msra.mxu0 %v2966
        %v2968 = vand.u32 %v385, 4294901760
        %v2969 = vsub.f32 %v385, %v2968
        %2970 = vmatprep.subr.mxu0 %v2969
        %v2971 = vand.u32 %v384, 4294901760
        %v2972 = vsub.f32 %v384, %v2971
        %2973 = vmatpush1.msra.mxu0 %v2972
        %v2974 = vand.u32 %v377, 4294901760
        %v2975 = vsub.f32 %v377, %v2974
        %2976 = vmatprep.subr.mxu0 %v2975
        %v2977 = vand.u32 %v376, 4294901760
        %v2978 = vsub.f32 %v376, %v2977
        %2979 = vmatpush1.msra.mxu0 %v2978
        %v2980 = vand.u32 %v369, 4294901760
        %v2981 = vsub.f32 %v369, %v2980
        %2982 = vmatprep.subr.mxu0 %v2981
        %v2983 = vand.u32 %v368, 4294901760
        %v2984 = vsub.f32 %v368, %v2983
        %2985 = vmatpush1.msra.mxu0 %v2984
        %v2986 = vand.u32 %v361, 4294901760
        %v2987 = vsub.f32 %v361, %v2986
        %2988 = vmatprep.subr.mxu0 %v2987
        %v2989 = vand.u32 %v360, 4294901760
        %v2990 = vsub.f32 %v360, %v2989
        %2991 = vmatpush1.msra.mxu0 %v2990
        %v2992 = vand.u32 %v353, 4294901760
        %v2993 = vsub.f32 %v353, %v2992
        %2994 = vmatprep.subr.mxu0 %v2993
        %v2995 = vand.u32 %v352, 4294901760
        %v2996 = vsub.f32 %v352, %v2995
        %2997 = vmatpush1.msra.mxu0 %v2996
        %v2998 = vand.u32 %v345, 4294901760
        %v2999 = vsub.f32 %v345, %v2998
        %3000 = vmatprep.subr.mxu0 %v2999
        %v3001 = vand.u32 %v344, 4294901760
        %v3002 = vsub.f32 %v344, %v3001
        %3003 = vmatpush1.msra.mxu0 %v3002
        %3004 = vmatprep.subr.mxu0 0.0
        %3005 = vmatpush2.msra.mxu0 0.0
        %3006 = vmatprep.subr.mxu0 0.0
        %3007 = vmatpush2.msra.mxu0 0.0
        %3008 = vmatprep.subr.mxu0 0.0
        %3009 = vmatpush2.msra.mxu0 0.0
        %3010 = vmatprep.subr.mxu0 0.0
        %3011 = vmatpush2.msra.mxu0 0.0
        %3012 = vmatprep.subr.mxu0 0.0
        %3013 = vmatpush2.msra.mxu0 0.0
        %3014 = vmatprep.subr.mxu0 0.0
        %3015 = vmatpush2.msra.mxu0 0.0
        %3016 = vmatprep.subr.mxu0 0.0
        %3017 = vmatpush2.msra.mxu0 0.0
        %3018 = vmatprep.subr.mxu0 0.0
        %3019 = vmatpush2.msra.mxu0 0.0
        %3020 = vmatprep.subr.mxu0 0.0
        %3021 = vmatpush2.msra.mxu0 0.0
        %3022 = vmatprep.subr.mxu0 0.0
        %3023 = vmatpush2.msra.mxu0 0.0
        %3024 = vmatprep.subr.mxu0 0.0
        %3025 = vmatpush2.msra.mxu0 0.0
        %3026 = vmatprep.subr.mxu0 0.0
        %3027 = vmatpush2.msra.mxu0 0.0
        %3028 = vmatprep.subr.mxu0 0.0
        %3029 = vmatpush2.msra.mxu0 0.0
        %3030 = vmatprep.subr.mxu0 0.0
        %3031 = vmatpush2.msra.mxu0 0.0
        %3032 = vmatprep.subr.mxu0 0.0
        %3033 = vmatpush2.msra.mxu0 0.0
        %3034 = vmatprep.subr.mxu0 0.0
        %3035 = vmatpush2.msra.mxu0 0.0
        %3036 = vmatprep.mubr.f32.mxu0 0.0
        %v3037 = vand.u32 %v336, 4294901760
        %v3038 = vsub.f32 %v336, %v3037
        %3039 = vmatmul.mubr.f32.gmra.mxu0 %v3038
        %v3040 = vpop.f32.mrf.mxu0
        %v3041 = vadd.f32 %v2883, %v3040
        %v3042 = vpop.f32.mrf.mxu0
        %v3043 = vadd.f32 %v2885, %v3042
        %3044 = vmatprep.mubr.f32.mxu0 0.0
        %v3045 = vand.u32 %v337, 4294901760
        %v3046 = vsub.f32 %v337, %v3045
        %3047 = vmatmul.mubr.f32.gmra.mxu0 %v3046
        %v3048 = vpop.f32.mrf.mxu0
        %v3049 = vadd.f32 %v2890, %v3048
        %v3050 = vpop.f32.mrf.mxu0
        %v3051 = vadd.f32 %v2892, %v3050
        %3052 = vmatprep.mubr.f32.mxu0 0.0
        %v3053 = vand.u32 %v338, 4294901760
        %v3054 = vsub.f32 %v338, %v3053
        %3055 = vmatmul.mubr.f32.gmra.mxu0 %v3054
        %v3056 = vpop.f32.mrf.mxu0
        %v3057 = vadd.f32 %v2897, %v3056
        %v3058 = vpop.f32.mrf.mxu0
        %v3059 = vadd.f32 %v2899, %v3058
        %3060 = vmatprep.mubr.f32.mxu0 0.0
        %v3061 = vand.u32 %v339, 4294901760
        %v3062 = vsub.f32 %v339, %v3061
        %3063 = vmatmul.mubr.f32.gmra.mxu0 %v3062
        %v3064 = vpop.f32.mrf.mxu0
        %v3065 = vadd.f32 %v2904, %v3064
        %v3066 = vpop.f32.mrf.mxu0
        %v3067 = vadd.f32 %v2906, %v3066
        %3068 = vdwg.mxu0
        %v3069 = vand.u32 %v465, 4294901760
        %3070 = vmatprep.subr.mxu0 %v3069
        %v3071 = vand.u32 %v464, 4294901760
        %3072 = vmatpush1.msra.mxu0 %v3071
        %v3073 = vand.u32 %v457, 4294901760
        %3074 = vmatprep.subr.mxu0 %v3073
        %v3075 = vand.u32 %v456, 4294901760
        %3076 = vmatpush1.msra.mxu0 %v3075
        %v3077 = vand.u32 %v449, 4294901760
        %3078 = vmatprep.subr.mxu0 %v3077
        %v3079 = vand.u32 %v448, 4294901760
        %3080 = vmatpush1.msra.mxu0 %v3079
        %v3081 = vand.u32 %v441, 4294901760
        %3082 = vmatprep.subr.mxu0 %v3081
        %v3083 = vand.u32 %v440, 4294901760
        %3084 = vmatpush1.msra.mxu0 %v3083
        %v3085 = vand.u32 %v433, 4294901760
        %3086 = vmatprep.subr.mxu0 %v3085
        %v3087 = vand.u32 %v432, 4294901760
        %3088 = vmatpush1.msra.mxu0 %v3087
        %v3089 = vand.u32 %v425, 4294901760
        %3090 = vmatprep.subr.mxu0 %v3089
        %v3091 = vand.u32 %v424, 4294901760
        %3092 = vmatpush1.msra.mxu0 %v3091
        %v3093 = vand.u32 %v417, 4294901760
        %3094 = vmatprep.subr.mxu0 %v3093
        %v3095 = vand.u32 %v416, 4294901760
        %3096 = vmatpush1.msra.mxu0 %v3095
        %v3097 = vand.u32 %v409, 4294901760
        %3098 = vmatprep.subr.mxu0 %v3097
        %v3099 = vand.u32 %v408, 4294901760
        %3100 = vmatpush1.msra.mxu0 %v3099
        %v3101 = vand.u32 %v401, 4294901760
        %3102 = vmatprep.subr.mxu0 %v3101
        %v3103 = vand.u32 %v400, 4294901760
        %3104 = vmatpush1.msra.mxu0 %v3103
        %v3105 = vand.u32 %v393, 4294901760
        %3106 = vmatprep.subr.mxu0 %v3105
        %v3107 = vand.u32 %v392, 4294901760
        %3108 = vmatpush1.msra.mxu0 %v3107
        %v3109 = vand.u32 %v385, 4294901760
        %3110 = vmatprep.subr.mxu0 %v3109
        %v3111 = vand.u32 %v384, 4294901760
        %3112 = vmatpush1.msra.mxu0 %v3111
        %v3113 = vand.u32 %v377, 4294901760
        %3114 = vmatprep.subr.mxu0 %v3113
        %v3115 = vand.u32 %v376, 4294901760
        %3116 = vmatpush1.msra.mxu0 %v3115
        %v3117 = vand.u32 %v369, 4294901760
        %3118 = vmatprep.subr.mxu0 %v3117
        %v3119 = vand.u32 %v368, 4294901760
        %3120 = vmatpush1.msra.mxu0 %v3119
        %v3121 = vand.u32 %v361, 4294901760
        %3122 = vmatprep.subr.mxu0 %v3121
        %v3123 = vand.u32 %v360, 4294901760
        %3124 = vmatpush1.msra.mxu0 %v3123
        %v3125 = vand.u32 %v353, 4294901760
        %3126 = vmatprep.subr.mxu0 %v3125
        %v3127 = vand.u32 %v352, 4294901760
        %3128 = vmatpush1.msra.mxu0 %v3127
        %v3129 = vand.u32 %v345, 4294901760
        %3130 = vmatprep.subr.mxu0 %v3129
        %v3131 = vand.u32 %v344, 4294901760
        %3132 = vmatpush1.msra.mxu0 %v3131
        %3133 = vmatprep.subr.mxu0 0.0
        %3134 = vmatpush2.msra.mxu0 0.0
        %3135 = vmatprep.subr.mxu0 0.0
        %3136 = vmatpush2.msra.mxu0 0.0
        %3137 = vmatprep.subr.mxu0 0.0
        %3138 = vmatpush2.msra.mxu0 0.0
        %3139 = vmatprep.subr.mxu0 0.0
        %3140 = vmatpush2.msra.mxu0 0.0
        %3141 = vmatprep.subr.mxu0 0.0
        %3142 = vmatpush2.msra.mxu0 0.0
        %3143 = vmatprep.subr.mxu0 0.0
        %3144 = vmatpush2.msra.mxu0 0.0
        %3145 = vmatprep.subr.mxu0 0.0
        %3146 = vmatpush2.msra.mxu0 0.0
        %3147 = vmatprep.subr.mxu0 0.0
        %3148 = vmatpush2.msra.mxu0 0.0
        %3149 = vmatprep.subr.mxu0 0.0
        %3150 = vmatpush2.msra.mxu0 0.0
        %3151 = vmatprep.subr.mxu0 0.0
        %3152 = vmatpush2.msra.mxu0 0.0
        %3153 = vmatprep.subr.mxu0 0.0
        %3154 = vmatpush2.msra.mxu0 0.0
        %3155 = vmatprep.subr.mxu0 0.0
        %3156 = vmatpush2.msra.mxu0 0.0
        %3157 = vmatprep.subr.mxu0 0.0
        %3158 = vmatpush2.msra.mxu0 0.0
        %3159 = vmatprep.subr.mxu0 0.0
        %3160 = vmatpush2.msra.mxu0 0.0
        %3161 = vmatprep.subr.mxu0 0.0
        %3162 = vmatpush2.msra.mxu0 0.0
        %3163 = vmatprep.subr.mxu0 0.0
        %3164 = vmatpush2.msra.mxu0 0.0
        %3165 = vmatprep.mubr.f32.mxu0 0.0
        %v3166 = vand.u32 %v336, 4294901760
        %v3167 = vsub.f32 %v336, %v3166
        %v3168 = vand.u32 %v3167, 4294901760
        %3169 = vmatmul.mubr.f32.gmra.mxu0 %v3168
        %v3170 = vpop.f32.mrf.mxu0
        %v3171 = vadd.f32 %v3041, %v3170
        %v3172 = vpop.f32.mrf.mxu0
        %v3173 = vadd.f32 %v3043, %v3172
        %3174 = vmatprep.mubr.f32.mxu0 0.0
        %v3175 = vand.u32 %v337, 4294901760
        %v3176 = vsub.f32 %v337, %v3175
        %v3177 = vand.u32 %v3176, 4294901760
        %3178 = vmatmul.mubr.f32.gmra.mxu0 %v3177
        %v3179 = vpop.f32.mrf.mxu0
        %v3180 = vadd.f32 %v3049, %v3179
        %v3181 = vpop.f32.mrf.mxu0
        %v3182 = vadd.f32 %v3051, %v3181
        %3183 = vmatprep.mubr.f32.mxu0 0.0
        %v3184 = vand.u32 %v338, 4294901760
        %v3185 = vsub.f32 %v338, %v3184
        %v3186 = vand.u32 %v3185, 4294901760
        %3187 = vmatmul.mubr.f32.gmra.mxu0 %v3186
        %v3188 = vpop.f32.mrf.mxu0
        %v3189 = vadd.f32 %v3057, %v3188
        %v3190 = vpop.f32.mrf.mxu0
        %v3191 = vadd.f32 %v3059, %v3190
        %3192 = vmatprep.mubr.f32.mxu0 0.0
        %v3193 = vand.u32 %v339, 4294901760
        %v3194 = vsub.f32 %v339, %v3193
        %v3195 = vand.u32 %v3194, 4294901760
        %3196 = vmatmul.mubr.f32.gmra.mxu0 %v3195
        %v3197 = vpop.f32.mrf.mxu0
        %v3198 = vadd.f32 %v3065, %v3197
        %v3199 = vpop.f32.mrf.mxu0
        %v3200 = vadd.f32 %v3067, %v3199
        %3201 = vdwg.mxu0
        %v3202 = vand.u32 %v465, 4294901760
        %v3203 = vsub.f32 %v465, %v3202
        %v3204 = vand.u32 %v3203, 4294901760
        %3205 = vmatprep.subr.mxu0 %v3204
        %v3206 = vand.u32 %v464, 4294901760
        %v3207 = vsub.f32 %v464, %v3206
        %v3208 = vand.u32 %v3207, 4294901760
        %3209 = vmatpush1.msra.mxu0 %v3208
        %v3210 = vand.u32 %v457, 4294901760
        %v3211 = vsub.f32 %v457, %v3210
        %v3212 = vand.u32 %v3211, 4294901760
        %3213 = vmatprep.subr.mxu0 %v3212
        %v3214 = vand.u32 %v456, 4294901760
        %v3215 = vsub.f32 %v456, %v3214
        %v3216 = vand.u32 %v3215, 4294901760
        %3217 = vmatpush1.msra.mxu0 %v3216
        %v3218 = vand.u32 %v449, 4294901760
        %v3219 = vsub.f32 %v449, %v3218
        %v3220 = vand.u32 %v3219, 4294901760
        %3221 = vmatprep.subr.mxu0 %v3220
        %v3222 = vand.u32 %v448, 4294901760
        %v3223 = vsub.f32 %v448, %v3222
        %v3224 = vand.u32 %v3223, 4294901760
        %3225 = vmatpush1.msra.mxu0 %v3224
        %v3226 = vand.u32 %v441, 4294901760
        %v3227 = vsub.f32 %v441, %v3226
        %v3228 = vand.u32 %v3227, 4294901760
        %3229 = vmatprep.subr.mxu0 %v3228
        %v3230 = vand.u32 %v440, 4294901760
        %v3231 = vsub.f32 %v440, %v3230
        %v3232 = vand.u32 %v3231, 4294901760
        %3233 = vmatpush1.msra.mxu0 %v3232
        %v3234 = vand.u32 %v433, 4294901760
        %v3235 = vsub.f32 %v433, %v3234
        %v3236 = vand.u32 %v3235, 4294901760
        %3237 = vmatprep.subr.mxu0 %v3236
        %v3238 = vand.u32 %v432, 4294901760
        %v3239 = vsub.f32 %v432, %v3238
        %v3240 = vand.u32 %v3239, 4294901760
        %3241 = vmatpush1.msra.mxu0 %v3240
        %v3242 = vand.u32 %v425, 4294901760
        %v3243 = vsub.f32 %v425, %v3242
        %v3244 = vand.u32 %v3243, 4294901760
        %3245 = vmatprep.subr.mxu0 %v3244
        %v3246 = vand.u32 %v424, 4294901760
        %v3247 = vsub.f32 %v424, %v3246
        %v3248 = vand.u32 %v3247, 4294901760
        %3249 = vmatpush1.msra.mxu0 %v3248
        %v3250 = vand.u32 %v417, 4294901760
        %v3251 = vsub.f32 %v417, %v3250
        %v3252 = vand.u32 %v3251, 4294901760
        %3253 = vmatprep.subr.mxu0 %v3252
        %v3254 = vand.u32 %v416, 4294901760
        %v3255 = vsub.f32 %v416, %v3254
        %v3256 = vand.u32 %v3255, 4294901760
        %3257 = vmatpush1.msra.mxu0 %v3256
        %v3258 = vand.u32 %v409, 4294901760
        %v3259 = vsub.f32 %v409, %v3258
        %v3260 = vand.u32 %v3259, 4294901760
        %3261 = vmatprep.subr.mxu0 %v3260
        %v3262 = vand.u32 %v408, 4294901760
        %v3263 = vsub.f32 %v408, %v3262
        %v3264 = vand.u32 %v3263, 4294901760
        %3265 = vmatpush1.msra.mxu0 %v3264
        %v3266 = vand.u32 %v401, 4294901760
        %v3267 = vsub.f32 %v401, %v3266
        %v3268 = vand.u32 %v3267, 4294901760
        %3269 = vmatprep.subr.mxu0 %v3268
        %v3270 = vand.u32 %v400, 4294901760
        %v3271 = vsub.f32 %v400, %v3270
        %v3272 = vand.u32 %v3271, 4294901760
        %3273 = vmatpush1.msra.mxu0 %v3272
        %v3274 = vand.u32 %v393, 4294901760
        %v3275 = vsub.f32 %v393, %v3274
        %v3276 = vand.u32 %v3275, 4294901760
        %3277 = vmatprep.subr.mxu0 %v3276
        %v3278 = vand.u32 %v392, 4294901760
        %v3279 = vsub.f32 %v392, %v3278
        %v3280 = vand.u32 %v3279, 4294901760
        %3281 = vmatpush1.msra.mxu0 %v3280
        %v3282 = vand.u32 %v385, 4294901760
        %v3283 = vsub.f32 %v385, %v3282
        %v3284 = vand.u32 %v3283, 4294901760
        %3285 = vmatprep.subr.mxu0 %v3284
        %v3286 = vand.u32 %v384, 4294901760
        %v3287 = vsub.f32 %v384, %v3286
        %v3288 = vand.u32 %v3287, 4294901760
        %3289 = vmatpush1.msra.mxu0 %v3288
        %v3290 = vand.u32 %v377, 4294901760
        %v3291 = vsub.f32 %v377, %v3290
        %v3292 = vand.u32 %v3291, 4294901760
        %3293 = vmatprep.subr.mxu0 %v3292
        %v3294 = vand.u32 %v376, 4294901760
        %v3295 = vsub.f32 %v376, %v3294
        %v3296 = vand.u32 %v3295, 4294901760
        %3297 = vmatpush1.msra.mxu0 %v3296
        %v3298 = vand.u32 %v369, 4294901760
        %v3299 = vsub.f32 %v369, %v3298
        %v3300 = vand.u32 %v3299, 4294901760
        %3301 = vmatprep.subr.mxu0 %v3300
        %v3302 = vand.u32 %v368, 4294901760
        %v3303 = vsub.f32 %v368, %v3302
        %v3304 = vand.u32 %v3303, 4294901760
        %3305 = vmatpush1.msra.mxu0 %v3304
        %v3306 = vand.u32 %v361, 4294901760
        %v3307 = vsub.f32 %v361, %v3306
        %v3308 = vand.u32 %v3307, 4294901760
        %3309 = vmatprep.subr.mxu0 %v3308
        %v3310 = vand.u32 %v360, 4294901760
        %v3311 = vsub.f32 %v360, %v3310
        %v3312 = vand.u32 %v3311, 4294901760
        %3313 = vmatpush1.msra.mxu0 %v3312
        %v3314 = vand.u32 %v353, 4294901760
        %v3315 = vsub.f32 %v353, %v3314
        %v3316 = vand.u32 %v3315, 4294901760
        %3317 = vmatprep.subr.mxu0 %v3316
        %v3318 = vand.u32 %v352, 4294901760
        %v3319 = vsub.f32 %v352, %v3318
        %v3320 = vand.u32 %v3319, 4294901760
        %3321 = vmatpush1.msra.mxu0 %v3320
        %v3322 = vand.u32 %v345, 4294901760
        %v3323 = vsub.f32 %v345, %v3322
        %v3324 = vand.u32 %v3323, 4294901760
        %3325 = vmatprep.subr.mxu0 %v3324
        %v3326 = vand.u32 %v344, 4294901760
        %v3327 = vsub.f32 %v344, %v3326
        %v3328 = vand.u32 %v3327, 4294901760
        %3329 = vmatpush1.msra.mxu0 %v3328
        %3330 = vmatprep.subr.mxu0 0.0
        %3331 = vmatpush2.msra.mxu0 0.0
        %3332 = vmatprep.subr.mxu0 0.0
        %3333 = vmatpush2.msra.mxu0 0.0
        %3334 = vmatprep.subr.mxu0 0.0
        %3335 = vmatpush2.msra.mxu0 0.0
        %3336 = vmatprep.subr.mxu0 0.0
        %3337 = vmatpush2.msra.mxu0 0.0
        %3338 = vmatprep.subr.mxu0 0.0
        %3339 = vmatpush2.msra.mxu0 0.0
        %3340 = vmatprep.subr.mxu0 0.0
        %3341 = vmatpush2.msra.mxu0 0.0
        %3342 = vmatprep.subr.mxu0 0.0
        %3343 = vmatpush2.msra.mxu0 0.0
        %3344 = vmatprep.subr.mxu0 0.0
        %3345 = vmatpush2.msra.mxu0 0.0
        %3346 = vmatprep.subr.mxu0 0.0
        %3347 = vmatpush2.msra.mxu0 0.0
        %3348 = vmatprep.subr.mxu0 0.0
        %3349 = vmatpush2.msra.mxu0 0.0
        %3350 = vmatprep.subr.mxu0 0.0
        %3351 = vmatpush2.msra.mxu0 0.0
        %3352 = vmatprep.subr.mxu0 0.0
        %3353 = vmatpush2.msra.mxu0 0.0
        %3354 = vmatprep.subr.mxu0 0.0
        %3355 = vmatpush2.msra.mxu0 0.0
        %3356 = vmatprep.subr.mxu0 0.0
        %3357 = vmatpush2.msra.mxu0 0.0
        %3358 = vmatprep.subr.mxu0 0.0
        %3359 = vmatpush2.msra.mxu0 0.0
        %3360 = vmatprep.subr.mxu0 0.0
        %3361 = vmatpush2.msra.mxu0 0.0
        %3362 = vmatprep.mubr.f32.mxu0 0.0
        %v3363 = vand.u32 %v336, 4294901760
        %3364 = vmatmul.mubr.f32.gmra.mxu0 %v3363
        %v3365 = vpop.f32.mrf.mxu0
        %v3366 = vadd.f32 %v3171, %v3365
        %v3367 = vpop.f32.mrf.mxu0
        %v3368 = vadd.f32 %v3173, %v3367
        %3369 = vmatprep.mubr.f32.mxu0 0.0
        %v3370 = vand.u32 %v337, 4294901760
        %3371 = vmatmul.mubr.f32.gmra.mxu0 %v3370
        %v3372 = vpop.f32.mrf.mxu0
        %v3373 = vadd.f32 %v3180, %v3372
        %v3374 = vpop.f32.mrf.mxu0
        %v3375 = vadd.f32 %v3182, %v3374
        %3376 = vmatprep.mubr.f32.mxu0 0.0
        %v3377 = vand.u32 %v338, 4294901760
        %3378 = vmatmul.mubr.f32.gmra.mxu0 %v3377
        %v3379 = vpop.f32.mrf.mxu0
        %v3380 = vadd.f32 %v3189, %v3379
        %v3381 = vpop.f32.mrf.mxu0
        %v3382 = vadd.f32 %v3191, %v3381
        %3383 = vmatprep.mubr.f32.mxu0 0.0
        %v3384 = vand.u32 %v339, 4294901760
        %3385 = vmatmul.mubr.f32.gmra.mxu0 %v3384
        %v3386 = vpop.f32.mrf.mxu0
        %v3387 = vadd.f32 %v3198, %v3386
        %v3388 = vpop.f32.mrf.mxu0
        %v3389 = vadd.f32 %v3200, %v3388
        %3390 = vdwg.mxu0
        %v3391 = vand.u32 %v465, 4294901760
        %3392 = vmatprep.subr.mxu0 %v3391
        %v3393 = vand.u32 %v464, 4294901760
        %3394 = vmatpush1.msra.mxu0 %v3393
        %v3395 = vand.u32 %v457, 4294901760
        %3396 = vmatprep.subr.mxu0 %v3395
        %v3397 = vand.u32 %v456, 4294901760
        %3398 = vmatpush1.msra.mxu0 %v3397
        %v3399 = vand.u32 %v449, 4294901760
        %3400 = vmatprep.subr.mxu0 %v3399
        %v3401 = vand.u32 %v448, 4294901760
        %3402 = vmatpush1.msra.mxu0 %v3401
        %v3403 = vand.u32 %v441, 4294901760
        %3404 = vmatprep.subr.mxu0 %v3403
        %v3405 = vand.u32 %v440, 4294901760
        %3406 = vmatpush1.msra.mxu0 %v3405
        %v3407 = vand.u32 %v433, 4294901760
        %3408 = vmatprep.subr.mxu0 %v3407
        %v3409 = vand.u32 %v432, 4294901760
        %3410 = vmatpush1.msra.mxu0 %v3409
        %v3411 = vand.u32 %v425, 4294901760
        %3412 = vmatprep.subr.mxu0 %v3411
        %v3413 = vand.u32 %v424, 4294901760
        %3414 = vmatpush1.msra.mxu0 %v3413
        %v3415 = vand.u32 %v417, 4294901760
        %3416 = vmatprep.subr.mxu0 %v3415
        %v3417 = vand.u32 %v416, 4294901760
        %3418 = vmatpush1.msra.mxu0 %v3417
        %v3419 = vand.u32 %v409, 4294901760
        %3420 = vmatprep.subr.mxu0 %v3419
        %v3421 = vand.u32 %v408, 4294901760
        %3422 = vmatpush1.msra.mxu0 %v3421
        %v3423 = vand.u32 %v401, 4294901760
        %3424 = vmatprep.subr.mxu0 %v3423
        %v3425 = vand.u32 %v400, 4294901760
        %3426 = vmatpush1.msra.mxu0 %v3425
        %v3427 = vand.u32 %v393, 4294901760
        %3428 = vmatprep.subr.mxu0 %v3427
        %v3429 = vand.u32 %v392, 4294901760
        %3430 = vmatpush1.msra.mxu0 %v3429
        %v3431 = vand.u32 %v385, 4294901760
        %3432 = vmatprep.subr.mxu0 %v3431
        %v3433 = vand.u32 %v384, 4294901760
        %3434 = vmatpush1.msra.mxu0 %v3433
        %v3435 = vand.u32 %v377, 4294901760
        %3436 = vmatprep.subr.mxu0 %v3435
        %v3437 = vand.u32 %v376, 4294901760
        %3438 = vmatpush1.msra.mxu0 %v3437
        %v3439 = vand.u32 %v369, 4294901760
        %3440 = vmatprep.subr.mxu0 %v3439
        %v3441 = vand.u32 %v368, 4294901760
        %3442 = vmatpush1.msra.mxu0 %v3441
        %v3443 = vand.u32 %v361, 4294901760
        %3444 = vmatprep.subr.mxu0 %v3443
        %v3445 = vand.u32 %v360, 4294901760
        %3446 = vmatpush1.msra.mxu0 %v3445
        %v3447 = vand.u32 %v353, 4294901760
        %3448 = vmatprep.subr.mxu0 %v3447
        %v3449 = vand.u32 %v352, 4294901760
        %3450 = vmatpush1.msra.mxu0 %v3449
        %v3451 = vand.u32 %v345, 4294901760
        %3452 = vmatprep.subr.mxu0 %v3451
        %v3453 = vand.u32 %v344, 4294901760
        %3454 = vmatpush1.msra.mxu0 %v3453
        %3455 = vmatprep.subr.mxu0 0.0
        %3456 = vmatpush2.msra.mxu0 0.0
        %3457 = vmatprep.subr.mxu0 0.0
        %3458 = vmatpush2.msra.mxu0 0.0
        %3459 = vmatprep.subr.mxu0 0.0
        %3460 = vmatpush2.msra.mxu0 0.0
        %3461 = vmatprep.subr.mxu0 0.0
        %3462 = vmatpush2.msra.mxu0 0.0
        %3463 = vmatprep.subr.mxu0 0.0
        %3464 = vmatpush2.msra.mxu0 0.0
        %3465 = vmatprep.subr.mxu0 0.0
        %3466 = vmatpush2.msra.mxu0 0.0
        %3467 = vmatprep.subr.mxu0 0.0
        %3468 = vmatpush2.msra.mxu0 0.0
        %3469 = vmatprep.subr.mxu0 0.0
        %3470 = vmatpush2.msra.mxu0 0.0
        %3471 = vmatprep.subr.mxu0 0.0
        %3472 = vmatpush2.msra.mxu0 0.0
        %3473 = vmatprep.subr.mxu0 0.0
        %3474 = vmatpush2.msra.mxu0 0.0
        %3475 = vmatprep.subr.mxu0 0.0
        %3476 = vmatpush2.msra.mxu0 0.0
        %3477 = vmatprep.subr.mxu0 0.0
        %3478 = vmatpush2.msra.mxu0 0.0
        %3479 = vmatprep.subr.mxu0 0.0
        %3480 = vmatpush2.msra.mxu0 0.0
        %3481 = vmatprep.subr.mxu0 0.0
        %3482 = vmatpush2.msra.mxu0 0.0
        %3483 = vmatprep.subr.mxu0 0.0
        %3484 = vmatpush2.msra.mxu0 0.0
        %3485 = vmatprep.subr.mxu0 0.0
        %3486 = vmatpush2.msra.mxu0 0.0
        %3487 = vmatprep.mubr.f32.mxu0 0.0
        %v3488 = vand.u32 %v336, 4294901760
        %3489 = vmatmul.mubr.f32.gmra.mxu0 %v3488
        %v3490 = vpop.f32.mrf.mxu0
        %v3491 = vadd.f32 %v3366, %v3490
        %v3492 = vpop.f32.mrf.mxu0
        %v3493 = vadd.f32 %v3368, %v3492
        %3494 = vmatprep.mubr.f32.mxu0 0.0
        %v3495 = vand.u32 %v337, 4294901760
        %3496 = vmatmul.mubr.f32.gmra.mxu0 %v3495
        %v3497 = vpop.f32.mrf.mxu0
        %v3498 = vadd.f32 %v3373, %v3497
        %v3499 = vpop.f32.mrf.mxu0
        %v3500 = vadd.f32 %v3375, %v3499
        %3501 = vmatprep.mubr.f32.mxu0 0.0
        %v3502 = vand.u32 %v338, 4294901760
        %3503 = vmatmul.mubr.f32.gmra.mxu0 %v3502
        %v3504 = vpop.f32.mrf.mxu0
        %v3505 = vadd.f32 %v3380, %v3504
        %v3506 = vpop.f32.mrf.mxu0
        %v3507 = vadd.f32 %v3382, %v3506
        %3508 = vmatprep.mubr.f32.mxu0 0.0
        %v3509 = vand.u32 %v339, 4294901760
        %3510 = vmatmul.mubr.f32.gmra.mxu0 %v3509
        %v3511 = vpop.f32.mrf.mxu0
        %v3512 = vadd.f32 %v3387, %v3511
        %v3513 = vpop.f32.mrf.mxu0
        %v3514 = vadd.f32 %v3389, %v3513
        %3515 = vdwg.mxu0
        %v3516 = vand.u32 %v467, 4294901760
        %3517 = vmatprep.subr.mxu0 %v3516
        %v3518 = vand.u32 %v466, 4294901760
        %3519 = vmatpush1.msra.mxu0 %v3518
        %v3520 = vand.u32 %v459, 4294901760
        %3521 = vmatprep.subr.mxu0 %v3520
        %v3522 = vand.u32 %v458, 4294901760
        %3523 = vmatpush1.msra.mxu0 %v3522
        %v3524 = vand.u32 %v451, 4294901760
        %3525 = vmatprep.subr.mxu0 %v3524
        %v3526 = vand.u32 %v450, 4294901760
        %3527 = vmatpush1.msra.mxu0 %v3526
        %v3528 = vand.u32 %v443, 4294901760
        %3529 = vmatprep.subr.mxu0 %v3528
        %v3530 = vand.u32 %v442, 4294901760
        %3531 = vmatpush1.msra.mxu0 %v3530
        %v3532 = vand.u32 %v435, 4294901760
        %3533 = vmatprep.subr.mxu0 %v3532
        %v3534 = vand.u32 %v434, 4294901760
        %3535 = vmatpush1.msra.mxu0 %v3534
        %v3536 = vand.u32 %v427, 4294901760
        %3537 = vmatprep.subr.mxu0 %v3536
        %v3538 = vand.u32 %v426, 4294901760
        %3539 = vmatpush1.msra.mxu0 %v3538
        %v3540 = vand.u32 %v419, 4294901760
        %3541 = vmatprep.subr.mxu0 %v3540
        %v3542 = vand.u32 %v418, 4294901760
        %3543 = vmatpush1.msra.mxu0 %v3542
        %v3544 = vand.u32 %v411, 4294901760
        %3545 = vmatprep.subr.mxu0 %v3544
        %v3546 = vand.u32 %v410, 4294901760
        %3547 = vmatpush1.msra.mxu0 %v3546
        %v3548 = vand.u32 %v403, 4294901760
        %3549 = vmatprep.subr.mxu0 %v3548
        %v3550 = vand.u32 %v402, 4294901760
        %3551 = vmatpush1.msra.mxu0 %v3550
        %v3552 = vand.u32 %v395, 4294901760
        %3553 = vmatprep.subr.mxu0 %v3552
        %v3554 = vand.u32 %v394, 4294901760
        %3555 = vmatpush1.msra.mxu0 %v3554
        %v3556 = vand.u32 %v387, 4294901760
        %3557 = vmatprep.subr.mxu0 %v3556
        %v3558 = vand.u32 %v386, 4294901760
        %3559 = vmatpush1.msra.mxu0 %v3558
        %v3560 = vand.u32 %v379, 4294901760
        %3561 = vmatprep.subr.mxu0 %v3560
        %v3562 = vand.u32 %v378, 4294901760
        %3563 = vmatpush1.msra.mxu0 %v3562
        %v3564 = vand.u32 %v371, 4294901760
        %3565 = vmatprep.subr.mxu0 %v3564
        %v3566 = vand.u32 %v370, 4294901760
        %3567 = vmatpush1.msra.mxu0 %v3566
        %v3568 = vand.u32 %v363, 4294901760
        %3569 = vmatprep.subr.mxu0 %v3568
        %v3570 = vand.u32 %v362, 4294901760
        %3571 = vmatpush1.msra.mxu0 %v3570
        %v3572 = vand.u32 %v355, 4294901760
        %3573 = vmatprep.subr.mxu0 %v3572
        %v3574 = vand.u32 %v354, 4294901760
        %3575 = vmatpush1.msra.mxu0 %v3574
        %v3576 = vand.u32 %v347, 4294901760
        %3577 = vmatprep.subr.mxu0 %v3576
        %v3578 = vand.u32 %v346, 4294901760
        %3579 = vmatpush1.msra.mxu0 %v3578
        %3580 = vmatprep.subr.mxu0 0.0
        %3581 = vmatpush2.msra.mxu0 0.0
        %3582 = vmatprep.subr.mxu0 0.0
        %3583 = vmatpush2.msra.mxu0 0.0
        %3584 = vmatprep.subr.mxu0 0.0
        %3585 = vmatpush2.msra.mxu0 0.0
        %3586 = vmatprep.subr.mxu0 0.0
        %3587 = vmatpush2.msra.mxu0 0.0
        %3588 = vmatprep.subr.mxu0 0.0
        %3589 = vmatpush2.msra.mxu0 0.0
        %3590 = vmatprep.subr.mxu0 0.0
        %3591 = vmatpush2.msra.mxu0 0.0
        %3592 = vmatprep.subr.mxu0 0.0
        %3593 = vmatpush2.msra.mxu0 0.0
        %3594 = vmatprep.subr.mxu0 0.0
        %3595 = vmatpush2.msra.mxu0 0.0
        %3596 = vmatprep.subr.mxu0 0.0
        %3597 = vmatpush2.msra.mxu0 0.0
        %3598 = vmatprep.subr.mxu0 0.0
        %3599 = vmatpush2.msra.mxu0 0.0
        %3600 = vmatprep.subr.mxu0 0.0
        %3601 = vmatpush2.msra.mxu0 0.0
        %3602 = vmatprep.subr.mxu0 0.0
        %3603 = vmatpush2.msra.mxu0 0.0
        %3604 = vmatprep.subr.mxu0 0.0
        %3605 = vmatpush2.msra.mxu0 0.0
        %3606 = vmatprep.subr.mxu0 0.0
        %3607 = vmatpush2.msra.mxu0 0.0
        %3608 = vmatprep.subr.mxu0 0.0
        %3609 = vmatpush2.msra.mxu0 0.0
        %3610 = vmatprep.subr.mxu0 0.0
        %3611 = vmatpush2.msra.mxu0 0.0
        %3612 = vmatprep.mubr.f32.mxu0 0.0
        %v3613 = vand.u32 %v336, 4294901760
        %v3614 = vsub.f32 %v336, %v3613
        %v3615 = vand.u32 %v3614, 4294901760
        %v3616 = vsub.f32 %v3614, %v3615
        %v3617 = vand.u32 %v3616, 4294901760
        %3618 = vmatmul.mubr.f32.gmra.mxu0 %v3617
        %v3619 = vpop.f32.mrf.mxu0
        %v3620 = vadd.f32 %v497, %v3619
        %v3621 = vpop.f32.mrf.mxu0
        %v3622 = vadd.f32 %v501, %v3621
        %3623 = vmatprep.mubr.f32.mxu0 0.0
        %v3624 = vand.u32 %v337, 4294901760
        %v3625 = vsub.f32 %v337, %v3624
        %v3626 = vand.u32 %v3625, 4294901760
        %v3627 = vsub.f32 %v3625, %v3626
        %v3628 = vand.u32 %v3627, 4294901760
        %3629 = vmatmul.mubr.f32.gmra.mxu0 %v3628
        %v3630 = vpop.f32.mrf.mxu0
        %v3631 = vadd.f32 %v497, %v3630
        %v3632 = vpop.f32.mrf.mxu0
        %v3633 = vadd.f32 %v501, %v3632
        %3634 = vmatprep.mubr.f32.mxu0 0.0
        %v3635 = vand.u32 %v338, 4294901760
        %v3636 = vsub.f32 %v338, %v3635
        %v3637 = vand.u32 %v3636, 4294901760
        %v3638 = vsub.f32 %v3636, %v3637
        %v3639 = vand.u32 %v3638, 4294901760
        %3640 = vmatmul.mubr.f32.gmra.mxu0 %v3639
        %v3641 = vpop.f32.mrf.mxu0
        %v3642 = vadd.f32 %v497, %v3641
        %v3643 = vpop.f32.mrf.mxu0
        %v3644 = vadd.f32 %v501, %v3643
        %3645 = vmatprep.mubr.f32.mxu0 0.0
        %v3646 = vand.u32 %v339, 4294901760
        %v3647 = vsub.f32 %v339, %v3646
        %v3648 = vand.u32 %v3647, 4294901760
        %v3649 = vsub.f32 %v3647, %v3648
        %v3650 = vand.u32 %v3649, 4294901760
        %3651 = vmatmul.mubr.f32.gmra.mxu0 %v3650
        %v3652 = vpop.f32.mrf.mxu0
        %v3653 = vadd.f32 %v497, %v3652
        %v3654 = vpop.f32.mrf.mxu0
        %v3655 = vadd.f32 %v501, %v3654
        %3656 = vdwg.mxu0
        %v3657 = vand.u32 %v467, 4294901760
        %v3658 = vsub.f32 %v467, %v3657
        %v3659 = vand.u32 %v3658, 4294901760
        %v3660 = vsub.f32 %v3658, %v3659
        %v3661 = vand.u32 %v3660, 4294901760
        %3662 = vmatprep.subr.mxu0 %v3661
        %v3663 = vand.u32 %v466, 4294901760
        %v3664 = vsub.f32 %v466, %v3663
        %v3665 = vand.u32 %v3664, 4294901760
        %v3666 = vsub.f32 %v3664, %v3665
        %v3667 = vand.u32 %v3666, 4294901760
        %3668 = vmatpush1.msra.mxu0 %v3667
        %v3669 = vand.u32 %v459, 4294901760
        %v3670 = vsub.f32 %v459, %v3669
        %v3671 = vand.u32 %v3670, 4294901760
        %v3672 = vsub.f32 %v3670, %v3671
        %v3673 = vand.u32 %v3672, 4294901760
        %3674 = vmatprep.subr.mxu0 %v3673
        %v3675 = vand.u32 %v458, 4294901760
        %v3676 = vsub.f32 %v458, %v3675
        %v3677 = vand.u32 %v3676, 4294901760
        %v3678 = vsub.f32 %v3676, %v3677
        %v3679 = vand.u32 %v3678, 4294901760
        %3680 = vmatpush1.msra.mxu0 %v3679
        %v3681 = vand.u32 %v451, 4294901760
        %v3682 = vsub.f32 %v451, %v3681
        %v3683 = vand.u32 %v3682, 4294901760
        %v3684 = vsub.f32 %v3682, %v3683
        %v3685 = vand.u32 %v3684, 4294901760
        %3686 = vmatprep.subr.mxu0 %v3685
        %v3687 = vand.u32 %v450, 4294901760
        %v3688 = vsub.f32 %v450, %v3687
        %v3689 = vand.u32 %v3688, 4294901760
        %v3690 = vsub.f32 %v3688, %v3689
        %v3691 = vand.u32 %v3690, 4294901760
        %3692 = vmatpush1.msra.mxu0 %v3691
        %v3693 = vand.u32 %v443, 4294901760
        %v3694 = vsub.f32 %v443, %v3693
        %v3695 = vand.u32 %v3694, 4294901760
        %v3696 = vsub.f32 %v3694, %v3695
        %v3697 = vand.u32 %v3696, 4294901760
        %3698 = vmatprep.subr.mxu0 %v3697
        %v3699 = vand.u32 %v442, 4294901760
        %v3700 = vsub.f32 %v442, %v3699
        %v3701 = vand.u32 %v3700, 4294901760
        %v3702 = vsub.f32 %v3700, %v3701
        %v3703 = vand.u32 %v3702, 4294901760
        %3704 = vmatpush1.msra.mxu0 %v3703
        %v3705 = vand.u32 %v435, 4294901760
        %v3706 = vsub.f32 %v435, %v3705
        %v3707 = vand.u32 %v3706, 4294901760
        %v3708 = vsub.f32 %v3706, %v3707
        %v3709 = vand.u32 %v3708, 4294901760
        %3710 = vmatprep.subr.mxu0 %v3709
        %v3711 = vand.u32 %v434, 4294901760
        %v3712 = vsub.f32 %v434, %v3711
        %v3713 = vand.u32 %v3712, 4294901760
        %v3714 = vsub.f32 %v3712, %v3713
        %v3715 = vand.u32 %v3714, 4294901760
        %3716 = vmatpush1.msra.mxu0 %v3715
        %v3717 = vand.u32 %v427, 4294901760
        %v3718 = vsub.f32 %v427, %v3717
        %v3719 = vand.u32 %v3718, 4294901760
        %v3720 = vsub.f32 %v3718, %v3719
        %v3721 = vand.u32 %v3720, 4294901760
        %3722 = vmatprep.subr.mxu0 %v3721
        %v3723 = vand.u32 %v426, 4294901760
        %v3724 = vsub.f32 %v426, %v3723
        %v3725 = vand.u32 %v3724, 4294901760
        %v3726 = vsub.f32 %v3724, %v3725
        %v3727 = vand.u32 %v3726, 4294901760
        %3728 = vmatpush1.msra.mxu0 %v3727
        %v3729 = vand.u32 %v419, 4294901760
        %v3730 = vsub.f32 %v419, %v3729
        %v3731 = vand.u32 %v3730, 4294901760
        %v3732 = vsub.f32 %v3730, %v3731
        %v3733 = vand.u32 %v3732, 4294901760
        %3734 = vmatprep.subr.mxu0 %v3733
        %v3735 = vand.u32 %v418, 4294901760
        %v3736 = vsub.f32 %v418, %v3735
        %v3737 = vand.u32 %v3736, 4294901760
        %v3738 = vsub.f32 %v3736, %v3737
        %v3739 = vand.u32 %v3738, 4294901760
        %3740 = vmatpush1.msra.mxu0 %v3739
        %v3741 = vand.u32 %v411, 4294901760
        %v3742 = vsub.f32 %v411, %v3741
        %v3743 = vand.u32 %v3742, 4294901760
        %v3744 = vsub.f32 %v3742, %v3743
        %v3745 = vand.u32 %v3744, 4294901760
        %3746 = vmatprep.subr.mxu0 %v3745
        %v3747 = vand.u32 %v410, 4294901760
        %v3748 = vsub.f32 %v410, %v3747
        %v3749 = vand.u32 %v3748, 4294901760
        %v3750 = vsub.f32 %v3748, %v3749
        %v3751 = vand.u32 %v3750, 4294901760
        %3752 = vmatpush1.msra.mxu0 %v3751
        %v3753 = vand.u32 %v403, 4294901760
        %v3754 = vsub.f32 %v403, %v3753
        %v3755 = vand.u32 %v3754, 4294901760
        %v3756 = vsub.f32 %v3754, %v3755
        %v3757 = vand.u32 %v3756, 4294901760
        %3758 = vmatprep.subr.mxu0 %v3757
        %v3759 = vand.u32 %v402, 4294901760
        %v3760 = vsub.f32 %v402, %v3759
        %v3761 = vand.u32 %v3760, 4294901760
        %v3762 = vsub.f32 %v3760, %v3761
        %v3763 = vand.u32 %v3762, 4294901760
        %3764 = vmatpush1.msra.mxu0 %v3763
        %v3765 = vand.u32 %v395, 4294901760
        %v3766 = vsub.f32 %v395, %v3765
        %v3767 = vand.u32 %v3766, 4294901760
        %v3768 = vsub.f32 %v3766, %v3767
        %v3769 = vand.u32 %v3768, 4294901760
        %3770 = vmatprep.subr.mxu0 %v3769
        %v3771 = vand.u32 %v394, 4294901760
        %v3772 = vsub.f32 %v394, %v3771
        %v3773 = vand.u32 %v3772, 4294901760
        %v3774 = vsub.f32 %v3772, %v3773
        %v3775 = vand.u32 %v3774, 4294901760
        %3776 = vmatpush1.msra.mxu0 %v3775
        %v3777 = vand.u32 %v387, 4294901760
        %v3778 = vsub.f32 %v387, %v3777
        %v3779 = vand.u32 %v3778, 4294901760
        %v3780 = vsub.f32 %v3778, %v3779
        %v3781 = vand.u32 %v3780, 4294901760
        %3782 = vmatprep.subr.mxu0 %v3781
        %v3783 = vand.u32 %v386, 4294901760
        %v3784 = vsub.f32 %v386, %v3783
        %v3785 = vand.u32 %v3784, 4294901760
        %v3786 = vsub.f32 %v3784, %v3785
        %v3787 = vand.u32 %v3786, 4294901760
        %3788 = vmatpush1.msra.mxu0 %v3787
        %v3789 = vand.u32 %v379, 4294901760
        %v3790 = vsub.f32 %v379, %v3789
        %v3791 = vand.u32 %v3790, 4294901760
        %v3792 = vsub.f32 %v3790, %v3791
        %v3793 = vand.u32 %v3792, 4294901760
        %3794 = vmatprep.subr.mxu0 %v3793
        %v3795 = vand.u32 %v378, 4294901760
        %v3796 = vsub.f32 %v378, %v3795
        %v3797 = vand.u32 %v3796, 4294901760
        %v3798 = vsub.f32 %v3796, %v3797
        %v3799 = vand.u32 %v3798, 4294901760
        %3800 = vmatpush1.msra.mxu0 %v3799
        %v3801 = vand.u32 %v371, 4294901760
        %v3802 = vsub.f32 %v371, %v3801
        %v3803 = vand.u32 %v3802, 4294901760
        %v3804 = vsub.f32 %v3802, %v3803
        %v3805 = vand.u32 %v3804, 4294901760
        %3806 = vmatprep.subr.mxu0 %v3805
        %v3807 = vand.u32 %v370, 4294901760
        %v3808 = vsub.f32 %v370, %v3807
        %v3809 = vand.u32 %v3808, 4294901760
        %v3810 = vsub.f32 %v3808, %v3809
        %v3811 = vand.u32 %v3810, 4294901760
        %3812 = vmatpush1.msra.mxu0 %v3811
        %v3813 = vand.u32 %v363, 4294901760
        %v3814 = vsub.f32 %v363, %v3813
        %v3815 = vand.u32 %v3814, 4294901760
        %v3816 = vsub.f32 %v3814, %v3815
        %v3817 = vand.u32 %v3816, 4294901760
        %3818 = vmatprep.subr.mxu0 %v3817
        %v3819 = vand.u32 %v362, 4294901760
        %v3820 = vsub.f32 %v362, %v3819
        %v3821 = vand.u32 %v3820, 4294901760
        %v3822 = vsub.f32 %v3820, %v3821
        %v3823 = vand.u32 %v3822, 4294901760
        %3824 = vmatpush1.msra.mxu0 %v3823
        %v3825 = vand.u32 %v355, 4294901760
        %v3826 = vsub.f32 %v355, %v3825
        %v3827 = vand.u32 %v3826, 4294901760
        %v3828 = vsub.f32 %v3826, %v3827
        %v3829 = vand.u32 %v3828, 4294901760
        %3830 = vmatprep.subr.mxu0 %v3829
        %v3831 = vand.u32 %v354, 4294901760
        %v3832 = vsub.f32 %v354, %v3831
        %v3833 = vand.u32 %v3832, 4294901760
        %v3834 = vsub.f32 %v3832, %v3833
        %v3835 = vand.u32 %v3834, 4294901760
        %3836 = vmatpush1.msra.mxu0 %v3835
        %v3837 = vand.u32 %v347, 4294901760
        %v3838 = vsub.f32 %v347, %v3837
        %v3839 = vand.u32 %v3838, 4294901760
        %v3840 = vsub.f32 %v3838, %v3839
        %v3841 = vand.u32 %v3840, 4294901760
        %3842 = vmatprep.subr.mxu0 %v3841
        %v3843 = vand.u32 %v346, 4294901760
        %v3844 = vsub.f32 %v346, %v3843
        %v3845 = vand.u32 %v3844, 4294901760
        %v3846 = vsub.f32 %v3844, %v3845
        %v3847 = vand.u32 %v3846, 4294901760
        %3848 = vmatpush1.msra.mxu0 %v3847
        %3849 = vmatprep.subr.mxu0 0.0
        %3850 = vmatpush2.msra.mxu0 0.0
        %3851 = vmatprep.subr.mxu0 0.0
        %3852 = vmatpush2.msra.mxu0 0.0
        %3853 = vmatprep.subr.mxu0 0.0
        %3854 = vmatpush2.msra.mxu0 0.0
        %3855 = vmatprep.subr.mxu0 0.0
        %3856 = vmatpush2.msra.mxu0 0.0
        %3857 = vmatprep.subr.mxu0 0.0
        %3858 = vmatpush2.msra.mxu0 0.0
        %3859 = vmatprep.subr.mxu0 0.0
        %3860 = vmatpush2.msra.mxu0 0.0
        %3861 = vmatprep.subr.mxu0 0.0
        %3862 = vmatpush2.msra.mxu0 0.0
        %3863 = vmatprep.subr.mxu0 0.0
        %3864 = vmatpush2.msra.mxu0 0.0
        %3865 = vmatprep.subr.mxu0 0.0
        %3866 = vmatpush2.msra.mxu0 0.0
        %3867 = vmatprep.subr.mxu0 0.0
        %3868 = vmatpush2.msra.mxu0 0.0
        %3869 = vmatprep.subr.mxu0 0.0
        %3870 = vmatpush2.msra.mxu0 0.0
        %3871 = vmatprep.subr.mxu0 0.0
        %3872 = vmatpush2.msra.mxu0 0.0
        %3873 = vmatprep.subr.mxu0 0.0
        %3874 = vmatpush2.msra.mxu0 0.0
        %3875 = vmatprep.subr.mxu0 0.0
        %3876 = vmatpush2.msra.mxu0 0.0
        %3877 = vmatprep.subr.mxu0 0.0
        %3878 = vmatpush2.msra.mxu0 0.0
        %3879 = vmatprep.subr.mxu0 0.0
        %3880 = vmatpush2.msra.mxu0 0.0
        %3881 = vmatprep.mubr.f32.mxu0 0.0
        %v3882 = vand.u32 %v336, 4294901760
        %3883 = vmatmul.mubr.f32.gmra.mxu0 %v3882
        %v3884 = vpop.f32.mrf.mxu0
        %v3885 = vadd.f32 %v3620, %v3884
        %v3886 = vpop.f32.mrf.mxu0
        %v3887 = vadd.f32 %v3622, %v3886
        %3888 = vmatprep.mubr.f32.mxu0 0.0
        %v3889 = vand.u32 %v337, 4294901760
        %3890 = vmatmul.mubr.f32.gmra.mxu0 %v3889
        %v3891 = vpop.f32.mrf.mxu0
        %v3892 = vadd.f32 %v3631, %v3891
        %v3893 = vpop.f32.mrf.mxu0
        %v3894 = vadd.f32 %v3633, %v3893
        %3895 = vmatprep.mubr.f32.mxu0 0.0
        %v3896 = vand.u32 %v338, 4294901760
        %3897 = vmatmul.mubr.f32.gmra.mxu0 %v3896
        %v3898 = vpop.f32.mrf.mxu0
        %v3899 = vadd.f32 %v3642, %v3898
        %v3900 = vpop.f32.mrf.mxu0
        %v3901 = vadd.f32 %v3644, %v3900
        %3902 = vmatprep.mubr.f32.mxu0 0.0
        %v3903 = vand.u32 %v339, 4294901760
        %3904 = vmatmul.mubr.f32.gmra.mxu0 %v3903
        %v3905 = vpop.f32.mrf.mxu0
        %v3906 = vadd.f32 %v3653, %v3905
        %v3907 = vpop.f32.mrf.mxu0
        %v3908 = vadd.f32 %v3655, %v3907
        %3909 = vdwg.mxu0
        %v3910 = vand.u32 %v467, 4294901760
        %v3911 = vsub.f32 %v467, %v3910
        %3912 = vmatprep.subr.mxu0 %v3911
        %v3913 = vand.u32 %v466, 4294901760
        %v3914 = vsub.f32 %v466, %v3913
        %3915 = vmatpush1.msra.mxu0 %v3914
        %v3916 = vand.u32 %v459, 4294901760
        %v3917 = vsub.f32 %v459, %v3916
        %3918 = vmatprep.subr.mxu0 %v3917
        %v3919 = vand.u32 %v458, 4294901760
        %v3920 = vsub.f32 %v458, %v3919
        %3921 = vmatpush1.msra.mxu0 %v3920
        %v3922 = vand.u32 %v451, 4294901760
        %v3923 = vsub.f32 %v451, %v3922
        %3924 = vmatprep.subr.mxu0 %v3923
        %v3925 = vand.u32 %v450, 4294901760
        %v3926 = vsub.f32 %v450, %v3925
        %3927 = vmatpush1.msra.mxu0 %v3926
        %v3928 = vand.u32 %v443, 4294901760
        %v3929 = vsub.f32 %v443, %v3928
        %3930 = vmatprep.subr.mxu0 %v3929
        %v3931 = vand.u32 %v442, 4294901760
        %v3932 = vsub.f32 %v442, %v3931
        %3933 = vmatpush1.msra.mxu0 %v3932
        %v3934 = vand.u32 %v435, 4294901760
        %v3935 = vsub.f32 %v435, %v3934
        %3936 = vmatprep.subr.mxu0 %v3935
        %v3937 = vand.u32 %v434, 4294901760
        %v3938 = vsub.f32 %v434, %v3937
        %3939 = vmatpush1.msra.mxu0 %v3938
        %v3940 = vand.u32 %v427, 4294901760
        %v3941 = vsub.f32 %v427, %v3940
        %3942 = vmatprep.subr.mxu0 %v3941
        %v3943 = vand.u32 %v426, 4294901760
        %v3944 = vsub.f32 %v426, %v3943
        %3945 = vmatpush1.msra.mxu0 %v3944
        %v3946 = vand.u32 %v419, 4294901760
        %v3947 = vsub.f32 %v419, %v3946
        %3948 = vmatprep.subr.mxu0 %v3947
        %v3949 = vand.u32 %v418, 4294901760
        %v3950 = vsub.f32 %v418, %v3949
        %3951 = vmatpush1.msra.mxu0 %v3950
        %v3952 = vand.u32 %v411, 4294901760
        %v3953 = vsub.f32 %v411, %v3952
        %3954 = vmatprep.subr.mxu0 %v3953
        %v3955 = vand.u32 %v410, 4294901760
        %v3956 = vsub.f32 %v410, %v3955
        %3957 = vmatpush1.msra.mxu0 %v3956
        %v3958 = vand.u32 %v403, 4294901760
        %v3959 = vsub.f32 %v403, %v3958
        %3960 = vmatprep.subr.mxu0 %v3959
        %v3961 = vand.u32 %v402, 4294901760
        %v3962 = vsub.f32 %v402, %v3961
        %3963 = vmatpush1.msra.mxu0 %v3962
        %v3964 = vand.u32 %v395, 4294901760
        %v3965 = vsub.f32 %v395, %v3964
        %3966 = vmatprep.subr.mxu0 %v3965
        %v3967 = vand.u32 %v394, 4294901760
        %v3968 = vsub.f32 %v394, %v3967
        %3969 = vmatpush1.msra.mxu0 %v3968
        %v3970 = vand.u32 %v387, 4294901760
        %v3971 = vsub.f32 %v387, %v3970
        %3972 = vmatprep.subr.mxu0 %v3971
        %v3973 = vand.u32 %v386, 4294901760
        %v3974 = vsub.f32 %v386, %v3973
        %3975 = vmatpush1.msra.mxu0 %v3974
        %v3976 = vand.u32 %v379, 4294901760
        %v3977 = vsub.f32 %v379, %v3976
        %3978 = vmatprep.subr.mxu0 %v3977
        %v3979 = vand.u32 %v378, 4294901760
        %v3980 = vsub.f32 %v378, %v3979
        %3981 = vmatpush1.msra.mxu0 %v3980
        %v3982 = vand.u32 %v371, 4294901760
        %v3983 = vsub.f32 %v371, %v3982
        %3984 = vmatprep.subr.mxu0 %v3983
        %v3985 = vand.u32 %v370, 4294901760
        %v3986 = vsub.f32 %v370, %v3985
        %3987 = vmatpush1.msra.mxu0 %v3986
        %v3988 = vand.u32 %v363, 4294901760
        %v3989 = vsub.f32 %v363, %v3988
        %3990 = vmatprep.subr.mxu0 %v3989
        %v3991 = vand.u32 %v362, 4294901760
        %v3992 = vsub.f32 %v362, %v3991
        %3993 = vmatpush1.msra.mxu0 %v3992
        %v3994 = vand.u32 %v355, 4294901760
        %v3995 = vsub.f32 %v355, %v3994
        %3996 = vmatprep.subr.mxu0 %v3995
        %v3997 = vand.u32 %v354, 4294901760
        %v3998 = vsub.f32 %v354, %v3997
        %3999 = vmatpush1.msra.mxu0 %v3998
        %v4000 = vand.u32 %v347, 4294901760
        %v4001 = vsub.f32 %v347, %v4000
        %4002 = vmatprep.subr.mxu0 %v4001
        %v4003 = vand.u32 %v346, 4294901760
        %v4004 = vsub.f32 %v346, %v4003
        %4005 = vmatpush1.msra.mxu0 %v4004
        %4006 = vmatprep.subr.mxu0 0.0
        %4007 = vmatpush2.msra.mxu0 0.0
        %4008 = vmatprep.subr.mxu0 0.0
        %4009 = vmatpush2.msra.mxu0 0.0
        %4010 = vmatprep.subr.mxu0 0.0
        %4011 = vmatpush2.msra.mxu0 0.0
        %4012 = vmatprep.subr.mxu0 0.0
        %4013 = vmatpush2.msra.mxu0 0.0
        %4014 = vmatprep.subr.mxu0 0.0
        %4015 = vmatpush2.msra.mxu0 0.0
        %4016 = vmatprep.subr.mxu0 0.0
        %4017 = vmatpush2.msra.mxu0 0.0
        %4018 = vmatprep.subr.mxu0 0.0
        %4019 = vmatpush2.msra.mxu0 0.0
        %4020 = vmatprep.subr.mxu0 0.0
        %4021 = vmatpush2.msra.mxu0 0.0
        %4022 = vmatprep.subr.mxu0 0.0
        %4023 = vmatpush2.msra.mxu0 0.0
        %4024 = vmatprep.subr.mxu0 0.0
        %4025 = vmatpush2.msra.mxu0 0.0
        %4026 = vmatprep.subr.mxu0 0.0
        %4027 = vmatpush2.msra.mxu0 0.0
        %4028 = vmatprep.subr.mxu0 0.0
        %4029 = vmatpush2.msra.mxu0 0.0
        %4030 = vmatprep.subr.mxu0 0.0
        %4031 = vmatpush2.msra.mxu0 0.0
        %4032 = vmatprep.subr.mxu0 0.0
        %4033 = vmatpush2.msra.mxu0 0.0
        %4034 = vmatprep.subr.mxu0 0.0
        %4035 = vmatpush2.msra.mxu0 0.0
        %4036 = vmatprep.subr.mxu0 0.0
        %4037 = vmatpush2.msra.mxu0 0.0
        %4038 = vmatprep.mubr.f32.mxu0 0.0
        %v4039 = vand.u32 %v336, 4294901760
        %v4040 = vsub.f32 %v336, %v4039
        %4041 = vmatmul.mubr.f32.gmra.mxu0 %v4040
        %v4042 = vpop.f32.mrf.mxu0
        %v4043 = vadd.f32 %v3885, %v4042
        %v4044 = vpop.f32.mrf.mxu0
        %v4045 = vadd.f32 %v3887, %v4044
        %4046 = vmatprep.mubr.f32.mxu0 0.0
        %v4047 = vand.u32 %v337, 4294901760
        %v4048 = vsub.f32 %v337, %v4047
        %4049 = vmatmul.mubr.f32.gmra.mxu0 %v4048
        %v4050 = vpop.f32.mrf.mxu0
        %v4051 = vadd.f32 %v3892, %v4050
        %v4052 = vpop.f32.mrf.mxu0
        %v4053 = vadd.f32 %v3894, %v4052
        %4054 = vmatprep.mubr.f32.mxu0 0.0
        %v4055 = vand.u32 %v338, 4294901760
        %v4056 = vsub.f32 %v338, %v4055
        %4057 = vmatmul.mubr.f32.gmra.mxu0 %v4056
        %v4058 = vpop.f32.mrf.mxu0
        %v4059 = vadd.f32 %v3899, %v4058
        %v4060 = vpop.f32.mrf.mxu0
        %v4061 = vadd.f32 %v3901, %v4060
        %4062 = vmatprep.mubr.f32.mxu0 0.0
        %v4063 = vand.u32 %v339, 4294901760
        %v4064 = vsub.f32 %v339, %v4063
        %4065 = vmatmul.mubr.f32.gmra.mxu0 %v4064
        %v4066 = vpop.f32.mrf.mxu0
        %v4067 = vadd.f32 %v3906, %v4066
        %v4068 = vpop.f32.mrf.mxu0
        %v4069 = vadd.f32 %v3908, %v4068
        %4070 = vdwg.mxu0
        %v4071 = vand.u32 %v467, 4294901760
        %4072 = vmatprep.subr.mxu0 %v4071
        %v4073 = vand.u32 %v466, 4294901760
        %4074 = vmatpush1.msra.mxu0 %v4073
        %v4075 = vand.u32 %v459, 4294901760
        %4076 = vmatprep.subr.mxu0 %v4075
        %v4077 = vand.u32 %v458, 4294901760
        %4078 = vmatpush1.msra.mxu0 %v4077
        %v4079 = vand.u32 %v451, 4294901760
        %4080 = vmatprep.subr.mxu0 %v4079
        %v4081 = vand.u32 %v450, 4294901760
        %4082 = vmatpush1.msra.mxu0 %v4081
        %v4083 = vand.u32 %v443, 4294901760
        %4084 = vmatprep.subr.mxu0 %v4083
        %v4085 = vand.u32 %v442, 4294901760
        %4086 = vmatpush1.msra.mxu0 %v4085
        %v4087 = vand.u32 %v435, 4294901760
        %4088 = vmatprep.subr.mxu0 %v4087
        %v4089 = vand.u32 %v434, 4294901760
        %4090 = vmatpush1.msra.mxu0 %v4089
        %v4091 = vand.u32 %v427, 4294901760
        %4092 = vmatprep.subr.mxu0 %v4091
        %v4093 = vand.u32 %v426, 4294901760
        %4094 = vmatpush1.msra.mxu0 %v4093
        %v4095 = vand.u32 %v419, 4294901760
        %4096 = vmatprep.subr.mxu0 %v4095
        %v4097 = vand.u32 %v418, 4294901760
        %4098 = vmatpush1.msra.mxu0 %v4097
        %v4099 = vand.u32 %v411, 4294901760
        %4100 = vmatprep.subr.mxu0 %v4099
        %v4101 = vand.u32 %v410, 4294901760
        %4102 = vmatpush1.msra.mxu0 %v4101
        %v4103 = vand.u32 %v403, 4294901760
        %4104 = vmatprep.subr.mxu0 %v4103
        %v4105 = vand.u32 %v402, 4294901760
        %4106 = vmatpush1.msra.mxu0 %v4105
        %v4107 = vand.u32 %v395, 4294901760
        %4108 = vmatprep.subr.mxu0 %v4107
        %v4109 = vand.u32 %v394, 4294901760
        %4110 = vmatpush1.msra.mxu0 %v4109
        %v4111 = vand.u32 %v387, 4294901760
        %4112 = vmatprep.subr.mxu0 %v4111
        %v4113 = vand.u32 %v386, 4294901760
        %4114 = vmatpush1.msra.mxu0 %v4113
        %v4115 = vand.u32 %v379, 4294901760
        %4116 = vmatprep.subr.mxu0 %v4115
        %v4117 = vand.u32 %v378, 4294901760
        %4118 = vmatpush1.msra.mxu0 %v4117
        %v4119 = vand.u32 %v371, 4294901760
        %4120 = vmatprep.subr.mxu0 %v4119
        %v4121 = vand.u32 %v370, 4294901760
        %4122 = vmatpush1.msra.mxu0 %v4121
        %v4123 = vand.u32 %v363, 4294901760
        %4124 = vmatprep.subr.mxu0 %v4123
        %v4125 = vand.u32 %v362, 4294901760
        %4126 = vmatpush1.msra.mxu0 %v4125
        %v4127 = vand.u32 %v355, 4294901760
        %4128 = vmatprep.subr.mxu0 %v4127
        %v4129 = vand.u32 %v354, 4294901760
        %4130 = vmatpush1.msra.mxu0 %v4129
        %v4131 = vand.u32 %v347, 4294901760
        %4132 = vmatprep.subr.mxu0 %v4131
        %v4133 = vand.u32 %v346, 4294901760
        %4134 = vmatpush1.msra.mxu0 %v4133
        %4135 = vmatprep.subr.mxu0 0.0
        %4136 = vmatpush2.msra.mxu0 0.0
        %4137 = vmatprep.subr.mxu0 0.0
        %4138 = vmatpush2.msra.mxu0 0.0
        %4139 = vmatprep.subr.mxu0 0.0
        %4140 = vmatpush2.msra.mxu0 0.0
        %4141 = vmatprep.subr.mxu0 0.0
        %4142 = vmatpush2.msra.mxu0 0.0
        %4143 = vmatprep.subr.mxu0 0.0
        %4144 = vmatpush2.msra.mxu0 0.0
        %4145 = vmatprep.subr.mxu0 0.0
        %4146 = vmatpush2.msra.mxu0 0.0
        %4147 = vmatprep.subr.mxu0 0.0
        %4148 = vmatpush2.msra.mxu0 0.0
        %4149 = vmatprep.subr.mxu0 0.0
        %4150 = vmatpush2.msra.mxu0 0.0
        %4151 = vmatprep.subr.mxu0 0.0
        %4152 = vmatpush2.msra.mxu0 0.0
        %4153 = vmatprep.subr.mxu0 0.0
        %4154 = vmatpush2.msra.mxu0 0.0
        %4155 = vmatprep.subr.mxu0 0.0
        %4156 = vmatpush2.msra.mxu0 0.0
        %4157 = vmatprep.subr.mxu0 0.0
        %4158 = vmatpush2.msra.mxu0 0.0
        %4159 = vmatprep.subr.mxu0 0.0
        %4160 = vmatpush2.msra.mxu0 0.0
        %4161 = vmatprep.subr.mxu0 0.0
        %4162 = vmatpush2.msra.mxu0 0.0
        %4163 = vmatprep.subr.mxu0 0.0
        %4164 = vmatpush2.msra.mxu0 0.0
        %4165 = vmatprep.subr.mxu0 0.0
        %4166 = vmatpush2.msra.mxu0 0.0
        %4167 = vmatprep.mubr.f32.mxu0 0.0
        %v4168 = vand.u32 %v336, 4294901760
        %v4169 = vsub.f32 %v336, %v4168
        %v4170 = vand.u32 %v4169, 4294901760
        %4171 = vmatmul.mubr.f32.gmra.mxu0 %v4170
        %v4172 = vpop.f32.mrf.mxu0
        %v4173 = vadd.f32 %v4043, %v4172
        %v4174 = vpop.f32.mrf.mxu0
        %v4175 = vadd.f32 %v4045, %v4174
        %4176 = vmatprep.mubr.f32.mxu0 0.0
        %v4177 = vand.u32 %v337, 4294901760
        %v4178 = vsub.f32 %v337, %v4177
        %v4179 = vand.u32 %v4178, 4294901760
        %4180 = vmatmul.mubr.f32.gmra.mxu0 %v4179
        %v4181 = vpop.f32.mrf.mxu0
        %v4182 = vadd.f32 %v4051, %v4181
        %v4183 = vpop.f32.mrf.mxu0
        %v4184 = vadd.f32 %v4053, %v4183
        %4185 = vmatprep.mubr.f32.mxu0 0.0
        %v4186 = vand.u32 %v338, 4294901760
        %v4187 = vsub.f32 %v338, %v4186
        %v4188 = vand.u32 %v4187, 4294901760
        %4189 = vmatmul.mubr.f32.gmra.mxu0 %v4188
        %v4190 = vpop.f32.mrf.mxu0
        %v4191 = vadd.f32 %v4059, %v4190
        %v4192 = vpop.f32.mrf.mxu0
        %v4193 = vadd.f32 %v4061, %v4192
        %4194 = vmatprep.mubr.f32.mxu0 0.0
        %v4195 = vand.u32 %v339, 4294901760
        %v4196 = vsub.f32 %v339, %v4195
        %v4197 = vand.u32 %v4196, 4294901760
        %4198 = vmatmul.mubr.f32.gmra.mxu0 %v4197
        %v4199 = vpop.f32.mrf.mxu0
        %v4200 = vadd.f32 %v4067, %v4199
        %v4201 = vpop.f32.mrf.mxu0
        %v4202 = vadd.f32 %v4069, %v4201
        %4203 = vdwg.mxu0
        %v4204 = vand.u32 %v467, 4294901760
        %v4205 = vsub.f32 %v467, %v4204
        %v4206 = vand.u32 %v4205, 4294901760
        %4207 = vmatprep.subr.mxu0 %v4206
        %v4208 = vand.u32 %v466, 4294901760
        %v4209 = vsub.f32 %v466, %v4208
        %v4210 = vand.u32 %v4209, 4294901760
        %4211 = vmatpush1.msra.mxu0 %v4210
        %v4212 = vand.u32 %v459, 4294901760
        %v4213 = vsub.f32 %v459, %v4212
        %v4214 = vand.u32 %v4213, 4294901760
        %4215 = vmatprep.subr.mxu0 %v4214
        %v4216 = vand.u32 %v458, 4294901760
        %v4217 = vsub.f32 %v458, %v4216
        %v4218 = vand.u32 %v4217, 4294901760
        %4219 = vmatpush1.msra.mxu0 %v4218
        %v4220 = vand.u32 %v451, 4294901760
        %v4221 = vsub.f32 %v451, %v4220
        %v4222 = vand.u32 %v4221, 4294901760
        %4223 = vmatprep.subr.mxu0 %v4222
        %v4224 = vand.u32 %v450, 4294901760
        %v4225 = vsub.f32 %v450, %v4224
        %v4226 = vand.u32 %v4225, 4294901760
        %4227 = vmatpush1.msra.mxu0 %v4226
        %v4228 = vand.u32 %v443, 4294901760
        %v4229 = vsub.f32 %v443, %v4228
        %v4230 = vand.u32 %v4229, 4294901760
        %4231 = vmatprep.subr.mxu0 %v4230
        %v4232 = vand.u32 %v442, 4294901760
        %v4233 = vsub.f32 %v442, %v4232
        %v4234 = vand.u32 %v4233, 4294901760
        %4235 = vmatpush1.msra.mxu0 %v4234
        %v4236 = vand.u32 %v435, 4294901760
        %v4237 = vsub.f32 %v435, %v4236
        %v4238 = vand.u32 %v4237, 4294901760
        %4239 = vmatprep.subr.mxu0 %v4238
        %v4240 = vand.u32 %v434, 4294901760
        %v4241 = vsub.f32 %v434, %v4240
        %v4242 = vand.u32 %v4241, 4294901760
        %4243 = vmatpush1.msra.mxu0 %v4242
        %v4244 = vand.u32 %v427, 4294901760
        %v4245 = vsub.f32 %v427, %v4244
        %v4246 = vand.u32 %v4245, 4294901760
        %4247 = vmatprep.subr.mxu0 %v4246
        %v4248 = vand.u32 %v426, 4294901760
        %v4249 = vsub.f32 %v426, %v4248
        %v4250 = vand.u32 %v4249, 4294901760
        %4251 = vmatpush1.msra.mxu0 %v4250
        %v4252 = vand.u32 %v419, 4294901760
        %v4253 = vsub.f32 %v419, %v4252
        %v4254 = vand.u32 %v4253, 4294901760
        %4255 = vmatprep.subr.mxu0 %v4254
        %v4256 = vand.u32 %v418, 4294901760
        %v4257 = vsub.f32 %v418, %v4256
        %v4258 = vand.u32 %v4257, 4294901760
        %4259 = vmatpush1.msra.mxu0 %v4258
        %v4260 = vand.u32 %v411, 4294901760
        %v4261 = vsub.f32 %v411, %v4260
        %v4262 = vand.u32 %v4261, 4294901760
        %4263 = vmatprep.subr.mxu0 %v4262
        %v4264 = vand.u32 %v410, 4294901760
        %v4265 = vsub.f32 %v410, %v4264
        %v4266 = vand.u32 %v4265, 4294901760
        %4267 = vmatpush1.msra.mxu0 %v4266
        %v4268 = vand.u32 %v403, 4294901760
        %v4269 = vsub.f32 %v403, %v4268
        %v4270 = vand.u32 %v4269, 4294901760
        %4271 = vmatprep.subr.mxu0 %v4270
        %v4272 = vand.u32 %v402, 4294901760
        %v4273 = vsub.f32 %v402, %v4272
        %v4274 = vand.u32 %v4273, 4294901760
        %4275 = vmatpush1.msra.mxu0 %v4274
        %v4276 = vand.u32 %v395, 4294901760
        %v4277 = vsub.f32 %v395, %v4276
        %v4278 = vand.u32 %v4277, 4294901760
        %4279 = vmatprep.subr.mxu0 %v4278
        %v4280 = vand.u32 %v394, 4294901760
        %v4281 = vsub.f32 %v394, %v4280
        %v4282 = vand.u32 %v4281, 4294901760
        %4283 = vmatpush1.msra.mxu0 %v4282
        %v4284 = vand.u32 %v387, 4294901760
        %v4285 = vsub.f32 %v387, %v4284
        %v4286 = vand.u32 %v4285, 4294901760
        %4287 = vmatprep.subr.mxu0 %v4286
        %v4288 = vand.u32 %v386, 4294901760
        %v4289 = vsub.f32 %v386, %v4288
        %v4290 = vand.u32 %v4289, 4294901760
        %4291 = vmatpush1.msra.mxu0 %v4290
        %v4292 = vand.u32 %v379, 4294901760
        %v4293 = vsub.f32 %v379, %v4292
        %v4294 = vand.u32 %v4293, 4294901760
        %4295 = vmatprep.subr.mxu0 %v4294
        %v4296 = vand.u32 %v378, 4294901760
        %v4297 = vsub.f32 %v378, %v4296
        %v4298 = vand.u32 %v4297, 4294901760
        %4299 = vmatpush1.msra.mxu0 %v4298
        %v4300 = vand.u32 %v371, 4294901760
        %v4301 = vsub.f32 %v371, %v4300
        %v4302 = vand.u32 %v4301, 4294901760
        %4303 = vmatprep.subr.mxu0 %v4302
        %v4304 = vand.u32 %v370, 4294901760
        %v4305 = vsub.f32 %v370, %v4304
        %v4306 = vand.u32 %v4305, 4294901760
        %4307 = vmatpush1.msra.mxu0 %v4306
        %v4308 = vand.u32 %v363, 4294901760
        %v4309 = vsub.f32 %v363, %v4308
        %v4310 = vand.u32 %v4309, 4294901760
        %4311 = vmatprep.subr.mxu0 %v4310
        %v4312 = vand.u32 %v362, 4294901760
        %v4313 = vsub.f32 %v362, %v4312
        %v4314 = vand.u32 %v4313, 4294901760
        %4315 = vmatpush1.msra.mxu0 %v4314
        %v4316 = vand.u32 %v355, 4294901760
        %v4317 = vsub.f32 %v355, %v4316
        %v4318 = vand.u32 %v4317, 4294901760
        %4319 = vmatprep.subr.mxu0 %v4318
        %v4320 = vand.u32 %v354, 4294901760
        %v4321 = vsub.f32 %v354, %v4320
        %v4322 = vand.u32 %v4321, 4294901760
        %4323 = vmatpush1.msra.mxu0 %v4322
        %v4324 = vand.u32 %v347, 4294901760
        %v4325 = vsub.f32 %v347, %v4324
        %v4326 = vand.u32 %v4325, 4294901760
        %4327 = vmatprep.subr.mxu0 %v4326
        %v4328 = vand.u32 %v346, 4294901760
        %v4329 = vsub.f32 %v346, %v4328
        %v4330 = vand.u32 %v4329, 4294901760
        %4331 = vmatpush1.msra.mxu0 %v4330
        %4332 = vmatprep.subr.mxu0 0.0
        %4333 = vmatpush2.msra.mxu0 0.0
        %4334 = vmatprep.subr.mxu0 0.0
        %4335 = vmatpush2.msra.mxu0 0.0
        %4336 = vmatprep.subr.mxu0 0.0
        %4337 = vmatpush2.msra.mxu0 0.0
        %4338 = vmatprep.subr.mxu0 0.0
        %4339 = vmatpush2.msra.mxu0 0.0
        %4340 = vmatprep.subr.mxu0 0.0
        %4341 = vmatpush2.msra.mxu0 0.0
        %4342 = vmatprep.subr.mxu0 0.0
        %4343 = vmatpush2.msra.mxu0 0.0
        %4344 = vmatprep.subr.mxu0 0.0
        %4345 = vmatpush2.msra.mxu0 0.0
        %4346 = vmatprep.subr.mxu0 0.0
        %4347 = vmatpush2.msra.mxu0 0.0
        %4348 = vmatprep.subr.mxu0 0.0
        %4349 = vmatpush2.msra.mxu0 0.0
        %4350 = vmatprep.subr.mxu0 0.0
        %4351 = vmatpush2.msra.mxu0 0.0
        %4352 = vmatprep.subr.mxu0 0.0
        %4353 = vmatpush2.msra.mxu0 0.0
        %4354 = vmatprep.subr.mxu0 0.0
        %4355 = vmatpush2.msra.mxu0 0.0
        %4356 = vmatprep.subr.mxu0 0.0
        %4357 = vmatpush2.msra.mxu0 0.0
        %4358 = vmatprep.subr.mxu0 0.0
        %4359 = vmatpush2.msra.mxu0 0.0
        %4360 = vmatprep.subr.mxu0 0.0
        %4361 = vmatpush2.msra.mxu0 0.0
        %4362 = vmatprep.subr.mxu0 0.0
        %4363 = vmatpush2.msra.mxu0 0.0
        %4364 = vmatprep.mubr.f32.mxu0 0.0
        %v4365 = vand.u32 %v336, 4294901760
        %4366 = vmatmul.mubr.f32.gmra.mxu0 %v4365
        %v4367 = vpop.f32.mrf.mxu0
        %v4368 = vadd.f32 %v4173, %v4367
        %v4369 = vpop.f32.mrf.mxu0
        %v4370 = vadd.f32 %v4175, %v4369
        %4371 = vmatprep.mubr.f32.mxu0 0.0
        %v4372 = vand.u32 %v337, 4294901760
        %4373 = vmatmul.mubr.f32.gmra.mxu0 %v4372
        %v4374 = vpop.f32.mrf.mxu0
        %v4375 = vadd.f32 %v4182, %v4374
        %v4376 = vpop.f32.mrf.mxu0
        %v4377 = vadd.f32 %v4184, %v4376
        %4378 = vmatprep.mubr.f32.mxu0 0.0
        %v4379 = vand.u32 %v338, 4294901760
        %4380 = vmatmul.mubr.f32.gmra.mxu0 %v4379
        %v4381 = vpop.f32.mrf.mxu0
        %v4382 = vadd.f32 %v4191, %v4381
        %v4383 = vpop.f32.mrf.mxu0
        %v4384 = vadd.f32 %v4193, %v4383
        %4385 = vmatprep.mubr.f32.mxu0 0.0
        %v4386 = vand.u32 %v339, 4294901760
        %4387 = vmatmul.mubr.f32.gmra.mxu0 %v4386
        %v4388 = vpop.f32.mrf.mxu0
        %v4389 = vadd.f32 %v4200, %v4388
        %v4390 = vpop.f32.mrf.mxu0
        %v4391 = vadd.f32 %v4202, %v4390
        %4392 = vdwg.mxu0
        %v4393 = vand.u32 %v467, 4294901760
        %4394 = vmatprep.subr.mxu0 %v4393
        %v4395 = vand.u32 %v466, 4294901760
        %4396 = vmatpush1.msra.mxu0 %v4395
        %v4397 = vand.u32 %v459, 4294901760
        %4398 = vmatprep.subr.mxu0 %v4397
        %v4399 = vand.u32 %v458, 4294901760
        %4400 = vmatpush1.msra.mxu0 %v4399
        %v4401 = vand.u32 %v451, 4294901760
        %4402 = vmatprep.subr.mxu0 %v4401
        %v4403 = vand.u32 %v450, 4294901760
        %4404 = vmatpush1.msra.mxu0 %v4403
        %v4405 = vand.u32 %v443, 4294901760
        %4406 = vmatprep.subr.mxu0 %v4405
        %v4407 = vand.u32 %v442, 4294901760
        %4408 = vmatpush1.msra.mxu0 %v4407
        %v4409 = vand.u32 %v435, 4294901760
        %4410 = vmatprep.subr.mxu0 %v4409
        %v4411 = vand.u32 %v434, 4294901760
        %4412 = vmatpush1.msra.mxu0 %v4411
        %v4413 = vand.u32 %v427, 4294901760
        %4414 = vmatprep.subr.mxu0 %v4413
        %v4415 = vand.u32 %v426, 4294901760
        %4416 = vmatpush1.msra.mxu0 %v4415
        %v4417 = vand.u32 %v419, 4294901760
        %4418 = vmatprep.subr.mxu0 %v4417
        %v4419 = vand.u32 %v418, 4294901760
        %4420 = vmatpush1.msra.mxu0 %v4419
        %v4421 = vand.u32 %v411, 4294901760
        %4422 = vmatprep.subr.mxu0 %v4421
        %v4423 = vand.u32 %v410, 4294901760
        %4424 = vmatpush1.msra.mxu0 %v4423
        %v4425 = vand.u32 %v403, 4294901760
        %4426 = vmatprep.subr.mxu0 %v4425
        %v4427 = vand.u32 %v402, 4294901760
        %4428 = vmatpush1.msra.mxu0 %v4427
        %v4429 = vand.u32 %v395, 4294901760
        %4430 = vmatprep.subr.mxu0 %v4429
        %v4431 = vand.u32 %v394, 4294901760
        %4432 = vmatpush1.msra.mxu0 %v4431
        %v4433 = vand.u32 %v387, 4294901760
        %4434 = vmatprep.subr.mxu0 %v4433
        %v4435 = vand.u32 %v386, 4294901760
        %4436 = vmatpush1.msra.mxu0 %v4435
        %v4437 = vand.u32 %v379, 4294901760
        %4438 = vmatprep.subr.mxu0 %v4437
        %v4439 = vand.u32 %v378, 4294901760
        %4440 = vmatpush1.msra.mxu0 %v4439
        %v4441 = vand.u32 %v371, 4294901760
        %4442 = vmatprep.subr.mxu0 %v4441
        %v4443 = vand.u32 %v370, 4294901760
        %4444 = vmatpush1.msra.mxu0 %v4443
        %v4445 = vand.u32 %v363, 4294901760
        %4446 = vmatprep.subr.mxu0 %v4445
        %v4447 = vand.u32 %v362, 4294901760
        %4448 = vmatpush1.msra.mxu0 %v4447
        %v4449 = vand.u32 %v355, 4294901760
        %4450 = vmatprep.subr.mxu0 %v4449
        %v4451 = vand.u32 %v354, 4294901760
        %4452 = vmatpush1.msra.mxu0 %v4451
        %v4453 = vand.u32 %v347, 4294901760
        %4454 = vmatprep.subr.mxu0 %v4453
        %v4455 = vand.u32 %v346, 4294901760
        %4456 = vmatpush1.msra.mxu0 %v4455
        %4457 = vmatprep.subr.mxu0 0.0
        %4458 = vmatpush2.msra.mxu0 0.0
        %4459 = vmatprep.subr.mxu0 0.0
        %4460 = vmatpush2.msra.mxu0 0.0
        %4461 = vmatprep.subr.mxu0 0.0
        %4462 = vmatpush2.msra.mxu0 0.0
        %4463 = vmatprep.subr.mxu0 0.0
        %4464 = vmatpush2.msra.mxu0 0.0
        %4465 = vmatprep.subr.mxu0 0.0
        %4466 = vmatpush2.msra.mxu0 0.0
        %4467 = vmatprep.subr.mxu0 0.0
        %4468 = vmatpush2.msra.mxu0 0.0
        %4469 = vmatprep.subr.mxu0 0.0
        %4470 = vmatpush2.msra.mxu0 0.0
        %4471 = vmatprep.subr.mxu0 0.0
        %4472 = vmatpush2.msra.mxu0 0.0
        %4473 = vmatprep.subr.mxu0 0.0
        %4474 = vmatpush2.msra.mxu0 0.0
        %4475 = vmatprep.subr.mxu0 0.0
        %4476 = vmatpush2.msra.mxu0 0.0
        %4477 = vmatprep.subr.mxu0 0.0
        %4478 = vmatpush2.msra.mxu0 0.0
        %4479 = vmatprep.subr.mxu0 0.0
        %4480 = vmatpush2.msra.mxu0 0.0
        %4481 = vmatprep.subr.mxu0 0.0
        %4482 = vmatpush2.msra.mxu0 0.0
        %4483 = vmatprep.subr.mxu0 0.0
        %4484 = vmatpush2.msra.mxu0 0.0
        %4485 = vmatprep.subr.mxu0 0.0
        %4486 = vmatpush2.msra.mxu0 0.0
        %4487 = vmatprep.subr.mxu0 0.0
        %4488 = vmatpush2.msra.mxu0 0.0
        %4489 = vmatprep.mubr.f32.mxu0 0.0
        %v4490 = vand.u32 %v336, 4294901760
        %4491 = vmatmul.mubr.f32.gmra.mxu0 %v4490
        %v4492 = vpop.f32.mrf.mxu0
        %v4493 = vadd.f32 %v4368, %v4492
        %v4494 = vpop.f32.mrf.mxu0
        %v4495 = vadd.f32 %v4370, %v4494
        %4496 = vmatprep.mubr.f32.mxu0 0.0
        %v4497 = vand.u32 %v337, 4294901760
        %4498 = vmatmul.mubr.f32.gmra.mxu0 %v4497
        %v4499 = vpop.f32.mrf.mxu0
        %v4500 = vadd.f32 %v4375, %v4499
        %v4501 = vpop.f32.mrf.mxu0
        %v4502 = vadd.f32 %v4377, %v4501
        %4503 = vmatprep.mubr.f32.mxu0 0.0
        %v4504 = vand.u32 %v338, 4294901760
        %4505 = vmatmul.mubr.f32.gmra.mxu0 %v4504
        %v4506 = vpop.f32.mrf.mxu0
        %v4507 = vadd.f32 %v4382, %v4506
        %v4508 = vpop.f32.mrf.mxu0
        %v4509 = vadd.f32 %v4384, %v4508
        %4510 = vmatprep.mubr.f32.mxu0 0.0
        %v4511 = vand.u32 %v339, 4294901760
        %4512 = vmatmul.mubr.f32.gmra.mxu0 %v4511
        %v4513 = vpop.f32.mrf.mxu0
        %v4514 = vadd.f32 %v4389, %v4513
        %v4515 = vpop.f32.mrf.mxu0
        %v4516 = vadd.f32 %v4391, %v4515
        %4517 = vdwg.mxu0
        %v4518 = vmax.f32 %v1487, 0.0
        %v4519 = vmax.f32 %v1489, 0.0
        %v4520 = vmax.f32 %v2489, 0.0
        %v4521 = vmax.f32 %v2491, 0.0
        %v4522 = vmax.f32 %v3491, 0.0
        %v4523 = vmax.f32 %v3493, 0.0
        %v4524 = vmax.f32 %v4493, 0.0
        %v4525 = vmax.f32 %v4495, 0.0
        %v4526 = vmax.f32 %v1494, 0.0
        %v4527 = vmax.f32 %v1496, 0.0
        %v4528 = vmax.f32 %v2496, 0.0
        %v4529 = vmax.f32 %v2498, 0.0
        %v4530 = vmax.f32 %v3498, 0.0
        %v4531 = vmax.f32 %v3500, 0.0
        %v4532 = vmax.f32 %v4500, 0.0
        %v4533 = vmax.f32 %v4502, 0.0
        %v4534 = vmax.f32 %v1501, 0.0
        %v4535 = vmax.f32 %v1503, 0.0
        %v4536 = vmax.f32 %v2503, 0.0
        %v4537 = vmax.f32 %v2505, 0.0
        %v4538 = vmax.f32 %v3505, 0.0
        %v4539 = vmax.f32 %v3507, 0.0
        %v4540 = vmax.f32 %v4507, 0.0
        %v4541 = vmax.f32 %v4509, 0.0
        %v4542 = vmax.f32 %v1508, 0.0
        %v4543 = vmax.f32 %v1510, 0.0
        %v4544 = vmax.f32 %v2510, 0.0
        %v4545 = vmax.f32 %v2512, 0.0
        %v4546 = vmax.f32 %v3512, 0.0
        %v4547 = vmax.f32 %v3514, 0.0
        %v4548 = vmax.f32 %v4514, 0.0
        %v4549 = vmax.f32 %v4516, 0.0
        loop: start=0, step=1, limit=32
        $region57: #{tpu_custom_call.1} parent=39 // loop_pre_header
          _
        $region58: #{tpu_custom_call.1} parent=39 // loop_header
          %s4551 = sphi 0, %s4555
          %p4552 = scmp.ge.s32.totalorder %s4551, 32
          %v4556 = vphi %v4518, %v4660
          %v4557 = vphi %v4519, %v4661
          %v4558 = vphi %v4520, %v4662
          %v4559 = vphi %v4521, %v4663
          %v4560 = vphi %v4522, %v4664
          %v4561 = vphi %v4523, %v4665
          %v4562 = vphi %v4524, %v4666
          %v4563 = vphi %v4525, %v4667
          %v4564 = vphi %v4526, %v4668
          %v4565 = vphi %v4527, %v4669
          %v4566 = vphi %v4528, %v4670
          %v4567 = vphi %v4529, %v4671
          %v4568 = vphi %v4530, %v4672
          %v4569 = vphi %v4531, %v4673
          %v4570 = vphi %v4532, %v4674
          %v4571 = vphi %v4533, %v4675
          %v4572 = vphi %v4534, %v4676
          %v4573 = vphi %v4535, %v4677
          %v4574 = vphi %v4536, %v4678
          %v4575 = vphi %v4537, %v4679
          %v4576 = vphi %v4538, %v4680
          %v4577 = vphi %v4539, %v4681
          %v4578 = vphi %v4540, %v4682
          %v4579 = vphi %v4541, %v4683
          %v4580 = vphi %v4542, %v4684
          %v4581 = vphi %v4543, %v4685
          %v4582 = vphi %v4544, %v4686
          %v4583 = vphi %v4545, %v4687
          %v4584 = vphi %v4546, %v4688
          %v4585 = vphi %v4547, %v4689
          %v4586 = vphi %v4548, %v4690
          %v4587 = vphi %v4549, %v4691
          %v4588 = vphi inf, %v4600
          %v4589 = vphi inf, %v4609
          %v4590 = vphi inf, %v4618
          %v4591 = vphi inf, %v4627
        $region59: #{tpu_custom_call.1} parent=39 // loop_header_branch
          %4554 = sbr.rel (%p4552) target = $region63
        $region60: #{tpu_custom_call.1} parent=39 // loop_body
          %v4592 = vmax.f32 %v4556, %v4557
          %v4593 = vmax.f32 %v4592, %v4558
          %v4594 = vmax.f32 %v4593, %v4559
          %v4595 = vmax.f32 %v4594, %v4560
          %v4596 = vmax.f32 %v4595, %v4561
          %v4597 = vmax.f32 %v4596, %v4562
          %v4598 = vmax.f32 %v4597, %v4563
          %4599 = vmax.xlane.f32.xlu0 %v4598
          %v4600 = vpop.xlane.xlu0 %4599
          %v4601 = vmax.f32 %v4564, %v4565
          %v4602 = vmax.f32 %v4601, %v4566
          %v4603 = vmax.f32 %v4602, %v4567
          %v4604 = vmax.f32 %v4603, %v4568
          %v4605 = vmax.f32 %v4604, %v4569
          %v4606 = vmax.f32 %v4605, %v4570
          %v4607 = vmax.f32 %v4606, %v4571
          %4608 = vmax.xlane.f32.xlu0 %v4607
          %v4609 = vpop.xlane.xlu0 %4608
          %v4610 = vmax.f32 %v4572, %v4573
          %v4611 = vmax.f32 %v4610, %v4574
          %v4612 = vmax.f32 %v4611, %v4575
          %v4613 = vmax.f32 %v4612, %v4576
          %v4614 = vmax.f32 %v4613, %v4577
          %v4615 = vmax.f32 %v4614, %v4578
          %v4616 = vmax.f32 %v4615, %v4579
          %4617 = vmax.xlane.f32.xlu0 %v4616
          %v4618 = vpop.xlane.xlu0 %4617
          %v4619 = vmax.f32 %v4580, %v4581
          %v4620 = vmax.f32 %v4619, %v4582
          %v4621 = vmax.f32 %v4620, %v4583
          %v4622 = vmax.f32 %v4621, %v4584
          %v4623 = vmax.f32 %v4622, %v4585
          %v4624 = vmax.f32 %v4623, %v4586
          %v4625 = vmax.f32 %v4624, %v4587
          %4626 = vmax.xlane.f32.xlu0 %v4625
          %v4627 = vpop.xlane.xlu0 %4626
          %vm4628 = vcmp.ge.f32.partialorder %v4556, %v4600
          %vm4629 = vcmp.ge.f32.partialorder %v4557, %v4600
          %vm4630 = vcmp.ge.f32.partialorder %v4558, %v4600
          %vm4631 = vcmp.ge.f32.partialorder %v4559, %v4600
          %vm4632 = vcmp.ge.f32.partialorder %v4560, %v4600
          %vm4633 = vcmp.ge.f32.partialorder %v4561, %v4600
          %vm4634 = vcmp.ge.f32.partialorder %v4562, %v4600
          %vm4635 = vcmp.ge.f32.partialorder %v4563, %v4600
          %vm4636 = vcmp.ge.f32.partialorder %v4564, %v4609
          %vm4637 = vcmp.ge.f32.partialorder %v4565, %v4609
          %vm4638 = vcmp.ge.f32.partialorder %v4566, %v4609
          %vm4639 = vcmp.ge.f32.partialorder %v4567, %v4609
          %vm4640 = vcmp.ge.f32.partialorder %v4568, %v4609
          %vm4641 = vcmp.ge.f32.partialorder %v4569, %v4609
          %vm4642 = vcmp.ge.f32.partialorder %v4570, %v4609
          %vm4643 = vcmp.ge.f32.partialorder %v4571, %v4609
          %vm4644 = vcmp.ge.f32.partialorder %v4572, %v4618
          %vm4645 = vcmp.ge.f32.partialorder %v4573, %v4618
          %vm4646 = vcmp.ge.f32.partialorder %v4574, %v4618
          %vm4647 = vcmp.ge.f32.partialorder %v4575, %v4618
          %vm4648 = vcmp.ge.f32.partialorder %v4576, %v4618
          %vm4649 = vcmp.ge.f32.partialorder %v4577, %v4618
          %vm4650 = vcmp.ge.f32.partialorder %v4578, %v4618
          %vm4651 = vcmp.ge.f32.partialorder %v4579, %v4618
          %vm4652 = vcmp.ge.f32.partialorder %v4580, %v4627
          %vm4653 = vcmp.ge.f32.partialorder %v4581, %v4627
          %vm4654 = vcmp.ge.f32.partialorder %v4582, %v4627
          %vm4655 = vcmp.ge.f32.partialorder %v4583, %v4627
          %vm4656 = vcmp.ge.f32.partialorder %v4584, %v4627
          %vm4657 = vcmp.ge.f32.partialorder %v4585, %v4627
          %vm4658 = vcmp.ge.f32.partialorder %v4586, %v4627
          %vm4659 = vcmp.ge.f32.partialorder %v4587, %v4627
          %v4660 = vsel %vm4628, -inf, %v4556
          %v4661 = vsel %vm4629, -inf, %v4557
          %v4662 = vsel %vm4630, -inf, %v4558
          %v4663 = vsel %vm4631, -inf, %v4559
          %v4664 = vsel %vm4632, -inf, %v4560
          %v4665 = vsel %vm4633, -inf, %v4561
          %v4666 = vsel %vm4634, -inf, %v4562
          %v4667 = vsel %vm4635, -inf, %v4563
          %v4668 = vsel %vm4636, -inf, %v4564
          %v4669 = vsel %vm4637, -inf, %v4565
          %v4670 = vsel %vm4638, -inf, %v4566
          %v4671 = vsel %vm4639, -inf, %v4567
          %v4672 = vsel %vm4640, -inf, %v4568
          %v4673 = vsel %vm4641, -inf, %v4569
          %v4674 = vsel %vm4642, -inf, %v4570
          %v4675 = vsel %vm4643, -inf, %v4571
          %v4676 = vsel %vm4644, -inf, %v4572
          %v4677 = vsel %vm4645, -inf, %v4573
          %v4678 = vsel %vm4646, -inf, %v4574
          %v4679 = vsel %vm4647, -inf, %v4575
          %v4680 = vsel %vm4648, -inf, %v4576
          %v4681 = vsel %vm4649, -inf, %v4577
          %v4682 = vsel %vm4650, -inf, %v4578
          %v4683 = vsel %vm4651, -inf, %v4579
          %v4684 = vsel %vm4652, -inf, %v4580
          %v4685 = vsel %vm4653, -inf, %v4581
          %v4686 = vsel %vm4654, -inf, %v4582
          %v4687 = vsel %vm4655, -inf, %v4583
          %v4688 = vsel %vm4656, -inf, %v4584
          %v4689 = vsel %vm4657, -inf, %v4585
          %v4690 = vsel %vm4658, -inf, %v4586
          %v4691 = vsel %vm4659, -inf, %v4587
        $region61: #{tpu_custom_call.1} parent=39 // loop_footer
          %s4555 = sadd.s32 1, %s4551
        $region62: #{tpu_custom_call.1} parent=39 // loop_footer_branch
          %4550 = sbr.rel target = $region58
        $region63: #{tpu_custom_call.1} parent=39 // loop_exit
          _
        %vm4692 = vcmp.ge.f32.partialorder %v4518, %v4588
        %vm4693 = vcmp.ge.f32.partialorder %v4519, %v4588
        %vm4694 = vcmp.ge.f32.partialorder %v4520, %v4588
        %vm4695 = vcmp.ge.f32.partialorder %v4521, %v4588
        %vm4696 = vcmp.ge.f32.partialorder %v4522, %v4588
        %vm4697 = vcmp.ge.f32.partialorder %v4523, %v4588
        %vm4698 = vcmp.ge.f32.partialorder %v4524, %v4588
        %vm4699 = vcmp.ge.f32.partialorder %v4525, %v4588
        %vm4700 = vcmp.ge.f32.partialorder %v4526, %v4589
        %vm4701 = vcmp.ge.f32.partialorder %v4527, %v4589
        %vm4702 = vcmp.ge.f32.partialorder %v4528, %v4589
        %vm4703 = vcmp.ge.f32.partialorder %v4529, %v4589
        %vm4704 = vcmp.ge.f32.partialorder %v4530, %v4589
        %vm4705 = vcmp.ge.f32.partialorder %v4531, %v4589
        %vm4706 = vcmp.ge.f32.partialorder %v4532, %v4589
        %vm4707 = vcmp.ge.f32.partialorder %v4533, %v4589
        %vm4708 = vcmp.ge.f32.partialorder %v4534, %v4590
        %vm4709 = vcmp.ge.f32.partialorder %v4535, %v4590
        %vm4710 = vcmp.ge.f32.partialorder %v4536, %v4590
        %vm4711 = vcmp.ge.f32.partialorder %v4537, %v4590
        %vm4712 = vcmp.ge.f32.partialorder %v4538, %v4590
        %vm4713 = vcmp.ge.f32.partialorder %v4539, %v4590
        %vm4714 = vcmp.ge.f32.partialorder %v4540, %v4590
        %vm4715 = vcmp.ge.f32.partialorder %v4541, %v4590
        %vm4716 = vcmp.ge.f32.partialorder %v4542, %v4591
        %vm4717 = vcmp.ge.f32.partialorder %v4543, %v4591
        %vm4718 = vcmp.ge.f32.partialorder %v4544, %v4591
        %vm4719 = vcmp.ge.f32.partialorder %v4545, %v4591
        %vm4720 = vcmp.ge.f32.partialorder %v4546, %v4591
        %vm4721 = vcmp.ge.f32.partialorder %v4547, %v4591
        %vm4722 = vcmp.ge.f32.partialorder %v4548, %v4591
        %vm4723 = vcmp.ge.f32.partialorder %v4549, %v4591
        %v4724 = vsel %vm4692, %v4518, 0.0
        %v4725 = vsel %vm4693, %v4519, 0.0
        %v4726 = vsel %vm4694, %v4520, 0.0
        %v4727 = vsel %vm4695, %v4521, 0.0
        %v4728 = vsel %vm4696, %v4522, 0.0
        %v4729 = vsel %vm4697, %v4523, 0.0
        %v4730 = vsel %vm4698, %v4524, 0.0
        %v4731 = vsel %vm4699, %v4525, 0.0
        %v4732 = vsel %vm4700, %v4526, 0.0
        %v4733 = vsel %vm4701, %v4527, 0.0
        %v4734 = vsel %vm4702, %v4528, 0.0
        %v4735 = vsel %vm4703, %v4529, 0.0
        %v4736 = vsel %vm4704, %v4530, 0.0
        %v4737 = vsel %vm4705, %v4531, 0.0
        %v4738 = vsel %vm4706, %v4532, 0.0
        %v4739 = vsel %vm4707, %v4533, 0.0
        %v4740 = vsel %vm4708, %v4534, 0.0
        %v4741 = vsel %vm4709, %v4535, 0.0
        %v4742 = vsel %vm4710, %v4536, 0.0
        %v4743 = vsel %vm4711, %v4537, 0.0
        %v4744 = vsel %vm4712, %v4538, 0.0
        %v4745 = vsel %vm4713, %v4539, 0.0
        %v4746 = vsel %vm4714, %v4540, 0.0
        %v4747 = vsel %vm4715, %v4541, 0.0
        %v4748 = vsel %vm4716, %v4542, 0.0
        %v4749 = vsel %vm4717, %v4543, 0.0
        %v4750 = vsel %vm4718, %v4544, 0.0
        %v4751 = vsel %vm4719, %v4545, 0.0
        %v4752 = vsel %vm4720, %v4546, 0.0
        %v4753 = vsel %vm4721, %v4547, 0.0
        %v4754 = vsel %vm4722, %v4548, 0.0
        %v4755 = vsel %vm4723, %v4549, 0.0
        %v4756 = vld [vmem:[#allocation8] sm:$0xff]
        %v4757 = vld [vmem:[#allocation8 + $0x8] sm:$0xff]
        %v4758 = vld [vmem:[#allocation8 + $0x10] sm:$0xff]
        %v4759 = vld [vmem:[#allocation8 + $0x18] sm:$0xff]
        %v4760 = vld [vmem:[#allocation8 + $0x20] sm:$0xff]
        %v4761 = vld [vmem:[#allocation8 + $0x28] sm:$0xff]
        %v4762 = vld [vmem:[#allocation8 + $0x30] sm:$0xff]
        %v4763 = vld [vmem:[#allocation8 + $0x38] sm:$0xff]
        %v4764 = vld [vmem:[#allocation8 + $0x40] sm:$0xff]
        %v4765 = vld [vmem:[#allocation8 + $0x48] sm:$0xff]
        %v4766 = vld [vmem:[#allocation8 + $0x50] sm:$0xff]
        %v4767 = vld [vmem:[#allocation8 + $0x58] sm:$0xff]
        %v4768 = vld [vmem:[#allocation8 + $0x60] sm:$0xff]
        %v4769 = vld [vmem:[#allocation8 + $0x68] sm:$0xff]
        %v4770 = vld [vmem:[#allocation8 + $0x70] sm:$0xff]
        %v4771 = vld [vmem:[#allocation8 + $0x78] sm:$0xff]
        %v4772 = vld [vmem:[#allocation8 + $0x80] sm:$0xff]
        %v4773 = vld [vmem:[#allocation8 + $0x88] sm:$0xff]
        %v4774 = vld [vmem:[#allocation8 + $0x90] sm:$0xff]
        %v4775 = vld [vmem:[#allocation8 + $0x98] sm:$0xff]
        %v4776 = vld [vmem:[#allocation8 + $0xa0] sm:$0xff]
        %v4777 = vld [vmem:[#allocation8 + $0xa8] sm:$0xff]
        %v4778 = vld [vmem:[#allocation8 + $0xb0] sm:$0xff]
        %v4779 = vld [vmem:[#allocation8 + $0xb8] sm:$0xff]
        %v4780 = vld [vmem:[#allocation8 + $0xc0] sm:$0xff]
        %v4781 = vld [vmem:[#allocation8 + $0xc8] sm:$0xff]
        %v4782 = vld [vmem:[#allocation8 + $0xd0] sm:$0xff]
        %v4783 = vld [vmem:[#allocation8 + $0xd8] sm:$0xff]
        %v4784 = vld [vmem:[#allocation8 + $0xe0] sm:$0xff]
        %v4785 = vld [vmem:[#allocation8 + $0xe8] sm:$0xff]
        %v4786 = vld [vmem:[#allocation8 + $0xf0] sm:$0xff]
        %v4787 = vld [vmem:[#allocation8 + $0xf8] sm:$0xff]
        %v4788 = vld [vmem:[#allocation8 + $0x100] sm:$0xff]
        %v4789 = vld [vmem:[#allocation8 + $0x108] sm:$0xff]
        %v4790 = vld [vmem:[#allocation8 + $0x110] sm:$0xff]
        %v4791 = vld [vmem:[#allocation8 + $0x118] sm:$0xff]
        %v4792 = vld [vmem:[#allocation8 + $0x120] sm:$0xff]
        %v4793 = vld [vmem:[#allocation8 + $0x128] sm:$0xff]
        %v4794 = vld [vmem:[#allocation8 + $0x130] sm:$0xff]
        %v4795 = vld [vmem:[#allocation8 + $0x138] sm:$0xff]
        %v4796 = vld [vmem:[#allocation8 + $0x140] sm:$0xff]
        %v4797 = vld [vmem:[#allocation8 + $0x148] sm:$0xff]
        %v4798 = vld [vmem:[#allocation8 + $0x150] sm:$0xff]
        %v4799 = vld [vmem:[#allocation8 + $0x158] sm:$0xff]
        %v4800 = vld [vmem:[#allocation8 + $0x160] sm:$0xff]
        %v4801 = vld [vmem:[#allocation8 + $0x168] sm:$0xff]
        %v4802 = vld [vmem:[#allocation8 + $0x170] sm:$0xff]
        %v4803 = vld [vmem:[#allocation8 + $0x178] sm:$0xff]
        %v4804 = vld [vmem:[#allocation8 + $0x180] sm:$0xff]
        %v4805 = vld [vmem:[#allocation8 + $0x188] sm:$0xff]
        %v4806 = vld [vmem:[#allocation8 + $0x190] sm:$0xff]
        %v4807 = vld [vmem:[#allocation8 + $0x198] sm:$0xff]
        %v4808 = vld [vmem:[#allocation8 + $0x1a0] sm:$0xff]
        %v4809 = vld [vmem:[#allocation8 + $0x1a8] sm:$0xff]
        %v4810 = vld [vmem:[#allocation8 + $0x1b0] sm:$0xff]
        %v4811 = vld [vmem:[#allocation8 + $0x1b8] sm:$0xff]
        %v4812 = vld [vmem:[#allocation8 + $0x1c0] sm:$0xff]
        %v4813 = vld [vmem:[#allocation8 + $0x1c8] sm:$0xff]
        %v4814 = vld [vmem:[#allocation8 + $0x1d0] sm:$0xff]
        %v4815 = vld [vmem:[#allocation8 + $0x1d8] sm:$0xff]
        %v4816 = vld [vmem:[#allocation8 + $0x1e0] sm:$0xff]
        %v4817 = vld [vmem:[#allocation8 + $0x1e8] sm:$0xff]
        %v4818 = vld [vmem:[#allocation8 + $0x1f0] sm:$0xff]
        %v4819 = vld [vmem:[#allocation8 + $0x1f8] sm:$0xff]
        %v4820 = vld [vmem:[#allocation8 + $0x200] sm:$0xff]
        %v4821 = vld [vmem:[#allocation8 + $0x208] sm:$0xff]
        %v4822 = vld [vmem:[#allocation8 + $0x210] sm:$0xff]
        %v4823 = vld [vmem:[#allocation8 + $0x218] sm:$0xff]
        %v4824 = vld [vmem:[#allocation8 + $0x220] sm:$0xff]
        %v4825 = vld [vmem:[#allocation8 + $0x228] sm:$0xff]
        %v4826 = vld [vmem:[#allocation8 + $0x230] sm:$0xff]
        %v4827 = vld [vmem:[#allocation8 + $0x238] sm:$0xff]
        %v4828 = vld [vmem:[#allocation8 + $0x240] sm:$0xff]
        %v4829 = vld [vmem:[#allocation8 + $0x248] sm:$0xff]
        %v4830 = vld [vmem:[#allocation8 + $0x250] sm:$0xff]
        %v4831 = vld [vmem:[#allocation8 + $0x258] sm:$0xff]
        %v4832 = vld [vmem:[#allocation8 + $0x260] sm:$0xff]
        %v4833 = vld [vmem:[#allocation8 + $0x268] sm:$0xff]
        %v4834 = vld [vmem:[#allocation8 + $0x270] sm:$0xff]
        %v4835 = vld [vmem:[#allocation8 + $0x278] sm:$0xff]
        %v4836 = vld [vmem:[#allocation8 + $0x280] sm:$0xff]
        %v4837 = vld [vmem:[#allocation8 + $0x288] sm:$0xff]
        %v4838 = vld [vmem:[#allocation8 + $0x290] sm:$0xff]
        %v4839 = vld [vmem:[#allocation8 + $0x298] sm:$0xff]
        %v4840 = vld [vmem:[#allocation8 + $0x2a0] sm:$0xff]
        %v4841 = vld [vmem:[#allocation8 + $0x2a8] sm:$0xff]
        %v4842 = vld [vmem:[#allocation8 + $0x2b0] sm:$0xff]
        %v4843 = vld [vmem:[#allocation8 + $0x2b8] sm:$0xff]
        %v4844 = vld [vmem:[#allocation8 + $0x2c0] sm:$0xff]
        %v4845 = vld [vmem:[#allocation8 + $0x2c8] sm:$0xff]
        %v4846 = vld [vmem:[#allocation8 + $0x2d0] sm:$0xff]
        %v4847 = vld [vmem:[#allocation8 + $0x2d8] sm:$0xff]
        %v4848 = vld [vmem:[#allocation8 + $0x2e0] sm:$0xff]
        %v4849 = vld [vmem:[#allocation8 + $0x2e8] sm:$0xff]
        %v4850 = vld [vmem:[#allocation8 + $0x2f0] sm:$0xff]
        %v4851 = vld [vmem:[#allocation8 + $0x2f8] sm:$0xff]
        %v4852 = vld [vmem:[#allocation8 + $0x300] sm:$0xff]
        %v4853 = vld [vmem:[#allocation8 + $0x308] sm:$0xff]
        %v4854 = vld [vmem:[#allocation8 + $0x310] sm:$0xff]
        %v4855 = vld [vmem:[#allocation8 + $0x318] sm:$0xff]
        %v4856 = vld [vmem:[#allocation8 + $0x320] sm:$0xff]
        %v4857 = vld [vmem:[#allocation8 + $0x328] sm:$0xff]
        %v4858 = vld [vmem:[#allocation8 + $0x330] sm:$0xff]
        %v4859 = vld [vmem:[#allocation8 + $0x338] sm:$0xff]
        %v4860 = vld [vmem:[#allocation8 + $0x340] sm:$0xff]
        %v4861 = vld [vmem:[#allocation8 + $0x348] sm:$0xff]
        %v4862 = vld [vmem:[#allocation8 + $0x350] sm:$0xff]
        %v4863 = vld [vmem:[#allocation8 + $0x358] sm:$0xff]
        %v4864 = vld [vmem:[#allocation8 + $0x360] sm:$0xff]
        %v4865 = vld [vmem:[#allocation8 + $0x368] sm:$0xff]
        %v4866 = vld [vmem:[#allocation8 + $0x370] sm:$0xff]
        %v4867 = vld [vmem:[#allocation8 + $0x378] sm:$0xff]
        %v4868 = vld [vmem:[#allocation8 + $0x380] sm:$0xff]
        %v4869 = vld [vmem:[#allocation8 + $0x388] sm:$0xff]
        %v4870 = vld [vmem:[#allocation8 + $0x390] sm:$0xff]
        %v4871 = vld [vmem:[#allocation8 + $0x398] sm:$0xff]
        %v4872 = vld [vmem:[#allocation8 + $0x3a0] sm:$0xff]
        %v4873 = vld [vmem:[#allocation8 + $0x3a8] sm:$0xff]
        %v4874 = vld [vmem:[#allocation8 + $0x3b0] sm:$0xff]
        %v4875 = vld [vmem:[#allocation8 + $0x3b8] sm:$0xff]
        %v4876 = vld [vmem:[#allocation8 + $0x3c0] sm:$0xff]
        %v4877 = vld [vmem:[#allocation8 + $0x3c8] sm:$0xff]
        %v4878 = vld [vmem:[#allocation8 + $0x3d0] sm:$0xff]
        %v4879 = vld [vmem:[#allocation8 + $0x3d8] sm:$0xff]
        %v4880 = vld [vmem:[#allocation8 + $0x3e0] sm:$0xff]
        %v4881 = vld [vmem:[#allocation8 + $0x3e8] sm:$0xff]
        %v4882 = vld [vmem:[#allocation8 + $0x3f0] sm:$0xff]
        %v4883 = vld [vmem:[#allocation8 + $0x3f8] sm:$0xff]
        %4884 = vmatprep.subr.mxu0 0.0
        %v4885 = vand.u32 %v4771, 4294901760
        %4886 = vmatpush1.msra.mxu0 %v4885
        %4887 = vmatprep.subr.mxu0 0.0
        %v4888 = vand.u32 %v4770, 4294901760
        %4889 = vmatpush1.msra.mxu0 %v4888
        %4890 = vmatprep.subr.mxu0 0.0
        %v4891 = vand.u32 %v4769, 4294901760
        %4892 = vmatpush1.msra.mxu0 %v4891
        %4893 = vmatprep.subr.mxu0 0.0
        %v4894 = vand.u32 %v4768, 4294901760
        %4895 = vmatpush1.msra.mxu0 %v4894
        %4896 = vmatprep.subr.mxu0 0.0
        %v4897 = vand.u32 %v4767, 4294901760
        %4898 = vmatpush1.msra.mxu0 %v4897
        %4899 = vmatprep.subr.mxu0 0.0
        %v4900 = vand.u32 %v4766, 4294901760
        %4901 = vmatpush1.msra.mxu0 %v4900
        %4902 = vmatprep.subr.mxu0 0.0
        %v4903 = vand.u32 %v4765, 4294901760
        %4904 = vmatpush1.msra.mxu0 %v4903
        %4905 = vmatprep.subr.mxu0 0.0
        %v4906 = vand.u32 %v4764, 4294901760
        %4907 = vmatpush1.msra.mxu0 %v4906
        %4908 = vmatprep.subr.mxu0 0.0
        %v4909 = vand.u32 %v4763, 4294901760
        %4910 = vmatpush1.msra.mxu0 %v4909
        %4911 = vmatprep.subr.mxu0 0.0
        %v4912 = vand.u32 %v4762, 4294901760
        %4913 = vmatpush1.msra.mxu0 %v4912
        %4914 = vmatprep.subr.mxu0 0.0
        %v4915 = vand.u32 %v4761, 4294901760
        %4916 = vmatpush1.msra.mxu0 %v4915
        %4917 = vmatprep.subr.mxu0 0.0
        %v4918 = vand.u32 %v4760, 4294901760
        %4919 = vmatpush1.msra.mxu0 %v4918
        %4920 = vmatprep.subr.mxu0 0.0
        %v4921 = vand.u32 %v4759, 4294901760
        %4922 = vmatpush1.msra.mxu0 %v4921
        %4923 = vmatprep.subr.mxu0 0.0
        %v4924 = vand.u32 %v4758, 4294901760
        %4925 = vmatpush1.msra.mxu0 %v4924
        %4926 = vmatprep.subr.mxu0 0.0
        %v4927 = vand.u32 %v4757, 4294901760
        %4928 = vmatpush1.msra.mxu0 %v4927
        %4929 = vmatprep.subr.mxu0 0.0
        %v4930 = vand.u32 %v4756, 4294901760
        %4931 = vmatpush1.msra.mxu0 %v4930
        %4932 = vmatprep.subr.mxu0 0.0
        %v4933 = vand.u32 %v4787, 4294901760
        %4934 = vmatpush2.msra.mxu0 %v4933
        %4935 = vmatprep.subr.mxu0 0.0
        %v4936 = vand.u32 %v4786, 4294901760
        %4937 = vmatpush2.msra.mxu0 %v4936
        %4938 = vmatprep.subr.mxu0 0.0
        %v4939 = vand.u32 %v4785, 4294901760
        %4940 = vmatpush2.msra.mxu0 %v4939
        %4941 = vmatprep.subr.mxu0 0.0
        %v4942 = vand.u32 %v4784, 4294901760
        %4943 = vmatpush2.msra.mxu0 %v4942
        %4944 = vmatprep.subr.mxu0 0.0
        %v4945 = vand.u32 %v4783, 4294901760
        %4946 = vmatpush2.msra.mxu0 %v4945
        %4947 = vmatprep.subr.mxu0 0.0
        %v4948 = vand.u32 %v4782, 4294901760
        %4949 = vmatpush2.msra.mxu0 %v4948
        %4950 = vmatprep.subr.mxu0 0.0
        %v4951 = vand.u32 %v4781, 4294901760
        %4952 = vmatpush2.msra.mxu0 %v4951
        %4953 = vmatprep.subr.mxu0 0.0
        %v4954 = vand.u32 %v4780, 4294901760
        %4955 = vmatpush2.msra.mxu0 %v4954
        %4956 = vmatprep.subr.mxu0 0.0
        %v4957 = vand.u32 %v4779, 4294901760
        %4958 = vmatpush2.msra.mxu0 %v4957
        %4959 = vmatprep.subr.mxu0 0.0
        %v4960 = vand.u32 %v4778, 4294901760
        %4961 = vmatpush2.msra.mxu0 %v4960
        %4962 = vmatprep.subr.mxu0 0.0
        %v4963 = vand.u32 %v4777, 4294901760
        %4964 = vmatpush2.msra.mxu0 %v4963
        %4965 = vmatprep.subr.mxu0 0.0
        %v4966 = vand.u32 %v4776, 4294901760
        %4967 = vmatpush2.msra.mxu0 %v4966
        %4968 = vmatprep.subr.mxu0 0.0
        %v4969 = vand.u32 %v4775, 4294901760
        %4970 = vmatpush2.msra.mxu0 %v4969
        %4971 = vmatprep.subr.mxu0 0.0
        %v4972 = vand.u32 %v4774, 4294901760
        %4973 = vmatpush2.msra.mxu0 %v4972
        %4974 = vmatprep.subr.mxu0 0.0
        %v4975 = vand.u32 %v4773, 4294901760
        %4976 = vmatpush2.msra.mxu0 %v4975
        %4977 = vmatprep.subr.mxu0 0.0
        %v4978 = vand.u32 %v4772, 4294901760
        %4979 = vmatpush2.msra.mxu0 %v4978
        %v4980 = vand.u32 %v4725, 4294901760
        %v4981 = vsub.f32 %v4725, %v4980
        %v4982 = vand.u32 %v4981, 4294901760
        %v4983 = vsub.f32 %v4981, %v4982
        %v4984 = vand.u32 %v4983, 4294901760
        %4985 = vmatprep.mubr.f32.mxu0 %v4984
        %v4986 = vand.u32 %v4724, 4294901760
        %v4987 = vsub.f32 %v4724, %v4986
        %v4988 = vand.u32 %v4987, 4294901760
        %v4989 = vsub.f32 %v4987, %v4988
        %v4990 = vand.u32 %v4989, 4294901760
        %4991 = vmatmul.mubr.f32.gmra.mxu0 %v4990
        %v4992 = vpop.f32.mrf.mxu0
        %v4993 = vadd.f32 %v334, %v4992
        %v4994 = vpop.f32.mrf.mxu0
        %v4995 = vand.u32 %v4733, 4294901760
        %v4996 = vsub.f32 %v4733, %v4995
        %v4997 = vand.u32 %v4996, 4294901760
        %v4998 = vsub.f32 %v4996, %v4997
        %v4999 = vand.u32 %v4998, 4294901760
        %5000 = vmatprep.mubr.f32.mxu0 %v4999
        %v5001 = vand.u32 %v4732, 4294901760
        %v5002 = vsub.f32 %v4732, %v5001
        %v5003 = vand.u32 %v5002, 4294901760
        %v5004 = vsub.f32 %v5002, %v5003
        %v5005 = vand.u32 %v5004, 4294901760
        %5006 = vmatmul.mubr.f32.gmra.mxu0 %v5005
        %v5007 = vpop.f32.mrf.mxu0
        %v5008 = vadd.f32 %v334, %v5007
        %v5009 = vpop.f32.mrf.mxu0
        %v5010 = vand.u32 %v4741, 4294901760
        %v5011 = vsub.f32 %v4741, %v5010
        %v5012 = vand.u32 %v5011, 4294901760
        %v5013 = vsub.f32 %v5011, %v5012
        %v5014 = vand.u32 %v5013, 4294901760
        %5015 = vmatprep.mubr.f32.mxu0 %v5014
        %v5016 = vand.u32 %v4740, 4294901760
        %v5017 = vsub.f32 %v4740, %v5016
        %v5018 = vand.u32 %v5017, 4294901760
        %v5019 = vsub.f32 %v5017, %v5018
        %v5020 = vand.u32 %v5019, 4294901760
        %5021 = vmatmul.mubr.f32.gmra.mxu0 %v5020
        %v5022 = vpop.f32.mrf.mxu0
        %v5023 = vadd.f32 %v334, %v5022
        %v5024 = vpop.f32.mrf.mxu0
        %v5025 = vand.u32 %v4749, 4294901760
        %v5026 = vsub.f32 %v4749, %v5025
        %v5027 = vand.u32 %v5026, 4294901760
        %v5028 = vsub.f32 %v5026, %v5027
        %v5029 = vand.u32 %v5028, 4294901760
        %5030 = vmatprep.mubr.f32.mxu0 %v5029
        %v5031 = vand.u32 %v4748, 4294901760
        %v5032 = vsub.f32 %v4748, %v5031
        %v5033 = vand.u32 %v5032, 4294901760
        %v5034 = vsub.f32 %v5032, %v5033
        %v5035 = vand.u32 %v5034, 4294901760
        %5036 = vmatmul.mubr.f32.gmra.mxu0 %v5035
        %v5037 = vpop.f32.mrf.mxu0
        %v5038 = vadd.f32 %v334, %v5037
        %v5039 = vpop.f32.mrf.mxu0
        %5040 = vdwg.mxu0
        %5041 = vmatprep.subr.mxu0 0.0
        %v5042 = vand.u32 %v4771, 4294901760
        %v5043 = vsub.f32 %v4771, %v5042
        %v5044 = vand.u32 %v5043, 4294901760
        %v5045 = vsub.f32 %v5043, %v5044
        %v5046 = vand.u32 %v5045, 4294901760
        %5047 = vmatpush1.msra.mxu0 %v5046
        %5048 = vmatprep.subr.mxu0 0.0
        %v5049 = vand.u32 %v4770, 4294901760
        %v5050 = vsub.f32 %v4770, %v5049
        %v5051 = vand.u32 %v5050, 4294901760
        %v5052 = vsub.f32 %v5050, %v5051
        %v5053 = vand.u32 %v5052, 4294901760
        %5054 = vmatpush1.msra.mxu0 %v5053
        %5055 = vmatprep.subr.mxu0 0.0
        %v5056 = vand.u32 %v4769, 4294901760
        %v5057 = vsub.f32 %v4769, %v5056
        %v5058 = vand.u32 %v5057, 4294901760
        %v5059 = vsub.f32 %v5057, %v5058
        %v5060 = vand.u32 %v5059, 4294901760
        %5061 = vmatpush1.msra.mxu0 %v5060
        %5062 = vmatprep.subr.mxu0 0.0
        %v5063 = vand.u32 %v4768, 4294901760
        %v5064 = vsub.f32 %v4768, %v5063
        %v5065 = vand.u32 %v5064, 4294901760
        %v5066 = vsub.f32 %v5064, %v5065
        %v5067 = vand.u32 %v5066, 4294901760
        %5068 = vmatpush1.msra.mxu0 %v5067
        %5069 = vmatprep.subr.mxu0 0.0
        %v5070 = vand.u32 %v4767, 4294901760
        %v5071 = vsub.f32 %v4767, %v5070
        %v5072 = vand.u32 %v5071, 4294901760
        %v5073 = vsub.f32 %v5071, %v5072
        %v5074 = vand.u32 %v5073, 4294901760
        %5075 = vmatpush1.msra.mxu0 %v5074
        %5076 = vmatprep.subr.mxu0 0.0
        %v5077 = vand.u32 %v4766, 4294901760
        %v5078 = vsub.f32 %v4766, %v5077
        %v5079 = vand.u32 %v5078, 4294901760
        %v5080 = vsub.f32 %v5078, %v5079
        %v5081 = vand.u32 %v5080, 4294901760
        %5082 = vmatpush1.msra.mxu0 %v5081
        %5083 = vmatprep.subr.mxu0 0.0
        %v5084 = vand.u32 %v4765, 4294901760
        %v5085 = vsub.f32 %v4765, %v5084
        %v5086 = vand.u32 %v5085, 4294901760
        %v5087 = vsub.f32 %v5085, %v5086
        %v5088 = vand.u32 %v5087, 4294901760
        %5089 = vmatpush1.msra.mxu0 %v5088
        %5090 = vmatprep.subr.mxu0 0.0
        %v5091 = vand.u32 %v4764, 4294901760
        %v5092 = vsub.f32 %v4764, %v5091
        %v5093 = vand.u32 %v5092, 4294901760
        %v5094 = vsub.f32 %v5092, %v5093
        %v5095 = vand.u32 %v5094, 4294901760
        %5096 = vmatpush1.msra.mxu0 %v5095
        %5097 = vmatprep.subr.mxu0 0.0
        %v5098 = vand.u32 %v4763, 4294901760
        %v5099 = vsub.f32 %v4763, %v5098
        %v5100 = vand.u32 %v5099, 4294901760
        %v5101 = vsub.f32 %v5099, %v5100
        %v5102 = vand.u32 %v5101, 4294901760
        %5103 = vmatpush1.msra.mxu0 %v5102
        %5104 = vmatprep.subr.mxu0 0.0
        %v5105 = vand.u32 %v4762, 4294901760
        %v5106 = vsub.f32 %v4762, %v5105
        %v5107 = vand.u32 %v5106, 4294901760
        %v5108 = vsub.f32 %v5106, %v5107
        %v5109 = vand.u32 %v5108, 4294901760
        %5110 = vmatpush1.msra.mxu0 %v5109
        %5111 = vmatprep.subr.mxu0 0.0
        %v5112 = vand.u32 %v4761, 4294901760
        %v5113 = vsub.f32 %v4761, %v5112
        %v5114 = vand.u32 %v5113, 4294901760
        %v5115 = vsub.f32 %v5113, %v5114
        %v5116 = vand.u32 %v5115, 4294901760
        %5117 = vmatpush1.msra.mxu0 %v5116
        %5118 = vmatprep.subr.mxu0 0.0
        %v5119 = vand.u32 %v4760, 4294901760
        %v5120 = vsub.f32 %v4760, %v5119
        %v5121 = vand.u32 %v5120, 4294901760
        %v5122 = vsub.f32 %v5120, %v5121
        %v5123 = vand.u32 %v5122, 4294901760
        %5124 = vmatpush1.msra.mxu0 %v5123
        %5125 = vmatprep.subr.mxu0 0.0
        %v5126 = vand.u32 %v4759, 4294901760
        %v5127 = vsub.f32 %v4759, %v5126
        %v5128 = vand.u32 %v5127, 4294901760
        %v5129 = vsub.f32 %v5127, %v5128
        %v5130 = vand.u32 %v5129, 4294901760
        %5131 = vmatpush1.msra.mxu0 %v5130
        %5132 = vmatprep.subr.mxu0 0.0
        %v5133 = vand.u32 %v4758, 4294901760
        %v5134 = vsub.f32 %v4758, %v5133
        %v5135 = vand.u32 %v5134, 4294901760
        %v5136 = vsub.f32 %v5134, %v5135
        %v5137 = vand.u32 %v5136, 4294901760
        %5138 = vmatpush1.msra.mxu0 %v5137
        %5139 = vmatprep.subr.mxu0 0.0
        %v5140 = vand.u32 %v4757, 4294901760
        %v5141 = vsub.f32 %v4757, %v5140
        %v5142 = vand.u32 %v5141, 4294901760
        %v5143 = vsub.f32 %v5141, %v5142
        %v5144 = vand.u32 %v5143, 4294901760
        %5145 = vmatpush1.msra.mxu0 %v5144
        %5146 = vmatprep.subr.mxu0 0.0
        %v5147 = vand.u32 %v4756, 4294901760
        %v5148 = vsub.f32 %v4756, %v5147
        %v5149 = vand.u32 %v5148, 4294901760
        %v5150 = vsub.f32 %v5148, %v5149
        %v5151 = vand.u32 %v5150, 4294901760
        %5152 = vmatpush1.msra.mxu0 %v5151
        %5153 = vmatprep.subr.mxu0 0.0
        %v5154 = vand.u32 %v4787, 4294901760
        %v5155 = vsub.f32 %v4787, %v5154
        %v5156 = vand.u32 %v5155, 4294901760
        %v5157 = vsub.f32 %v5155, %v5156
        %v5158 = vand.u32 %v5157, 4294901760
        %5159 = vmatpush2.msra.mxu0 %v5158
        %5160 = vmatprep.subr.mxu0 0.0
        %v5161 = vand.u32 %v4786, 4294901760
        %v5162 = vsub.f32 %v4786, %v5161
        %v5163 = vand.u32 %v5162, 4294901760
        %v5164 = vsub.f32 %v5162, %v5163
        %v5165 = vand.u32 %v5164, 4294901760
        %5166 = vmatpush2.msra.mxu0 %v5165
        %5167 = vmatprep.subr.mxu0 0.0
        %v5168 = vand.u32 %v4785, 4294901760
        %v5169 = vsub.f32 %v4785, %v5168
        %v5170 = vand.u32 %v5169, 4294901760
        %v5171 = vsub.f32 %v5169, %v5170
        %v5172 = vand.u32 %v5171, 4294901760
        %5173 = vmatpush2.msra.mxu0 %v5172
        %5174 = vmatprep.subr.mxu0 0.0
        %v5175 = vand.u32 %v4784, 4294901760
        %v5176 = vsub.f32 %v4784, %v5175
        %v5177 = vand.u32 %v5176, 4294901760
        %v5178 = vsub.f32 %v5176, %v5177
        %v5179 = vand.u32 %v5178, 4294901760
        %5180 = vmatpush2.msra.mxu0 %v5179
        %5181 = vmatprep.subr.mxu0 0.0
        %v5182 = vand.u32 %v4783, 4294901760
        %v5183 = vsub.f32 %v4783, %v5182
        %v5184 = vand.u32 %v5183, 4294901760
        %v5185 = vsub.f32 %v5183, %v5184
        %v5186 = vand.u32 %v5185, 4294901760
        %5187 = vmatpush2.msra.mxu0 %v5186
        %5188 = vmatprep.subr.mxu0 0.0
        %v5189 = vand.u32 %v4782, 4294901760
        %v5190 = vsub.f32 %v4782, %v5189
        %v5191 = vand.u32 %v5190, 4294901760
        %v5192 = vsub.f32 %v5190, %v5191
        %v5193 = vand.u32 %v5192, 4294901760
        %5194 = vmatpush2.msra.mxu0 %v5193
        %5195 = vmatprep.subr.mxu0 0.0
        %v5196 = vand.u32 %v4781, 4294901760
        %v5197 = vsub.f32 %v4781, %v5196
        %v5198 = vand.u32 %v5197, 4294901760
        %v5199 = vsub.f32 %v5197, %v5198
        %v5200 = vand.u32 %v5199, 4294901760
        %5201 = vmatpush2.msra.mxu0 %v5200
        %5202 = vmatprep.subr.mxu0 0.0
        %v5203 = vand.u32 %v4780, 4294901760
        %v5204 = vsub.f32 %v4780, %v5203
        %v5205 = vand.u32 %v5204, 4294901760
        %v5206 = vsub.f32 %v5204, %v5205
        %v5207 = vand.u32 %v5206, 4294901760
        %5208 = vmatpush2.msra.mxu0 %v5207
        %5209 = vmatprep.subr.mxu0 0.0
        %v5210 = vand.u32 %v4779, 4294901760
        %v5211 = vsub.f32 %v4779, %v5210
        %v5212 = vand.u32 %v5211, 4294901760
        %v5213 = vsub.f32 %v5211, %v5212
        %v5214 = vand.u32 %v5213, 4294901760
        %5215 = vmatpush2.msra.mxu0 %v5214
        %5216 = vmatprep.subr.mxu0 0.0
        %v5217 = vand.u32 %v4778, 4294901760
        %v5218 = vsub.f32 %v4778, %v5217
        %v5219 = vand.u32 %v5218, 4294901760
        %v5220 = vsub.f32 %v5218, %v5219
        %v5221 = vand.u32 %v5220, 4294901760
        %5222 = vmatpush2.msra.mxu0 %v5221
        %5223 = vmatprep.subr.mxu0 0.0
        %v5224 = vand.u32 %v4777, 4294901760
        %v5225 = vsub.f32 %v4777, %v5224
        %v5226 = vand.u32 %v5225, 4294901760
        %v5227 = vsub.f32 %v5225, %v5226
        %v5228 = vand.u32 %v5227, 4294901760
        %5229 = vmatpush2.msra.mxu0 %v5228
        %5230 = vmatprep.subr.mxu0 0.0
        %v5231 = vand.u32 %v4776, 4294901760
        %v5232 = vsub.f32 %v4776, %v5231
        %v5233 = vand.u32 %v5232, 4294901760
        %v5234 = vsub.f32 %v5232, %v5233
        %v5235 = vand.u32 %v5234, 4294901760
        %5236 = vmatpush2.msra.mxu0 %v5235
        %5237 = vmatprep.subr.mxu0 0.0
        %v5238 = vand.u32 %v4775, 4294901760
        %v5239 = vsub.f32 %v4775, %v5238
        %v5240 = vand.u32 %v5239, 4294901760
        %v5241 = vsub.f32 %v5239, %v5240
        %v5242 = vand.u32 %v5241, 4294901760
        %5243 = vmatpush2.msra.mxu0 %v5242
        %5244 = vmatprep.subr.mxu0 0.0
        %v5245 = vand.u32 %v4774, 4294901760
        %v5246 = vsub.f32 %v4774, %v5245
        %v5247 = vand.u32 %v5246, 4294901760
        %v5248 = vsub.f32 %v5246, %v5247
        %v5249 = vand.u32 %v5248, 4294901760
        %5250 = vmatpush2.msra.mxu0 %v5249
        %5251 = vmatprep.subr.mxu0 0.0
        %v5252 = vand.u32 %v4773, 4294901760
        %v5253 = vsub.f32 %v4773, %v5252
        %v5254 = vand.u32 %v5253, 4294901760
        %v5255 = vsub.f32 %v5253, %v5254
        %v5256 = vand.u32 %v5255, 4294901760
        %5257 = vmatpush2.msra.mxu0 %v5256
        %5258 = vmatprep.subr.mxu0 0.0
        %v5259 = vand.u32 %v4772, 4294901760
        %v5260 = vsub.f32 %v4772, %v5259
        %v5261 = vand.u32 %v5260, 4294901760
        %v5262 = vsub.f32 %v5260, %v5261
        %v5263 = vand.u32 %v5262, 4294901760
        %5264 = vmatpush2.msra.mxu0 %v5263
        %v5265 = vand.u32 %v4725, 4294901760
        %5266 = vmatprep.mubr.f32.mxu0 %v5265
        %v5267 = vand.u32 %v4724, 4294901760
        %5268 = vmatmul.mubr.f32.gmra.mxu0 %v5267
        %v5269 = vpop.f32.mrf.mxu0
        %v5270 = vadd.f32 %v4993, %v5269
        %v5271 = vpop.f32.mrf.mxu0
        %v5272 = vand.u32 %v4733, 4294901760
        %5273 = vmatprep.mubr.f32.mxu0 %v5272
        %v5274 = vand.u32 %v4732, 4294901760
        %5275 = vmatmul.mubr.f32.gmra.mxu0 %v5274
        %v5276 = vpop.f32.mrf.mxu0
        %v5277 = vadd.f32 %v5008, %v5276
        %v5278 = vpop.f32.mrf.mxu0
        %v5279 = vand.u32 %v4741, 4294901760
        %5280 = vmatprep.mubr.f32.mxu0 %v5279
        %v5281 = vand.u32 %v4740, 4294901760
        %5282 = vmatmul.mubr.f32.gmra.mxu0 %v5281
        %v5283 = vpop.f32.mrf.mxu0
        %v5284 = vadd.f32 %v5023, %v5283
        %v5285 = vpop.f32.mrf.mxu0
        %v5286 = vand.u32 %v4749, 4294901760
        %5287 = vmatprep.mubr.f32.mxu0 %v5286
        %v5288 = vand.u32 %v4748, 4294901760
        %5289 = vmatmul.mubr.f32.gmra.mxu0 %v5288
        %v5290 = vpop.f32.mrf.mxu0
        %v5291 = vadd.f32 %v5038, %v5290
        %v5292 = vpop.f32.mrf.mxu0
        %5293 = vdwg.mxu0
        %5294 = vmatprep.subr.mxu0 0.0
        %v5295 = vand.u32 %v4771, 4294901760
        %v5296 = vsub.f32 %v4771, %v5295
        %5297 = vmatpush1.msra.mxu0 %v5296
        %5298 = vmatprep.subr.mxu0 0.0
        %v5299 = vand.u32 %v4770, 4294901760
        %v5300 = vsub.f32 %v4770, %v5299
        %5301 = vmatpush1.msra.mxu0 %v5300
        %5302 = vmatprep.subr.mxu0 0.0
        %v5303 = vand.u32 %v4769, 4294901760
        %v5304 = vsub.f32 %v4769, %v5303
        %5305 = vmatpush1.msra.mxu0 %v5304
        %5306 = vmatprep.subr.mxu0 0.0
        %v5307 = vand.u32 %v4768, 4294901760
        %v5308 = vsub.f32 %v4768, %v5307
        %5309 = vmatpush1.msra.mxu0 %v5308
        %5310 = vmatprep.subr.mxu0 0.0
        %v5311 = vand.u32 %v4767, 4294901760
        %v5312 = vsub.f32 %v4767, %v5311
        %5313 = vmatpush1.msra.mxu0 %v5312
        %5314 = vmatprep.subr.mxu0 0.0
        %v5315 = vand.u32 %v4766, 4294901760
        %v5316 = vsub.f32 %v4766, %v5315
        %5317 = vmatpush1.msra.mxu0 %v5316
        %5318 = vmatprep.subr.mxu0 0.0
        %v5319 = vand.u32 %v4765, 4294901760
        %v5320 = vsub.f32 %v4765, %v5319
        %5321 = vmatpush1.msra.mxu0 %v5320
        %5322 = vmatprep.subr.mxu0 0.0
        %v5323 = vand.u32 %v4764, 4294901760
        %v5324 = vsub.f32 %v4764, %v5323
        %5325 = vmatpush1.msra.mxu0 %v5324
        %5326 = vmatprep.subr.mxu0 0.0
        %v5327 = vand.u32 %v4763, 4294901760
        %v5328 = vsub.f32 %v4763, %v5327
        %5329 = vmatpush1.msra.mxu0 %v5328
        %5330 = vmatprep.subr.mxu0 0.0
        %v5331 = vand.u32 %v4762, 4294901760
        %v5332 = vsub.f32 %v4762, %v5331
        %5333 = vmatpush1.msra.mxu0 %v5332
        %5334 = vmatprep.subr.mxu0 0.0
        %v5335 = vand.u32 %v4761, 4294901760
        %v5336 = vsub.f32 %v4761, %v5335
        %5337 = vmatpush1.msra.mxu0 %v5336
        %5338 = vmatprep.subr.mxu0 0.0
        %v5339 = vand.u32 %v4760, 4294901760
        %v5340 = vsub.f32 %v4760, %v5339
        %5341 = vmatpush1.msra.mxu0 %v5340
        %5342 = vmatprep.subr.mxu0 0.0
        %v5343 = vand.u32 %v4759, 4294901760
        %v5344 = vsub.f32 %v4759, %v5343
        %5345 = vmatpush1.msra.mxu0 %v5344
        %5346 = vmatprep.subr.mxu0 0.0
        %v5347 = vand.u32 %v4758, 4294901760
        %v5348 = vsub.f32 %v4758, %v5347
        %5349 = vmatpush1.msra.mxu0 %v5348
        %5350 = vmatprep.subr.mxu0 0.0
        %v5351 = vand.u32 %v4757, 4294901760
        %v5352 = vsub.f32 %v4757, %v5351
        %5353 = vmatpush1.msra.mxu0 %v5352
        %5354 = vmatprep.subr.mxu0 0.0
        %v5355 = vand.u32 %v4756, 4294901760
        %v5356 = vsub.f32 %v4756, %v5355
        %5357 = vmatpush1.msra.mxu0 %v5356
        %5358 = vmatprep.subr.mxu0 0.0
        %v5359 = vand.u32 %v4787, 4294901760
        %v5360 = vsub.f32 %v4787, %v5359
        %5361 = vmatpush2.msra.mxu0 %v5360
        %5362 = vmatprep.subr.mxu0 0.0
        %v5363 = vand.u32 %v4786, 4294901760
        %v5364 = vsub.f32 %v4786, %v5363
        %5365 = vmatpush2.msra.mxu0 %v5364
        %5366 = vmatprep.subr.mxu0 0.0
        %v5367 = vand.u32 %v4785, 4294901760
        %v5368 = vsub.f32 %v4785, %v5367
        %5369 = vmatpush2.msra.mxu0 %v5368
        %5370 = vmatprep.subr.mxu0 0.0
        %v5371 = vand.u32 %v4784, 4294901760
        %v5372 = vsub.f32 %v4784, %v5371
        %5373 = vmatpush2.msra.mxu0 %v5372
        %5374 = vmatprep.subr.mxu0 0.0
        %v5375 = vand.u32 %v4783, 4294901760
        %v5376 = vsub.f32 %v4783, %v5375
        %5377 = vmatpush2.msra.mxu0 %v5376
        %5378 = vmatprep.subr.mxu0 0.0
        %v5379 = vand.u32 %v4782, 4294901760
        %v5380 = vsub.f32 %v4782, %v5379
        %5381 = vmatpush2.msra.mxu0 %v5380
        %5382 = vmatprep.subr.mxu0 0.0
        %v5383 = vand.u32 %v4781, 4294901760
        %v5384 = vsub.f32 %v4781, %v5383
        %5385 = vmatpush2.msra.mxu0 %v5384
        %5386 = vmatprep.subr.mxu0 0.0
        %v5387 = vand.u32 %v4780, 4294901760
        %v5388 = vsub.f32 %v4780, %v5387
        %5389 = vmatpush2.msra.mxu0 %v5388
        %5390 = vmatprep.subr.mxu0 0.0
        %v5391 = vand.u32 %v4779, 4294901760
        %v5392 = vsub.f32 %v4779, %v5391
        %5393 = vmatpush2.msra.mxu0 %v5392
        %5394 = vmatprep.subr.mxu0 0.0
        %v5395 = vand.u32 %v4778, 4294901760
        %v5396 = vsub.f32 %v4778, %v5395
        %5397 = vmatpush2.msra.mxu0 %v5396
        %5398 = vmatprep.subr.mxu0 0.0
        %v5399 = vand.u32 %v4777, 4294901760
        %v5400 = vsub.f32 %v4777, %v5399
        %5401 = vmatpush2.msra.mxu0 %v5400
        %5402 = vmatprep.subr.mxu0 0.0
        %v5403 = vand.u32 %v4776, 4294901760
        %v5404 = vsub.f32 %v4776, %v5403
        %5405 = vmatpush2.msra.mxu0 %v5404
        %5406 = vmatprep.subr.mxu0 0.0
        %v5407 = vand.u32 %v4775, 4294901760
        %v5408 = vsub.f32 %v4775, %v5407
        %5409 = vmatpush2.msra.mxu0 %v5408
        %5410 = vmatprep.subr.mxu0 0.0
        %v5411 = vand.u32 %v4774, 4294901760
        %v5412 = vsub.f32 %v4774, %v5411
        %5413 = vmatpush2.msra.mxu0 %v5412
        %5414 = vmatprep.subr.mxu0 0.0
        %v5415 = vand.u32 %v4773, 4294901760
        %v5416 = vsub.f32 %v4773, %v5415
        %5417 = vmatpush2.msra.mxu0 %v5416
        %5418 = vmatprep.subr.mxu0 0.0
        %v5419 = vand.u32 %v4772, 4294901760
        %v5420 = vsub.f32 %v4772, %v5419
        %5421 = vmatpush2.msra.mxu0 %v5420
        %v5422 = vand.u32 %v4725, 4294901760
        %v5423 = vsub.f32 %v4725, %v5422
        %5424 = vmatprep.mubr.f32.mxu0 %v5423
        %v5425 = vand.u32 %v4724, 4294901760
        %v5426 = vsub.f32 %v4724, %v5425
        %5427 = vmatmul.mubr.f32.gmra.mxu0 %v5426
        %v5428 = vpop.f32.mrf.mxu0
        %v5429 = vadd.f32 %v5270, %v5428
        %v5430 = vpop.f32.mrf.mxu0
        %v5431 = vand.u32 %v4733, 4294901760
        %v5432 = vsub.f32 %v4733, %v5431
        %5433 = vmatprep.mubr.f32.mxu0 %v5432
        %v5434 = vand.u32 %v4732, 4294901760
        %v5435 = vsub.f32 %v4732, %v5434
        %5436 = vmatmul.mubr.f32.gmra.mxu0 %v5435
        %v5437 = vpop.f32.mrf.mxu0
        %v5438 = vadd.f32 %v5277, %v5437
        %v5439 = vpop.f32.mrf.mxu0
        %v5440 = vand.u32 %v4741, 4294901760
        %v5441 = vsub.f32 %v4741, %v5440
        %5442 = vmatprep.mubr.f32.mxu0 %v5441
        %v5443 = vand.u32 %v4740, 4294901760
        %v5444 = vsub.f32 %v4740, %v5443
        %5445 = vmatmul.mubr.f32.gmra.mxu0 %v5444
        %v5446 = vpop.f32.mrf.mxu0
        %v5447 = vadd.f32 %v5284, %v5446
        %v5448 = vpop.f32.mrf.mxu0
        %v5449 = vand.u32 %v4749, 4294901760
        %v5450 = vsub.f32 %v4749, %v5449
        %5451 = vmatprep.mubr.f32.mxu0 %v5450
        %v5452 = vand.u32 %v4748, 4294901760
        %v5453 = vsub.f32 %v4748, %v5452
        %5454 = vmatmul.mubr.f32.gmra.mxu0 %v5453
        %v5455 = vpop.f32.mrf.mxu0
        %v5456 = vadd.f32 %v5291, %v5455
        %v5457 = vpop.f32.mrf.mxu0
        %5458 = vdwg.mxu0
        %5459 = vmatprep.subr.mxu0 0.0
        %v5460 = vand.u32 %v4771, 4294901760
        %5461 = vmatpush1.msra.mxu0 %v5460
        %5462 = vmatprep.subr.mxu0 0.0
        %v5463 = vand.u32 %v4770, 4294901760
        %5464 = vmatpush1.msra.mxu0 %v5463
        %5465 = vmatprep.subr.mxu0 0.0
        %v5466 = vand.u32 %v4769, 4294901760
        %5467 = vmatpush1.msra.mxu0 %v5466
        %5468 = vmatprep.subr.mxu0 0.0
        %v5469 = vand.u32 %v4768, 4294901760
        %5470 = vmatpush1.msra.mxu0 %v5469
        %5471 = vmatprep.subr.mxu0 0.0
        %v5472 = vand.u32 %v4767, 4294901760
        %5473 = vmatpush1.msra.mxu0 %v5472
        %5474 = vmatprep.subr.mxu0 0.0
        %v5475 = vand.u32 %v4766, 4294901760
        %5476 = vmatpush1.msra.mxu0 %v5475
        %5477 = vmatprep.subr.mxu0 0.0
        %v5478 = vand.u32 %v4765, 4294901760
        %5479 = vmatpush1.msra.mxu0 %v5478
        %5480 = vmatprep.subr.mxu0 0.0
        %v5481 = vand.u32 %v4764, 4294901760
        %5482 = vmatpush1.msra.mxu0 %v5481
        %5483 = vmatprep.subr.mxu0 0.0
        %v5484 = vand.u32 %v4763, 4294901760
        %5485 = vmatpush1.msra.mxu0 %v5484
        %5486 = vmatprep.subr.mxu0 0.0
        %v5487 = vand.u32 %v4762, 4294901760
        %5488 = vmatpush1.msra.mxu0 %v5487
        %5489 = vmatprep.subr.mxu0 0.0
        %v5490 = vand.u32 %v4761, 4294901760
        %5491 = vmatpush1.msra.mxu0 %v5490
        %5492 = vmatprep.subr.mxu0 0.0
        %v5493 = vand.u32 %v4760, 4294901760
        %5494 = vmatpush1.msra.mxu0 %v5493
        %5495 = vmatprep.subr.mxu0 0.0
        %v5496 = vand.u32 %v4759, 4294901760
        %5497 = vmatpush1.msra.mxu0 %v5496
        %5498 = vmatprep.subr.mxu0 0.0
        %v5499 = vand.u32 %v4758, 4294901760
        %5500 = vmatpush1.msra.mxu0 %v5499
        %5501 = vmatprep.subr.mxu0 0.0
        %v5502 = vand.u32 %v4757, 4294901760
        %5503 = vmatpush1.msra.mxu0 %v5502
        %5504 = vmatprep.subr.mxu0 0.0
        %v5505 = vand.u32 %v4756, 4294901760
        %5506 = vmatpush1.msra.mxu0 %v5505
        %5507 = vmatprep.subr.mxu0 0.0
        %v5508 = vand.u32 %v4787, 4294901760
        %5509 = vmatpush2.msra.mxu0 %v5508
        %5510 = vmatprep.subr.mxu0 0.0
        %v5511 = vand.u32 %v4786, 4294901760
        %5512 = vmatpush2.msra.mxu0 %v5511
        %5513 = vmatprep.subr.mxu0 0.0
        %v5514 = vand.u32 %v4785, 4294901760
        %5515 = vmatpush2.msra.mxu0 %v5514
        %5516 = vmatprep.subr.mxu0 0.0
        %v5517 = vand.u32 %v4784, 4294901760
        %5518 = vmatpush2.msra.mxu0 %v5517
        %5519 = vmatprep.subr.mxu0 0.0
        %v5520 = vand.u32 %v4783, 4294901760
        %5521 = vmatpush2.msra.mxu0 %v5520
        %5522 = vmatprep.subr.mxu0 0.0
        %v5523 = vand.u32 %v4782, 4294901760
        %5524 = vmatpush2.msra.mxu0 %v5523
        %5525 = vmatprep.subr.mxu0 0.0
        %v5526 = vand.u32 %v4781, 4294901760
        %5527 = vmatpush2.msra.mxu0 %v5526
        %5528 = vmatprep.subr.mxu0 0.0
        %v5529 = vand.u32 %v4780, 4294901760
        %5530 = vmatpush2.msra.mxu0 %v5529
        %5531 = vmatprep.subr.mxu0 0.0
        %v5532 = vand.u32 %v4779, 4294901760
        %5533 = vmatpush2.msra.mxu0 %v5532
        %5534 = vmatprep.subr.mxu0 0.0
        %v5535 = vand.u32 %v4778, 4294901760
        %5536 = vmatpush2.msra.mxu0 %v5535
        %5537 = vmatprep.subr.mxu0 0.0
        %v5538 = vand.u32 %v4777, 4294901760
        %5539 = vmatpush2.msra.mxu0 %v5538
        %5540 = vmatprep.subr.mxu0 0.0
        %v5541 = vand.u32 %v4776, 4294901760
        %5542 = vmatpush2.msra.mxu0 %v5541
        %5543 = vmatprep.subr.mxu0 0.0
        %v5544 = vand.u32 %v4775, 4294901760
        %5545 = vmatpush2.msra.mxu0 %v5544
        %5546 = vmatprep.subr.mxu0 0.0
        %v5547 = vand.u32 %v4774, 4294901760
        %5548 = vmatpush2.msra.mxu0 %v5547
        %5549 = vmatprep.subr.mxu0 0.0
        %v5550 = vand.u32 %v4773, 4294901760
        %5551 = vmatpush2.msra.mxu0 %v5550
        %5552 = vmatprep.subr.mxu0 0.0
        %v5553 = vand.u32 %v4772, 4294901760
        %5554 = vmatpush2.msra.mxu0 %v5553
        %v5555 = vand.u32 %v4725, 4294901760
        %v5556 = vsub.f32 %v4725, %v5555
        %v5557 = vand.u32 %v5556, 4294901760
        %5558 = vmatprep.mubr.f32.mxu0 %v5557
        %v5559 = vand.u32 %v4724, 4294901760
        %v5560 = vsub.f32 %v4724, %v5559
        %v5561 = vand.u32 %v5560, 4294901760
        %5562 = vmatmul.mubr.f32.gmra.mxu0 %v5561
        %v5563 = vpop.f32.mrf.mxu0
        %v5564 = vadd.f32 %v5429, %v5563
        %v5565 = vpop.f32.mrf.mxu0
        %v5566 = vand.u32 %v4733, 4294901760
        %v5567 = vsub.f32 %v4733, %v5566
        %v5568 = vand.u32 %v5567, 4294901760
        %5569 = vmatprep.mubr.f32.mxu0 %v5568
        %v5570 = vand.u32 %v4732, 4294901760
        %v5571 = vsub.f32 %v4732, %v5570
        %v5572 = vand.u32 %v5571, 4294901760
        %5573 = vmatmul.mubr.f32.gmra.mxu0 %v5572
        %v5574 = vpop.f32.mrf.mxu0
        %v5575 = vadd.f32 %v5438, %v5574
        %v5576 = vpop.f32.mrf.mxu0
        %v5577 = vand.u32 %v4741, 4294901760
        %v5578 = vsub.f32 %v4741, %v5577
        %v5579 = vand.u32 %v5578, 4294901760
        %5580 = vmatprep.mubr.f32.mxu0 %v5579
        %v5581 = vand.u32 %v4740, 4294901760
        %v5582 = vsub.f32 %v4740, %v5581
        %v5583 = vand.u32 %v5582, 4294901760
        %5584 = vmatmul.mubr.f32.gmra.mxu0 %v5583
        %v5585 = vpop.f32.mrf.mxu0
        %v5586 = vadd.f32 %v5447, %v5585
        %v5587 = vpop.f32.mrf.mxu0
        %v5588 = vand.u32 %v4749, 4294901760
        %v5589 = vsub.f32 %v4749, %v5588
        %v5590 = vand.u32 %v5589, 4294901760
        %5591 = vmatprep.mubr.f32.mxu0 %v5590
        %v5592 = vand.u32 %v4748, 4294901760
        %v5593 = vsub.f32 %v4748, %v5592
        %v5594 = vand.u32 %v5593, 4294901760
        %5595 = vmatmul.mubr.f32.gmra.mxu0 %v5594
        %v5596 = vpop.f32.mrf.mxu0
        %v5597 = vadd.f32 %v5456, %v5596
        %v5598 = vpop.f32.mrf.mxu0
        %5599 = vdwg.mxu0
        %5600 = vmatprep.subr.mxu0 0.0
        %v5601 = vand.u32 %v4771, 4294901760
        %v5602 = vsub.f32 %v4771, %v5601
        %v5603 = vand.u32 %v5602, 4294901760
        %5604 = vmatpush1.msra.mxu0 %v5603
        %5605 = vmatprep.subr.mxu0 0.0
        %v5606 = vand.u32 %v4770, 4294901760
        %v5607 = vsub.f32 %v4770, %v5606
        %v5608 = vand.u32 %v5607, 4294901760
        %5609 = vmatpush1.msra.mxu0 %v5608
        %5610 = vmatprep.subr.mxu0 0.0
        %v5611 = vand.u32 %v4769, 4294901760
        %v5612 = vsub.f32 %v4769, %v5611
        %v5613 = vand.u32 %v5612, 4294901760
        %5614 = vmatpush1.msra.mxu0 %v5613
        %5615 = vmatprep.subr.mxu0 0.0
        %v5616 = vand.u32 %v4768, 4294901760
        %v5617 = vsub.f32 %v4768, %v5616
        %v5618 = vand.u32 %v5617, 4294901760
        %5619 = vmatpush1.msra.mxu0 %v5618
        %5620 = vmatprep.subr.mxu0 0.0
        %v5621 = vand.u32 %v4767, 4294901760
        %v5622 = vsub.f32 %v4767, %v5621
        %v5623 = vand.u32 %v5622, 4294901760
        %5624 = vmatpush1.msra.mxu0 %v5623
        %5625 = vmatprep.subr.mxu0 0.0
        %v5626 = vand.u32 %v4766, 4294901760
        %v5627 = vsub.f32 %v4766, %v5626
        %v5628 = vand.u32 %v5627, 4294901760
        %5629 = vmatpush1.msra.mxu0 %v5628
        %5630 = vmatprep.subr.mxu0 0.0
        %v5631 = vand.u32 %v4765, 4294901760
        %v5632 = vsub.f32 %v4765, %v5631
        %v5633 = vand.u32 %v5632, 4294901760
        %5634 = vmatpush1.msra.mxu0 %v5633
        %5635 = vmatprep.subr.mxu0 0.0
        %v5636 = vand.u32 %v4764, 4294901760
        %v5637 = vsub.f32 %v4764, %v5636
        %v5638 = vand.u32 %v5637, 4294901760
        %5639 = vmatpush1.msra.mxu0 %v5638
        %5640 = vmatprep.subr.mxu0 0.0
        %v5641 = vand.u32 %v4763, 4294901760
        %v5642 = vsub.f32 %v4763, %v5641
        %v5643 = vand.u32 %v5642, 4294901760
        %5644 = vmatpush1.msra.mxu0 %v5643
        %5645 = vmatprep.subr.mxu0 0.0
        %v5646 = vand.u32 %v4762, 4294901760
        %v5647 = vsub.f32 %v4762, %v5646
        %v5648 = vand.u32 %v5647, 4294901760
        %5649 = vmatpush1.msra.mxu0 %v5648
        %5650 = vmatprep.subr.mxu0 0.0
        %v5651 = vand.u32 %v4761, 4294901760
        %v5652 = vsub.f32 %v4761, %v5651
        %v5653 = vand.u32 %v5652, 4294901760
        %5654 = vmatpush1.msra.mxu0 %v5653
        %5655 = vmatprep.subr.mxu0 0.0
        %v5656 = vand.u32 %v4760, 4294901760
        %v5657 = vsub.f32 %v4760, %v5656
        %v5658 = vand.u32 %v5657, 4294901760
        %5659 = vmatpush1.msra.mxu0 %v5658
        %5660 = vmatprep.subr.mxu0 0.0
        %v5661 = vand.u32 %v4759, 4294901760
        %v5662 = vsub.f32 %v4759, %v5661
        %v5663 = vand.u32 %v5662, 4294901760
        %5664 = vmatpush1.msra.mxu0 %v5663
        %5665 = vmatprep.subr.mxu0 0.0
        %v5666 = vand.u32 %v4758, 4294901760
        %v5667 = vsub.f32 %v4758, %v5666
        %v5668 = vand.u32 %v5667, 4294901760
        %5669 = vmatpush1.msra.mxu0 %v5668
        %5670 = vmatprep.subr.mxu0 0.0
        %v5671 = vand.u32 %v4757, 4294901760
        %v5672 = vsub.f32 %v4757, %v5671
        %v5673 = vand.u32 %v5672, 4294901760
        %5674 = vmatpush1.msra.mxu0 %v5673
        %5675 = vmatprep.subr.mxu0 0.0
        %v5676 = vand.u32 %v4756, 4294901760
        %v5677 = vsub.f32 %v4756, %v5676
        %v5678 = vand.u32 %v5677, 4294901760
        %5679 = vmatpush1.msra.mxu0 %v5678
        %5680 = vmatprep.subr.mxu0 0.0
        %v5681 = vand.u32 %v4787, 4294901760
        %v5682 = vsub.f32 %v4787, %v5681
        %v5683 = vand.u32 %v5682, 4294901760
        %5684 = vmatpush2.msra.mxu0 %v5683
        %5685 = vmatprep.subr.mxu0 0.0
        %v5686 = vand.u32 %v4786, 4294901760
        %v5687 = vsub.f32 %v4786, %v5686
        %v5688 = vand.u32 %v5687, 4294901760
        %5689 = vmatpush2.msra.mxu0 %v5688
        %5690 = vmatprep.subr.mxu0 0.0
        %v5691 = vand.u32 %v4785, 4294901760
        %v5692 = vsub.f32 %v4785, %v5691
        %v5693 = vand.u32 %v5692, 4294901760
        %5694 = vmatpush2.msra.mxu0 %v5693
        %5695 = vmatprep.subr.mxu0 0.0
        %v5696 = vand.u32 %v4784, 4294901760
        %v5697 = vsub.f32 %v4784, %v5696
        %v5698 = vand.u32 %v5697, 4294901760
        %5699 = vmatpush2.msra.mxu0 %v5698
        %5700 = vmatprep.subr.mxu0 0.0
        %v5701 = vand.u32 %v4783, 4294901760
        %v5702 = vsub.f32 %v4783, %v5701
        %v5703 = vand.u32 %v5702, 4294901760
        %5704 = vmatpush2.msra.mxu0 %v5703
        %5705 = vmatprep.subr.mxu0 0.0
        %v5706 = vand.u32 %v4782, 4294901760
        %v5707 = vsub.f32 %v4782, %v5706
        %v5708 = vand.u32 %v5707, 4294901760
        %5709 = vmatpush2.msra.mxu0 %v5708
        %5710 = vmatprep.subr.mxu0 0.0
        %v5711 = vand.u32 %v4781, 4294901760
        %v5712 = vsub.f32 %v4781, %v5711
        %v5713 = vand.u32 %v5712, 4294901760
        %5714 = vmatpush2.msra.mxu0 %v5713
        %5715 = vmatprep.subr.mxu0 0.0
        %v5716 = vand.u32 %v4780, 4294901760
        %v5717 = vsub.f32 %v4780, %v5716
        %v5718 = vand.u32 %v5717, 4294901760
        %5719 = vmatpush2.msra.mxu0 %v5718
        %5720 = vmatprep.subr.mxu0 0.0
        %v5721 = vand.u32 %v4779, 4294901760
        %v5722 = vsub.f32 %v4779, %v5721
        %v5723 = vand.u32 %v5722, 4294901760
        %5724 = vmatpush2.msra.mxu0 %v5723
        %5725 = vmatprep.subr.mxu0 0.0
        %v5726 = vand.u32 %v4778, 4294901760
        %v5727 = vsub.f32 %v4778, %v5726
        %v5728 = vand.u32 %v5727, 4294901760
        %5729 = vmatpush2.msra.mxu0 %v5728
        %5730 = vmatprep.subr.mxu0 0.0
        %v5731 = vand.u32 %v4777, 4294901760
        %v5732 = vsub.f32 %v4777, %v5731
        %v5733 = vand.u32 %v5732, 4294901760
        %5734 = vmatpush2.msra.mxu0 %v5733
        %5735 = vmatprep.subr.mxu0 0.0
        %v5736 = vand.u32 %v4776, 4294901760
        %v5737 = vsub.f32 %v4776, %v5736
        %v5738 = vand.u32 %v5737, 4294901760
        %5739 = vmatpush2.msra.mxu0 %v5738
        %5740 = vmatprep.subr.mxu0 0.0
        %v5741 = vand.u32 %v4775, 4294901760
        %v5742 = vsub.f32 %v4775, %v5741
        %v5743 = vand.u32 %v5742, 4294901760
        %5744 = vmatpush2.msra.mxu0 %v5743
        %5745 = vmatprep.subr.mxu0 0.0
        %v5746 = vand.u32 %v4774, 4294901760
        %v5747 = vsub.f32 %v4774, %v5746
        %v5748 = vand.u32 %v5747, 4294901760
        %5749 = vmatpush2.msra.mxu0 %v5748
        %5750 = vmatprep.subr.mxu0 0.0
        %v5751 = vand.u32 %v4773, 4294901760
        %v5752 = vsub.f32 %v4773, %v5751
        %v5753 = vand.u32 %v5752, 4294901760
        %5754 = vmatpush2.msra.mxu0 %v5753
        %5755 = vmatprep.subr.mxu0 0.0
        %v5756 = vand.u32 %v4772, 4294901760
        %v5757 = vsub.f32 %v4772, %v5756
        %v5758 = vand.u32 %v5757, 4294901760
        %5759 = vmatpush2.msra.mxu0 %v5758
        %v5760 = vand.u32 %v4725, 4294901760
        %5761 = vmatprep.mubr.f32.mxu0 %v5760
        %v5762 = vand.u32 %v4724, 4294901760
        %5763 = vmatmul.mubr.f32.gmra.mxu0 %v5762
        %v5764 = vpop.f32.mrf.mxu0
        %v5765 = vadd.f32 %v5564, %v5764
        %v5766 = vpop.f32.mrf.mxu0
        %v5767 = vand.u32 %v4733, 4294901760
        %5768 = vmatprep.mubr.f32.mxu0 %v5767
        %v5769 = vand.u32 %v4732, 4294901760
        %5770 = vmatmul.mubr.f32.gmra.mxu0 %v5769
        %v5771 = vpop.f32.mrf.mxu0
        %v5772 = vadd.f32 %v5575, %v5771
        %v5773 = vpop.f32.mrf.mxu0
        %v5774 = vand.u32 %v4741, 4294901760
        %5775 = vmatprep.mubr.f32.mxu0 %v5774
        %v5776 = vand.u32 %v4740, 4294901760
        %5777 = vmatmul.mubr.f32.gmra.mxu0 %v5776
        %v5778 = vpop.f32.mrf.mxu0
        %v5779 = vadd.f32 %v5586, %v5778
        %v5780 = vpop.f32.mrf.mxu0
        %v5781 = vand.u32 %v4749, 4294901760
        %5782 = vmatprep.mubr.f32.mxu0 %v5781
        %v5783 = vand.u32 %v4748, 4294901760
        %5784 = vmatmul.mubr.f32.gmra.mxu0 %v5783
        %v5785 = vpop.f32.mrf.mxu0
        %v5786 = vadd.f32 %v5597, %v5785
        %v5787 = vpop.f32.mrf.mxu0
        %5788 = vdwg.mxu0
        %5789 = vmatprep.subr.mxu0 0.0
        %v5790 = vand.u32 %v4771, 4294901760
        %5791 = vmatpush1.msra.mxu0 %v5790
        %5792 = vmatprep.subr.mxu0 0.0
        %v5793 = vand.u32 %v4770, 4294901760
        %5794 = vmatpush1.msra.mxu0 %v5793
        %5795 = vmatprep.subr.mxu0 0.0
        %v5796 = vand.u32 %v4769, 4294901760
        %5797 = vmatpush1.msra.mxu0 %v5796
        %5798 = vmatprep.subr.mxu0 0.0
        %v5799 = vand.u32 %v4768, 4294901760
        %5800 = vmatpush1.msra.mxu0 %v5799
        %5801 = vmatprep.subr.mxu0 0.0
        %v5802 = vand.u32 %v4767, 4294901760
        %5803 = vmatpush1.msra.mxu0 %v5802
        %5804 = vmatprep.subr.mxu0 0.0
        %v5805 = vand.u32 %v4766, 4294901760
        %5806 = vmatpush1.msra.mxu0 %v5805
        %5807 = vmatprep.subr.mxu0 0.0
        %v5808 = vand.u32 %v4765, 4294901760
        %5809 = vmatpush1.msra.mxu0 %v5808
        %5810 = vmatprep.subr.mxu0 0.0
        %v5811 = vand.u32 %v4764, 4294901760
        %5812 = vmatpush1.msra.mxu0 %v5811
        %5813 = vmatprep.subr.mxu0 0.0
        %v5814 = vand.u32 %v4763, 4294901760
        %5815 = vmatpush1.msra.mxu0 %v5814
        %5816 = vmatprep.subr.mxu0 0.0
        %v5817 = vand.u32 %v4762, 4294901760
        %5818 = vmatpush1.msra.mxu0 %v5817
        %5819 = vmatprep.subr.mxu0 0.0
        %v5820 = vand.u32 %v4761, 4294901760
        %5821 = vmatpush1.msra.mxu0 %v5820
        %5822 = vmatprep.subr.mxu0 0.0
        %v5823 = vand.u32 %v4760, 4294901760
        %5824 = vmatpush1.msra.mxu0 %v5823
        %5825 = vmatprep.subr.mxu0 0.0
        %v5826 = vand.u32 %v4759, 4294901760
        %5827 = vmatpush1.msra.mxu0 %v5826
        %5828 = vmatprep.subr.mxu0 0.0
        %v5829 = vand.u32 %v4758, 4294901760
        %5830 = vmatpush1.msra.mxu0 %v5829
        %5831 = vmatprep.subr.mxu0 0.0
        %v5832 = vand.u32 %v4757, 4294901760
        %5833 = vmatpush1.msra.mxu0 %v5832
        %5834 = vmatprep.subr.mxu0 0.0
        %v5835 = vand.u32 %v4756, 4294901760
        %5836 = vmatpush1.msra.mxu0 %v5835
        %5837 = vmatprep.subr.mxu0 0.0
        %v5838 = vand.u32 %v4787, 4294901760
        %5839 = vmatpush2.msra.mxu0 %v5838
        %5840 = vmatprep.subr.mxu0 0.0
        %v5841 = vand.u32 %v4786, 4294901760
        %5842 = vmatpush2.msra.mxu0 %v5841
        %5843 = vmatprep.subr.mxu0 0.0
        %v5844 = vand.u32 %v4785, 4294901760
        %5845 = vmatpush2.msra.mxu0 %v5844
        %5846 = vmatprep.subr.mxu0 0.0
        %v5847 = vand.u32 %v4784, 4294901760
        %5848 = vmatpush2.msra.mxu0 %v5847
        %5849 = vmatprep.subr.mxu0 0.0
        %v5850 = vand.u32 %v4783, 4294901760
        %5851 = vmatpush2.msra.mxu0 %v5850
        %5852 = vmatprep.subr.mxu0 0.0
        %v5853 = vand.u32 %v4782, 4294901760
        %5854 = vmatpush2.msra.mxu0 %v5853
        %5855 = vmatprep.subr.mxu0 0.0
        %v5856 = vand.u32 %v4781, 4294901760
        %5857 = vmatpush2.msra.mxu0 %v5856
        %5858 = vmatprep.subr.mxu0 0.0
        %v5859 = vand.u32 %v4780, 4294901760
        %5860 = vmatpush2.msra.mxu0 %v5859
        %5861 = vmatprep.subr.mxu0 0.0
        %v5862 = vand.u32 %v4779, 4294901760
        %5863 = vmatpush2.msra.mxu0 %v5862
        %5864 = vmatprep.subr.mxu0 0.0
        %v5865 = vand.u32 %v4778, 4294901760
        %5866 = vmatpush2.msra.mxu0 %v5865
        %5867 = vmatprep.subr.mxu0 0.0
        %v5868 = vand.u32 %v4777, 4294901760
        %5869 = vmatpush2.msra.mxu0 %v5868
        %5870 = vmatprep.subr.mxu0 0.0
        %v5871 = vand.u32 %v4776, 4294901760
        %5872 = vmatpush2.msra.mxu0 %v5871
        %5873 = vmatprep.subr.mxu0 0.0
        %v5874 = vand.u32 %v4775, 4294901760
        %5875 = vmatpush2.msra.mxu0 %v5874
        %5876 = vmatprep.subr.mxu0 0.0
        %v5877 = vand.u32 %v4774, 4294901760
        %5878 = vmatpush2.msra.mxu0 %v5877
        %5879 = vmatprep.subr.mxu0 0.0
        %v5880 = vand.u32 %v4773, 4294901760
        %5881 = vmatpush2.msra.mxu0 %v5880
        %5882 = vmatprep.subr.mxu0 0.0
        %v5883 = vand.u32 %v4772, 4294901760
        %5884 = vmatpush2.msra.mxu0 %v5883
        %v5885 = vand.u32 %v4725, 4294901760
        %5886 = vmatprep.mubr.f32.mxu0 %v5885
        %v5887 = vand.u32 %v4724, 4294901760
        %5888 = vmatmul.mubr.f32.gmra.mxu0 %v5887
        %v5889 = vpop.f32.mrf.mxu0
        %v5890 = vadd.f32 %v5765, %v5889
        %v5891 = vpop.f32.mrf.mxu0
        %v5892 = vand.u32 %v4733, 4294901760
        %5893 = vmatprep.mubr.f32.mxu0 %v5892
        %v5894 = vand.u32 %v4732, 4294901760
        %5895 = vmatmul.mubr.f32.gmra.mxu0 %v5894
        %v5896 = vpop.f32.mrf.mxu0
        %v5897 = vadd.f32 %v5772, %v5896
        %v5898 = vpop.f32.mrf.mxu0
        %v5899 = vand.u32 %v4741, 4294901760
        %5900 = vmatprep.mubr.f32.mxu0 %v5899
        %v5901 = vand.u32 %v4740, 4294901760
        %5902 = vmatmul.mubr.f32.gmra.mxu0 %v5901
        %v5903 = vpop.f32.mrf.mxu0
        %v5904 = vadd.f32 %v5779, %v5903
        %v5905 = vpop.f32.mrf.mxu0
        %v5906 = vand.u32 %v4749, 4294901760
        %5907 = vmatprep.mubr.f32.mxu0 %v5906
        %v5908 = vand.u32 %v4748, 4294901760
        %5909 = vmatmul.mubr.f32.gmra.mxu0 %v5908
        %v5910 = vpop.f32.mrf.mxu0
        %v5911 = vadd.f32 %v5786, %v5910
        %v5912 = vpop.f32.mrf.mxu0
        %5913 = vdwg.mxu0
        %5914 = vmatprep.subr.mxu0 0.0
        %v5915 = vand.u32 %v4803, 4294901760
        %5916 = vmatpush1.msra.mxu0 %v5915
        %5917 = vmatprep.subr.mxu0 0.0
        %v5918 = vand.u32 %v4802, 4294901760
        %5919 = vmatpush1.msra.mxu0 %v5918
        %5920 = vmatprep.subr.mxu0 0.0
        %v5921 = vand.u32 %v4801, 4294901760
        %5922 = vmatpush1.msra.mxu0 %v5921
        %5923 = vmatprep.subr.mxu0 0.0
        %v5924 = vand.u32 %v4800, 4294901760
        %5925 = vmatpush1.msra.mxu0 %v5924
        %5926 = vmatprep.subr.mxu0 0.0
        %v5927 = vand.u32 %v4799, 4294901760
        %5928 = vmatpush1.msra.mxu0 %v5927
        %5929 = vmatprep.subr.mxu0 0.0
        %v5930 = vand.u32 %v4798, 4294901760
        %5931 = vmatpush1.msra.mxu0 %v5930
        %5932 = vmatprep.subr.mxu0 0.0
        %v5933 = vand.u32 %v4797, 4294901760
        %5934 = vmatpush1.msra.mxu0 %v5933
        %5935 = vmatprep.subr.mxu0 0.0
        %v5936 = vand.u32 %v4796, 4294901760
        %5937 = vmatpush1.msra.mxu0 %v5936
        %5938 = vmatprep.subr.mxu0 0.0
        %v5939 = vand.u32 %v4795, 4294901760
        %5940 = vmatpush1.msra.mxu0 %v5939
        %5941 = vmatprep.subr.mxu0 0.0
        %v5942 = vand.u32 %v4794, 4294901760
        %5943 = vmatpush1.msra.mxu0 %v5942
        %5944 = vmatprep.subr.mxu0 0.0
        %v5945 = vand.u32 %v4793, 4294901760
        %5946 = vmatpush1.msra.mxu0 %v5945
        %5947 = vmatprep.subr.mxu0 0.0
        %v5948 = vand.u32 %v4792, 4294901760
        %5949 = vmatpush1.msra.mxu0 %v5948
        %5950 = vmatprep.subr.mxu0 0.0
        %v5951 = vand.u32 %v4791, 4294901760
        %5952 = vmatpush1.msra.mxu0 %v5951
        %5953 = vmatprep.subr.mxu0 0.0
        %v5954 = vand.u32 %v4790, 4294901760
        %5955 = vmatpush1.msra.mxu0 %v5954
        %5956 = vmatprep.subr.mxu0 0.0
        %v5957 = vand.u32 %v4789, 4294901760
        %5958 = vmatpush1.msra.mxu0 %v5957
        %5959 = vmatprep.subr.mxu0 0.0
        %v5960 = vand.u32 %v4788, 4294901760
        %5961 = vmatpush1.msra.mxu0 %v5960
        %5962 = vmatprep.subr.mxu0 0.0
        %v5963 = vand.u32 %v4819, 4294901760
        %5964 = vmatpush2.msra.mxu0 %v5963
        %5965 = vmatprep.subr.mxu0 0.0
        %v5966 = vand.u32 %v4818, 4294901760
        %5967 = vmatpush2.msra.mxu0 %v5966
        %5968 = vmatprep.subr.mxu0 0.0
        %v5969 = vand.u32 %v4817, 4294901760
        %5970 = vmatpush2.msra.mxu0 %v5969
        %5971 = vmatprep.subr.mxu0 0.0
        %v5972 = vand.u32 %v4816, 4294901760
        %5973 = vmatpush2.msra.mxu0 %v5972
        %5974 = vmatprep.subr.mxu0 0.0
        %v5975 = vand.u32 %v4815, 4294901760
        %5976 = vmatpush2.msra.mxu0 %v5975
        %5977 = vmatprep.subr.mxu0 0.0
        %v5978 = vand.u32 %v4814, 4294901760
        %5979 = vmatpush2.msra.mxu0 %v5978
        %5980 = vmatprep.subr.mxu0 0.0
        %v5981 = vand.u32 %v4813, 4294901760
        %5982 = vmatpush2.msra.mxu0 %v5981
        %5983 = vmatprep.subr.mxu0 0.0
        %v5984 = vand.u32 %v4812, 4294901760
        %5985 = vmatpush2.msra.mxu0 %v5984
        %5986 = vmatprep.subr.mxu0 0.0
        %v5987 = vand.u32 %v4811, 4294901760
        %5988 = vmatpush2.msra.mxu0 %v5987
        %5989 = vmatprep.subr.mxu0 0.0
        %v5990 = vand.u32 %v4810, 4294901760
        %5991 = vmatpush2.msra.mxu0 %v5990
        %5992 = vmatprep.subr.mxu0 0.0
        %v5993 = vand.u32 %v4809, 4294901760
        %5994 = vmatpush2.msra.mxu0 %v5993
        %5995 = vmatprep.subr.mxu0 0.0
        %v5996 = vand.u32 %v4808, 4294901760
        %5997 = vmatpush2.msra.mxu0 %v5996
        %5998 = vmatprep.subr.mxu0 0.0
        %v5999 = vand.u32 %v4807, 4294901760
        %6000 = vmatpush2.msra.mxu0 %v5999
        %6001 = vmatprep.subr.mxu0 0.0
        %v6002 = vand.u32 %v4806, 4294901760
        %6003 = vmatpush2.msra.mxu0 %v6002
        %6004 = vmatprep.subr.mxu0 0.0
        %v6005 = vand.u32 %v4805, 4294901760
        %6006 = vmatpush2.msra.mxu0 %v6005
        %6007 = vmatprep.subr.mxu0 0.0
        %v6008 = vand.u32 %v4804, 4294901760
        %6009 = vmatpush2.msra.mxu0 %v6008
        %v6010 = vand.u32 %v4727, 4294901760
        %v6011 = vsub.f32 %v4727, %v6010
        %v6012 = vand.u32 %v6011, 4294901760
        %v6013 = vsub.f32 %v6011, %v6012
        %v6014 = vand.u32 %v6013, 4294901760
        %6015 = vmatprep.mubr.f32.mxu0 %v6014
        %v6016 = vand.u32 %v4726, 4294901760
        %v6017 = vsub.f32 %v4726, %v6016
        %v6018 = vand.u32 %v6017, 4294901760
        %v6019 = vsub.f32 %v6017, %v6018
        %v6020 = vand.u32 %v6019, 4294901760
        %6021 = vmatmul.mubr.f32.gmra.mxu0 %v6020
        %v6022 = vpop.f32.mrf.mxu0
        %v6023 = vadd.f32 %v5890, %v6022
        %v6024 = vpop.f32.mrf.mxu0
        %v6025 = vand.u32 %v4735, 4294901760
        %v6026 = vsub.f32 %v4735, %v6025
        %v6027 = vand.u32 %v6026, 4294901760
        %v6028 = vsub.f32 %v6026, %v6027
        %v6029 = vand.u32 %v6028, 4294901760
        %6030 = vmatprep.mubr.f32.mxu0 %v6029
        %v6031 = vand.u32 %v4734, 4294901760
        %v6032 = vsub.f32 %v4734, %v6031
        %v6033 = vand.u32 %v6032, 4294901760
        %v6034 = vsub.f32 %v6032, %v6033
        %v6035 = vand.u32 %v6034, 4294901760
        %6036 = vmatmul.mubr.f32.gmra.mxu0 %v6035
        %v6037 = vpop.f32.mrf.mxu0
        %v6038 = vadd.f32 %v5897, %v6037
        %v6039 = vpop.f32.mrf.mxu0
        %v6040 = vand.u32 %v4743, 4294901760
        %v6041 = vsub.f32 %v4743, %v6040
        %v6042 = vand.u32 %v6041, 4294901760
        %v6043 = vsub.f32 %v6041, %v6042
        %v6044 = vand.u32 %v6043, 4294901760
        %6045 = vmatprep.mubr.f32.mxu0 %v6044
        %v6046 = vand.u32 %v4742, 4294901760
        %v6047 = vsub.f32 %v4742, %v6046
        %v6048 = vand.u32 %v6047, 4294901760
        %v6049 = vsub.f32 %v6047, %v6048
        %v6050 = vand.u32 %v6049, 4294901760
        %6051 = vmatmul.mubr.f32.gmra.mxu0 %v6050
        %v6052 = vpop.f32.mrf.mxu0
        %v6053 = vadd.f32 %v5904, %v6052
        %v6054 = vpop.f32.mrf.mxu0
        %v6055 = vand.u32 %v4751, 4294901760
        %v6056 = vsub.f32 %v4751, %v6055
        %v6057 = vand.u32 %v6056, 4294901760
        %v6058 = vsub.f32 %v6056, %v6057
        %v6059 = vand.u32 %v6058, 4294901760
        %6060 = vmatprep.mubr.f32.mxu0 %v6059
        %v6061 = vand.u32 %v4750, 4294901760
        %v6062 = vsub.f32 %v4750, %v6061
        %v6063 = vand.u32 %v6062, 4294901760
        %v6064 = vsub.f32 %v6062, %v6063
        %v6065 = vand.u32 %v6064, 4294901760
        %6066 = vmatmul.mubr.f32.gmra.mxu0 %v6065
        %v6067 = vpop.f32.mrf.mxu0
        %v6068 = vadd.f32 %v5911, %v6067
        %v6069 = vpop.f32.mrf.mxu0
        %6070 = vdwg.mxu0
        %6071 = vmatprep.subr.mxu0 0.0
        %v6072 = vand.u32 %v4803, 4294901760
        %v6073 = vsub.f32 %v4803, %v6072
        %v6074 = vand.u32 %v6073, 4294901760
        %v6075 = vsub.f32 %v6073, %v6074
        %v6076 = vand.u32 %v6075, 4294901760
        %6077 = vmatpush1.msra.mxu0 %v6076
        %6078 = vmatprep.subr.mxu0 0.0
        %v6079 = vand.u32 %v4802, 4294901760
        %v6080 = vsub.f32 %v4802, %v6079
        %v6081 = vand.u32 %v6080, 4294901760
        %v6082 = vsub.f32 %v6080, %v6081
        %v6083 = vand.u32 %v6082, 4294901760
        %6084 = vmatpush1.msra.mxu0 %v6083
        %6085 = vmatprep.subr.mxu0 0.0
        %v6086 = vand.u32 %v4801, 4294901760
        %v6087 = vsub.f32 %v4801, %v6086
        %v6088 = vand.u32 %v6087, 4294901760
        %v6089 = vsub.f32 %v6087, %v6088
        %v6090 = vand.u32 %v6089, 4294901760
        %6091 = vmatpush1.msra.mxu0 %v6090
        %6092 = vmatprep.subr.mxu0 0.0
        %v6093 = vand.u32 %v4800, 4294901760
        %v6094 = vsub.f32 %v4800, %v6093
        %v6095 = vand.u32 %v6094, 4294901760
        %v6096 = vsub.f32 %v6094, %v6095
        %v6097 = vand.u32 %v6096, 4294901760
        %6098 = vmatpush1.msra.mxu0 %v6097
        %6099 = vmatprep.subr.mxu0 0.0
        %v6100 = vand.u32 %v4799, 4294901760
        %v6101 = vsub.f32 %v4799, %v6100
        %v6102 = vand.u32 %v6101, 4294901760
        %v6103 = vsub.f32 %v6101, %v6102
        %v6104 = vand.u32 %v6103, 4294901760
        %6105 = vmatpush1.msra.mxu0 %v6104
        %6106 = vmatprep.subr.mxu0 0.0
        %v6107 = vand.u32 %v4798, 4294901760
        %v6108 = vsub.f32 %v4798, %v6107
        %v6109 = vand.u32 %v6108, 4294901760
        %v6110 = vsub.f32 %v6108, %v6109
        %v6111 = vand.u32 %v6110, 4294901760
        %6112 = vmatpush1.msra.mxu0 %v6111
        %6113 = vmatprep.subr.mxu0 0.0
        %v6114 = vand.u32 %v4797, 4294901760
        %v6115 = vsub.f32 %v4797, %v6114
        %v6116 = vand.u32 %v6115, 4294901760
        %v6117 = vsub.f32 %v6115, %v6116
        %v6118 = vand.u32 %v6117, 4294901760
        %6119 = vmatpush1.msra.mxu0 %v6118
        %6120 = vmatprep.subr.mxu0 0.0
        %v6121 = vand.u32 %v4796, 4294901760
        %v6122 = vsub.f32 %v4796, %v6121
        %v6123 = vand.u32 %v6122, 4294901760
        %v6124 = vsub.f32 %v6122, %v6123
        %v6125 = vand.u32 %v6124, 4294901760
        %6126 = vmatpush1.msra.mxu0 %v6125
        %6127 = vmatprep.subr.mxu0 0.0
        %v6128 = vand.u32 %v4795, 4294901760
        %v6129 = vsub.f32 %v4795, %v6128
        %v6130 = vand.u32 %v6129, 4294901760
        %v6131 = vsub.f32 %v6129, %v6130
        %v6132 = vand.u32 %v6131, 4294901760
        %6133 = vmatpush1.msra.mxu0 %v6132
        %6134 = vmatprep.subr.mxu0 0.0
        %v6135 = vand.u32 %v4794, 4294901760
        %v6136 = vsub.f32 %v4794, %v6135
        %v6137 = vand.u32 %v6136, 4294901760
        %v6138 = vsub.f32 %v6136, %v6137
        %v6139 = vand.u32 %v6138, 4294901760
        %6140 = vmatpush1.msra.mxu0 %v6139
        %6141 = vmatprep.subr.mxu0 0.0
        %v6142 = vand.u32 %v4793, 4294901760
        %v6143 = vsub.f32 %v4793, %v6142
        %v6144 = vand.u32 %v6143, 4294901760
        %v6145 = vsub.f32 %v6143, %v6144
        %v6146 = vand.u32 %v6145, 4294901760
        %6147 = vmatpush1.msra.mxu0 %v6146
        %6148 = vmatprep.subr.mxu0 0.0
        %v6149 = vand.u32 %v4792, 4294901760
        %v6150 = vsub.f32 %v4792, %v6149
        %v6151 = vand.u32 %v6150, 4294901760
        %v6152 = vsub.f32 %v6150, %v6151
        %v6153 = vand.u32 %v6152, 4294901760
        %6154 = vmatpush1.msra.mxu0 %v6153
        %6155 = vmatprep.subr.mxu0 0.0
        %v6156 = vand.u32 %v4791, 4294901760
        %v6157 = vsub.f32 %v4791, %v6156
        %v6158 = vand.u32 %v6157, 4294901760
        %v6159 = vsub.f32 %v6157, %v6158
        %v6160 = vand.u32 %v6159, 4294901760
        %6161 = vmatpush1.msra.mxu0 %v6160
        %6162 = vmatprep.subr.mxu0 0.0
        %v6163 = vand.u32 %v4790, 4294901760
        %v6164 = vsub.f32 %v4790, %v6163
        %v6165 = vand.u32 %v6164, 4294901760
        %v6166 = vsub.f32 %v6164, %v6165
        %v6167 = vand.u32 %v6166, 4294901760
        %6168 = vmatpush1.msra.mxu0 %v6167
        %6169 = vmatprep.subr.mxu0 0.0
        %v6170 = vand.u32 %v4789, 4294901760
        %v6171 = vsub.f32 %v4789, %v6170
        %v6172 = vand.u32 %v6171, 4294901760
        %v6173 = vsub.f32 %v6171, %v6172
        %v6174 = vand.u32 %v6173, 4294901760
        %6175 = vmatpush1.msra.mxu0 %v6174
        %6176 = vmatprep.subr.mxu0 0.0
        %v6177 = vand.u32 %v4788, 4294901760
        %v6178 = vsub.f32 %v4788, %v6177
        %v6179 = vand.u32 %v6178, 4294901760
        %v6180 = vsub.f32 %v6178, %v6179
        %v6181 = vand.u32 %v6180, 4294901760
        %6182 = vmatpush1.msra.mxu0 %v6181
        %6183 = vmatprep.subr.mxu0 0.0
        %v6184 = vand.u32 %v4819, 4294901760
        %v6185 = vsub.f32 %v4819, %v6184
        %v6186 = vand.u32 %v6185, 4294901760
        %v6187 = vsub.f32 %v6185, %v6186
        %v6188 = vand.u32 %v6187, 4294901760
        %6189 = vmatpush2.msra.mxu0 %v6188
        %6190 = vmatprep.subr.mxu0 0.0
        %v6191 = vand.u32 %v4818, 4294901760
        %v6192 = vsub.f32 %v4818, %v6191
        %v6193 = vand.u32 %v6192, 4294901760
        %v6194 = vsub.f32 %v6192, %v6193
        %v6195 = vand.u32 %v6194, 4294901760
        %6196 = vmatpush2.msra.mxu0 %v6195
        %6197 = vmatprep.subr.mxu0 0.0
        %v6198 = vand.u32 %v4817, 4294901760
        %v6199 = vsub.f32 %v4817, %v6198
        %v6200 = vand.u32 %v6199, 4294901760
        %v6201 = vsub.f32 %v6199, %v6200
        %v6202 = vand.u32 %v6201, 4294901760
        %6203 = vmatpush2.msra.mxu0 %v6202
        %6204 = vmatprep.subr.mxu0 0.0
        %v6205 = vand.u32 %v4816, 4294901760
        %v6206 = vsub.f32 %v4816, %v6205
        %v6207 = vand.u32 %v6206, 4294901760
        %v6208 = vsub.f32 %v6206, %v6207
        %v6209 = vand.u32 %v6208, 4294901760
        %6210 = vmatpush2.msra.mxu0 %v6209
        %6211 = vmatprep.subr.mxu0 0.0
        %v6212 = vand.u32 %v4815, 4294901760
        %v6213 = vsub.f32 %v4815, %v6212
        %v6214 = vand.u32 %v6213, 4294901760
        %v6215 = vsub.f32 %v6213, %v6214
        %v6216 = vand.u32 %v6215, 4294901760
        %6217 = vmatpush2.msra.mxu0 %v6216
        %6218 = vmatprep.subr.mxu0 0.0
        %v6219 = vand.u32 %v4814, 4294901760
        %v6220 = vsub.f32 %v4814, %v6219
        %v6221 = vand.u32 %v6220, 4294901760
        %v6222 = vsub.f32 %v6220, %v6221
        %v6223 = vand.u32 %v6222, 4294901760
        %6224 = vmatpush2.msra.mxu0 %v6223
        %6225 = vmatprep.subr.mxu0 0.0
        %v6226 = vand.u32 %v4813, 4294901760
        %v6227 = vsub.f32 %v4813, %v6226
        %v6228 = vand.u32 %v6227, 4294901760
        %v6229 = vsub.f32 %v6227, %v6228
        %v6230 = vand.u32 %v6229, 4294901760
        %6231 = vmatpush2.msra.mxu0 %v6230
        %6232 = vmatprep.subr.mxu0 0.0
        %v6233 = vand.u32 %v4812, 4294901760
        %v6234 = vsub.f32 %v4812, %v6233
        %v6235 = vand.u32 %v6234, 4294901760
        %v6236 = vsub.f32 %v6234, %v6235
        %v6237 = vand.u32 %v6236, 4294901760
        %6238 = vmatpush2.msra.mxu0 %v6237
        %6239 = vmatprep.subr.mxu0 0.0
        %v6240 = vand.u32 %v4811, 4294901760
        %v6241 = vsub.f32 %v4811, %v6240
        %v6242 = vand.u32 %v6241, 4294901760
        %v6243 = vsub.f32 %v6241, %v6242
        %v6244 = vand.u32 %v6243, 4294901760
        %6245 = vmatpush2.msra.mxu0 %v6244
        %6246 = vmatprep.subr.mxu0 0.0
        %v6247 = vand.u32 %v4810, 4294901760
        %v6248 = vsub.f32 %v4810, %v6247
        %v6249 = vand.u32 %v6248, 4294901760
        %v6250 = vsub.f32 %v6248, %v6249
        %v6251 = vand.u32 %v6250, 4294901760
        %6252 = vmatpush2.msra.mxu0 %v6251
        %6253 = vmatprep.subr.mxu0 0.0
        %v6254 = vand.u32 %v4809, 4294901760
        %v6255 = vsub.f32 %v4809, %v6254
        %v6256 = vand.u32 %v6255, 4294901760
        %v6257 = vsub.f32 %v6255, %v6256
        %v6258 = vand.u32 %v6257, 4294901760
        %6259 = vmatpush2.msra.mxu0 %v6258
        %6260 = vmatprep.subr.mxu0 0.0
        %v6261 = vand.u32 %v4808, 4294901760
        %v6262 = vsub.f32 %v4808, %v6261
        %v6263 = vand.u32 %v6262, 4294901760
        %v6264 = vsub.f32 %v6262, %v6263
        %v6265 = vand.u32 %v6264, 4294901760
        %6266 = vmatpush2.msra.mxu0 %v6265
        %6267 = vmatprep.subr.mxu0 0.0
        %v6268 = vand.u32 %v4807, 4294901760
        %v6269 = vsub.f32 %v4807, %v6268
        %v6270 = vand.u32 %v6269, 4294901760
        %v6271 = vsub.f32 %v6269, %v6270
        %v6272 = vand.u32 %v6271, 4294901760
        %6273 = vmatpush2.msra.mxu0 %v6272
        %6274 = vmatprep.subr.mxu0 0.0
        %v6275 = vand.u32 %v4806, 4294901760
        %v6276 = vsub.f32 %v4806, %v6275
        %v6277 = vand.u32 %v6276, 4294901760
        %v6278 = vsub.f32 %v6276, %v6277
        %v6279 = vand.u32 %v6278, 4294901760
        %6280 = vmatpush2.msra.mxu0 %v6279
        %6281 = vmatprep.subr.mxu0 0.0
        %v6282 = vand.u32 %v4805, 4294901760
        %v6283 = vsub.f32 %v4805, %v6282
        %v6284 = vand.u32 %v6283, 4294901760
        %v6285 = vsub.f32 %v6283, %v6284
        %v6286 = vand.u32 %v6285, 4294901760
        %6287 = vmatpush2.msra.mxu0 %v6286
        %6288 = vmatprep.subr.mxu0 0.0
        %v6289 = vand.u32 %v4804, 4294901760
        %v6290 = vsub.f32 %v4804, %v6289
        %v6291 = vand.u32 %v6290, 4294901760
        %v6292 = vsub.f32 %v6290, %v6291
        %v6293 = vand.u32 %v6292, 4294901760
        %6294 = vmatpush2.msra.mxu0 %v6293
        %v6295 = vand.u32 %v4727, 4294901760
        %6296 = vmatprep.mubr.f32.mxu0 %v6295
        %v6297 = vand.u32 %v4726, 4294901760
        %6298 = vmatmul.mubr.f32.gmra.mxu0 %v6297
        %v6299 = vpop.f32.mrf.mxu0
        %v6300 = vadd.f32 %v6023, %v6299
        %v6301 = vpop.f32.mrf.mxu0
        %v6302 = vand.u32 %v4735, 4294901760
        %6303 = vmatprep.mubr.f32.mxu0 %v6302
        %v6304 = vand.u32 %v4734, 4294901760
        %6305 = vmatmul.mubr.f32.gmra.mxu0 %v6304
        %v6306 = vpop.f32.mrf.mxu0
        %v6307 = vadd.f32 %v6038, %v6306
        %v6308 = vpop.f32.mrf.mxu0
        %v6309 = vand.u32 %v4743, 4294901760
        %6310 = vmatprep.mubr.f32.mxu0 %v6309
        %v6311 = vand.u32 %v4742, 4294901760
        %6312 = vmatmul.mubr.f32.gmra.mxu0 %v6311
        %v6313 = vpop.f32.mrf.mxu0
        %v6314 = vadd.f32 %v6053, %v6313
        %v6315 = vpop.f32.mrf.mxu0
        %v6316 = vand.u32 %v4751, 4294901760
        %6317 = vmatprep.mubr.f32.mxu0 %v6316
        %v6318 = vand.u32 %v4750, 4294901760
        %6319 = vmatmul.mubr.f32.gmra.mxu0 %v6318
        %v6320 = vpop.f32.mrf.mxu0
        %v6321 = vadd.f32 %v6068, %v6320
        %v6322 = vpop.f32.mrf.mxu0
        %6323 = vdwg.mxu0
        %6324 = vmatprep.subr.mxu0 0.0
        %v6325 = vand.u32 %v4803, 4294901760
        %v6326 = vsub.f32 %v4803, %v6325
        %6327 = vmatpush1.msra.mxu0 %v6326
        %6328 = vmatprep.subr.mxu0 0.0
        %v6329 = vand.u32 %v4802, 4294901760
        %v6330 = vsub.f32 %v4802, %v6329
        %6331 = vmatpush1.msra.mxu0 %v6330
        %6332 = vmatprep.subr.mxu0 0.0
        %v6333 = vand.u32 %v4801, 4294901760
        %v6334 = vsub.f32 %v4801, %v6333
        %6335 = vmatpush1.msra.mxu0 %v6334
        %6336 = vmatprep.subr.mxu0 0.0
        %v6337 = vand.u32 %v4800, 4294901760
        %v6338 = vsub.f32 %v4800, %v6337
        %6339 = vmatpush1.msra.mxu0 %v6338
        %6340 = vmatprep.subr.mxu0 0.0
        %v6341 = vand.u32 %v4799, 4294901760
        %v6342 = vsub.f32 %v4799, %v6341
        %6343 = vmatpush1.msra.mxu0 %v6342
        %6344 = vmatprep.subr.mxu0 0.0
        %v6345 = vand.u32 %v4798, 4294901760
        %v6346 = vsub.f32 %v4798, %v6345
        %6347 = vmatpush1.msra.mxu0 %v6346
        %6348 = vmatprep.subr.mxu0 0.0
        %v6349 = vand.u32 %v4797, 4294901760
        %v6350 = vsub.f32 %v4797, %v6349
        %6351 = vmatpush1.msra.mxu0 %v6350
        %6352 = vmatprep.subr.mxu0 0.0
        %v6353 = vand.u32 %v4796, 4294901760
        %v6354 = vsub.f32 %v4796, %v6353
        %6355 = vmatpush1.msra.mxu0 %v6354
        %6356 = vmatprep.subr.mxu0 0.0
        %v6357 = vand.u32 %v4795, 4294901760
        %v6358 = vsub.f32 %v4795, %v6357
        %6359 = vmatpush1.msra.mxu0 %v6358
        %6360 = vmatprep.subr.mxu0 0.0
        %v6361 = vand.u32 %v4794, 4294901760
        %v6362 = vsub.f32 %v4794, %v6361
        %6363 = vmatpush1.msra.mxu0 %v6362
        %6364 = vmatprep.subr.mxu0 0.0
        %v6365 = vand.u32 %v4793, 4294901760
        %v6366 = vsub.f32 %v4793, %v6365
        %6367 = vmatpush1.msra.mxu0 %v6366
        %6368 = vmatprep.subr.mxu0 0.0
        %v6369 = vand.u32 %v4792, 4294901760
        %v6370 = vsub.f32 %v4792, %v6369
        %6371 = vmatpush1.msra.mxu0 %v6370
        %6372 = vmatprep.subr.mxu0 0.0
        %v6373 = vand.u32 %v4791, 4294901760
        %v6374 = vsub.f32 %v4791, %v6373
        %6375 = vmatpush1.msra.mxu0 %v6374
        %6376 = vmatprep.subr.mxu0 0.0
        %v6377 = vand.u32 %v4790, 4294901760
        %v6378 = vsub.f32 %v4790, %v6377
        %6379 = vmatpush1.msra.mxu0 %v6378
        %6380 = vmatprep.subr.mxu0 0.0
        %v6381 = vand.u32 %v4789, 4294901760
        %v6382 = vsub.f32 %v4789, %v6381
        %6383 = vmatpush1.msra.mxu0 %v6382
        %6384 = vmatprep.subr.mxu0 0.0
        %v6385 = vand.u32 %v4788, 4294901760
        %v6386 = vsub.f32 %v4788, %v6385
        %6387 = vmatpush1.msra.mxu0 %v6386
        %6388 = vmatprep.subr.mxu0 0.0
        %v6389 = vand.u32 %v4819, 4294901760
        %v6390 = vsub.f32 %v4819, %v6389
        %6391 = vmatpush2.msra.mxu0 %v6390
        %6392 = vmatprep.subr.mxu0 0.0
        %v6393 = vand.u32 %v4818, 4294901760
        %v6394 = vsub.f32 %v4818, %v6393
        %6395 = vmatpush2.msra.mxu0 %v6394
        %6396 = vmatprep.subr.mxu0 0.0
        %v6397 = vand.u32 %v4817, 4294901760
        %v6398 = vsub.f32 %v4817, %v6397
        %6399 = vmatpush2.msra.mxu0 %v6398
        %6400 = vmatprep.subr.mxu0 0.0
        %v6401 = vand.u32 %v4816, 4294901760
        %v6402 = vsub.f32 %v4816, %v6401
        %6403 = vmatpush2.msra.mxu0 %v6402
        %6404 = vmatprep.subr.mxu0 0.0
        %v6405 = vand.u32 %v4815, 4294901760
        %v6406 = vsub.f32 %v4815, %v6405
        %6407 = vmatpush2.msra.mxu0 %v6406
        %6408 = vmatprep.subr.mxu0 0.0
        %v6409 = vand.u32 %v4814, 4294901760
        %v6410 = vsub.f32 %v4814, %v6409
        %6411 = vmatpush2.msra.mxu0 %v6410
        %6412 = vmatprep.subr.mxu0 0.0
        %v6413 = vand.u32 %v4813, 4294901760
        %v6414 = vsub.f32 %v4813, %v6413
        %6415 = vmatpush2.msra.mxu0 %v6414
        %6416 = vmatprep.subr.mxu0 0.0
        %v6417 = vand.u32 %v4812, 4294901760
        %v6418 = vsub.f32 %v4812, %v6417
        %6419 = vmatpush2.msra.mxu0 %v6418
        %6420 = vmatprep.subr.mxu0 0.0
        %v6421 = vand.u32 %v4811, 4294901760
        %v6422 = vsub.f32 %v4811, %v6421
        %6423 = vmatpush2.msra.mxu0 %v6422
        %6424 = vmatprep.subr.mxu0 0.0
        %v6425 = vand.u32 %v4810, 4294901760
        %v6426 = vsub.f32 %v4810, %v6425
        %6427 = vmatpush2.msra.mxu0 %v6426
        %6428 = vmatprep.subr.mxu0 0.0
        %v6429 = vand.u32 %v4809, 4294901760
        %v6430 = vsub.f32 %v4809, %v6429
        %6431 = vmatpush2.msra.mxu0 %v6430
        %6432 = vmatprep.subr.mxu0 0.0
        %v6433 = vand.u32 %v4808, 4294901760
        %v6434 = vsub.f32 %v4808, %v6433
        %6435 = vmatpush2.msra.mxu0 %v6434
        %6436 = vmatprep.subr.mxu0 0.0
        %v6437 = vand.u32 %v4807, 4294901760
        %v6438 = vsub.f32 %v4807, %v6437
        %6439 = vmatpush2.msra.mxu0 %v6438
        %6440 = vmatprep.subr.mxu0 0.0
        %v6441 = vand.u32 %v4806, 4294901760
        %v6442 = vsub.f32 %v4806, %v6441
        %6443 = vmatpush2.msra.mxu0 %v6442
        %6444 = vmatprep.subr.mxu0 0.0
        %v6445 = vand.u32 %v4805, 4294901760
        %v6446 = vsub.f32 %v4805, %v6445
        %6447 = vmatpush2.msra.mxu0 %v6446
        %6448 = vmatprep.subr.mxu0 0.0
        %v6449 = vand.u32 %v4804, 4294901760
        %v6450 = vsub.f32 %v4804, %v6449
        %6451 = vmatpush2.msra.mxu0 %v6450
        %v6452 = vand.u32 %v4727, 4294901760
        %v6453 = vsub.f32 %v4727, %v6452
        %6454 = vmatprep.mubr.f32.mxu0 %v6453
        %v6455 = vand.u32 %v4726, 4294901760
        %v6456 = vsub.f32 %v4726, %v6455
        %6457 = vmatmul.mubr.f32.gmra.mxu0 %v6456
        %v6458 = vpop.f32.mrf.mxu0
        %v6459 = vadd.f32 %v6300, %v6458
        %v6460 = vpop.f32.mrf.mxu0
        %v6461 = vand.u32 %v4735, 4294901760
        %v6462 = vsub.f32 %v4735, %v6461
        %6463 = vmatprep.mubr.f32.mxu0 %v6462
        %v6464 = vand.u32 %v4734, 4294901760
        %v6465 = vsub.f32 %v4734, %v6464
        %6466 = vmatmul.mubr.f32.gmra.mxu0 %v6465
        %v6467 = vpop.f32.mrf.mxu0
        %v6468 = vadd.f32 %v6307, %v6467
        %v6469 = vpop.f32.mrf.mxu0
        %v6470 = vand.u32 %v4743, 4294901760
        %v6471 = vsub.f32 %v4743, %v6470
        %6472 = vmatprep.mubr.f32.mxu0 %v6471
        %v6473 = vand.u32 %v4742, 4294901760
        %v6474 = vsub.f32 %v4742, %v6473
        %6475 = vmatmul.mubr.f32.gmra.mxu0 %v6474
        %v6476 = vpop.f32.mrf.mxu0
        %v6477 = vadd.f32 %v6314, %v6476
        %v6478 = vpop.f32.mrf.mxu0
        %v6479 = vand.u32 %v4751, 4294901760
        %v6480 = vsub.f32 %v4751, %v6479
        %6481 = vmatprep.mubr.f32.mxu0 %v6480
        %v6482 = vand.u32 %v4750, 4294901760
        %v6483 = vsub.f32 %v4750, %v6482
        %6484 = vmatmul.mubr.f32.gmra.mxu0 %v6483
        %v6485 = vpop.f32.mrf.mxu0
        %v6486 = vadd.f32 %v6321, %v6485
        %v6487 = vpop.f32.mrf.mxu0
        %6488 = vdwg.mxu0
        %6489 = vmatprep.subr.mxu0 0.0
        %v6490 = vand.u32 %v4803, 4294901760
        %6491 = vmatpush1.msra.mxu0 %v6490
        %6492 = vmatprep.subr.mxu0 0.0
        %v6493 = vand.u32 %v4802, 4294901760
        %6494 = vmatpush1.msra.mxu0 %v6493
        %6495 = vmatprep.subr.mxu0 0.0
        %v6496 = vand.u32 %v4801, 4294901760
        %6497 = vmatpush1.msra.mxu0 %v6496
        %6498 = vmatprep.subr.mxu0 0.0
        %v6499 = vand.u32 %v4800, 4294901760
        %6500 = vmatpush1.msra.mxu0 %v6499
        %6501 = vmatprep.subr.mxu0 0.0
        %v6502 = vand.u32 %v4799, 4294901760
        %6503 = vmatpush1.msra.mxu0 %v6502
        %6504 = vmatprep.subr.mxu0 0.0
        %v6505 = vand.u32 %v4798, 4294901760
        %6506 = vmatpush1.msra.mxu0 %v6505
        %6507 = vmatprep.subr.mxu0 0.0
        %v6508 = vand.u32 %v4797, 4294901760
        %6509 = vmatpush1.msra.mxu0 %v6508
        %6510 = vmatprep.subr.mxu0 0.0
        %v6511 = vand.u32 %v4796, 4294901760
        %6512 = vmatpush1.msra.mxu0 %v6511
        %6513 = vmatprep.subr.mxu0 0.0
        %v6514 = vand.u32 %v4795, 4294901760
        %6515 = vmatpush1.msra.mxu0 %v6514
        %6516 = vmatprep.subr.mxu0 0.0
        %v6517 = vand.u32 %v4794, 4294901760
        %6518 = vmatpush1.msra.mxu0 %v6517
        %6519 = vmatprep.subr.mxu0 0.0
        %v6520 = vand.u32 %v4793, 4294901760
        %6521 = vmatpush1.msra.mxu0 %v6520
        %6522 = vmatprep.subr.mxu0 0.0
        %v6523 = vand.u32 %v4792, 4294901760
        %6524 = vmatpush1.msra.mxu0 %v6523
        %6525 = vmatprep.subr.mxu0 0.0
        %v6526 = vand.u32 %v4791, 4294901760
        %6527 = vmatpush1.msra.mxu0 %v6526
        %6528 = vmatprep.subr.mxu0 0.0
        %v6529 = vand.u32 %v4790, 4294901760
        %6530 = vmatpush1.msra.mxu0 %v6529
        %6531 = vmatprep.subr.mxu0 0.0
        %v6532 = vand.u32 %v4789, 4294901760
        %6533 = vmatpush1.msra.mxu0 %v6532
        %6534 = vmatprep.subr.mxu0 0.0
        %v6535 = vand.u32 %v4788, 4294901760
        %6536 = vmatpush1.msra.mxu0 %v6535
        %6537 = vmatprep.subr.mxu0 0.0
        %v6538 = vand.u32 %v4819, 4294901760
        %6539 = vmatpush2.msra.mxu0 %v6538
        %6540 = vmatprep.subr.mxu0 0.0
        %v6541 = vand.u32 %v4818, 4294901760
        %6542 = vmatpush2.msra.mxu0 %v6541
        %6543 = vmatprep.subr.mxu0 0.0
        %v6544 = vand.u32 %v4817, 4294901760
        %6545 = vmatpush2.msra.mxu0 %v6544
        %6546 = vmatprep.subr.mxu0 0.0
        %v6547 = vand.u32 %v4816, 4294901760
        %6548 = vmatpush2.msra.mxu0 %v6547
        %6549 = vmatprep.subr.mxu0 0.0
        %v6550 = vand.u32 %v4815, 4294901760
        %6551 = vmatpush2.msra.mxu0 %v6550
        %6552 = vmatprep.subr.mxu0 0.0
        %v6553 = vand.u32 %v4814, 4294901760
        %6554 = vmatpush2.msra.mxu0 %v6553
        %6555 = vmatprep.subr.mxu0 0.0
        %v6556 = vand.u32 %v4813, 4294901760
        %6557 = vmatpush2.msra.mxu0 %v6556
        %6558 = vmatprep.subr.mxu0 0.0
        %v6559 = vand.u32 %v4812, 4294901760
        %6560 = vmatpush2.msra.mxu0 %v6559
        %6561 = vmatprep.subr.mxu0 0.0
        %v6562 = vand.u32 %v4811, 4294901760
        %6563 = vmatpush2.msra.mxu0 %v6562
        %6564 = vmatprep.subr.mxu0 0.0
        %v6565 = vand.u32 %v4810, 4294901760
        %6566 = vmatpush2.msra.mxu0 %v6565
        %6567 = vmatprep.subr.mxu0 0.0
        %v6568 = vand.u32 %v4809, 4294901760
        %6569 = vmatpush2.msra.mxu0 %v6568
        %6570 = vmatprep.subr.mxu0 0.0
        %v6571 = vand.u32 %v4808, 4294901760
        %6572 = vmatpush2.msra.mxu0 %v6571
        %6573 = vmatprep.subr.mxu0 0.0
        %v6574 = vand.u32 %v4807, 4294901760
        %6575 = vmatpush2.msra.mxu0 %v6574
        %6576 = vmatprep.subr.mxu0 0.0
        %v6577 = vand.u32 %v4806, 4294901760
        %6578 = vmatpush2.msra.mxu0 %v6577
        %6579 = vmatprep.subr.mxu0 0.0
        %v6580 = vand.u32 %v4805, 4294901760
        %6581 = vmatpush2.msra.mxu0 %v6580
        %6582 = vmatprep.subr.mxu0 0.0
        %v6583 = vand.u32 %v4804, 4294901760
        %6584 = vmatpush2.msra.mxu0 %v6583
        %v6585 = vand.u32 %v4727, 4294901760
        %v6586 = vsub.f32 %v4727, %v6585
        %v6587 = vand.u32 %v6586, 4294901760
        %6588 = vmatprep.mubr.f32.mxu0 %v6587
        %v6589 = vand.u32 %v4726, 4294901760
        %v6590 = vsub.f32 %v4726, %v6589
        %v6591 = vand.u32 %v6590, 4294901760
        %6592 = vmatmul.mubr.f32.gmra.mxu0 %v6591
        %v6593 = vpop.f32.mrf.mxu0
        %v6594 = vadd.f32 %v6459, %v6593
        %v6595 = vpop.f32.mrf.mxu0
        %v6596 = vand.u32 %v4735, 4294901760
        %v6597 = vsub.f32 %v4735, %v6596
        %v6598 = vand.u32 %v6597, 4294901760
        %6599 = vmatprep.mubr.f32.mxu0 %v6598
        %v6600 = vand.u32 %v4734, 4294901760
        %v6601 = vsub.f32 %v4734, %v6600
        %v6602 = vand.u32 %v6601, 4294901760
        %6603 = vmatmul.mubr.f32.gmra.mxu0 %v6602
        %v6604 = vpop.f32.mrf.mxu0
        %v6605 = vadd.f32 %v6468, %v6604
        %v6606 = vpop.f32.mrf.mxu0
        %v6607 = vand.u32 %v4743, 4294901760
        %v6608 = vsub.f32 %v4743, %v6607
        %v6609 = vand.u32 %v6608, 4294901760
        %6610 = vmatprep.mubr.f32.mxu0 %v6609
        %v6611 = vand.u32 %v4742, 4294901760
        %v6612 = vsub.f32 %v4742, %v6611
        %v6613 = vand.u32 %v6612, 4294901760
        %6614 = vmatmul.mubr.f32.gmra.mxu0 %v6613
        %v6615 = vpop.f32.mrf.mxu0
        %v6616 = vadd.f32 %v6477, %v6615
        %v6617 = vpop.f32.mrf.mxu0
        %v6618 = vand.u32 %v4751, 4294901760
        %v6619 = vsub.f32 %v4751, %v6618
        %v6620 = vand.u32 %v6619, 4294901760
        %6621 = vmatprep.mubr.f32.mxu0 %v6620
        %v6622 = vand.u32 %v4750, 4294901760
        %v6623 = vsub.f32 %v4750, %v6622
        %v6624 = vand.u32 %v6623, 4294901760
        %6625 = vmatmul.mubr.f32.gmra.mxu0 %v6624
        %v6626 = vpop.f32.mrf.mxu0
        %v6627 = vadd.f32 %v6486, %v6626
        %v6628 = vpop.f32.mrf.mxu0
        %6629 = vdwg.mxu0
        %6630 = vmatprep.subr.mxu0 0.0
        %v6631 = vand.u32 %v4803, 4294901760
        %v6632 = vsub.f32 %v4803, %v6631
        %v6633 = vand.u32 %v6632, 4294901760
        %6634 = vmatpush1.msra.mxu0 %v6633
        %6635 = vmatprep.subr.mxu0 0.0
        %v6636 = vand.u32 %v4802, 4294901760
        %v6637 = vsub.f32 %v4802, %v6636
        %v6638 = vand.u32 %v6637, 4294901760
        %6639 = vmatpush1.msra.mxu0 %v6638
        %6640 = vmatprep.subr.mxu0 0.0
        %v6641 = vand.u32 %v4801, 4294901760
        %v6642 = vsub.f32 %v4801, %v6641
        %v6643 = vand.u32 %v6642, 4294901760
        %6644 = vmatpush1.msra.mxu0 %v6643
        %6645 = vmatprep.subr.mxu0 0.0
        %v6646 = vand.u32 %v4800, 4294901760
        %v6647 = vsub.f32 %v4800, %v6646
        %v6648 = vand.u32 %v6647, 4294901760
        %6649 = vmatpush1.msra.mxu0 %v6648
        %6650 = vmatprep.subr.mxu0 0.0
        %v6651 = vand.u32 %v4799, 4294901760
        %v6652 = vsub.f32 %v4799, %v6651
        %v6653 = vand.u32 %v6652, 4294901760
        %6654 = vmatpush1.msra.mxu0 %v6653
        %6655 = vmatprep.subr.mxu0 0.0
        %v6656 = vand.u32 %v4798, 4294901760
        %v6657 = vsub.f32 %v4798, %v6656
        %v6658 = vand.u32 %v6657, 4294901760
        %6659 = vmatpush1.msra.mxu0 %v6658
        %6660 = vmatprep.subr.mxu0 0.0
        %v6661 = vand.u32 %v4797, 4294901760
        %v6662 = vsub.f32 %v4797, %v6661
        %v6663 = vand.u32 %v6662, 4294901760
        %6664 = vmatpush1.msra.mxu0 %v6663
        %6665 = vmatprep.subr.mxu0 0.0
        %v6666 = vand.u32 %v4796, 4294901760
        %v6667 = vsub.f32 %v4796, %v6666
        %v6668 = vand.u32 %v6667, 4294901760
        %6669 = vmatpush1.msra.mxu0 %v6668
        %6670 = vmatprep.subr.mxu0 0.0
        %v6671 = vand.u32 %v4795, 4294901760
        %v6672 = vsub.f32 %v4795, %v6671
        %v6673 = vand.u32 %v6672, 4294901760
        %6674 = vmatpush1.msra.mxu0 %v6673
        %6675 = vmatprep.subr.mxu0 0.0
        %v6676 = vand.u32 %v4794, 4294901760
        %v6677 = vsub.f32 %v4794, %v6676
        %v6678 = vand.u32 %v6677, 4294901760
        %6679 = vmatpush1.msra.mxu0 %v6678
        %6680 = vmatprep.subr.mxu0 0.0
        %v6681 = vand.u32 %v4793, 4294901760
        %v6682 = vsub.f32 %v4793, %v6681
        %v6683 = vand.u32 %v6682, 4294901760
        %6684 = vmatpush1.msra.mxu0 %v6683
        %6685 = vmatprep.subr.mxu0 0.0
        %v6686 = vand.u32 %v4792, 4294901760
        %v6687 = vsub.f32 %v4792, %v6686
        %v6688 = vand.u32 %v6687, 4294901760
        %6689 = vmatpush1.msra.mxu0 %v6688
        %6690 = vmatprep.subr.mxu0 0.0
        %v6691 = vand.u32 %v4791, 4294901760
        %v6692 = vsub.f32 %v4791, %v6691
        %v6693 = vand.u32 %v6692, 4294901760
        %6694 = vmatpush1.msra.mxu0 %v6693
        %6695 = vmatprep.subr.mxu0 0.0
        %v6696 = vand.u32 %v4790, 4294901760
        %v6697 = vsub.f32 %v4790, %v6696
        %v6698 = vand.u32 %v6697, 4294901760
        %6699 = vmatpush1.msra.mxu0 %v6698
        %6700 = vmatprep.subr.mxu0 0.0
        %v6701 = vand.u32 %v4789, 4294901760
        %v6702 = vsub.f32 %v4789, %v6701
        %v6703 = vand.u32 %v6702, 4294901760
        %6704 = vmatpush1.msra.mxu0 %v6703
        %6705 = vmatprep.subr.mxu0 0.0
        %v6706 = vand.u32 %v4788, 4294901760
        %v6707 = vsub.f32 %v4788, %v6706
        %v6708 = vand.u32 %v6707, 4294901760
        %6709 = vmatpush1.msra.mxu0 %v6708
        %6710 = vmatprep.subr.mxu0 0.0
        %v6711 = vand.u32 %v4819, 4294901760
        %v6712 = vsub.f32 %v4819, %v6711
        %v6713 = vand.u32 %v6712, 4294901760
        %6714 = vmatpush2.msra.mxu0 %v6713
        %6715 = vmatprep.subr.mxu0 0.0
        %v6716 = vand.u32 %v4818, 4294901760
        %v6717 = vsub.f32 %v4818, %v6716
        %v6718 = vand.u32 %v6717, 4294901760
        %6719 = vmatpush2.msra.mxu0 %v6718
        %6720 = vmatprep.subr.mxu0 0.0
        %v6721 = vand.u32 %v4817, 4294901760
        %v6722 = vsub.f32 %v4817, %v6721
        %v6723 = vand.u32 %v6722, 4294901760
        %6724 = vmatpush2.msra.mxu0 %v6723
        %6725 = vmatprep.subr.mxu0 0.0
        %v6726 = vand.u32 %v4816, 4294901760
        %v6727 = vsub.f32 %v4816, %v6726
        %v6728 = vand.u32 %v6727, 4294901760
        %6729 = vmatpush2.msra.mxu0 %v6728
        %6730 = vmatprep.subr.mxu0 0.0
        %v6731 = vand.u32 %v4815, 4294901760
        %v6732 = vsub.f32 %v4815, %v6731
        %v6733 = vand.u32 %v6732, 4294901760
        %6734 = vmatpush2.msra.mxu0 %v6733
        %6735 = vmatprep.subr.mxu0 0.0
        %v6736 = vand.u32 %v4814, 4294901760
        %v6737 = vsub.f32 %v4814, %v6736
        %v6738 = vand.u32 %v6737, 4294901760
        %6739 = vmatpush2.msra.mxu0 %v6738
        %6740 = vmatprep.subr.mxu0 0.0
        %v6741 = vand.u32 %v4813, 4294901760
        %v6742 = vsub.f32 %v4813, %v6741
        %v6743 = vand.u32 %v6742, 4294901760
        %6744 = vmatpush2.msra.mxu0 %v6743
        %6745 = vmatprep.subr.mxu0 0.0
        %v6746 = vand.u32 %v4812, 4294901760
        %v6747 = vsub.f32 %v4812, %v6746
        %v6748 = vand.u32 %v6747, 4294901760
        %6749 = vmatpush2.msra.mxu0 %v6748
        %6750 = vmatprep.subr.mxu0 0.0
        %v6751 = vand.u32 %v4811, 4294901760
        %v6752 = vsub.f32 %v4811, %v6751
        %v6753 = vand.u32 %v6752, 4294901760
        %6754 = vmatpush2.msra.mxu0 %v6753
        %6755 = vmatprep.subr.mxu0 0.0
        %v6756 = vand.u32 %v4810, 4294901760
        %v6757 = vsub.f32 %v4810, %v6756
        %v6758 = vand.u32 %v6757, 4294901760
        %6759 = vmatpush2.msra.mxu0 %v6758
        %6760 = vmatprep.subr.mxu0 0.0
        %v6761 = vand.u32 %v4809, 4294901760
        %v6762 = vsub.f32 %v4809, %v6761
        %v6763 = vand.u32 %v6762, 4294901760
        %6764 = vmatpush2.msra.mxu0 %v6763
        %6765 = vmatprep.subr.mxu0 0.0
        %v6766 = vand.u32 %v4808, 4294901760
        %v6767 = vsub.f32 %v4808, %v6766
        %v6768 = vand.u32 %v6767, 4294901760
        %6769 = vmatpush2.msra.mxu0 %v6768
        %6770 = vmatprep.subr.mxu0 0.0
        %v6771 = vand.u32 %v4807, 4294901760
        %v6772 = vsub.f32 %v4807, %v6771
        %v6773 = vand.u32 %v6772, 4294901760
        %6774 = vmatpush2.msra.mxu0 %v6773
        %6775 = vmatprep.subr.mxu0 0.0
        %v6776 = vand.u32 %v4806, 4294901760
        %v6777 = vsub.f32 %v4806, %v6776
        %v6778 = vand.u32 %v6777, 4294901760
        %6779 = vmatpush2.msra.mxu0 %v6778
        %6780 = vmatprep.subr.mxu0 0.0
        %v6781 = vand.u32 %v4805, 4294901760
        %v6782 = vsub.f32 %v4805, %v6781
        %v6783 = vand.u32 %v6782, 4294901760
        %6784 = vmatpush2.msra.mxu0 %v6783
        %6785 = vmatprep.subr.mxu0 0.0
        %v6786 = vand.u32 %v4804, 4294901760
        %v6787 = vsub.f32 %v4804, %v6786
        %v6788 = vand.u32 %v6787, 4294901760
        %6789 = vmatpush2.msra.mxu0 %v6788
        %v6790 = vand.u32 %v4727, 4294901760
        %6791 = vmatprep.mubr.f32.mxu0 %v6790
        %v6792 = vand.u32 %v4726, 4294901760
        %6793 = vmatmul.mubr.f32.gmra.mxu0 %v6792
        %v6794 = vpop.f32.mrf.mxu0
        %v6795 = vadd.f32 %v6594, %v6794
        %v6796 = vpop.f32.mrf.mxu0
        %v6797 = vand.u32 %v4735, 4294901760
        %6798 = vmatprep.mubr.f32.mxu0 %v6797
        %v6799 = vand.u32 %v4734, 4294901760
        %6800 = vmatmul.mubr.f32.gmra.mxu0 %v6799
        %v6801 = vpop.f32.mrf.mxu0
        %v6802 = vadd.f32 %v6605, %v6801
        %v6803 = vpop.f32.mrf.mxu0
        %v6804 = vand.u32 %v4743, 4294901760
        %6805 = vmatprep.mubr.f32.mxu0 %v6804
        %v6806 = vand.u32 %v4742, 4294901760
        %6807 = vmatmul.mubr.f32.gmra.mxu0 %v6806
        %v6808 = vpop.f32.mrf.mxu0
        %v6809 = vadd.f32 %v6616, %v6808
        %v6810 = vpop.f32.mrf.mxu0
        %v6811 = vand.u32 %v4751, 4294901760
        %6812 = vmatprep.mubr.f32.mxu0 %v6811
        %v6813 = vand.u32 %v4750, 4294901760
        %6814 = vmatmul.mubr.f32.gmra.mxu0 %v6813
        %v6815 = vpop.f32.mrf.mxu0
        %v6816 = vadd.f32 %v6627, %v6815
        %v6817 = vpop.f32.mrf.mxu0
        %6818 = vdwg.mxu0
        %6819 = vmatprep.subr.mxu0 0.0
        %v6820 = vand.u32 %v4803, 4294901760
        %6821 = vmatpush1.msra.mxu0 %v6820
        %6822 = vmatprep.subr.mxu0 0.0
        %v6823 = vand.u32 %v4802, 4294901760
        %6824 = vmatpush1.msra.mxu0 %v6823
        %6825 = vmatprep.subr.mxu0 0.0
        %v6826 = vand.u32 %v4801, 4294901760
        %6827 = vmatpush1.msra.mxu0 %v6826
        %6828 = vmatprep.subr.mxu0 0.0
        %v6829 = vand.u32 %v4800, 4294901760
        %6830 = vmatpush1.msra.mxu0 %v6829
        %6831 = vmatprep.subr.mxu0 0.0
        %v6832 = vand.u32 %v4799, 4294901760
        %6833 = vmatpush1.msra.mxu0 %v6832
        %6834 = vmatprep.subr.mxu0 0.0
        %v6835 = vand.u32 %v4798, 4294901760
        %6836 = vmatpush1.msra.mxu0 %v6835
        %6837 = vmatprep.subr.mxu0 0.0
        %v6838 = vand.u32 %v4797, 4294901760
        %6839 = vmatpush1.msra.mxu0 %v6838
        %6840 = vmatprep.subr.mxu0 0.0
        %v6841 = vand.u32 %v4796, 4294901760
        %6842 = vmatpush1.msra.mxu0 %v6841
        %6843 = vmatprep.subr.mxu0 0.0
        %v6844 = vand.u32 %v4795, 4294901760
        %6845 = vmatpush1.msra.mxu0 %v6844
        %6846 = vmatprep.subr.mxu0 0.0
        %v6847 = vand.u32 %v4794, 4294901760
        %6848 = vmatpush1.msra.mxu0 %v6847
        %6849 = vmatprep.subr.mxu0 0.0
        %v6850 = vand.u32 %v4793, 4294901760
        %6851 = vmatpush1.msra.mxu0 %v6850
        %6852 = vmatprep.subr.mxu0 0.0
        %v6853 = vand.u32 %v4792, 4294901760
        %6854 = vmatpush1.msra.mxu0 %v6853
        %6855 = vmatprep.subr.mxu0 0.0
        %v6856 = vand.u32 %v4791, 4294901760
        %6857 = vmatpush1.msra.mxu0 %v6856
        %6858 = vmatprep.subr.mxu0 0.0
        %v6859 = vand.u32 %v4790, 4294901760
        %6860 = vmatpush1.msra.mxu0 %v6859
        %6861 = vmatprep.subr.mxu0 0.0
        %v6862 = vand.u32 %v4789, 4294901760
        %6863 = vmatpush1.msra.mxu0 %v6862
        %6864 = vmatprep.subr.mxu0 0.0
        %v6865 = vand.u32 %v4788, 4294901760
        %6866 = vmatpush1.msra.mxu0 %v6865
        %6867 = vmatprep.subr.mxu0 0.0
        %v6868 = vand.u32 %v4819, 4294901760
        %6869 = vmatpush2.msra.mxu0 %v6868
        %6870 = vmatprep.subr.mxu0 0.0
        %v6871 = vand.u32 %v4818, 4294901760
        %6872 = vmatpush2.msra.mxu0 %v6871
        %6873 = vmatprep.subr.mxu0 0.0
        %v6874 = vand.u32 %v4817, 4294901760
        %6875 = vmatpush2.msra.mxu0 %v6874
        %6876 = vmatprep.subr.mxu0 0.0
        %v6877 = vand.u32 %v4816, 4294901760
        %6878 = vmatpush2.msra.mxu0 %v6877
        %6879 = vmatprep.subr.mxu0 0.0
        %v6880 = vand.u32 %v4815, 4294901760
        %6881 = vmatpush2.msra.mxu0 %v6880
        %6882 = vmatprep.subr.mxu0 0.0
        %v6883 = vand.u32 %v4814, 4294901760
        %6884 = vmatpush2.msra.mxu0 %v6883
        %6885 = vmatprep.subr.mxu0 0.0
        %v6886 = vand.u32 %v4813, 4294901760
        %6887 = vmatpush2.msra.mxu0 %v6886
        %6888 = vmatprep.subr.mxu0 0.0
        %v6889 = vand.u32 %v4812, 4294901760
        %6890 = vmatpush2.msra.mxu0 %v6889
        %6891 = vmatprep.subr.mxu0 0.0
        %v6892 = vand.u32 %v4811, 4294901760
        %6893 = vmatpush2.msra.mxu0 %v6892
        %6894 = vmatprep.subr.mxu0 0.0
        %v6895 = vand.u32 %v4810, 4294901760
        %6896 = vmatpush2.msra.mxu0 %v6895
        %6897 = vmatprep.subr.mxu0 0.0
        %v6898 = vand.u32 %v4809, 4294901760
        %6899 = vmatpush2.msra.mxu0 %v6898
        %6900 = vmatprep.subr.mxu0 0.0
        %v6901 = vand.u32 %v4808, 4294901760
        %6902 = vmatpush2.msra.mxu0 %v6901
        %6903 = vmatprep.subr.mxu0 0.0
        %v6904 = vand.u32 %v4807, 4294901760
        %6905 = vmatpush2.msra.mxu0 %v6904
        %6906 = vmatprep.subr.mxu0 0.0
        %v6907 = vand.u32 %v4806, 4294901760
        %6908 = vmatpush2.msra.mxu0 %v6907
        %6909 = vmatprep.subr.mxu0 0.0
        %v6910 = vand.u32 %v4805, 4294901760
        %6911 = vmatpush2.msra.mxu0 %v6910
        %6912 = vmatprep.subr.mxu0 0.0
        %v6913 = vand.u32 %v4804, 4294901760
        %6914 = vmatpush2.msra.mxu0 %v6913
        %v6915 = vand.u32 %v4727, 4294901760
        %6916 = vmatprep.mubr.f32.mxu0 %v6915
        %v6917 = vand.u32 %v4726, 4294901760
        %6918 = vmatmul.mubr.f32.gmra.mxu0 %v6917
        %v6919 = vpop.f32.mrf.mxu0
        %v6920 = vadd.f32 %v6795, %v6919
        %v6921 = vpop.f32.mrf.mxu0
        %v6922 = vand.u32 %v4735, 4294901760
        %6923 = vmatprep.mubr.f32.mxu0 %v6922
        %v6924 = vand.u32 %v4734, 4294901760
        %6925 = vmatmul.mubr.f32.gmra.mxu0 %v6924
        %v6926 = vpop.f32.mrf.mxu0
        %v6927 = vadd.f32 %v6802, %v6926
        %v6928 = vpop.f32.mrf.mxu0
        %v6929 = vand.u32 %v4743, 4294901760
        %6930 = vmatprep.mubr.f32.mxu0 %v6929
        %v6931 = vand.u32 %v4742, 4294901760
        %6932 = vmatmul.mubr.f32.gmra.mxu0 %v6931
        %v6933 = vpop.f32.mrf.mxu0
        %v6934 = vadd.f32 %v6809, %v6933
        %v6935 = vpop.f32.mrf.mxu0
        %v6936 = vand.u32 %v4751, 4294901760
        %6937 = vmatprep.mubr.f32.mxu0 %v6936
        %v6938 = vand.u32 %v4750, 4294901760
        %6939 = vmatmul.mubr.f32.gmra.mxu0 %v6938
        %v6940 = vpop.f32.mrf.mxu0
        %v6941 = vadd.f32 %v6816, %v6940
        %v6942 = vpop.f32.mrf.mxu0
        %6943 = vdwg.mxu0
        %6944 = vmatprep.subr.mxu0 0.0
        %v6945 = vand.u32 %v4835, 4294901760
        %6946 = vmatpush1.msra.mxu0 %v6945
        %6947 = vmatprep.subr.mxu0 0.0
        %v6948 = vand.u32 %v4834, 4294901760
        %6949 = vmatpush1.msra.mxu0 %v6948
        %6950 = vmatprep.subr.mxu0 0.0
        %v6951 = vand.u32 %v4833, 4294901760
        %6952 = vmatpush1.msra.mxu0 %v6951
        %6953 = vmatprep.subr.mxu0 0.0
        %v6954 = vand.u32 %v4832, 4294901760
        %6955 = vmatpush1.msra.mxu0 %v6954
        %6956 = vmatprep.subr.mxu0 0.0
        %v6957 = vand.u32 %v4831, 4294901760
        %6958 = vmatpush1.msra.mxu0 %v6957
        %6959 = vmatprep.subr.mxu0 0.0
        %v6960 = vand.u32 %v4830, 4294901760
        %6961 = vmatpush1.msra.mxu0 %v6960
        %6962 = vmatprep.subr.mxu0 0.0
        %v6963 = vand.u32 %v4829, 4294901760
        %6964 = vmatpush1.msra.mxu0 %v6963
        %6965 = vmatprep.subr.mxu0 0.0
        %v6966 = vand.u32 %v4828, 4294901760
        %6967 = vmatpush1.msra.mxu0 %v6966
        %6968 = vmatprep.subr.mxu0 0.0
        %v6969 = vand.u32 %v4827, 4294901760
        %6970 = vmatpush1.msra.mxu0 %v6969
        %6971 = vmatprep.subr.mxu0 0.0
        %v6972 = vand.u32 %v4826, 4294901760
        %6973 = vmatpush1.msra.mxu0 %v6972
        %6974 = vmatprep.subr.mxu0 0.0
        %v6975 = vand.u32 %v4825, 4294901760
        %6976 = vmatpush1.msra.mxu0 %v6975
        %6977 = vmatprep.subr.mxu0 0.0
        %v6978 = vand.u32 %v4824, 4294901760
        %6979 = vmatpush1.msra.mxu0 %v6978
        %6980 = vmatprep.subr.mxu0 0.0
        %v6981 = vand.u32 %v4823, 4294901760
        %6982 = vmatpush1.msra.mxu0 %v6981
        %6983 = vmatprep.subr.mxu0 0.0
        %v6984 = vand.u32 %v4822, 4294901760
        %6985 = vmatpush1.msra.mxu0 %v6984
        %6986 = vmatprep.subr.mxu0 0.0
        %v6987 = vand.u32 %v4821, 4294901760
        %6988 = vmatpush1.msra.mxu0 %v6987
        %6989 = vmatprep.subr.mxu0 0.0
        %v6990 = vand.u32 %v4820, 4294901760
        %6991 = vmatpush1.msra.mxu0 %v6990
        %6992 = vmatprep.subr.mxu0 0.0
        %v6993 = vand.u32 %v4851, 4294901760
        %6994 = vmatpush2.msra.mxu0 %v6993
        %6995 = vmatprep.subr.mxu0 0.0
        %v6996 = vand.u32 %v4850, 4294901760
        %6997 = vmatpush2.msra.mxu0 %v6996
        %6998 = vmatprep.subr.mxu0 0.0
        %v6999 = vand.u32 %v4849, 4294901760
        %7000 = vmatpush2.msra.mxu0 %v6999
        %7001 = vmatprep.subr.mxu0 0.0
        %v7002 = vand.u32 %v4848, 4294901760
        %7003 = vmatpush2.msra.mxu0 %v7002
        %7004 = vmatprep.subr.mxu0 0.0
        %v7005 = vand.u32 %v4847, 4294901760
        %7006 = vmatpush2.msra.mxu0 %v7005
        %7007 = vmatprep.subr.mxu0 0.0
        %v7008 = vand.u32 %v4846, 4294901760
        %7009 = vmatpush2.msra.mxu0 %v7008
        %7010 = vmatprep.subr.mxu0 0.0
        %v7011 = vand.u32 %v4845, 4294901760
        %7012 = vmatpush2.msra.mxu0 %v7011
        %7013 = vmatprep.subr.mxu0 0.0
        %v7014 = vand.u32 %v4844, 4294901760
        %7015 = vmatpush2.msra.mxu0 %v7014
        %7016 = vmatprep.subr.mxu0 0.0
        %v7017 = vand.u32 %v4843, 4294901760
        %7018 = vmatpush2.msra.mxu0 %v7017
        %7019 = vmatprep.subr.mxu0 0.0
        %v7020 = vand.u32 %v4842, 4294901760
        %7021 = vmatpush2.msra.mxu0 %v7020
        %7022 = vmatprep.subr.mxu0 0.0
        %v7023 = vand.u32 %v4841, 4294901760
        %7024 = vmatpush2.msra.mxu0 %v7023
        %7025 = vmatprep.subr.mxu0 0.0
        %v7026 = vand.u32 %v4840, 4294901760
        %7027 = vmatpush2.msra.mxu0 %v7026
        %7028 = vmatprep.subr.mxu0 0.0
        %v7029 = vand.u32 %v4839, 4294901760
        %7030 = vmatpush2.msra.mxu0 %v7029
        %7031 = vmatprep.subr.mxu0 0.0
        %v7032 = vand.u32 %v4838, 4294901760
        %7033 = vmatpush2.msra.mxu0 %v7032
        %7034 = vmatprep.subr.mxu0 0.0
        %v7035 = vand.u32 %v4837, 4294901760
        %7036 = vmatpush2.msra.mxu0 %v7035
        %7037 = vmatprep.subr.mxu0 0.0
        %v7038 = vand.u32 %v4836, 4294901760
        %7039 = vmatpush2.msra.mxu0 %v7038
        %v7040 = vand.u32 %v4729, 4294901760
        %v7041 = vsub.f32 %v4729, %v7040
        %v7042 = vand.u32 %v7041, 4294901760
        %v7043 = vsub.f32 %v7041, %v7042
        %v7044 = vand.u32 %v7043, 4294901760
        %7045 = vmatprep.mubr.f32.mxu0 %v7044
        %v7046 = vand.u32 %v4728, 4294901760
        %v7047 = vsub.f32 %v4728, %v7046
        %v7048 = vand.u32 %v7047, 4294901760
        %v7049 = vsub.f32 %v7047, %v7048
        %v7050 = vand.u32 %v7049, 4294901760
        %7051 = vmatmul.mubr.f32.gmra.mxu0 %v7050
        %v7052 = vpop.f32.mrf.mxu0
        %v7053 = vadd.f32 %v6920, %v7052
        %v7054 = vpop.f32.mrf.mxu0
        %v7055 = vand.u32 %v4737, 4294901760
        %v7056 = vsub.f32 %v4737, %v7055
        %v7057 = vand.u32 %v7056, 4294901760
        %v7058 = vsub.f32 %v7056, %v7057
        %v7059 = vand.u32 %v7058, 4294901760
        %7060 = vmatprep.mubr.f32.mxu0 %v7059
        %v7061 = vand.u32 %v4736, 4294901760
        %v7062 = vsub.f32 %v4736, %v7061
        %v7063 = vand.u32 %v7062, 4294901760
        %v7064 = vsub.f32 %v7062, %v7063
        %v7065 = vand.u32 %v7064, 4294901760
        %7066 = vmatmul.mubr.f32.gmra.mxu0 %v7065
        %v7067 = vpop.f32.mrf.mxu0
        %v7068 = vadd.f32 %v6927, %v7067
        %v7069 = vpop.f32.mrf.mxu0
        %v7070 = vand.u32 %v4745, 4294901760
        %v7071 = vsub.f32 %v4745, %v7070
        %v7072 = vand.u32 %v7071, 4294901760
        %v7073 = vsub.f32 %v7071, %v7072
        %v7074 = vand.u32 %v7073, 4294901760
        %7075 = vmatprep.mubr.f32.mxu0 %v7074
        %v7076 = vand.u32 %v4744, 4294901760
        %v7077 = vsub.f32 %v4744, %v7076
        %v7078 = vand.u32 %v7077, 4294901760
        %v7079 = vsub.f32 %v7077, %v7078
        %v7080 = vand.u32 %v7079, 4294901760
        %7081 = vmatmul.mubr.f32.gmra.mxu0 %v7080
        %v7082 = vpop.f32.mrf.mxu0
        %v7083 = vadd.f32 %v6934, %v7082
        %v7084 = vpop.f32.mrf.mxu0
        %v7085 = vand.u32 %v4753, 4294901760
        %v7086 = vsub.f32 %v4753, %v7085
        %v7087 = vand.u32 %v7086, 4294901760
        %v7088 = vsub.f32 %v7086, %v7087
        %v7089 = vand.u32 %v7088, 4294901760
        %7090 = vmatprep.mubr.f32.mxu0 %v7089
        %v7091 = vand.u32 %v4752, 4294901760
        %v7092 = vsub.f32 %v4752, %v7091
        %v7093 = vand.u32 %v7092, 4294901760
        %v7094 = vsub.f32 %v7092, %v7093
        %v7095 = vand.u32 %v7094, 4294901760
        %7096 = vmatmul.mubr.f32.gmra.mxu0 %v7095
        %v7097 = vpop.f32.mrf.mxu0
        %v7098 = vadd.f32 %v6941, %v7097
        %v7099 = vpop.f32.mrf.mxu0
        %7100 = vdwg.mxu0
        %7101 = vmatprep.subr.mxu0 0.0
        %v7102 = vand.u32 %v4835, 4294901760
        %v7103 = vsub.f32 %v4835, %v7102
        %v7104 = vand.u32 %v7103, 4294901760
        %v7105 = vsub.f32 %v7103, %v7104
        %v7106 = vand.u32 %v7105, 4294901760
        %7107 = vmatpush1.msra.mxu0 %v7106
        %7108 = vmatprep.subr.mxu0 0.0
        %v7109 = vand.u32 %v4834, 4294901760
        %v7110 = vsub.f32 %v4834, %v7109
        %v7111 = vand.u32 %v7110, 4294901760
        %v7112 = vsub.f32 %v7110, %v7111
        %v7113 = vand.u32 %v7112, 4294901760
        %7114 = vmatpush1.msra.mxu0 %v7113
        %7115 = vmatprep.subr.mxu0 0.0
        %v7116 = vand.u32 %v4833, 4294901760
        %v7117 = vsub.f32 %v4833, %v7116
        %v7118 = vand.u32 %v7117, 4294901760
        %v7119 = vsub.f32 %v7117, %v7118
        %v7120 = vand.u32 %v7119, 4294901760
        %7121 = vmatpush1.msra.mxu0 %v7120
        %7122 = vmatprep.subr.mxu0 0.0
        %v7123 = vand.u32 %v4832, 4294901760
        %v7124 = vsub.f32 %v4832, %v7123
        %v7125 = vand.u32 %v7124, 4294901760
        %v7126 = vsub.f32 %v7124, %v7125
        %v7127 = vand.u32 %v7126, 4294901760
        %7128 = vmatpush1.msra.mxu0 %v7127
        %7129 = vmatprep.subr.mxu0 0.0
        %v7130 = vand.u32 %v4831, 4294901760
        %v7131 = vsub.f32 %v4831, %v7130
        %v7132 = vand.u32 %v7131, 4294901760
        %v7133 = vsub.f32 %v7131, %v7132
        %v7134 = vand.u32 %v7133, 4294901760
        %7135 = vmatpush1.msra.mxu0 %v7134
        %7136 = vmatprep.subr.mxu0 0.0
        %v7137 = vand.u32 %v4830, 4294901760
        %v7138 = vsub.f32 %v4830, %v7137
        %v7139 = vand.u32 %v7138, 4294901760
        %v7140 = vsub.f32 %v7138, %v7139
        %v7141 = vand.u32 %v7140, 4294901760
        %7142 = vmatpush1.msra.mxu0 %v7141
        %7143 = vmatprep.subr.mxu0 0.0
        %v7144 = vand.u32 %v4829, 4294901760
        %v7145 = vsub.f32 %v4829, %v7144
        %v7146 = vand.u32 %v7145, 4294901760
        %v7147 = vsub.f32 %v7145, %v7146
        %v7148 = vand.u32 %v7147, 4294901760
        %7149 = vmatpush1.msra.mxu0 %v7148
        %7150 = vmatprep.subr.mxu0 0.0
        %v7151 = vand.u32 %v4828, 4294901760
        %v7152 = vsub.f32 %v4828, %v7151
        %v7153 = vand.u32 %v7152, 4294901760
        %v7154 = vsub.f32 %v7152, %v7153
        %v7155 = vand.u32 %v7154, 4294901760
        %7156 = vmatpush1.msra.mxu0 %v7155
        %7157 = vmatprep.subr.mxu0 0.0
        %v7158 = vand.u32 %v4827, 4294901760
        %v7159 = vsub.f32 %v4827, %v7158
        %v7160 = vand.u32 %v7159, 4294901760
        %v7161 = vsub.f32 %v7159, %v7160
        %v7162 = vand.u32 %v7161, 4294901760
        %7163 = vmatpush1.msra.mxu0 %v7162
        %7164 = vmatprep.subr.mxu0 0.0
        %v7165 = vand.u32 %v4826, 4294901760
        %v7166 = vsub.f32 %v4826, %v7165
        %v7167 = vand.u32 %v7166, 4294901760
        %v7168 = vsub.f32 %v7166, %v7167
        %v7169 = vand.u32 %v7168, 4294901760
        %7170 = vmatpush1.msra.mxu0 %v7169
        %7171 = vmatprep.subr.mxu0 0.0
        %v7172 = vand.u32 %v4825, 4294901760
        %v7173 = vsub.f32 %v4825, %v7172
        %v7174 = vand.u32 %v7173, 4294901760
        %v7175 = vsub.f32 %v7173, %v7174
        %v7176 = vand.u32 %v7175, 4294901760
        %7177 = vmatpush1.msra.mxu0 %v7176
        %7178 = vmatprep.subr.mxu0 0.0
        %v7179 = vand.u32 %v4824, 4294901760
        %v7180 = vsub.f32 %v4824, %v7179
        %v7181 = vand.u32 %v7180, 4294901760
        %v7182 = vsub.f32 %v7180, %v7181
        %v7183 = vand.u32 %v7182, 4294901760
        %7184 = vmatpush1.msra.mxu0 %v7183
        %7185 = vmatprep.subr.mxu0 0.0
        %v7186 = vand.u32 %v4823, 4294901760
        %v7187 = vsub.f32 %v4823, %v7186
        %v7188 = vand.u32 %v7187, 4294901760
        %v7189 = vsub.f32 %v7187, %v7188
        %v7190 = vand.u32 %v7189, 4294901760
        %7191 = vmatpush1.msra.mxu0 %v7190
        %7192 = vmatprep.subr.mxu0 0.0
        %v7193 = vand.u32 %v4822, 4294901760
        %v7194 = vsub.f32 %v4822, %v7193
        %v7195 = vand.u32 %v7194, 4294901760
        %v7196 = vsub.f32 %v7194, %v7195
        %v7197 = vand.u32 %v7196, 4294901760
        %7198 = vmatpush1.msra.mxu0 %v7197
        %7199 = vmatprep.subr.mxu0 0.0
        %v7200 = vand.u32 %v4821, 4294901760
        %v7201 = vsub.f32 %v4821, %v7200
        %v7202 = vand.u32 %v7201, 4294901760
        %v7203 = vsub.f32 %v7201, %v7202
        %v7204 = vand.u32 %v7203, 4294901760
        %7205 = vmatpush1.msra.mxu0 %v7204
        %7206 = vmatprep.subr.mxu0 0.0
        %v7207 = vand.u32 %v4820, 4294901760
        %v7208 = vsub.f32 %v4820, %v7207
        %v7209 = vand.u32 %v7208, 4294901760
        %v7210 = vsub.f32 %v7208, %v7209
        %v7211 = vand.u32 %v7210, 4294901760
        %7212 = vmatpush1.msra.mxu0 %v7211
        %7213 = vmatprep.subr.mxu0 0.0
        %v7214 = vand.u32 %v4851, 4294901760
        %v7215 = vsub.f32 %v4851, %v7214
        %v7216 = vand.u32 %v7215, 4294901760
        %v7217 = vsub.f32 %v7215, %v7216
        %v7218 = vand.u32 %v7217, 4294901760
        %7219 = vmatpush2.msra.mxu0 %v7218
        %7220 = vmatprep.subr.mxu0 0.0
        %v7221 = vand.u32 %v4850, 4294901760
        %v7222 = vsub.f32 %v4850, %v7221
        %v7223 = vand.u32 %v7222, 4294901760
        %v7224 = vsub.f32 %v7222, %v7223
        %v7225 = vand.u32 %v7224, 4294901760
        %7226 = vmatpush2.msra.mxu0 %v7225
        %7227 = vmatprep.subr.mxu0 0.0
        %v7228 = vand.u32 %v4849, 4294901760
        %v7229 = vsub.f32 %v4849, %v7228
        %v7230 = vand.u32 %v7229, 4294901760
        %v7231 = vsub.f32 %v7229, %v7230
        %v7232 = vand.u32 %v7231, 4294901760
        %7233 = vmatpush2.msra.mxu0 %v7232
        %7234 = vmatprep.subr.mxu0 0.0
        %v7235 = vand.u32 %v4848, 4294901760
        %v7236 = vsub.f32 %v4848, %v7235
        %v7237 = vand.u32 %v7236, 4294901760
        %v7238 = vsub.f32 %v7236, %v7237
        %v7239 = vand.u32 %v7238, 4294901760
        %7240 = vmatpush2.msra.mxu0 %v7239
        %7241 = vmatprep.subr.mxu0 0.0
        %v7242 = vand.u32 %v4847, 4294901760
        %v7243 = vsub.f32 %v4847, %v7242
        %v7244 = vand.u32 %v7243, 4294901760
        %v7245 = vsub.f32 %v7243, %v7244
        %v7246 = vand.u32 %v7245, 4294901760
        %7247 = vmatpush2.msra.mxu0 %v7246
        %7248 = vmatprep.subr.mxu0 0.0
        %v7249 = vand.u32 %v4846, 4294901760
        %v7250 = vsub.f32 %v4846, %v7249
        %v7251 = vand.u32 %v7250, 4294901760
        %v7252 = vsub.f32 %v7250, %v7251
        %v7253 = vand.u32 %v7252, 4294901760
        %7254 = vmatpush2.msra.mxu0 %v7253
        %7255 = vmatprep.subr.mxu0 0.0
        %v7256 = vand.u32 %v4845, 4294901760
        %v7257 = vsub.f32 %v4845, %v7256
        %v7258 = vand.u32 %v7257, 4294901760
        %v7259 = vsub.f32 %v7257, %v7258
        %v7260 = vand.u32 %v7259, 4294901760
        %7261 = vmatpush2.msra.mxu0 %v7260
        %7262 = vmatprep.subr.mxu0 0.0
        %v7263 = vand.u32 %v4844, 4294901760
        %v7264 = vsub.f32 %v4844, %v7263
        %v7265 = vand.u32 %v7264, 4294901760
        %v7266 = vsub.f32 %v7264, %v7265
        %v7267 = vand.u32 %v7266, 4294901760
        %7268 = vmatpush2.msra.mxu0 %v7267
        %7269 = vmatprep.subr.mxu0 0.0
        %v7270 = vand.u32 %v4843, 4294901760
        %v7271 = vsub.f32 %v4843, %v7270
        %v7272 = vand.u32 %v7271, 4294901760
        %v7273 = vsub.f32 %v7271, %v7272
        %v7274 = vand.u32 %v7273, 4294901760
        %7275 = vmatpush2.msra.mxu0 %v7274
        %7276 = vmatprep.subr.mxu0 0.0
        %v7277 = vand.u32 %v4842, 4294901760
        %v7278 = vsub.f32 %v4842, %v7277
        %v7279 = vand.u32 %v7278, 4294901760
        %v7280 = vsub.f32 %v7278, %v7279
        %v7281 = vand.u32 %v7280, 4294901760
        %7282 = vmatpush2.msra.mxu0 %v7281
        %7283 = vmatprep.subr.mxu0 0.0
        %v7284 = vand.u32 %v4841, 4294901760
        %v7285 = vsub.f32 %v4841, %v7284
        %v7286 = vand.u32 %v7285, 4294901760
        %v7287 = vsub.f32 %v7285, %v7286
        %v7288 = vand.u32 %v7287, 4294901760
        %7289 = vmatpush2.msra.mxu0 %v7288
        %7290 = vmatprep.subr.mxu0 0.0
        %v7291 = vand.u32 %v4840, 4294901760
        %v7292 = vsub.f32 %v4840, %v7291
        %v7293 = vand.u32 %v7292, 4294901760
        %v7294 = vsub.f32 %v7292, %v7293
        %v7295 = vand.u32 %v7294, 4294901760
        %7296 = vmatpush2.msra.mxu0 %v7295
        %7297 = vmatprep.subr.mxu0 0.0
        %v7298 = vand.u32 %v4839, 4294901760
        %v7299 = vsub.f32 %v4839, %v7298
        %v7300 = vand.u32 %v7299, 4294901760
        %v7301 = vsub.f32 %v7299, %v7300
        %v7302 = vand.u32 %v7301, 4294901760
        %7303 = vmatpush2.msra.mxu0 %v7302
        %7304 = vmatprep.subr.mxu0 0.0
        %v7305 = vand.u32 %v4838, 4294901760
        %v7306 = vsub.f32 %v4838, %v7305
        %v7307 = vand.u32 %v7306, 4294901760
        %v7308 = vsub.f32 %v7306, %v7307
        %v7309 = vand.u32 %v7308, 4294901760
        %7310 = vmatpush2.msra.mxu0 %v7309
        %7311 = vmatprep.subr.mxu0 0.0
        %v7312 = vand.u32 %v4837, 4294901760
        %v7313 = vsub.f32 %v4837, %v7312
        %v7314 = vand.u32 %v7313, 4294901760
        %v7315 = vsub.f32 %v7313, %v7314
        %v7316 = vand.u32 %v7315, 4294901760
        %7317 = vmatpush2.msra.mxu0 %v7316
        %7318 = vmatprep.subr.mxu0 0.0
        %v7319 = vand.u32 %v4836, 4294901760
        %v7320 = vsub.f32 %v4836, %v7319
        %v7321 = vand.u32 %v7320, 4294901760
        %v7322 = vsub.f32 %v7320, %v7321
        %v7323 = vand.u32 %v7322, 4294901760
        %7324 = vmatpush2.msra.mxu0 %v7323
        %v7325 = vand.u32 %v4729, 4294901760
        %7326 = vmatprep.mubr.f32.mxu0 %v7325
        %v7327 = vand.u32 %v4728, 4294901760
        %7328 = vmatmul.mubr.f32.gmra.mxu0 %v7327
        %v7329 = vpop.f32.mrf.mxu0
        %v7330 = vadd.f32 %v7053, %v7329
        %v7331 = vpop.f32.mrf.mxu0
        %v7332 = vand.u32 %v4737, 4294901760
        %7333 = vmatprep.mubr.f32.mxu0 %v7332
        %v7334 = vand.u32 %v4736, 4294901760
        %7335 = vmatmul.mubr.f32.gmra.mxu0 %v7334
        %v7336 = vpop.f32.mrf.mxu0
        %v7337 = vadd.f32 %v7068, %v7336
        %v7338 = vpop.f32.mrf.mxu0
        %v7339 = vand.u32 %v4745, 4294901760
        %7340 = vmatprep.mubr.f32.mxu0 %v7339
        %v7341 = vand.u32 %v4744, 4294901760
        %7342 = vmatmul.mubr.f32.gmra.mxu0 %v7341
        %v7343 = vpop.f32.mrf.mxu0
        %v7344 = vadd.f32 %v7083, %v7343
        %v7345 = vpop.f32.mrf.mxu0
        %v7346 = vand.u32 %v4753, 4294901760
        %7347 = vmatprep.mubr.f32.mxu0 %v7346
        %v7348 = vand.u32 %v4752, 4294901760
        %7349 = vmatmul.mubr.f32.gmra.mxu0 %v7348
        %v7350 = vpop.f32.mrf.mxu0
        %v7351 = vadd.f32 %v7098, %v7350
        %v7352 = vpop.f32.mrf.mxu0
        %7353 = vdwg.mxu0
        %7354 = vmatprep.subr.mxu0 0.0
        %v7355 = vand.u32 %v4835, 4294901760
        %v7356 = vsub.f32 %v4835, %v7355
        %7357 = vmatpush1.msra.mxu0 %v7356
        %7358 = vmatprep.subr.mxu0 0.0
        %v7359 = vand.u32 %v4834, 4294901760
        %v7360 = vsub.f32 %v4834, %v7359
        %7361 = vmatpush1.msra.mxu0 %v7360
        %7362 = vmatprep.subr.mxu0 0.0
        %v7363 = vand.u32 %v4833, 4294901760
        %v7364 = vsub.f32 %v4833, %v7363
        %7365 = vmatpush1.msra.mxu0 %v7364
        %7366 = vmatprep.subr.mxu0 0.0
        %v7367 = vand.u32 %v4832, 4294901760
        %v7368 = vsub.f32 %v4832, %v7367
        %7369 = vmatpush1.msra.mxu0 %v7368
        %7370 = vmatprep.subr.mxu0 0.0
        %v7371 = vand.u32 %v4831, 4294901760
        %v7372 = vsub.f32 %v4831, %v7371
        %7373 = vmatpush1.msra.mxu0 %v7372
        %7374 = vmatprep.subr.mxu0 0.0
        %v7375 = vand.u32 %v4830, 4294901760
        %v7376 = vsub.f32 %v4830, %v7375
        %7377 = vmatpush1.msra.mxu0 %v7376
        %7378 = vmatprep.subr.mxu0 0.0
        %v7379 = vand.u32 %v4829, 4294901760
        %v7380 = vsub.f32 %v4829, %v7379
        %7381 = vmatpush1.msra.mxu0 %v7380
        %7382 = vmatprep.subr.mxu0 0.0
        %v7383 = vand.u32 %v4828, 4294901760
        %v7384 = vsub.f32 %v4828, %v7383
        %7385 = vmatpush1.msra.mxu0 %v7384
        %7386 = vmatprep.subr.mxu0 0.0
        %v7387 = vand.u32 %v4827, 4294901760
        %v7388 = vsub.f32 %v4827, %v7387
        %7389 = vmatpush1.msra.mxu0 %v7388
        %7390 = vmatprep.subr.mxu0 0.0
        %v7391 = vand.u32 %v4826, 4294901760
        %v7392 = vsub.f32 %v4826, %v7391
        %7393 = vmatpush1.msra.mxu0 %v7392
        %7394 = vmatprep.subr.mxu0 0.0
        %v7395 = vand.u32 %v4825, 4294901760
        %v7396 = vsub.f32 %v4825, %v7395
        %7397 = vmatpush1.msra.mxu0 %v7396
        %7398 = vmatprep.subr.mxu0 0.0
        %v7399 = vand.u32 %v4824, 4294901760
        %v7400 = vsub.f32 %v4824, %v7399
        %7401 = vmatpush1.msra.mxu0 %v7400
        %7402 = vmatprep.subr.mxu0 0.0
        %v7403 = vand.u32 %v4823, 4294901760
        %v7404 = vsub.f32 %v4823, %v7403
        %7405 = vmatpush1.msra.mxu0 %v7404
        %7406 = vmatprep.subr.mxu0 0.0
        %v7407 = vand.u32 %v4822, 4294901760
        %v7408 = vsub.f32 %v4822, %v7407
        %7409 = vmatpush1.msra.mxu0 %v7408
        %7410 = vmatprep.subr.mxu0 0.0
        %v7411 = vand.u32 %v4821, 4294901760
        %v7412 = vsub.f32 %v4821, %v7411
        %7413 = vmatpush1.msra.mxu0 %v7412
        %7414 = vmatprep.subr.mxu0 0.0
        %v7415 = vand.u32 %v4820, 4294901760
        %v7416 = vsub.f32 %v4820, %v7415
        %7417 = vmatpush1.msra.mxu0 %v7416
        %7418 = vmatprep.subr.mxu0 0.0
        %v7419 = vand.u32 %v4851, 4294901760
        %v7420 = vsub.f32 %v4851, %v7419
        %7421 = vmatpush2.msra.mxu0 %v7420
        %7422 = vmatprep.subr.mxu0 0.0
        %v7423 = vand.u32 %v4850, 4294901760
        %v7424 = vsub.f32 %v4850, %v7423
        %7425 = vmatpush2.msra.mxu0 %v7424
        %7426 = vmatprep.subr.mxu0 0.0
        %v7427 = vand.u32 %v4849, 4294901760
        %v7428 = vsub.f32 %v4849, %v7427
        %7429 = vmatpush2.msra.mxu0 %v7428
        %7430 = vmatprep.subr.mxu0 0.0
        %v7431 = vand.u32 %v4848, 4294901760
        %v7432 = vsub.f32 %v4848, %v7431
        %7433 = vmatpush2.msra.mxu0 %v7432
        %7434 = vmatprep.subr.mxu0 0.0
        %v7435 = vand.u32 %v4847, 4294901760
        %v7436 = vsub.f32 %v4847, %v7435
        %7437 = vmatpush2.msra.mxu0 %v7436
        %7438 = vmatprep.subr.mxu0 0.0
        %v7439 = vand.u32 %v4846, 4294901760
        %v7440 = vsub.f32 %v4846, %v7439
        %7441 = vmatpush2.msra.mxu0 %v7440
        %7442 = vmatprep.subr.mxu0 0.0
        %v7443 = vand.u32 %v4845, 4294901760
        %v7444 = vsub.f32 %v4845, %v7443
        %7445 = vmatpush2.msra.mxu0 %v7444
        %7446 = vmatprep.subr.mxu0 0.0
        %v7447 = vand.u32 %v4844, 4294901760
        %v7448 = vsub.f32 %v4844, %v7447
        %7449 = vmatpush2.msra.mxu0 %v7448
        %7450 = vmatprep.subr.mxu0 0.0
        %v7451 = vand.u32 %v4843, 4294901760
        %v7452 = vsub.f32 %v4843, %v7451
        %7453 = vmatpush2.msra.mxu0 %v7452
        %7454 = vmatprep.subr.mxu0 0.0
        %v7455 = vand.u32 %v4842, 4294901760
        %v7456 = vsub.f32 %v4842, %v7455
        %7457 = vmatpush2.msra.mxu0 %v7456
        %7458 = vmatprep.subr.mxu0 0.0
        %v7459 = vand.u32 %v4841, 4294901760
        %v7460 = vsub.f32 %v4841, %v7459
        %7461 = vmatpush2.msra.mxu0 %v7460
        %7462 = vmatprep.subr.mxu0 0.0
        %v7463 = vand.u32 %v4840, 4294901760
        %v7464 = vsub.f32 %v4840, %v7463
        %7465 = vmatpush2.msra.mxu0 %v7464
        %7466 = vmatprep.subr.mxu0 0.0
        %v7467 = vand.u32 %v4839, 4294901760
        %v7468 = vsub.f32 %v4839, %v7467
        %7469 = vmatpush2.msra.mxu0 %v7468
        %7470 = vmatprep.subr.mxu0 0.0
        %v7471 = vand.u32 %v4838, 4294901760
        %v7472 = vsub.f32 %v4838, %v7471
        %7473 = vmatpush2.msra.mxu0 %v7472
        %7474 = vmatprep.subr.mxu0 0.0
        %v7475 = vand.u32 %v4837, 4294901760
        %v7476 = vsub.f32 %v4837, %v7475
        %7477 = vmatpush2.msra.mxu0 %v7476
        %7478 = vmatprep.subr.mxu0 0.0
        %v7479 = vand.u32 %v4836, 4294901760
        %v7480 = vsub.f32 %v4836, %v7479
        %7481 = vmatpush2.msra.mxu0 %v7480
        %v7482 = vand.u32 %v4729, 4294901760
        %v7483 = vsub.f32 %v4729, %v7482
        %7484 = vmatprep.mubr.f32.mxu0 %v7483
        %v7485 = vand.u32 %v4728, 4294901760
        %v7486 = vsub.f32 %v4728, %v7485
        %7487 = vmatmul.mubr.f32.gmra.mxu0 %v7486
        %v7488 = vpop.f32.mrf.mxu0
        %v7489 = vadd.f32 %v7330, %v7488
        %v7490 = vpop.f32.mrf.mxu0
        %v7491 = vand.u32 %v4737, 4294901760
        %v7492 = vsub.f32 %v4737, %v7491
        %7493 = vmatprep.mubr.f32.mxu0 %v7492
        %v7494 = vand.u32 %v4736, 4294901760
        %v7495 = vsub.f32 %v4736, %v7494
        %7496 = vmatmul.mubr.f32.gmra.mxu0 %v7495
        %v7497 = vpop.f32.mrf.mxu0
        %v7498 = vadd.f32 %v7337, %v7497
        %v7499 = vpop.f32.mrf.mxu0
        %v7500 = vand.u32 %v4745, 4294901760
        %v7501 = vsub.f32 %v4745, %v7500
        %7502 = vmatprep.mubr.f32.mxu0 %v7501
        %v7503 = vand.u32 %v4744, 4294901760
        %v7504 = vsub.f32 %v4744, %v7503
        %7505 = vmatmul.mubr.f32.gmra.mxu0 %v7504
        %v7506 = vpop.f32.mrf.mxu0
        %v7507 = vadd.f32 %v7344, %v7506
        %v7508 = vpop.f32.mrf.mxu0
        %v7509 = vand.u32 %v4753, 4294901760
        %v7510 = vsub.f32 %v4753, %v7509
        %7511 = vmatprep.mubr.f32.mxu0 %v7510
        %v7512 = vand.u32 %v4752, 4294901760
        %v7513 = vsub.f32 %v4752, %v7512
        %7514 = vmatmul.mubr.f32.gmra.mxu0 %v7513
        %v7515 = vpop.f32.mrf.mxu0
        %v7516 = vadd.f32 %v7351, %v7515
        %v7517 = vpop.f32.mrf.mxu0
        %7518 = vdwg.mxu0
        %7519 = vmatprep.subr.mxu0 0.0
        %v7520 = vand.u32 %v4835, 4294901760
        %7521 = vmatpush1.msra.mxu0 %v7520
        %7522 = vmatprep.subr.mxu0 0.0
        %v7523 = vand.u32 %v4834, 4294901760
        %7524 = vmatpush1.msra.mxu0 %v7523
        %7525 = vmatprep.subr.mxu0 0.0
        %v7526 = vand.u32 %v4833, 4294901760
        %7527 = vmatpush1.msra.mxu0 %v7526
        %7528 = vmatprep.subr.mxu0 0.0
        %v7529 = vand.u32 %v4832, 4294901760
        %7530 = vmatpush1.msra.mxu0 %v7529
        %7531 = vmatprep.subr.mxu0 0.0
        %v7532 = vand.u32 %v4831, 4294901760
        %7533 = vmatpush1.msra.mxu0 %v7532
        %7534 = vmatprep.subr.mxu0 0.0
        %v7535 = vand.u32 %v4830, 4294901760
        %7536 = vmatpush1.msra.mxu0 %v7535
        %7537 = vmatprep.subr.mxu0 0.0
        %v7538 = vand.u32 %v4829, 4294901760
        %7539 = vmatpush1.msra.mxu0 %v7538
        %7540 = vmatprep.subr.mxu0 0.0
        %v7541 = vand.u32 %v4828, 4294901760
        %7542 = vmatpush1.msra.mxu0 %v7541
        %7543 = vmatprep.subr.mxu0 0.0
        %v7544 = vand.u32 %v4827, 4294901760
        %7545 = vmatpush1.msra.mxu0 %v7544
        %7546 = vmatprep.subr.mxu0 0.0
        %v7547 = vand.u32 %v4826, 4294901760
        %7548 = vmatpush1.msra.mxu0 %v7547
        %7549 = vmatprep.subr.mxu0 0.0
        %v7550 = vand.u32 %v4825, 4294901760
        %7551 = vmatpush1.msra.mxu0 %v7550
        %7552 = vmatprep.subr.mxu0 0.0
        %v7553 = vand.u32 %v4824, 4294901760
        %7554 = vmatpush1.msra.mxu0 %v7553
        %7555 = vmatprep.subr.mxu0 0.0
        %v7556 = vand.u32 %v4823, 4294901760
        %7557 = vmatpush1.msra.mxu0 %v7556
        %7558 = vmatprep.subr.mxu0 0.0
        %v7559 = vand.u32 %v4822, 4294901760
        %7560 = vmatpush1.msra.mxu0 %v7559
        %7561 = vmatprep.subr.mxu0 0.0
        %v7562 = vand.u32 %v4821, 4294901760
        %7563 = vmatpush1.msra.mxu0 %v7562
        %7564 = vmatprep.subr.mxu0 0.0
        %v7565 = vand.u32 %v4820, 4294901760
        %7566 = vmatpush1.msra.mxu0 %v7565
        %7567 = vmatprep.subr.mxu0 0.0
        %v7568 = vand.u32 %v4851, 4294901760
        %7569 = vmatpush2.msra.mxu0 %v7568
        %7570 = vmatprep.subr.mxu0 0.0
        %v7571 = vand.u32 %v4850, 4294901760
        %7572 = vmatpush2.msra.mxu0 %v7571
        %7573 = vmatprep.subr.mxu0 0.0
        %v7574 = vand.u32 %v4849, 4294901760
        %7575 = vmatpush2.msra.mxu0 %v7574
        %7576 = vmatprep.subr.mxu0 0.0
        %v7577 = vand.u32 %v4848, 4294901760
        %7578 = vmatpush2.msra.mxu0 %v7577
        %7579 = vmatprep.subr.mxu0 0.0
        %v7580 = vand.u32 %v4847, 4294901760
        %7581 = vmatpush2.msra.mxu0 %v7580
        %7582 = vmatprep.subr.mxu0 0.0
        %v7583 = vand.u32 %v4846, 4294901760
        %7584 = vmatpush2.msra.mxu0 %v7583
        %7585 = vmatprep.subr.mxu0 0.0
        %v7586 = vand.u32 %v4845, 4294901760
        %7587 = vmatpush2.msra.mxu0 %v7586
        %7588 = vmatprep.subr.mxu0 0.0
        %v7589 = vand.u32 %v4844, 4294901760
        %7590 = vmatpush2.msra.mxu0 %v7589
        %7591 = vmatprep.subr.mxu0 0.0
        %v7592 = vand.u32 %v4843, 4294901760
        %7593 = vmatpush2.msra.mxu0 %v7592
        %7594 = vmatprep.subr.mxu0 0.0
        %v7595 = vand.u32 %v4842, 4294901760
        %7596 = vmatpush2.msra.mxu0 %v7595
        %7597 = vmatprep.subr.mxu0 0.0
        %v7598 = vand.u32 %v4841, 4294901760
        %7599 = vmatpush2.msra.mxu0 %v7598
        %7600 = vmatprep.subr.mxu0 0.0
        %v7601 = vand.u32 %v4840, 4294901760
        %7602 = vmatpush2.msra.mxu0 %v7601
        %7603 = vmatprep.subr.mxu0 0.0
        %v7604 = vand.u32 %v4839, 4294901760
        %7605 = vmatpush2.msra.mxu0 %v7604
        %7606 = vmatprep.subr.mxu0 0.0
        %v7607 = vand.u32 %v4838, 4294901760
        %7608 = vmatpush2.msra.mxu0 %v7607
        %7609 = vmatprep.subr.mxu0 0.0
        %v7610 = vand.u32 %v4837, 4294901760
        %7611 = vmatpush2.msra.mxu0 %v7610
        %7612 = vmatprep.subr.mxu0 0.0
        %v7613 = vand.u32 %v4836, 4294901760
        %7614 = vmatpush2.msra.mxu0 %v7613
        %v7615 = vand.u32 %v4729, 4294901760
        %v7616 = vsub.f32 %v4729, %v7615
        %v7617 = vand.u32 %v7616, 4294901760
        %7618 = vmatprep.mubr.f32.mxu0 %v7617
        %v7619 = vand.u32 %v4728, 4294901760
        %v7620 = vsub.f32 %v4728, %v7619
        %v7621 = vand.u32 %v7620, 4294901760
        %7622 = vmatmul.mubr.f32.gmra.mxu0 %v7621
        %v7623 = vpop.f32.mrf.mxu0
        %v7624 = vadd.f32 %v7489, %v7623
        %v7625 = vpop.f32.mrf.mxu0
        %v7626 = vand.u32 %v4737, 4294901760
        %v7627 = vsub.f32 %v4737, %v7626
        %v7628 = vand.u32 %v7627, 4294901760
        %7629 = vmatprep.mubr.f32.mxu0 %v7628
        %v7630 = vand.u32 %v4736, 4294901760
        %v7631 = vsub.f32 %v4736, %v7630
        %v7632 = vand.u32 %v7631, 4294901760
        %7633 = vmatmul.mubr.f32.gmra.mxu0 %v7632
        %v7634 = vpop.f32.mrf.mxu0
        %v7635 = vadd.f32 %v7498, %v7634
        %v7636 = vpop.f32.mrf.mxu0
        %v7637 = vand.u32 %v4745, 4294901760
        %v7638 = vsub.f32 %v4745, %v7637
        %v7639 = vand.u32 %v7638, 4294901760
        %7640 = vmatprep.mubr.f32.mxu0 %v7639
        %v7641 = vand.u32 %v4744, 4294901760
        %v7642 = vsub.f32 %v4744, %v7641
        %v7643 = vand.u32 %v7642, 4294901760
        %7644 = vmatmul.mubr.f32.gmra.mxu0 %v7643
        %v7645 = vpop.f32.mrf.mxu0
        %v7646 = vadd.f32 %v7507, %v7645
        %v7647 = vpop.f32.mrf.mxu0
        %v7648 = vand.u32 %v4753, 4294901760
        %v7649 = vsub.f32 %v4753, %v7648
        %v7650 = vand.u32 %v7649, 4294901760
        %7651 = vmatprep.mubr.f32.mxu0 %v7650
        %v7652 = vand.u32 %v4752, 4294901760
        %v7653 = vsub.f32 %v4752, %v7652
        %v7654 = vand.u32 %v7653, 4294901760
        %7655 = vmatmul.mubr.f32.gmra.mxu0 %v7654
        %v7656 = vpop.f32.mrf.mxu0
        %v7657 = vadd.f32 %v7516, %v7656
        %v7658 = vpop.f32.mrf.mxu0
        %7659 = vdwg.mxu0
        %7660 = vmatprep.subr.mxu0 0.0
        %v7661 = vand.u32 %v4835, 4294901760
        %v7662 = vsub.f32 %v4835, %v7661
        %v7663 = vand.u32 %v7662, 4294901760
        %7664 = vmatpush1.msra.mxu0 %v7663
        %7665 = vmatprep.subr.mxu0 0.0
        %v7666 = vand.u32 %v4834, 4294901760
        %v7667 = vsub.f32 %v4834, %v7666
        %v7668 = vand.u32 %v7667, 4294901760
        %7669 = vmatpush1.msra.mxu0 %v7668
        %7670 = vmatprep.subr.mxu0 0.0
        %v7671 = vand.u32 %v4833, 4294901760
        %v7672 = vsub.f32 %v4833, %v7671
        %v7673 = vand.u32 %v7672, 4294901760
        %7674 = vmatpush1.msra.mxu0 %v7673
        %7675 = vmatprep.subr.mxu0 0.0
        %v7676 = vand.u32 %v4832, 4294901760
        %v7677 = vsub.f32 %v4832, %v7676
        %v7678 = vand.u32 %v7677, 4294901760
        %7679 = vmatpush1.msra.mxu0 %v7678
        %7680 = vmatprep.subr.mxu0 0.0
        %v7681 = vand.u32 %v4831, 4294901760
        %v7682 = vsub.f32 %v4831, %v7681
        %v7683 = vand.u32 %v7682, 4294901760
        %7684 = vmatpush1.msra.mxu0 %v7683
        %7685 = vmatprep.subr.mxu0 0.0
        %v7686 = vand.u32 %v4830, 4294901760
        %v7687 = vsub.f32 %v4830, %v7686
        %v7688 = vand.u32 %v7687, 4294901760
        %7689 = vmatpush1.msra.mxu0 %v7688
        %7690 = vmatprep.subr.mxu0 0.0
        %v7691 = vand.u32 %v4829, 4294901760
        %v7692 = vsub.f32 %v4829, %v7691
        %v7693 = vand.u32 %v7692, 4294901760
        %7694 = vmatpush1.msra.mxu0 %v7693
        %7695 = vmatprep.subr.mxu0 0.0
        %v7696 = vand.u32 %v4828, 4294901760
        %v7697 = vsub.f32 %v4828, %v7696
        %v7698 = vand.u32 %v7697, 4294901760
        %7699 = vmatpush1.msra.mxu0 %v7698
        %7700 = vmatprep.subr.mxu0 0.0
        %v7701 = vand.u32 %v4827, 4294901760
        %v7702 = vsub.f32 %v4827, %v7701
        %v7703 = vand.u32 %v7702, 4294901760
        %7704 = vmatpush1.msra.mxu0 %v7703
        %7705 = vmatprep.subr.mxu0 0.0
        %v7706 = vand.u32 %v4826, 4294901760
        %v7707 = vsub.f32 %v4826, %v7706
        %v7708 = vand.u32 %v7707, 4294901760
        %7709 = vmatpush1.msra.mxu0 %v7708
        %7710 = vmatprep.subr.mxu0 0.0
        %v7711 = vand.u32 %v4825, 4294901760
        %v7712 = vsub.f32 %v4825, %v7711
        %v7713 = vand.u32 %v7712, 4294901760
        %7714 = vmatpush1.msra.mxu0 %v7713
        %7715 = vmatprep.subr.mxu0 0.0
        %v7716 = vand.u32 %v4824, 4294901760
        %v7717 = vsub.f32 %v4824, %v7716
        %v7718 = vand.u32 %v7717, 4294901760
        %7719 = vmatpush1.msra.mxu0 %v7718
        %7720 = vmatprep.subr.mxu0 0.0
        %v7721 = vand.u32 %v4823, 4294901760
        %v7722 = vsub.f32 %v4823, %v7721
        %v7723 = vand.u32 %v7722, 4294901760
        %7724 = vmatpush1.msra.mxu0 %v7723
        %7725 = vmatprep.subr.mxu0 0.0
        %v7726 = vand.u32 %v4822, 4294901760
        %v7727 = vsub.f32 %v4822, %v7726
        %v7728 = vand.u32 %v7727, 4294901760
        %7729 = vmatpush1.msra.mxu0 %v7728
        %7730 = vmatprep.subr.mxu0 0.0
        %v7731 = vand.u32 %v4821, 4294901760
        %v7732 = vsub.f32 %v4821, %v7731
        %v7733 = vand.u32 %v7732, 4294901760
        %7734 = vmatpush1.msra.mxu0 %v7733
        %7735 = vmatprep.subr.mxu0 0.0
        %v7736 = vand.u32 %v4820, 4294901760
        %v7737 = vsub.f32 %v4820, %v7736
        %v7738 = vand.u32 %v7737, 4294901760
        %7739 = vmatpush1.msra.mxu0 %v7738
        %7740 = vmatprep.subr.mxu0 0.0
        %v7741 = vand.u32 %v4851, 4294901760
        %v7742 = vsub.f32 %v4851, %v7741
        %v7743 = vand.u32 %v7742, 4294901760
        %7744 = vmatpush2.msra.mxu0 %v7743
        %7745 = vmatprep.subr.mxu0 0.0
        %v7746 = vand.u32 %v4850, 4294901760
        %v7747 = vsub.f32 %v4850, %v7746
        %v7748 = vand.u32 %v7747, 4294901760
        %7749 = vmatpush2.msra.mxu0 %v7748
        %7750 = vmatprep.subr.mxu0 0.0
        %v7751 = vand.u32 %v4849, 4294901760
        %v7752 = vsub.f32 %v4849, %v7751
        %v7753 = vand.u32 %v7752, 4294901760
        %7754 = vmatpush2.msra.mxu0 %v7753
        %7755 = vmatprep.subr.mxu0 0.0
        %v7756 = vand.u32 %v4848, 4294901760
        %v7757 = vsub.f32 %v4848, %v7756
        %v7758 = vand.u32 %v7757, 4294901760
        %7759 = vmatpush2.msra.mxu0 %v7758
        %7760 = vmatprep.subr.mxu0 0.0
        %v7761 = vand.u32 %v4847, 4294901760
        %v7762 = vsub.f32 %v4847, %v7761
        %v7763 = vand.u32 %v7762, 4294901760
        %7764 = vmatpush2.msra.mxu0 %v7763
        %7765 = vmatprep.subr.mxu0 0.0
        %v7766 = vand.u32 %v4846, 4294901760
        %v7767 = vsub.f32 %v4846, %v7766
        %v7768 = vand.u32 %v7767, 4294901760
        %7769 = vmatpush2.msra.mxu0 %v7768
        %7770 = vmatprep.subr.mxu0 0.0
        %v7771 = vand.u32 %v4845, 4294901760
        %v7772 = vsub.f32 %v4845, %v7771
        %v7773 = vand.u32 %v7772, 4294901760
        %7774 = vmatpush2.msra.mxu0 %v7773
        %7775 = vmatprep.subr.mxu0 0.0
        %v7776 = vand.u32 %v4844, 4294901760
        %v7777 = vsub.f32 %v4844, %v7776
        %v7778 = vand.u32 %v7777, 4294901760
        %7779 = vmatpush2.msra.mxu0 %v7778
        %7780 = vmatprep.subr.mxu0 0.0
        %v7781 = vand.u32 %v4843, 4294901760
        %v7782 = vsub.f32 %v4843, %v7781
        %v7783 = vand.u32 %v7782, 4294901760
        %7784 = vmatpush2.msra.mxu0 %v7783
        %7785 = vmatprep.subr.mxu0 0.0
        %v7786 = vand.u32 %v4842, 4294901760
        %v7787 = vsub.f32 %v4842, %v7786
        %v7788 = vand.u32 %v7787, 4294901760
        %7789 = vmatpush2.msra.mxu0 %v7788
        %7790 = vmatprep.subr.mxu0 0.0
        %v7791 = vand.u32 %v4841, 4294901760
        %v7792 = vsub.f32 %v4841, %v7791
        %v7793 = vand.u32 %v7792, 4294901760
        %7794 = vmatpush2.msra.mxu0 %v7793
        %7795 = vmatprep.subr.mxu0 0.0
        %v7796 = vand.u32 %v4840, 4294901760
        %v7797 = vsub.f32 %v4840, %v7796
        %v7798 = vand.u32 %v7797, 4294901760
        %7799 = vmatpush2.msra.mxu0 %v7798
        %7800 = vmatprep.subr.mxu0 0.0
        %v7801 = vand.u32 %v4839, 4294901760
        %v7802 = vsub.f32 %v4839, %v7801
        %v7803 = vand.u32 %v7802, 4294901760
        %7804 = vmatpush2.msra.mxu0 %v7803
        %7805 = vmatprep.subr.mxu0 0.0
        %v7806 = vand.u32 %v4838, 4294901760
        %v7807 = vsub.f32 %v4838, %v7806
        %v7808 = vand.u32 %v7807, 4294901760
        %7809 = vmatpush2.msra.mxu0 %v7808
        %7810 = vmatprep.subr.mxu0 0.0
        %v7811 = vand.u32 %v4837, 4294901760
        %v7812 = vsub.f32 %v4837, %v7811
        %v7813 = vand.u32 %v7812, 4294901760
        %7814 = vmatpush2.msra.mxu0 %v7813
        %7815 = vmatprep.subr.mxu0 0.0
        %v7816 = vand.u32 %v4836, 4294901760
        %v7817 = vsub.f32 %v4836, %v7816
        %v7818 = vand.u32 %v7817, 4294901760
        %7819 = vmatpush2.msra.mxu0 %v7818
        %v7820 = vand.u32 %v4729, 4294901760
        %7821 = vmatprep.mubr.f32.mxu0 %v7820
        %v7822 = vand.u32 %v4728, 4294901760
        %7823 = vmatmul.mubr.f32.gmra.mxu0 %v7822
        %v7824 = vpop.f32.mrf.mxu0
        %v7825 = vadd.f32 %v7624, %v7824
        %v7826 = vpop.f32.mrf.mxu0
        %v7827 = vand.u32 %v4737, 4294901760
        %7828 = vmatprep.mubr.f32.mxu0 %v7827
        %v7829 = vand.u32 %v4736, 4294901760
        %7830 = vmatmul.mubr.f32.gmra.mxu0 %v7829
        %v7831 = vpop.f32.mrf.mxu0
        %v7832 = vadd.f32 %v7635, %v7831
        %v7833 = vpop.f32.mrf.mxu0
        %v7834 = vand.u32 %v4745, 4294901760
        %7835 = vmatprep.mubr.f32.mxu0 %v7834
        %v7836 = vand.u32 %v4744, 4294901760
        %7837 = vmatmul.mubr.f32.gmra.mxu0 %v7836
        %v7838 = vpop.f32.mrf.mxu0
        %v7839 = vadd.f32 %v7646, %v7838
        %v7840 = vpop.f32.mrf.mxu0
        %v7841 = vand.u32 %v4753, 4294901760
        %7842 = vmatprep.mubr.f32.mxu0 %v7841
        %v7843 = vand.u32 %v4752, 4294901760
        %7844 = vmatmul.mubr.f32.gmra.mxu0 %v7843
        %v7845 = vpop.f32.mrf.mxu0
        %v7846 = vadd.f32 %v7657, %v7845
        %v7847 = vpop.f32.mrf.mxu0
        %7848 = vdwg.mxu0
        %7849 = vmatprep.subr.mxu0 0.0
        %v7850 = vand.u32 %v4835, 4294901760
        %7851 = vmatpush1.msra.mxu0 %v7850
        %7852 = vmatprep.subr.mxu0 0.0
        %v7853 = vand.u32 %v4834, 4294901760
        %7854 = vmatpush1.msra.mxu0 %v7853
        %7855 = vmatprep.subr.mxu0 0.0
        %v7856 = vand.u32 %v4833, 4294901760
        %7857 = vmatpush1.msra.mxu0 %v7856
        %7858 = vmatprep.subr.mxu0 0.0
        %v7859 = vand.u32 %v4832, 4294901760
        %7860 = vmatpush1.msra.mxu0 %v7859
        %7861 = vmatprep.subr.mxu0 0.0
        %v7862 = vand.u32 %v4831, 4294901760
        %7863 = vmatpush1.msra.mxu0 %v7862
        %7864 = vmatprep.subr.mxu0 0.0
        %v7865 = vand.u32 %v4830, 4294901760
        %7866 = vmatpush1.msra.mxu0 %v7865
        %7867 = vmatprep.subr.mxu0 0.0
        %v7868 = vand.u32 %v4829, 4294901760
        %7869 = vmatpush1.msra.mxu0 %v7868
        %7870 = vmatprep.subr.mxu0 0.0
        %v7871 = vand.u32 %v4828, 4294901760
        %7872 = vmatpush1.msra.mxu0 %v7871
        %7873 = vmatprep.subr.mxu0 0.0
        %v7874 = vand.u32 %v4827, 4294901760
        %7875 = vmatpush1.msra.mxu0 %v7874
        %7876 = vmatprep.subr.mxu0 0.0
        %v7877 = vand.u32 %v4826, 4294901760
        %7878 = vmatpush1.msra.mxu0 %v7877
        %7879 = vmatprep.subr.mxu0 0.0
        %v7880 = vand.u32 %v4825, 4294901760
        %7881 = vmatpush1.msra.mxu0 %v7880
        %7882 = vmatprep.subr.mxu0 0.0
        %v7883 = vand.u32 %v4824, 4294901760
        %7884 = vmatpush1.msra.mxu0 %v7883
        %7885 = vmatprep.subr.mxu0 0.0
        %v7886 = vand.u32 %v4823, 4294901760
        %7887 = vmatpush1.msra.mxu0 %v7886
        %7888 = vmatprep.subr.mxu0 0.0
        %v7889 = vand.u32 %v4822, 4294901760
        %7890 = vmatpush1.msra.mxu0 %v7889
        %7891 = vmatprep.subr.mxu0 0.0
        %v7892 = vand.u32 %v4821, 4294901760
        %7893 = vmatpush1.msra.mxu0 %v7892
        %7894 = vmatprep.subr.mxu0 0.0
        %v7895 = vand.u32 %v4820, 4294901760
        %7896 = vmatpush1.msra.mxu0 %v7895
        %7897 = vmatprep.subr.mxu0 0.0
        %v7898 = vand.u32 %v4851, 4294901760
        %7899 = vmatpush2.msra.mxu0 %v7898
        %7900 = vmatprep.subr.mxu0 0.0
        %v7901 = vand.u32 %v4850, 4294901760
        %7902 = vmatpush2.msra.mxu0 %v7901
        %7903 = vmatprep.subr.mxu0 0.0
        %v7904 = vand.u32 %v4849, 4294901760
        %7905 = vmatpush2.msra.mxu0 %v7904
        %7906 = vmatprep.subr.mxu0 0.0
        %v7907 = vand.u32 %v4848, 4294901760
        %7908 = vmatpush2.msra.mxu0 %v7907
        %7909 = vmatprep.subr.mxu0 0.0
        %v7910 = vand.u32 %v4847, 4294901760
        %7911 = vmatpush2.msra.mxu0 %v7910
        %7912 = vmatprep.subr.mxu0 0.0
        %v7913 = vand.u32 %v4846, 4294901760
        %7914 = vmatpush2.msra.mxu0 %v7913
        %7915 = vmatprep.subr.mxu0 0.0
        %v7916 = vand.u32 %v4845, 4294901760
        %7917 = vmatpush2.msra.mxu0 %v7916
        %7918 = vmatprep.subr.mxu0 0.0
        %v7919 = vand.u32 %v4844, 4294901760
        %7920 = vmatpush2.msra.mxu0 %v7919
        %7921 = vmatprep.subr.mxu0 0.0
        %v7922 = vand.u32 %v4843, 4294901760
        %7923 = vmatpush2.msra.mxu0 %v7922
        %7924 = vmatprep.subr.mxu0 0.0
        %v7925 = vand.u32 %v4842, 4294901760
        %7926 = vmatpush2.msra.mxu0 %v7925
        %7927 = vmatprep.subr.mxu0 0.0
        %v7928 = vand.u32 %v4841, 4294901760
        %7929 = vmatpush2.msra.mxu0 %v7928
        %7930 = vmatprep.subr.mxu0 0.0
        %v7931 = vand.u32 %v4840, 4294901760
        %7932 = vmatpush2.msra.mxu0 %v7931
        %7933 = vmatprep.subr.mxu0 0.0
        %v7934 = vand.u32 %v4839, 4294901760
        %7935 = vmatpush2.msra.mxu0 %v7934
        %7936 = vmatprep.subr.mxu0 0.0
        %v7937 = vand.u32 %v4838, 4294901760
        %7938 = vmatpush2.msra.mxu0 %v7937
        %7939 = vmatprep.subr.mxu0 0.0
        %v7940 = vand.u32 %v4837, 4294901760
        %7941 = vmatpush2.msra.mxu0 %v7940
        %7942 = vmatprep.subr.mxu0 0.0
        %v7943 = vand.u32 %v4836, 4294901760
        %7944 = vmatpush2.msra.mxu0 %v7943
        %v7945 = vand.u32 %v4729, 4294901760
        %7946 = vmatprep.mubr.f32.mxu0 %v7945
        %v7947 = vand.u32 %v4728, 4294901760
        %7948 = vmatmul.mubr.f32.gmra.mxu0 %v7947
        %v7949 = vpop.f32.mrf.mxu0
        %v7950 = vadd.f32 %v7825, %v7949
        %v7951 = vpop.f32.mrf.mxu0
        %v7952 = vand.u32 %v4737, 4294901760
        %7953 = vmatprep.mubr.f32.mxu0 %v7952
        %v7954 = vand.u32 %v4736, 4294901760
        %7955 = vmatmul.mubr.f32.gmra.mxu0 %v7954
        %v7956 = vpop.f32.mrf.mxu0
        %v7957 = vadd.f32 %v7832, %v7956
        %v7958 = vpop.f32.mrf.mxu0
        %v7959 = vand.u32 %v4745, 4294901760
        %7960 = vmatprep.mubr.f32.mxu0 %v7959
        %v7961 = vand.u32 %v4744, 4294901760
        %7962 = vmatmul.mubr.f32.gmra.mxu0 %v7961
        %v7963 = vpop.f32.mrf.mxu0
        %v7964 = vadd.f32 %v7839, %v7963
        %v7965 = vpop.f32.mrf.mxu0
        %v7966 = vand.u32 %v4753, 4294901760
        %7967 = vmatprep.mubr.f32.mxu0 %v7966
        %v7968 = vand.u32 %v4752, 4294901760
        %7969 = vmatmul.mubr.f32.gmra.mxu0 %v7968
        %v7970 = vpop.f32.mrf.mxu0
        %v7971 = vadd.f32 %v7846, %v7970
        %v7972 = vpop.f32.mrf.mxu0
        %7973 = vdwg.mxu0
        %7974 = vmatprep.subr.mxu0 0.0
        %v7975 = vand.u32 %v4867, 4294901760
        %7976 = vmatpush1.msra.mxu0 %v7975
        %7977 = vmatprep.subr.mxu0 0.0
        %v7978 = vand.u32 %v4866, 4294901760
        %7979 = vmatpush1.msra.mxu0 %v7978
        %7980 = vmatprep.subr.mxu0 0.0
        %v7981 = vand.u32 %v4865, 4294901760
        %7982 = vmatpush1.msra.mxu0 %v7981
        %7983 = vmatprep.subr.mxu0 0.0
        %v7984 = vand.u32 %v4864, 4294901760
        %7985 = vmatpush1.msra.mxu0 %v7984
        %7986 = vmatprep.subr.mxu0 0.0
        %v7987 = vand.u32 %v4863, 4294901760
        %7988 = vmatpush1.msra.mxu0 %v7987
        %7989 = vmatprep.subr.mxu0 0.0
        %v7990 = vand.u32 %v4862, 4294901760
        %7991 = vmatpush1.msra.mxu0 %v7990
        %7992 = vmatprep.subr.mxu0 0.0
        %v7993 = vand.u32 %v4861, 4294901760
        %7994 = vmatpush1.msra.mxu0 %v7993
        %7995 = vmatprep.subr.mxu0 0.0
        %v7996 = vand.u32 %v4860, 4294901760
        %7997 = vmatpush1.msra.mxu0 %v7996
        %7998 = vmatprep.subr.mxu0 0.0
        %v7999 = vand.u32 %v4859, 4294901760
        %8000 = vmatpush1.msra.mxu0 %v7999
        %8001 = vmatprep.subr.mxu0 0.0
        %v8002 = vand.u32 %v4858, 4294901760
        %8003 = vmatpush1.msra.mxu0 %v8002
        %8004 = vmatprep.subr.mxu0 0.0
        %v8005 = vand.u32 %v4857, 4294901760
        %8006 = vmatpush1.msra.mxu0 %v8005
        %8007 = vmatprep.subr.mxu0 0.0
        %v8008 = vand.u32 %v4856, 4294901760
        %8009 = vmatpush1.msra.mxu0 %v8008
        %8010 = vmatprep.subr.mxu0 0.0
        %v8011 = vand.u32 %v4855, 4294901760
        %8012 = vmatpush1.msra.mxu0 %v8011
        %8013 = vmatprep.subr.mxu0 0.0
        %v8014 = vand.u32 %v4854, 4294901760
        %8015 = vmatpush1.msra.mxu0 %v8014
        %8016 = vmatprep.subr.mxu0 0.0
        %v8017 = vand.u32 %v4853, 4294901760
        %8018 = vmatpush1.msra.mxu0 %v8017
        %8019 = vmatprep.subr.mxu0 0.0
        %v8020 = vand.u32 %v4852, 4294901760
        %8021 = vmatpush1.msra.mxu0 %v8020
        %8022 = vmatprep.subr.mxu0 0.0
        %v8023 = vand.u32 %v4883, 4294901760
        %8024 = vmatpush2.msra.mxu0 %v8023
        %8025 = vmatprep.subr.mxu0 0.0
        %v8026 = vand.u32 %v4882, 4294901760
        %8027 = vmatpush2.msra.mxu0 %v8026
        %8028 = vmatprep.subr.mxu0 0.0
        %v8029 = vand.u32 %v4881, 4294901760
        %8030 = vmatpush2.msra.mxu0 %v8029
        %8031 = vmatprep.subr.mxu0 0.0
        %v8032 = vand.u32 %v4880, 4294901760
        %8033 = vmatpush2.msra.mxu0 %v8032
        %8034 = vmatprep.subr.mxu0 0.0
        %v8035 = vand.u32 %v4879, 4294901760
        %8036 = vmatpush2.msra.mxu0 %v8035
        %8037 = vmatprep.subr.mxu0 0.0
        %v8038 = vand.u32 %v4878, 4294901760
        %8039 = vmatpush2.msra.mxu0 %v8038
        %8040 = vmatprep.subr.mxu0 0.0
        %v8041 = vand.u32 %v4877, 4294901760
        %8042 = vmatpush2.msra.mxu0 %v8041
        %8043 = vmatprep.subr.mxu0 0.0
        %v8044 = vand.u32 %v4876, 4294901760
        %8045 = vmatpush2.msra.mxu0 %v8044
        %8046 = vmatprep.subr.mxu0 0.0
        %v8047 = vand.u32 %v4875, 4294901760
        %8048 = vmatpush2.msra.mxu0 %v8047
        %8049 = vmatprep.subr.mxu0 0.0
        %v8050 = vand.u32 %v4874, 4294901760
        %8051 = vmatpush2.msra.mxu0 %v8050
        %8052 = vmatprep.subr.mxu0 0.0
        %v8053 = vand.u32 %v4873, 4294901760
        %8054 = vmatpush2.msra.mxu0 %v8053
        %8055 = vmatprep.subr.mxu0 0.0
        %v8056 = vand.u32 %v4872, 4294901760
        %8057 = vmatpush2.msra.mxu0 %v8056
        %8058 = vmatprep.subr.mxu0 0.0
        %v8059 = vand.u32 %v4871, 4294901760
        %8060 = vmatpush2.msra.mxu0 %v8059
        %8061 = vmatprep.subr.mxu0 0.0
        %v8062 = vand.u32 %v4870, 4294901760
        %8063 = vmatpush2.msra.mxu0 %v8062
        %8064 = vmatprep.subr.mxu0 0.0
        %v8065 = vand.u32 %v4869, 4294901760
        %8066 = vmatpush2.msra.mxu0 %v8065
        %8067 = vmatprep.subr.mxu0 0.0
        %v8068 = vand.u32 %v4868, 4294901760
        %8069 = vmatpush2.msra.mxu0 %v8068
        %v8070 = vand.u32 %v4731, 4294901760
        %v8071 = vsub.f32 %v4731, %v8070
        %v8072 = vand.u32 %v8071, 4294901760
        %v8073 = vsub.f32 %v8071, %v8072
        %v8074 = vand.u32 %v8073, 4294901760
        %8075 = vmatprep.mubr.f32.mxu0 %v8074
        %v8076 = vand.u32 %v4730, 4294901760
        %v8077 = vsub.f32 %v4730, %v8076
        %v8078 = vand.u32 %v8077, 4294901760
        %v8079 = vsub.f32 %v8077, %v8078
        %v8080 = vand.u32 %v8079, 4294901760
        %8081 = vmatmul.mubr.f32.gmra.mxu0 %v8080
        %v8082 = vpop.f32.mrf.mxu0
        %v8083 = vadd.f32 %v7950, %v8082
        %v8084 = vpop.f32.mrf.mxu0
        %v8085 = vand.u32 %v4739, 4294901760
        %v8086 = vsub.f32 %v4739, %v8085
        %v8087 = vand.u32 %v8086, 4294901760
        %v8088 = vsub.f32 %v8086, %v8087
        %v8089 = vand.u32 %v8088, 4294901760
        %8090 = vmatprep.mubr.f32.mxu0 %v8089
        %v8091 = vand.u32 %v4738, 4294901760
        %v8092 = vsub.f32 %v4738, %v8091
        %v8093 = vand.u32 %v8092, 4294901760
        %v8094 = vsub.f32 %v8092, %v8093
        %v8095 = vand.u32 %v8094, 4294901760
        %8096 = vmatmul.mubr.f32.gmra.mxu0 %v8095
        %v8097 = vpop.f32.mrf.mxu0
        %v8098 = vadd.f32 %v7957, %v8097
        %v8099 = vpop.f32.mrf.mxu0
        %v8100 = vand.u32 %v4747, 4294901760
        %v8101 = vsub.f32 %v4747, %v8100
        %v8102 = vand.u32 %v8101, 4294901760
        %v8103 = vsub.f32 %v8101, %v8102
        %v8104 = vand.u32 %v8103, 4294901760
        %8105 = vmatprep.mubr.f32.mxu0 %v8104
        %v8106 = vand.u32 %v4746, 4294901760
        %v8107 = vsub.f32 %v4746, %v8106
        %v8108 = vand.u32 %v8107, 4294901760
        %v8109 = vsub.f32 %v8107, %v8108
        %v8110 = vand.u32 %v8109, 4294901760
        %8111 = vmatmul.mubr.f32.gmra.mxu0 %v8110
        %v8112 = vpop.f32.mrf.mxu0
        %v8113 = vadd.f32 %v7964, %v8112
        %v8114 = vpop.f32.mrf.mxu0
        %v8115 = vand.u32 %v4755, 4294901760
        %v8116 = vsub.f32 %v4755, %v8115
        %v8117 = vand.u32 %v8116, 4294901760
        %v8118 = vsub.f32 %v8116, %v8117
        %v8119 = vand.u32 %v8118, 4294901760
        %8120 = vmatprep.mubr.f32.mxu0 %v8119
        %v8121 = vand.u32 %v4754, 4294901760
        %v8122 = vsub.f32 %v4754, %v8121
        %v8123 = vand.u32 %v8122, 4294901760
        %v8124 = vsub.f32 %v8122, %v8123
        %v8125 = vand.u32 %v8124, 4294901760
        %8126 = vmatmul.mubr.f32.gmra.mxu0 %v8125
        %v8127 = vpop.f32.mrf.mxu0
        %v8128 = vadd.f32 %v7971, %v8127
        %v8129 = vpop.f32.mrf.mxu0
        %8130 = vdwg.mxu0
        %8131 = vmatprep.subr.mxu0 0.0
        %v8132 = vand.u32 %v4867, 4294901760
        %v8133 = vsub.f32 %v4867, %v8132
        %v8134 = vand.u32 %v8133, 4294901760
        %v8135 = vsub.f32 %v8133, %v8134
        %v8136 = vand.u32 %v8135, 4294901760
        %8137 = vmatpush1.msra.mxu0 %v8136
        %8138 = vmatprep.subr.mxu0 0.0
        %v8139 = vand.u32 %v4866, 4294901760
        %v8140 = vsub.f32 %v4866, %v8139
        %v8141 = vand.u32 %v8140, 4294901760
        %v8142 = vsub.f32 %v8140, %v8141
        %v8143 = vand.u32 %v8142, 4294901760
        %8144 = vmatpush1.msra.mxu0 %v8143
        %8145 = vmatprep.subr.mxu0 0.0
        %v8146 = vand.u32 %v4865, 4294901760
        %v8147 = vsub.f32 %v4865, %v8146
        %v8148 = vand.u32 %v8147, 4294901760
        %v8149 = vsub.f32 %v8147, %v8148
        %v8150 = vand.u32 %v8149, 4294901760
        %8151 = vmatpush1.msra.mxu0 %v8150
        %8152 = vmatprep.subr.mxu0 0.0
        %v8153 = vand.u32 %v4864, 4294901760
        %v8154 = vsub.f32 %v4864, %v8153
        %v8155 = vand.u32 %v8154, 4294901760
        %v8156 = vsub.f32 %v8154, %v8155
        %v8157 = vand.u32 %v8156, 4294901760
        %8158 = vmatpush1.msra.mxu0 %v8157
        %8159 = vmatprep.subr.mxu0 0.0
        %v8160 = vand.u32 %v4863, 4294901760
        %v8161 = vsub.f32 %v4863, %v8160
        %v8162 = vand.u32 %v8161, 4294901760
        %v8163 = vsub.f32 %v8161, %v8162
        %v8164 = vand.u32 %v8163, 4294901760
        %8165 = vmatpush1.msra.mxu0 %v8164
        %8166 = vmatprep.subr.mxu0 0.0
        %v8167 = vand.u32 %v4862, 4294901760
        %v8168 = vsub.f32 %v4862, %v8167
        %v8169 = vand.u32 %v8168, 4294901760
        %v8170 = vsub.f32 %v8168, %v8169
        %v8171 = vand.u32 %v8170, 4294901760
        %8172 = vmatpush1.msra.mxu0 %v8171
        %8173 = vmatprep.subr.mxu0 0.0
        %v8174 = vand.u32 %v4861, 4294901760
        %v8175 = vsub.f32 %v4861, %v8174
        %v8176 = vand.u32 %v8175, 4294901760
        %v8177 = vsub.f32 %v8175, %v8176
        %v8178 = vand.u32 %v8177, 4294901760
        %8179 = vmatpush1.msra.mxu0 %v8178
        %8180 = vmatprep.subr.mxu0 0.0
        %v8181 = vand.u32 %v4860, 4294901760
        %v8182 = vsub.f32 %v4860, %v8181
        %v8183 = vand.u32 %v8182, 4294901760
        %v8184 = vsub.f32 %v8182, %v8183
        %v8185 = vand.u32 %v8184, 4294901760
        %8186 = vmatpush1.msra.mxu0 %v8185
        %8187 = vmatprep.subr.mxu0 0.0
        %v8188 = vand.u32 %v4859, 4294901760
        %v8189 = vsub.f32 %v4859, %v8188
        %v8190 = vand.u32 %v8189, 4294901760
        %v8191 = vsub.f32 %v8189, %v8190
        %v8192 = vand.u32 %v8191, 4294901760
        %8193 = vmatpush1.msra.mxu0 %v8192
        %8194 = vmatprep.subr.mxu0 0.0
        %v8195 = vand.u32 %v4858, 4294901760
        %v8196 = vsub.f32 %v4858, %v8195
        %v8197 = vand.u32 %v8196, 4294901760
        %v8198 = vsub.f32 %v8196, %v8197
        %v8199 = vand.u32 %v8198, 4294901760
        %8200 = vmatpush1.msra.mxu0 %v8199
        %8201 = vmatprep.subr.mxu0 0.0
        %v8202 = vand.u32 %v4857, 4294901760
        %v8203 = vsub.f32 %v4857, %v8202
        %v8204 = vand.u32 %v8203, 4294901760
        %v8205 = vsub.f32 %v8203, %v8204
        %v8206 = vand.u32 %v8205, 4294901760
        %8207 = vmatpush1.msra.mxu0 %v8206
        %8208 = vmatprep.subr.mxu0 0.0
        %v8209 = vand.u32 %v4856, 4294901760
        %v8210 = vsub.f32 %v4856, %v8209
        %v8211 = vand.u32 %v8210, 4294901760
        %v8212 = vsub.f32 %v8210, %v8211
        %v8213 = vand.u32 %v8212, 4294901760
        %8214 = vmatpush1.msra.mxu0 %v8213
        %8215 = vmatprep.subr.mxu0 0.0
        %v8216 = vand.u32 %v4855, 4294901760
        %v8217 = vsub.f32 %v4855, %v8216
        %v8218 = vand.u32 %v8217, 4294901760
        %v8219 = vsub.f32 %v8217, %v8218
        %v8220 = vand.u32 %v8219, 4294901760
        %8221 = vmatpush1.msra.mxu0 %v8220
        %8222 = vmatprep.subr.mxu0 0.0
        %v8223 = vand.u32 %v4854, 4294901760
        %v8224 = vsub.f32 %v4854, %v8223
        %v8225 = vand.u32 %v8224, 4294901760
        %v8226 = vsub.f32 %v8224, %v8225
        %v8227 = vand.u32 %v8226, 4294901760
        %8228 = vmatpush1.msra.mxu0 %v8227
        %8229 = vmatprep.subr.mxu0 0.0
        %v8230 = vand.u32 %v4853, 4294901760
        %v8231 = vsub.f32 %v4853, %v8230
        %v8232 = vand.u32 %v8231, 4294901760
        %v8233 = vsub.f32 %v8231, %v8232
        %v8234 = vand.u32 %v8233, 4294901760
        %8235 = vmatpush1.msra.mxu0 %v8234
        %8236 = vmatprep.subr.mxu0 0.0
        %v8237 = vand.u32 %v4852, 4294901760
        %v8238 = vsub.f32 %v4852, %v8237
        %v8239 = vand.u32 %v8238, 4294901760
        %v8240 = vsub.f32 %v8238, %v8239
        %v8241 = vand.u32 %v8240, 4294901760
        %8242 = vmatpush1.msra.mxu0 %v8241
        %8243 = vmatprep.subr.mxu0 0.0
        %v8244 = vand.u32 %v4883, 4294901760
        %v8245 = vsub.f32 %v4883, %v8244
        %v8246 = vand.u32 %v8245, 4294901760
        %v8247 = vsub.f32 %v8245, %v8246
        %v8248 = vand.u32 %v8247, 4294901760
        %8249 = vmatpush2.msra.mxu0 %v8248
        %8250 = vmatprep.subr.mxu0 0.0
        %v8251 = vand.u32 %v4882, 4294901760
        %v8252 = vsub.f32 %v4882, %v8251
        %v8253 = vand.u32 %v8252, 4294901760
        %v8254 = vsub.f32 %v8252, %v8253
        %v8255 = vand.u32 %v8254, 4294901760
        %8256 = vmatpush2.msra.mxu0 %v8255
        %8257 = vmatprep.subr.mxu0 0.0
        %v8258 = vand.u32 %v4881, 4294901760
        %v8259 = vsub.f32 %v4881, %v8258
        %v8260 = vand.u32 %v8259, 4294901760
        %v8261 = vsub.f32 %v8259, %v8260
        %v8262 = vand.u32 %v8261, 4294901760
        %8263 = vmatpush2.msra.mxu0 %v8262
        %8264 = vmatprep.subr.mxu0 0.0
        %v8265 = vand.u32 %v4880, 4294901760
        %v8266 = vsub.f32 %v4880, %v8265
        %v8267 = vand.u32 %v8266, 4294901760
        %v8268 = vsub.f32 %v8266, %v8267
        %v8269 = vand.u32 %v8268, 4294901760
        %8270 = vmatpush2.msra.mxu0 %v8269
        %8271 = vmatprep.subr.mxu0 0.0
        %v8272 = vand.u32 %v4879, 4294901760
        %v8273 = vsub.f32 %v4879, %v8272
        %v8274 = vand.u32 %v8273, 4294901760
        %v8275 = vsub.f32 %v8273, %v8274
        %v8276 = vand.u32 %v8275, 4294901760
        %8277 = vmatpush2.msra.mxu0 %v8276
        %8278 = vmatprep.subr.mxu0 0.0
        %v8279 = vand.u32 %v4878, 4294901760
        %v8280 = vsub.f32 %v4878, %v8279
        %v8281 = vand.u32 %v8280, 4294901760
        %v8282 = vsub.f32 %v8280, %v8281
        %v8283 = vand.u32 %v8282, 4294901760
        %8284 = vmatpush2.msra.mxu0 %v8283
        %8285 = vmatprep.subr.mxu0 0.0
        %v8286 = vand.u32 %v4877, 4294901760
        %v8287 = vsub.f32 %v4877, %v8286
        %v8288 = vand.u32 %v8287, 4294901760
        %v8289 = vsub.f32 %v8287, %v8288
        %v8290 = vand.u32 %v8289, 4294901760
        %8291 = vmatpush2.msra.mxu0 %v8290
        %8292 = vmatprep.subr.mxu0 0.0
        %v8293 = vand.u32 %v4876, 4294901760
        %v8294 = vsub.f32 %v4876, %v8293
        %v8295 = vand.u32 %v8294, 4294901760
        %v8296 = vsub.f32 %v8294, %v8295
        %v8297 = vand.u32 %v8296, 4294901760
        %8298 = vmatpush2.msra.mxu0 %v8297
        %8299 = vmatprep.subr.mxu0 0.0
        %v8300 = vand.u32 %v4875, 4294901760
        %v8301 = vsub.f32 %v4875, %v8300
        %v8302 = vand.u32 %v8301, 4294901760
        %v8303 = vsub.f32 %v8301, %v8302
        %v8304 = vand.u32 %v8303, 4294901760
        %8305 = vmatpush2.msra.mxu0 %v8304
        %8306 = vmatprep.subr.mxu0 0.0
        %v8307 = vand.u32 %v4874, 4294901760
        %v8308 = vsub.f32 %v4874, %v8307
        %v8309 = vand.u32 %v8308, 4294901760
        %v8310 = vsub.f32 %v8308, %v8309
        %v8311 = vand.u32 %v8310, 4294901760
        %8312 = vmatpush2.msra.mxu0 %v8311
        %8313 = vmatprep.subr.mxu0 0.0
        %v8314 = vand.u32 %v4873, 4294901760
        %v8315 = vsub.f32 %v4873, %v8314
        %v8316 = vand.u32 %v8315, 4294901760
        %v8317 = vsub.f32 %v8315, %v8316
        %v8318 = vand.u32 %v8317, 4294901760
        %8319 = vmatpush2.msra.mxu0 %v8318
        %8320 = vmatprep.subr.mxu0 0.0
        %v8321 = vand.u32 %v4872, 4294901760
        %v8322 = vsub.f32 %v4872, %v8321
        %v8323 = vand.u32 %v8322, 4294901760
        %v8324 = vsub.f32 %v8322, %v8323
        %v8325 = vand.u32 %v8324, 4294901760
        %8326 = vmatpush2.msra.mxu0 %v8325
        %8327 = vmatprep.subr.mxu0 0.0
        %v8328 = vand.u32 %v4871, 4294901760
        %v8329 = vsub.f32 %v4871, %v8328
        %v8330 = vand.u32 %v8329, 4294901760
        %v8331 = vsub.f32 %v8329, %v8330
        %v8332 = vand.u32 %v8331, 4294901760
        %8333 = vmatpush2.msra.mxu0 %v8332
        %8334 = vmatprep.subr.mxu0 0.0
        %v8335 = vand.u32 %v4870, 4294901760
        %v8336 = vsub.f32 %v4870, %v8335
        %v8337 = vand.u32 %v8336, 4294901760
        %v8338 = vsub.f32 %v8336, %v8337
        %v8339 = vand.u32 %v8338, 4294901760
        %8340 = vmatpush2.msra.mxu0 %v8339
        %8341 = vmatprep.subr.mxu0 0.0
        %v8342 = vand.u32 %v4869, 4294901760
        %v8343 = vsub.f32 %v4869, %v8342
        %v8344 = vand.u32 %v8343, 4294901760
        %v8345 = vsub.f32 %v8343, %v8344
        %v8346 = vand.u32 %v8345, 4294901760
        %8347 = vmatpush2.msra.mxu0 %v8346
        %8348 = vmatprep.subr.mxu0 0.0
        %v8349 = vand.u32 %v4868, 4294901760
        %v8350 = vsub.f32 %v4868, %v8349
        %v8351 = vand.u32 %v8350, 4294901760
        %v8352 = vsub.f32 %v8350, %v8351
        %v8353 = vand.u32 %v8352, 4294901760
        %8354 = vmatpush2.msra.mxu0 %v8353
        %v8355 = vand.u32 %v4731, 4294901760
        %8356 = vmatprep.mubr.f32.mxu0 %v8355
        %v8357 = vand.u32 %v4730, 4294901760
        %8358 = vmatmul.mubr.f32.gmra.mxu0 %v8357
        %v8359 = vpop.f32.mrf.mxu0
        %v8360 = vadd.f32 %v8083, %v8359
        %v8361 = vpop.f32.mrf.mxu0
        %v8362 = vand.u32 %v4739, 4294901760
        %8363 = vmatprep.mubr.f32.mxu0 %v8362
        %v8364 = vand.u32 %v4738, 4294901760
        %8365 = vmatmul.mubr.f32.gmra.mxu0 %v8364
        %v8366 = vpop.f32.mrf.mxu0
        %v8367 = vadd.f32 %v8098, %v8366
        %v8368 = vpop.f32.mrf.mxu0
        %v8369 = vand.u32 %v4747, 4294901760
        %8370 = vmatprep.mubr.f32.mxu0 %v8369
        %v8371 = vand.u32 %v4746, 4294901760
        %8372 = vmatmul.mubr.f32.gmra.mxu0 %v8371
        %v8373 = vpop.f32.mrf.mxu0
        %v8374 = vadd.f32 %v8113, %v8373
        %v8375 = vpop.f32.mrf.mxu0
        %v8376 = vand.u32 %v4755, 4294901760
        %8377 = vmatprep.mubr.f32.mxu0 %v8376
        %v8378 = vand.u32 %v4754, 4294901760
        %8379 = vmatmul.mubr.f32.gmra.mxu0 %v8378
        %v8380 = vpop.f32.mrf.mxu0
        %v8381 = vadd.f32 %v8128, %v8380
        %v8382 = vpop.f32.mrf.mxu0
        %8383 = vdwg.mxu0
        %8384 = vmatprep.subr.mxu0 0.0
        %v8385 = vand.u32 %v4867, 4294901760
        %v8386 = vsub.f32 %v4867, %v8385
        %8387 = vmatpush1.msra.mxu0 %v8386
        %8388 = vmatprep.subr.mxu0 0.0
        %v8389 = vand.u32 %v4866, 4294901760
        %v8390 = vsub.f32 %v4866, %v8389
        %8391 = vmatpush1.msra.mxu0 %v8390
        %8392 = vmatprep.subr.mxu0 0.0
        %v8393 = vand.u32 %v4865, 4294901760
        %v8394 = vsub.f32 %v4865, %v8393
        %8395 = vmatpush1.msra.mxu0 %v8394
        %8396 = vmatprep.subr.mxu0 0.0
        %v8397 = vand.u32 %v4864, 4294901760
        %v8398 = vsub.f32 %v4864, %v8397
        %8399 = vmatpush1.msra.mxu0 %v8398
        %8400 = vmatprep.subr.mxu0 0.0
        %v8401 = vand.u32 %v4863, 4294901760
        %v8402 = vsub.f32 %v4863, %v8401
        %8403 = vmatpush1.msra.mxu0 %v8402
        %8404 = vmatprep.subr.mxu0 0.0
        %v8405 = vand.u32 %v4862, 4294901760
        %v8406 = vsub.f32 %v4862, %v8405
        %8407 = vmatpush1.msra.mxu0 %v8406
        %8408 = vmatprep.subr.mxu0 0.0
        %v8409 = vand.u32 %v4861, 4294901760
        %v8410 = vsub.f32 %v4861, %v8409
        %8411 = vmatpush1.msra.mxu0 %v8410
        %8412 = vmatprep.subr.mxu0 0.0
        %v8413 = vand.u32 %v4860, 4294901760
        %v8414 = vsub.f32 %v4860, %v8413
        %8415 = vmatpush1.msra.mxu0 %v8414
        %8416 = vmatprep.subr.mxu0 0.0
        %v8417 = vand.u32 %v4859, 4294901760
        %v8418 = vsub.f32 %v4859, %v8417
        %8419 = vmatpush1.msra.mxu0 %v8418
        %8420 = vmatprep.subr.mxu0 0.0
        %v8421 = vand.u32 %v4858, 4294901760
        %v8422 = vsub.f32 %v4858, %v8421
        %8423 = vmatpush1.msra.mxu0 %v8422
        %8424 = vmatprep.subr.mxu0 0.0
        %v8425 = vand.u32 %v4857, 4294901760
        %v8426 = vsub.f32 %v4857, %v8425
        %8427 = vmatpush1.msra.mxu0 %v8426
        %8428 = vmatprep.subr.mxu0 0.0
        %v8429 = vand.u32 %v4856, 4294901760
        %v8430 = vsub.f32 %v4856, %v8429
        %8431 = vmatpush1.msra.mxu0 %v8430
        %8432 = vmatprep.subr.mxu0 0.0
        %v8433 = vand.u32 %v4855, 4294901760
        %v8434 = vsub.f32 %v4855, %v8433
        %8435 = vmatpush1.msra.mxu0 %v8434
        %8436 = vmatprep.subr.mxu0 0.0
        %v8437 = vand.u32 %v4854, 4294901760
        %v8438 = vsub.f32 %v4854, %v8437
        %8439 = vmatpush1.msra.mxu0 %v8438
        %8440 = vmatprep.subr.mxu0 0.0
        %v8441 = vand.u32 %v4853, 4294901760
        %v8442 = vsub.f32 %v4853, %v8441
        %8443 = vmatpush1.msra.mxu0 %v8442
        %8444 = vmatprep.subr.mxu0 0.0
        %v8445 = vand.u32 %v4852, 4294901760
        %v8446 = vsub.f32 %v4852, %v8445
        %8447 = vmatpush1.msra.mxu0 %v8446
        %8448 = vmatprep.subr.mxu0 0.0
        %v8449 = vand.u32 %v4883, 4294901760
        %v8450 = vsub.f32 %v4883, %v8449
        %8451 = vmatpush2.msra.mxu0 %v8450
        %8452 = vmatprep.subr.mxu0 0.0
        %v8453 = vand.u32 %v4882, 4294901760
        %v8454 = vsub.f32 %v4882, %v8453
        %8455 = vmatpush2.msra.mxu0 %v8454
        %8456 = vmatprep.subr.mxu0 0.0
        %v8457 = vand.u32 %v4881, 4294901760
        %v8458 = vsub.f32 %v4881, %v8457
        %8459 = vmatpush2.msra.mxu0 %v8458
        %8460 = vmatprep.subr.mxu0 0.0
        %v8461 = vand.u32 %v4880, 4294901760
        %v8462 = vsub.f32 %v4880, %v8461
        %8463 = vmatpush2.msra.mxu0 %v8462
        %8464 = vmatprep.subr.mxu0 0.0
        %v8465 = vand.u32 %v4879, 4294901760
        %v8466 = vsub.f32 %v4879, %v8465
        %8467 = vmatpush2.msra.mxu0 %v8466
        %8468 = vmatprep.subr.mxu0 0.0
        %v8469 = vand.u32 %v4878, 4294901760
        %v8470 = vsub.f32 %v4878, %v8469
        %8471 = vmatpush2.msra.mxu0 %v8470
        %8472 = vmatprep.subr.mxu0 0.0
        %v8473 = vand.u32 %v4877, 4294901760
        %v8474 = vsub.f32 %v4877, %v8473
        %8475 = vmatpush2.msra.mxu0 %v8474
        %8476 = vmatprep.subr.mxu0 0.0
        %v8477 = vand.u32 %v4876, 4294901760
        %v8478 = vsub.f32 %v4876, %v8477
        %8479 = vmatpush2.msra.mxu0 %v8478
        %8480 = vmatprep.subr.mxu0 0.0
        %v8481 = vand.u32 %v4875, 4294901760
        %v8482 = vsub.f32 %v4875, %v8481
        %8483 = vmatpush2.msra.mxu0 %v8482
        %8484 = vmatprep.subr.mxu0 0.0
        %v8485 = vand.u32 %v4874, 4294901760
        %v8486 = vsub.f32 %v4874, %v8485
        %8487 = vmatpush2.msra.mxu0 %v8486
        %8488 = vmatprep.subr.mxu0 0.0
        %v8489 = vand.u32 %v4873, 4294901760
        %v8490 = vsub.f32 %v4873, %v8489
        %8491 = vmatpush2.msra.mxu0 %v8490
        %8492 = vmatprep.subr.mxu0 0.0
        %v8493 = vand.u32 %v4872, 4294901760
        %v8494 = vsub.f32 %v4872, %v8493
        %8495 = vmatpush2.msra.mxu0 %v8494
        %8496 = vmatprep.subr.mxu0 0.0
        %v8497 = vand.u32 %v4871, 4294901760
        %v8498 = vsub.f32 %v4871, %v8497
        %8499 = vmatpush2.msra.mxu0 %v8498
        %8500 = vmatprep.subr.mxu0 0.0
        %v8501 = vand.u32 %v4870, 4294901760
        %v8502 = vsub.f32 %v4870, %v8501
        %8503 = vmatpush2.msra.mxu0 %v8502
        %8504 = vmatprep.subr.mxu0 0.0
        %v8505 = vand.u32 %v4869, 4294901760
        %v8506 = vsub.f32 %v4869, %v8505
        %8507 = vmatpush2.msra.mxu0 %v8506
        %8508 = vmatprep.subr.mxu0 0.0
        %v8509 = vand.u32 %v4868, 4294901760
        %v8510 = vsub.f32 %v4868, %v8509
        %8511 = vmatpush2.msra.mxu0 %v8510
        %v8512 = vand.u32 %v4731, 4294901760
        %v8513 = vsub.f32 %v4731, %v8512
        %8514 = vmatprep.mubr.f32.mxu0 %v8513
        %v8515 = vand.u32 %v4730, 4294901760
        %v8516 = vsub.f32 %v4730, %v8515
        %8517 = vmatmul.mubr.f32.gmra.mxu0 %v8516
        %v8518 = vpop.f32.mrf.mxu0
        %v8519 = vadd.f32 %v8360, %v8518
        %v8520 = vpop.f32.mrf.mxu0
        %v8521 = vand.u32 %v4739, 4294901760
        %v8522 = vsub.f32 %v4739, %v8521
        %8523 = vmatprep.mubr.f32.mxu0 %v8522
        %v8524 = vand.u32 %v4738, 4294901760
        %v8525 = vsub.f32 %v4738, %v8524
        %8526 = vmatmul.mubr.f32.gmra.mxu0 %v8525
        %v8527 = vpop.f32.mrf.mxu0
        %v8528 = vadd.f32 %v8367, %v8527
        %v8529 = vpop.f32.mrf.mxu0
        %v8530 = vand.u32 %v4747, 4294901760
        %v8531 = vsub.f32 %v4747, %v8530
        %8532 = vmatprep.mubr.f32.mxu0 %v8531
        %v8533 = vand.u32 %v4746, 4294901760
        %v8534 = vsub.f32 %v4746, %v8533
        %8535 = vmatmul.mubr.f32.gmra.mxu0 %v8534
        %v8536 = vpop.f32.mrf.mxu0
        %v8537 = vadd.f32 %v8374, %v8536
        %v8538 = vpop.f32.mrf.mxu0
        %v8539 = vand.u32 %v4755, 4294901760
        %v8540 = vsub.f32 %v4755, %v8539
        %8541 = vmatprep.mubr.f32.mxu0 %v8540
        %v8542 = vand.u32 %v4754, 4294901760
        %v8543 = vsub.f32 %v4754, %v8542
        %8544 = vmatmul.mubr.f32.gmra.mxu0 %v8543
        %v8545 = vpop.f32.mrf.mxu0
        %v8546 = vadd.f32 %v8381, %v8545
        %v8547 = vpop.f32.mrf.mxu0
        %8548 = vdwg.mxu0
        %8549 = vmatprep.subr.mxu0 0.0
        %v8550 = vand.u32 %v4867, 4294901760
        %8551 = vmatpush1.msra.mxu0 %v8550
        %8552 = vmatprep.subr.mxu0 0.0
        %v8553 = vand.u32 %v4866, 4294901760
        %8554 = vmatpush1.msra.mxu0 %v8553
        %8555 = vmatprep.subr.mxu0 0.0
        %v8556 = vand.u32 %v4865, 4294901760
        %8557 = vmatpush1.msra.mxu0 %v8556
        %8558 = vmatprep.subr.mxu0 0.0
        %v8559 = vand.u32 %v4864, 4294901760
        %8560 = vmatpush1.msra.mxu0 %v8559
        %8561 = vmatprep.subr.mxu0 0.0
        %v8562 = vand.u32 %v4863, 4294901760
        %8563 = vmatpush1.msra.mxu0 %v8562
        %8564 = vmatprep.subr.mxu0 0.0
        %v8565 = vand.u32 %v4862, 4294901760
        %8566 = vmatpush1.msra.mxu0 %v8565
        %8567 = vmatprep.subr.mxu0 0.0
        %v8568 = vand.u32 %v4861, 4294901760
        %8569 = vmatpush1.msra.mxu0 %v8568
        %8570 = vmatprep.subr.mxu0 0.0
        %v8571 = vand.u32 %v4860, 4294901760
        %8572 = vmatpush1.msra.mxu0 %v8571
        %8573 = vmatprep.subr.mxu0 0.0
        %v8574 = vand.u32 %v4859, 4294901760
        %8575 = vmatpush1.msra.mxu0 %v8574
        %8576 = vmatprep.subr.mxu0 0.0
        %v8577 = vand.u32 %v4858, 4294901760
        %8578 = vmatpush1.msra.mxu0 %v8577
        %8579 = vmatprep.subr.mxu0 0.0
        %v8580 = vand.u32 %v4857, 4294901760
        %8581 = vmatpush1.msra.mxu0 %v8580
        %8582 = vmatprep.subr.mxu0 0.0
        %v8583 = vand.u32 %v4856, 4294901760
        %8584 = vmatpush1.msra.mxu0 %v8583
        %8585 = vmatprep.subr.mxu0 0.0
        %v8586 = vand.u32 %v4855, 4294901760
        %8587 = vmatpush1.msra.mxu0 %v8586
        %8588 = vmatprep.subr.mxu0 0.0
        %v8589 = vand.u32 %v4854, 4294901760
        %8590 = vmatpush1.msra.mxu0 %v8589
        %8591 = vmatprep.subr.mxu0 0.0
        %v8592 = vand.u32 %v4853, 4294901760
        %8593 = vmatpush1.msra.mxu0 %v8592
        %8594 = vmatprep.subr.mxu0 0.0
        %v8595 = vand.u32 %v4852, 4294901760
        %8596 = vmatpush1.msra.mxu0 %v8595
        %8597 = vmatprep.subr.mxu0 0.0
        %v8598 = vand.u32 %v4883, 4294901760
        %8599 = vmatpush2.msra.mxu0 %v8598
        %8600 = vmatprep.subr.mxu0 0.0
        %v8601 = vand.u32 %v4882, 4294901760
        %8602 = vmatpush2.msra.mxu0 %v8601
        %8603 = vmatprep.subr.mxu0 0.0
        %v8604 = vand.u32 %v4881, 4294901760
        %8605 = vmatpush2.msra.mxu0 %v8604
        %8606 = vmatprep.subr.mxu0 0.0
        %v8607 = vand.u32 %v4880, 4294901760
        %8608 = vmatpush2.msra.mxu0 %v8607
        %8609 = vmatprep.subr.mxu0 0.0
        %v8610 = vand.u32 %v4879, 4294901760
        %8611 = vmatpush2.msra.mxu0 %v8610
        %8612 = vmatprep.subr.mxu0 0.0
        %v8613 = vand.u32 %v4878, 4294901760
        %8614 = vmatpush2.msra.mxu0 %v8613
        %8615 = vmatprep.subr.mxu0 0.0
        %v8616 = vand.u32 %v4877, 4294901760
        %8617 = vmatpush2.msra.mxu0 %v8616
        %8618 = vmatprep.subr.mxu0 0.0
        %v8619 = vand.u32 %v4876, 4294901760
        %8620 = vmatpush2.msra.mxu0 %v8619
        %8621 = vmatprep.subr.mxu0 0.0
        %v8622 = vand.u32 %v4875, 4294901760
        %8623 = vmatpush2.msra.mxu0 %v8622
        %8624 = vmatprep.subr.mxu0 0.0
        %v8625 = vand.u32 %v4874, 4294901760
        %8626 = vmatpush2.msra.mxu0 %v8625
        %8627 = vmatprep.subr.mxu0 0.0
        %v8628 = vand.u32 %v4873, 4294901760
        %8629 = vmatpush2.msra.mxu0 %v8628
        %8630 = vmatprep.subr.mxu0 0.0
        %v8631 = vand.u32 %v4872, 4294901760
        %8632 = vmatpush2.msra.mxu0 %v8631
        %8633 = vmatprep.subr.mxu0 0.0
        %v8634 = vand.u32 %v4871, 4294901760
        %8635 = vmatpush2.msra.mxu0 %v8634
        %8636 = vmatprep.subr.mxu0 0.0
        %v8637 = vand.u32 %v4870, 4294901760
        %8638 = vmatpush2.msra.mxu0 %v8637
        %8639 = vmatprep.subr.mxu0 0.0
        %v8640 = vand.u32 %v4869, 4294901760
        %8641 = vmatpush2.msra.mxu0 %v8640
        %8642 = vmatprep.subr.mxu0 0.0
        %v8643 = vand.u32 %v4868, 4294901760
        %8644 = vmatpush2.msra.mxu0 %v8643
        %v8645 = vand.u32 %v4731, 4294901760
        %v8646 = vsub.f32 %v4731, %v8645
        %v8647 = vand.u32 %v8646, 4294901760
        %8648 = vmatprep.mubr.f32.mxu0 %v8647
        %v8649 = vand.u32 %v4730, 4294901760
        %v8650 = vsub.f32 %v4730, %v8649
        %v8651 = vand.u32 %v8650, 4294901760
        %8652 = vmatmul.mubr.f32.gmra.mxu0 %v8651
        %v8653 = vpop.f32.mrf.mxu0
        %v8654 = vadd.f32 %v8519, %v8653
        %v8655 = vpop.f32.mrf.mxu0
        %v8656 = vand.u32 %v4739, 4294901760
        %v8657 = vsub.f32 %v4739, %v8656
        %v8658 = vand.u32 %v8657, 4294901760
        %8659 = vmatprep.mubr.f32.mxu0 %v8658
        %v8660 = vand.u32 %v4738, 4294901760
        %v8661 = vsub.f32 %v4738, %v8660
        %v8662 = vand.u32 %v8661, 4294901760
        %8663 = vmatmul.mubr.f32.gmra.mxu0 %v8662
        %v8664 = vpop.f32.mrf.mxu0
        %v8665 = vadd.f32 %v8528, %v8664
        %v8666 = vpop.f32.mrf.mxu0
        %v8667 = vand.u32 %v4747, 4294901760
        %v8668 = vsub.f32 %v4747, %v8667
        %v8669 = vand.u32 %v8668, 4294901760
        %8670 = vmatprep.mubr.f32.mxu0 %v8669
        %v8671 = vand.u32 %v4746, 4294901760
        %v8672 = vsub.f32 %v4746, %v8671
        %v8673 = vand.u32 %v8672, 4294901760
        %8674 = vmatmul.mubr.f32.gmra.mxu0 %v8673
        %v8675 = vpop.f32.mrf.mxu0
        %v8676 = vadd.f32 %v8537, %v8675
        %v8677 = vpop.f32.mrf.mxu0
        %v8678 = vand.u32 %v4755, 4294901760
        %v8679 = vsub.f32 %v4755, %v8678
        %v8680 = vand.u32 %v8679, 4294901760
        %8681 = vmatprep.mubr.f32.mxu0 %v8680
        %v8682 = vand.u32 %v4754, 4294901760
        %v8683 = vsub.f32 %v4754, %v8682
        %v8684 = vand.u32 %v8683, 4294901760
        %8685 = vmatmul.mubr.f32.gmra.mxu0 %v8684
        %v8686 = vpop.f32.mrf.mxu0
        %v8687 = vadd.f32 %v8546, %v8686
        %v8688 = vpop.f32.mrf.mxu0
        %8689 = vdwg.mxu0
        %8690 = vmatprep.subr.mxu0 0.0
        %v8691 = vand.u32 %v4867, 4294901760
        %v8692 = vsub.f32 %v4867, %v8691
        %v8693 = vand.u32 %v8692, 4294901760
        %8694 = vmatpush1.msra.mxu0 %v8693
        %8695 = vmatprep.subr.mxu0 0.0
        %v8696 = vand.u32 %v4866, 4294901760
        %v8697 = vsub.f32 %v4866, %v8696
        %v8698 = vand.u32 %v8697, 4294901760
        %8699 = vmatpush1.msra.mxu0 %v8698
        %8700 = vmatprep.subr.mxu0 0.0
        %v8701 = vand.u32 %v4865, 4294901760
        %v8702 = vsub.f32 %v4865, %v8701
        %v8703 = vand.u32 %v8702, 4294901760
        %8704 = vmatpush1.msra.mxu0 %v8703
        %8705 = vmatprep.subr.mxu0 0.0
        %v8706 = vand.u32 %v4864, 4294901760
        %v8707 = vsub.f32 %v4864, %v8706
        %v8708 = vand.u32 %v8707, 4294901760
        %8709 = vmatpush1.msra.mxu0 %v8708
        %8710 = vmatprep.subr.mxu0 0.0
        %v8711 = vand.u32 %v4863, 4294901760
        %v8712 = vsub.f32 %v4863, %v8711
        %v8713 = vand.u32 %v8712, 4294901760
        %8714 = vmatpush1.msra.mxu0 %v8713
        %8715 = vmatprep.subr.mxu0 0.0
        %v8716 = vand.u32 %v4862, 4294901760
        %v8717 = vsub.f32 %v4862, %v8716
        %v8718 = vand.u32 %v8717, 4294901760
        %8719 = vmatpush1.msra.mxu0 %v8718
        %8720 = vmatprep.subr.mxu0 0.0
        %v8721 = vand.u32 %v4861, 4294901760
        %v8722 = vsub.f32 %v4861, %v8721
        %v8723 = vand.u32 %v8722, 4294901760
        %8724 = vmatpush1.msra.mxu0 %v8723
        %8725 = vmatprep.subr.mxu0 0.0
        %v8726 = vand.u32 %v4860, 4294901760
        %v8727 = vsub.f32 %v4860, %v8726
        %v8728 = vand.u32 %v8727, 4294901760
        %8729 = vmatpush1.msra.mxu0 %v8728
        %8730 = vmatprep.subr.mxu0 0.0
        %v8731 = vand.u32 %v4859, 4294901760
        %v8732 = vsub.f32 %v4859, %v8731
        %v8733 = vand.u32 %v8732, 4294901760
        %8734 = vmatpush1.msra.mxu0 %v8733
        %8735 = vmatprep.subr.mxu0 0.0
        %v8736 = vand.u32 %v4858, 4294901760
        %v8737 = vsub.f32 %v4858, %v8736
        %v8738 = vand.u32 %v8737, 4294901760
        %8739 = vmatpush1.msra.mxu0 %v8738
        %8740 = vmatprep.subr.mxu0 0.0
        %v8741 = vand.u32 %v4857, 4294901760
        %v8742 = vsub.f32 %v4857, %v8741
        %v8743 = vand.u32 %v8742, 4294901760
        %8744 = vmatpush1.msra.mxu0 %v8743
        %8745 = vmatprep.subr.mxu0 0.0
        %v8746 = vand.u32 %v4856, 4294901760
        %v8747 = vsub.f32 %v4856, %v8746
        %v8748 = vand.u32 %v8747, 4294901760
        %8749 = vmatpush1.msra.mxu0 %v8748
        %8750 = vmatprep.subr.mxu0 0.0
        %v8751 = vand.u32 %v4855, 4294901760
        %v8752 = vsub.f32 %v4855, %v8751
        %v8753 = vand.u32 %v8752, 4294901760
        %8754 = vmatpush1.msra.mxu0 %v8753
        %8755 = vmatprep.subr.mxu0 0.0
        %v8756 = vand.u32 %v4854, 4294901760
        %v8757 = vsub.f32 %v4854, %v8756
        %v8758 = vand.u32 %v8757, 4294901760
        %8759 = vmatpush1.msra.mxu0 %v8758
        %8760 = vmatprep.subr.mxu0 0.0
        %v8761 = vand.u32 %v4853, 4294901760
        %v8762 = vsub.f32 %v4853, %v8761
        %v8763 = vand.u32 %v8762, 4294901760
        %8764 = vmatpush1.msra.mxu0 %v8763
        %8765 = vmatprep.subr.mxu0 0.0
        %v8766 = vand.u32 %v4852, 4294901760
        %v8767 = vsub.f32 %v4852, %v8766
        %v8768 = vand.u32 %v8767, 4294901760
        %8769 = vmatpush1.msra.mxu0 %v8768
        %8770 = vmatprep.subr.mxu0 0.0
        %v8771 = vand.u32 %v4883, 4294901760
        %v8772 = vsub.f32 %v4883, %v8771
        %v8773 = vand.u32 %v8772, 4294901760
        %8774 = vmatpush2.msra.mxu0 %v8773
        %8775 = vmatprep.subr.mxu0 0.0
        %v8776 = vand.u32 %v4882, 4294901760
        %v8777 = vsub.f32 %v4882, %v8776
        %v8778 = vand.u32 %v8777, 4294901760
        %8779 = vmatpush2.msra.mxu0 %v8778
        %8780 = vmatprep.subr.mxu0 0.0
        %v8781 = vand.u32 %v4881, 4294901760
        %v8782 = vsub.f32 %v4881, %v8781
        %v8783 = vand.u32 %v8782, 4294901760
        %8784 = vmatpush2.msra.mxu0 %v8783
        %8785 = vmatprep.subr.mxu0 0.0
        %v8786 = vand.u32 %v4880, 4294901760
        %v8787 = vsub.f32 %v4880, %v8786
        %v8788 = vand.u32 %v8787, 4294901760
        %8789 = vmatpush2.msra.mxu0 %v8788
        %8790 = vmatprep.subr.mxu0 0.0
        %v8791 = vand.u32 %v4879, 4294901760
        %v8792 = vsub.f32 %v4879, %v8791
        %v8793 = vand.u32 %v8792, 4294901760
        %8794 = vmatpush2.msra.mxu0 %v8793
        %8795 = vmatprep.subr.mxu0 0.0
        %v8796 = vand.u32 %v4878, 4294901760
        %v8797 = vsub.f32 %v4878, %v8796
        %v8798 = vand.u32 %v8797, 4294901760
        %8799 = vmatpush2.msra.mxu0 %v8798
        %8800 = vmatprep.subr.mxu0 0.0
        %v8801 = vand.u32 %v4877, 4294901760
        %v8802 = vsub.f32 %v4877, %v8801
        %v8803 = vand.u32 %v8802, 4294901760
        %8804 = vmatpush2.msra.mxu0 %v8803
        %8805 = vmatprep.subr.mxu0 0.0
        %v8806 = vand.u32 %v4876, 4294901760
        %v8807 = vsub.f32 %v4876, %v8806
        %v8808 = vand.u32 %v8807, 4294901760
        %8809 = vmatpush2.msra.mxu0 %v8808
        %8810 = vmatprep.subr.mxu0 0.0
        %v8811 = vand.u32 %v4875, 4294901760
        %v8812 = vsub.f32 %v4875, %v8811
        %v8813 = vand.u32 %v8812, 4294901760
        %8814 = vmatpush2.msra.mxu0 %v8813
        %8815 = vmatprep.subr.mxu0 0.0
        %v8816 = vand.u32 %v4874, 4294901760
        %v8817 = vsub.f32 %v4874, %v8816
        %v8818 = vand.u32 %v8817, 4294901760
        %8819 = vmatpush2.msra.mxu0 %v8818
        %8820 = vmatprep.subr.mxu0 0.0
        %v8821 = vand.u32 %v4873, 4294901760
        %v8822 = vsub.f32 %v4873, %v8821
        %v8823 = vand.u32 %v8822, 4294901760
        %8824 = vmatpush2.msra.mxu0 %v8823
        %8825 = vmatprep.subr.mxu0 0.0
        %v8826 = vand.u32 %v4872, 4294901760
        %v8827 = vsub.f32 %v4872, %v8826
        %v8828 = vand.u32 %v8827, 4294901760
        %8829 = vmatpush2.msra.mxu0 %v8828
        %8830 = vmatprep.subr.mxu0 0.0
        %v8831 = vand.u32 %v4871, 4294901760
        %v8832 = vsub.f32 %v4871, %v8831
        %v8833 = vand.u32 %v8832, 4294901760
        %8834 = vmatpush2.msra.mxu0 %v8833
        %8835 = vmatprep.subr.mxu0 0.0
        %v8836 = vand.u32 %v4870, 4294901760
        %v8837 = vsub.f32 %v4870, %v8836
        %v8838 = vand.u32 %v8837, 4294901760
        %8839 = vmatpush2.msra.mxu0 %v8838
        %8840 = vmatprep.subr.mxu0 0.0
        %v8841 = vand.u32 %v4869, 4294901760
        %v8842 = vsub.f32 %v4869, %v8841
        %v8843 = vand.u32 %v8842, 4294901760
        %8844 = vmatpush2.msra.mxu0 %v8843
        %8845 = vmatprep.subr.mxu0 0.0
        %v8846 = vand.u32 %v4868, 4294901760
        %v8847 = vsub.f32 %v4868, %v8846
        %v8848 = vand.u32 %v8847, 4294901760
        %8849 = vmatpush2.msra.mxu0 %v8848
        %v8850 = vand.u32 %v4731, 4294901760
        %8851 = vmatprep.mubr.f32.mxu0 %v8850
        %v8852 = vand.u32 %v4730, 4294901760
        %8853 = vmatmul.mubr.f32.gmra.mxu0 %v8852
        %v8854 = vpop.f32.mrf.mxu0
        %v8855 = vadd.f32 %v8654, %v8854
        %v8856 = vpop.f32.mrf.mxu0
        %v8857 = vand.u32 %v4739, 4294901760
        %8858 = vmatprep.mubr.f32.mxu0 %v8857
        %v8859 = vand.u32 %v4738, 4294901760
        %8860 = vmatmul.mubr.f32.gmra.mxu0 %v8859
        %v8861 = vpop.f32.mrf.mxu0
        %v8862 = vadd.f32 %v8665, %v8861
        %v8863 = vpop.f32.mrf.mxu0
        %v8864 = vand.u32 %v4747, 4294901760
        %8865 = vmatprep.mubr.f32.mxu0 %v8864
        %v8866 = vand.u32 %v4746, 4294901760
        %8867 = vmatmul.mubr.f32.gmra.mxu0 %v8866
        %v8868 = vpop.f32.mrf.mxu0
        %v8869 = vadd.f32 %v8676, %v8868
        %v8870 = vpop.f32.mrf.mxu0
        %v8871 = vand.u32 %v4755, 4294901760
        %8872 = vmatprep.mubr.f32.mxu0 %v8871
        %v8873 = vand.u32 %v4754, 4294901760
        %8874 = vmatmul.mubr.f32.gmra.mxu0 %v8873
        %v8875 = vpop.f32.mrf.mxu0
        %v8876 = vadd.f32 %v8687, %v8875
        %v8877 = vpop.f32.mrf.mxu0
        %8878 = vdwg.mxu0
        %8879 = vmatprep.subr.mxu0 0.0
        %v8880 = vand.u32 %v4867, 4294901760
        %8881 = vmatpush1.msra.mxu0 %v8880
        %8882 = vmatprep.subr.mxu0 0.0
        %v8883 = vand.u32 %v4866, 4294901760
        %8884 = vmatpush1.msra.mxu0 %v8883
        %8885 = vmatprep.subr.mxu0 0.0
        %v8886 = vand.u32 %v4865, 4294901760
        %8887 = vmatpush1.msra.mxu0 %v8886
        %8888 = vmatprep.subr.mxu0 0.0
        %v8889 = vand.u32 %v4864, 4294901760
        %8890 = vmatpush1.msra.mxu0 %v8889
        %8891 = vmatprep.subr.mxu0 0.0
        %v8892 = vand.u32 %v4863, 4294901760
        %8893 = vmatpush1.msra.mxu0 %v8892
        %8894 = vmatprep.subr.mxu0 0.0
        %v8895 = vand.u32 %v4862, 4294901760
        %8896 = vmatpush1.msra.mxu0 %v8895
        %8897 = vmatprep.subr.mxu0 0.0
        %v8898 = vand.u32 %v4861, 4294901760
        %8899 = vmatpush1.msra.mxu0 %v8898
        %8900 = vmatprep.subr.mxu0 0.0
        %v8901 = vand.u32 %v4860, 4294901760
        %8902 = vmatpush1.msra.mxu0 %v8901
        %8903 = vmatprep.subr.mxu0 0.0
        %v8904 = vand.u32 %v4859, 4294901760
        %8905 = vmatpush1.msra.mxu0 %v8904
        %8906 = vmatprep.subr.mxu0 0.0
        %v8907 = vand.u32 %v4858, 4294901760
        %8908 = vmatpush1.msra.mxu0 %v8907
        %8909 = vmatprep.subr.mxu0 0.0
        %v8910 = vand.u32 %v4857, 4294901760
        %8911 = vmatpush1.msra.mxu0 %v8910
        %8912 = vmatprep.subr.mxu0 0.0
        %v8913 = vand.u32 %v4856, 4294901760
        %8914 = vmatpush1.msra.mxu0 %v8913
        %8915 = vmatprep.subr.mxu0 0.0
        %v8916 = vand.u32 %v4855, 4294901760
        %8917 = vmatpush1.msra.mxu0 %v8916
        %8918 = vmatprep.subr.mxu0 0.0
        %v8919 = vand.u32 %v4854, 4294901760
        %8920 = vmatpush1.msra.mxu0 %v8919
        %8921 = vmatprep.subr.mxu0 0.0
        %v8922 = vand.u32 %v4853, 4294901760
        %8923 = vmatpush1.msra.mxu0 %v8922
        %8924 = vmatprep.subr.mxu0 0.0
        %v8925 = vand.u32 %v4852, 4294901760
        %8926 = vmatpush1.msra.mxu0 %v8925
        %8927 = vmatprep.subr.mxu0 0.0
        %v8928 = vand.u32 %v4883, 4294901760
        %8929 = vmatpush2.msra.mxu0 %v8928
        %8930 = vmatprep.subr.mxu0 0.0
        %v8931 = vand.u32 %v4882, 4294901760
        %8932 = vmatpush2.msra.mxu0 %v8931
        %8933 = vmatprep.subr.mxu0 0.0
        %v8934 = vand.u32 %v4881, 4294901760
        %8935 = vmatpush2.msra.mxu0 %v8934
        %8936 = vmatprep.subr.mxu0 0.0
        %v8937 = vand.u32 %v4880, 4294901760
        %8938 = vmatpush2.msra.mxu0 %v8937
        %8939 = vmatprep.subr.mxu0 0.0
        %v8940 = vand.u32 %v4879, 4294901760
        %8941 = vmatpush2.msra.mxu0 %v8940
        %8942 = vmatprep.subr.mxu0 0.0
        %v8943 = vand.u32 %v4878, 4294901760
        %8944 = vmatpush2.msra.mxu0 %v8943
        %8945 = vmatprep.subr.mxu0 0.0
        %v8946 = vand.u32 %v4877, 4294901760
        %8947 = vmatpush2.msra.mxu0 %v8946
        %8948 = vmatprep.subr.mxu0 0.0
        %v8949 = vand.u32 %v4876, 4294901760
        %8950 = vmatpush2.msra.mxu0 %v8949
        %8951 = vmatprep.subr.mxu0 0.0
        %v8952 = vand.u32 %v4875, 4294901760
        %8953 = vmatpush2.msra.mxu0 %v8952
        %8954 = vmatprep.subr.mxu0 0.0
        %v8955 = vand.u32 %v4874, 4294901760
        %8956 = vmatpush2.msra.mxu0 %v8955
        %8957 = vmatprep.subr.mxu0 0.0
        %v8958 = vand.u32 %v4873, 4294901760
        %8959 = vmatpush2.msra.mxu0 %v8958
        %8960 = vmatprep.subr.mxu0 0.0
        %v8961 = vand.u32 %v4872, 4294901760
        %8962 = vmatpush2.msra.mxu0 %v8961
        %8963 = vmatprep.subr.mxu0 0.0
        %v8964 = vand.u32 %v4871, 4294901760
        %8965 = vmatpush2.msra.mxu0 %v8964
        %8966 = vmatprep.subr.mxu0 0.0
        %v8967 = vand.u32 %v4870, 4294901760
        %8968 = vmatpush2.msra.mxu0 %v8967
        %8969 = vmatprep.subr.mxu0 0.0
        %v8970 = vand.u32 %v4869, 4294901760
        %8971 = vmatpush2.msra.mxu0 %v8970
        %8972 = vmatprep.subr.mxu0 0.0
        %v8973 = vand.u32 %v4868, 4294901760
        %8974 = vmatpush2.msra.mxu0 %v8973
        %v8975 = vand.u32 %v4731, 4294901760
        %8976 = vmatprep.mubr.f32.mxu0 %v8975
        %v8977 = vand.u32 %v4730, 4294901760
        %8978 = vmatmul.mubr.f32.gmra.mxu0 %v8977
        %v8979 = vpop.f32.mrf.mxu0
        %v8980 = vadd.f32 %v8855, %v8979
        %v8981 = vpop.f32.mrf.mxu0
        %v8982 = vand.u32 %v4739, 4294901760
        %8983 = vmatprep.mubr.f32.mxu0 %v8982
        %v8984 = vand.u32 %v4738, 4294901760
        %8985 = vmatmul.mubr.f32.gmra.mxu0 %v8984
        %v8986 = vpop.f32.mrf.mxu0
        %v8987 = vadd.f32 %v8862, %v8986
        %v8988 = vpop.f32.mrf.mxu0
        %v8989 = vand.u32 %v4747, 4294901760
        %8990 = vmatprep.mubr.f32.mxu0 %v8989
        %v8991 = vand.u32 %v4746, 4294901760
        %8992 = vmatmul.mubr.f32.gmra.mxu0 %v8991
        %v8993 = vpop.f32.mrf.mxu0
        %v8994 = vadd.f32 %v8869, %v8993
        %v8995 = vpop.f32.mrf.mxu0
        %v8996 = vand.u32 %v4755, 4294901760
        %8997 = vmatprep.mubr.f32.mxu0 %v8996
        %v8998 = vand.u32 %v4754, 4294901760
        %8999 = vmatmul.mubr.f32.gmra.mxu0 %v8998
        %v9000 = vpop.f32.mrf.mxu0
        %v9001 = vadd.f32 %v8876, %v9000
        %v9002 = vpop.f32.mrf.mxu0
        %9003 = vdwg.mxu0
        %9004 = vst [vmem:[%s315] sm:$0xff] %v8980
        %9005 = vst [vmem:[%s315 + $0x8] sm:$0xff] %v8987
        %9006 = vst [vmem:[%s315 + $0x10] sm:$0xff] %v8994
        %9007 = vst [vmem:[%s315 + $0x18] sm:$0xff] %v9001
        %v9008 = vsub.f32 %v8980, %v325
        %v9009 = vsub.f32 %v8987, %v326
        %v9010 = vsub.f32 %v8994, %v327
        %v9011 = vsub.f32 %v9001, %v328
        %v9012 = vadd.f32 %v325, %v326
        %v9013 = vadd.f32 %v9012, %v327
        %v9014 = vadd.f32 %v9013, %v328
        %v9015 = vrot.slane %v9014, 4
        %v9016 = vadd.f32 %v9014, %v9015
        %v9017 = vrot.slane %v9016, 2
        %v9018 = vadd.f32 %v9016, %v9017
        %v9019 = vrot.slane %v9018, 1
        %v9020 = vadd.f32 %v9018, %v9019
        %v9021 = vmul.f32 %v325, %v325
        %v9022 = vmul.f32 %v326, %v326
        %v9023 = vmul.f32 %v327, %v327
        %v9024 = vmul.f32 %v328, %v328
        %v9025 = vadd.f32 %v9021, %v9022
        %v9026 = vadd.f32 %v9025, %v9023
        %v9027 = vadd.f32 %v9026, %v9024
        %v9028 = vrot.slane %v9027, 4
        %v9029 = vadd.f32 %v9027, %v9028
        %v9030 = vrot.slane %v9029, 2
        %v9031 = vadd.f32 %v9029, %v9030
        %v9032 = vrot.slane %v9031, 1
        %v9033 = vadd.f32 %v9031, %v9032
        %v9034 = vmul.f32 %v9008, %v9008
        %v9035 = vmul.f32 %v9009, %v9009
        %v9036 = vmul.f32 %v9010, %v9010
        %v9037 = vmul.f32 %v9011, %v9011
        %v9038 = vadd.f32 %v9034, %v9035
        %v9039 = vadd.f32 %v9038, %v9036
        %v9040 = vadd.f32 %v9039, %v9037
        %v9041 = vrot.slane %v9040, 4
        %v9042 = vadd.f32 %v9040, %v9041
        %v9043 = vrot.slane %v9042, 2
        %v9044 = vadd.f32 %v9042, %v9043
        %v9045 = vrot.slane %v9044, 1
        %v9046 = vadd.f32 %v9044, %v9045
        %vm9047 = vcmask 1040384
        %v9048 = vsel %vm9047, %v9020, %v9033
        %vm9049 = vcmask 1041408
        %v9050 = vsel %vm9049, %v9048, %v9046
        %vm9051 = vcmask 1042432
        %v9052 = vsel %vm9051, %v9050, 0.0
        %9053 = vst [vmem:[%s322] sm:$0xff] %v9052
        %s9054 = sand.u32 %s147, 1
        %s9055 = scalar_lea.sflag [#allocation4], %s9054
        %s9056 = sand.u32 %s147, 1
        %s9057 = smul.addr %s9056, 32
        %s9058 = scalar_lea.vmem [#allocation10], %s9057
        %s9059 = sand.u32 %s173, 1
        %s9060 = scalar_lea.sflag [#allocation12], %s9059
        %s9061 = sand.u32 %s173, 1
        %s9062 = smul.addr %s9061, 8
        %s9063 = scalar_lea.vmem [#allocation11], %s9062
        // Predicated region
        $region64: #{tpu_custom_call.1} parent=39 // pred_check
          %p9064 = pneg %p157
        $region65: #{tpu_custom_call.1} parent=39 // pred_check_branch
          %9066 = sbr.rel (%p9064) target = $region67
        $region66: #{tpu_custom_call.1} parent=39 // pred_region
          %s9067 = smul.u32 4, %s29
          %s9069 = ssub.s32 512, 512
          %9070 = vsyncadd %s9055, %s9069
          %s9071 = smul.addr %s9067, 128
          %s9072 = scalar_lea.hbm %s5, %s9071
          %s9073 = sshll.u32 %s9058, 4
          %s9074 = int_to_ptr.vmem [resolvable:$true] %s9073
          %9079 = dma.vmem_to_hbm [thread:$0]  %s9074, 512, %s9072, %s9055, 128, 128, 8
        $region67: #{tpu_custom_call.1} parent=39 // pred_fallthru
          _
        // Predicated region
        $region68: #{tpu_custom_call.1} parent=39 // pred_check
          %p9080 = pneg %p183
        $region69: #{tpu_custom_call.1} parent=39 // pred_check_branch
          %9082 = sbr.rel (%p9080) target = $region71
        $region70: #{tpu_custom_call.1} parent=39 // pred_region
          %s9084 = ssub.s32 128, 128
          %9085 = vsyncadd %s9060, %s9084
          %s9086 = smul.addr %s29, 128
          %s9087 = scalar_lea.hbm %s6, %s9086
          %s9089 = sshll.u32 %s9063, 4
          %s9090 = int_to_ptr.vmem [resolvable:$true] %s9089
          %9092 = dma.vmem_to_hbm [thread:$0]  %s9090, 128, %s9087, %s9060
        $region71: #{tpu_custom_call.1} parent=39 // pred_fallthru
          _
      $region40: #{tpu_custom_call.1} parent=5 // pred_fallthru
        _
      %p9093 = scmp.le.s32.totalorder 2, %s24
      // Predicated region
      $region72: #{tpu_custom_call.1} parent=5 // pred_check
        %p9094 = pneg %p9093
      $region73: #{tpu_custom_call.1} parent=5 // pred_check_branch
        %9096 = sbr.rel (%p9094) target = $region75
      $region74: #{tpu_custom_call.1} parent=5 // pred_region
        %s9097 = ssub.s32 %s24, 2
        // Predicated region
        $region76: #{tpu_custom_call.1} parent=74 // pred_check
          %p9098 = pneg %p163
        $region77: #{tpu_custom_call.1} parent=74 // pred_check_branch
          %9100 = sbr.rel (%p9098) target = $region79
        $region78: #{tpu_custom_call.1} parent=74 // pred_region
          %s9101 = sand.u32 %s148, 1
          %s9102 = scalar_lea.sflag [#allocation4], %s9101
          %s9103 = sand.u32 %s148, 1
          %s9104 = smul.addr %s9103, 32
          %s9105 = scalar_lea.vmem [#allocation10], %s9104
          %9106 = dma.done %s9102, 512
        $region79: #{tpu_custom_call.1} parent=74 // pred_fallthru
          _
        // Predicated region
        $region80: #{tpu_custom_call.1} parent=74 // pred_check
          %p9107 = pneg %p189
        $region81: #{tpu_custom_call.1} parent=74 // pred_check_branch
          %9109 = sbr.rel (%p9107) target = $region83
        $region82: #{tpu_custom_call.1} parent=74 // pred_region
          %s9110 = sand.u32 %s174, 1
          %s9111 = scalar_lea.sflag [#allocation12], %s9110
          %s9112 = sand.u32 %s174, 1
          %s9113 = smul.addr %s9112, 8
          %s9114 = scalar_lea.vmem [#allocation11], %s9113
          %9115 = dma.done %s9111, 128
        $region83: #{tpu_custom_call.1} parent=74 // pred_fallthru
          _
      $region75: #{tpu_custom_call.1} parent=5 // pred_fallthru
        _
    $region6: #{tpu_custom_call.1} parent=1 // loop_footer
      %s28 = sadd.s32 1, %s24
    $region7: #{tpu_custom_call.1} parent=1 // loop_footer_branch
      %23 = sbr.rel target = $region3
    $region8: #{tpu_custom_call.1} parent=1 // loop_exit
      _
    %9116 = vsyncpa [#allocation3], 1
    %s9117 = scalar_lea.sflag [#allocation3], 1
    %9118 = vsyncpa %s9117, 1
    %9119 = vsyncpa [#allocation6], 1
    %9120 = vsyncpa [#allocation9], 1
    %9121 = vsyncpa [#allocation4], 1
    %s9122 = scalar_lea.sflag [#allocation4], 1
    %9123 = vsyncpa %s9122, 1
    %9124 = vsyncpa [#allocation12], 1
    %s9125 = scalar_lea.sflag [#allocation12], 1
    %9126 = vsyncpa %s9125, 1

</llo_original>
